<compile_context>
chip_gen: v7x
topology: tpu7x:2x2x1
jax: 0.10.0
libtpu: 0.0.40
codegen_flags: <defaults>
</compile_context>

<pallas_src>
import functools

import jax
import jax.numpy as jnp
from jax.experimental import pallas as pl
from jax.experimental.pallas import tpu as pltpu

LANE = 128
SUBLANE = 8
OUT_DIM = 10


def _round_up(x, m):
    return (x + m - 1) // m * m


def _fused_mlp_kernel(x_ref, w1_ref, b1_ref, w2_ref, b2_ref, w3_ref, b3_ref,
                      o_ref):
    # Layer 1: (tm, 784) @ (784, 1000) + b1, ReLU   (full-K matmul, MXU, f32 acc)
    h = jnp.dot(x_ref[...], w1_ref[...], preferred_element_type=jnp.float32)
    h = jnp.maximum(h + b1_ref[...], 0.0)
    # Layer 2: (tm, 1000) @ (1000, 2000) + b2, ReLU
    h = jnp.dot(h, w2_ref[...], preferred_element_type=jnp.float32)
    h = jnp.maximum(h + b2_ref[...], 0.0)
    # Layer 3: (tm, 2000) @ (2000, 128-padded) + b3   (lane-dense output store)
    out = jnp.dot(h, w3_ref[...], preferred_element_type=jnp.float32) + b3_ref[...]
    o_ref[...] = out.astype(o_ref.dtype)


def fused_mlp(x, prepped, *, out_dim):
    """out = ((relu(x@w1+b1)@w2+b2).relu @ w3 + b3)[:, :out_dim], single kernel."""
    (w1, b1), (w2, b2), (w3p, b3p) = prepped
    M, K = x.shape
    Np = w3p.shape[1]

    # M tile: tiny batches -> one sublane-aligned tile; large batches -> 256-row
    # tiles so the M dimension fills the MXU and the grid can shard across TCs.
    tm = 256 if M > 256 else _round_up(M, SUBLANE)
    Mp = _round_up(M, tm)
    xp = x if Mp == M else jnp.pad(x, ((0, Mp - M), (0, 0)))  # only M is padded (tiny)

    invariant = lambda i: (0, 0)  # weights/biases: same full block every grid step

    out = pl.pallas_call(
        _fused_mlp_kernel,
        out_shape=jax.ShapeDtypeStruct((Mp, Np), x.dtype),
        grid_spec=pltpu.PrefetchScalarGridSpec(
            num_scalar_prefetch=0,
            grid=(Mp // tm,),
            in_specs=[
                pl.BlockSpec((tm, K), lambda i: (i, 0)),   # x tile, full K
                pl.BlockSpec(w1.shape, invariant),         # (784, 1000) full block
                pl.BlockSpec(b1.shape, invariant),         # (1, 1000)
                pl.BlockSpec(w2.shape, invariant),         # (1000, 2000) full block
                pl.BlockSpec(b2.shape, invariant),         # (1, 2000)
                pl.BlockSpec(w3p.shape, invariant),        # (2000, 128) full block
                pl.BlockSpec(b3p.shape, invariant),        # (1, 128)
            ],
            out_specs=pl.BlockSpec((tm, Np), lambda i: (i, 0)),
        ),
        compiler_params=pltpu.CompilerParams(
            dimension_semantics=("parallel",),
            vmem_limit_bytes=48 * 1024 * 1024,
        ),
    )(xp, w1, b1, w2, b2, w3p, b3p)

    return out[:M, :out_dim]


def init_params(key, hidden_size_1=1000, hidden_size_2=2000):
    """Deterministic synthetic params; shapes match the torch module."""
    dims = [(28 * 28, hidden_size_1), (hidden_size_1, hidden_size_2),
            (hidden_size_2, OUT_DIM)]
    params = []
    for fan_in, fan_out in dims:
        kw, kb, key = jax.random.split(key, 3)
        bound = 1.0 / jnp.sqrt(fan_in)  # torch nn.Linear default init range
        w = jax.random.uniform(kw, (fan_in, fan_out), jnp.float32, -bound, bound)
        b = jax.random.uniform(kb, (fan_out,), jnp.float32, -bound, bound)
        params.append((w, b))
    return params


def prepare_params(params):
    """One-time prep OUTSIDE the hot path: biases -> (1, N); pad only the last
    layer's output dim up to a 128-lane multiple (keeps output stores lane-dense).
    w1 / w2 stay unpadded — full-dim blocks need no (8,128) divisibility."""
    (w1, b1), (w2, b2), (w3, b3) = params
    n3 = w3.shape[1]
    n3p = _round_up(n3, LANE)
    w3p = jnp.pad(w3, ((0, 0), (0, n3p - n3)))
    b3p = jnp.pad(b3, (0, n3p - n3))
    return (
        (w1, b1.reshape(1, -1)),
        (w2, b2.reshape(1, -1)),
        (w3p, b3p.reshape(1, -1)),
    )


@jax.jit
def simple_nn_forward(img, prepped):
    # img: (B, 1, 28, 28) NCHW  ->  (B, 784), matching torch's .view(-1, 28*28)
    x = img.reshape(-1, 28 * 28)
    return fused_mlp(x, prepped, out_dim=OUT_DIM)


if __name__ == "__main__":
    key = jax.random.PRNGKey(0)
    k_img, k_params = jax.random.split(key)

    batch = 2
    img = jax.random.normal(k_img, (batch, 1, 28, 28), jnp.float32)
    params = init_params(k_params)
    prepped = prepare_params(params)  # one-time; not in the jitted hot path

    out = simple_nn_forward(img, prepped)
    jax.block_until_ready(out)

    # Pure-JAX reference check against the natural (unpadded) params.
    xr = img.reshape(-1, 28 * 28)
    (w1, b1), (w2, b2), (w3, b3) = params
    ref = jnp.maximum(xr @ w1 + b1, 0.0)
    ref = jnp.maximum(ref @ w2 + b2, 0.0)
    ref = ref @ w3 + b3
    assert out.shape == (batch, OUT_DIM)
    assert jnp.allclose(out, ref, atol=1e-4, rtol=1e-4)

    print("KERNEL_OK")
</pallas_src>

<mosaic_0001>
module attributes {stable_mosaic.version = 11 : i64} {
  func.func @_fused_mlp_kernel(%arg0: i32, %arg1: memref<8x784xf32, #tpu.memory_space<vmem>>, %arg2: memref<784x1000xf32, #tpu.memory_space<vmem>>, %arg3: memref<1x1000xf32, #tpu.memory_space<vmem>>, %arg4: memref<1000x2000xf32, #tpu.memory_space<vmem>>, %arg5: memref<1x2000xf32, #tpu.memory_space<vmem>>, %arg6: memref<2000x128xf32, #tpu.memory_space<vmem>>, %arg7: memref<1x128xf32, #tpu.memory_space<vmem>>, %arg8: memref<8x128xf32, #tpu.memory_space<vmem>>) attributes {dimension_semantics = [#tpu.dimension_semantics<parallel>], iteration_bounds = array<i64: 1>, scalar_prefetch = 0 : i64, scratch_operands = 0 : i64, tpu.core_type = #tpu.core_type<tc>, window_params = [{transform_indices = @transform_0, window_bounds = array<i64: 8, 784>}, {pipeline_mode = #tpu.pipeline_mode<synchronous>, transform_indices = @transform_1, window_bounds = array<i64: 784, 1000>}, {pipeline_mode = #tpu.pipeline_mode<synchronous>, transform_indices = @transform_2, window_bounds = array<i64: 1, 1000>}, {pipeline_mode = #tpu.pipeline_mode<synchronous>, transform_indices = @transform_3, window_bounds = array<i64: 1000, 2000>}, {pipeline_mode = #tpu.pipeline_mode<synchronous>, transform_indices = @transform_4, window_bounds = array<i64: 1, 2000>}, {pipeline_mode = #tpu.pipeline_mode<synchronous>, transform_indices = @transform_5, window_bounds = array<i64: 2000, 128>}, {pipeline_mode = #tpu.pipeline_mode<synchronous>, transform_indices = @transform_6, window_bounds = array<i64: 1, 128>}, {transform_indices = @transform_7, window_bounds = array<i64: 8, 128>}]} {
    %c0 = arith.constant 0 : index
    %c0_0 = arith.constant 0 : index
    %0 = vector.load %arg1[%c0, %c0_0] : memref<8x784xf32, #tpu.memory_space<vmem>>, vector<8x784xf32>
    %c0_1 = arith.constant 0 : index
    %c0_2 = arith.constant 0 : index
    %1 = vector.load %arg2[%c0_1, %c0_2] : memref<784x1000xf32, #tpu.memory_space<vmem>>, vector<784x1000xf32>
    %cst = arith.constant dense<0.000000e+00> : vector<8x1000xf32>
    %2 = tpu.matmul %0, %1, %cst {dimension_numbers = #tpu.dot_dimension_numbers<[1], [0], [0], [1], [0, 0, 1, 1], [], []>} : vector<8x784xf32>, vector<784x1000xf32>, vector<8x1000xf32> -> vector<8x1000xf32>
    %c0_3 = arith.constant 0 : index
    %c0_4 = arith.constant 0 : index
    %3 = vector.load %arg3[%c0_3, %c0_4] : memref<1x1000xf32, #tpu.memory_space<vmem>>, vector<1x1000xf32>
    %4 = vector.broadcast %3 : vector<1x1000xf32> to vector<8x1000xf32>
    %5 = arith.addf %2, %4 : vector<8x1000xf32>
    %cst_5 = arith.constant 0.000000e+00 : f32
    %6 = vector.broadcast %cst_5 : f32 to vector<8x1000xf32>
    %7 = arith.maximumf %5, %6 : vector<8x1000xf32>
    %c0_6 = arith.constant 0 : index
    %c0_7 = arith.constant 0 : index
    %8 = vector.load %arg4[%c0_6, %c0_7] : memref<1000x2000xf32, #tpu.memory_space<vmem>>, vector<1000x2000xf32>
    %cst_8 = arith.constant dense<0.000000e+00> : vector<8x2000xf32>
    %9 = tpu.matmul %7, %8, %cst_8 {dimension_numbers = #tpu.dot_dimension_numbers<[1], [0], [0], [1], [0, 0, 1, 1], [], []>} : vector<8x1000xf32>, vector<1000x2000xf32>, vector<8x2000xf32> -> vector<8x2000xf32>
    %c0_9 = arith.constant 0 : index
    %c0_10 = arith.constant 0 : index
    %10 = vector.load %arg5[%c0_9, %c0_10] : memref<1x2000xf32, #tpu.memory_space<vmem>>, vector<1x2000xf32>
    %11 = vector.broadcast %10 : vector<1x2000xf32> to vector<8x2000xf32>
    %12 = arith.addf %9, %11 : vector<8x2000xf32>
    %cst_11 = arith.constant 0.000000e+00 : f32
    %13 = vector.broadcast %cst_11 : f32 to vector<8x2000xf32>
    %14 = arith.maximumf %12, %13 : vector<8x2000xf32>
    %c0_12 = arith.constant 0 : index
    %c0_13 = arith.constant 0 : index
    %15 = vector.load %arg6[%c0_12, %c0_13] : memref<2000x128xf32, #tpu.memory_space<vmem>>, vector<2000x128xf32>
    %cst_14 = arith.constant dense<0.000000e+00> : vector<8x128xf32>
    %16 = tpu.matmul %14, %15, %cst_14 {dimension_numbers = #tpu.dot_dimension_numbers<[1], [0], [0], [1], [0, 0, 1, 1], [], []>} : vector<8x2000xf32>, vector<2000x128xf32>, vector<8x128xf32> -> vector<8x128xf32>
    %c0_15 = arith.constant 0 : index
    %c0_16 = arith.constant 0 : index
    %17 = vector.load %arg7[%c0_15, %c0_16] : memref<1x128xf32, #tpu.memory_space<vmem>>, vector<1x128xf32>
    %18 = vector.broadcast %17 : vector<1x128xf32> to vector<8x128xf32>
    %19 = arith.addf %16, %18 : vector<8x128xf32>
    %c0_17 = arith.constant 0 : index
    %c0_18 = arith.constant 0 : index
    %20 = vector.load %arg8[%c0_17, %c0_18] : memref<8x128xf32, #tpu.memory_space<vmem>>, vector<8x128xf32>
    tpu.vector_store %arg8[%c0_17, %c0_18], %19 {strides = array<i32>} : memref<8x128xf32, #tpu.memory_space<vmem>>, vector<8x128xf32>,
    return
  }
  func.func @transform_0(%arg0: i32) -> (i32, i32) {
    %c0_i32 = arith.constant 0 : i32
    %c0_i32_0 = arith.constant 0 : i32
    return %arg0, %c0_i32 : i32, i32
  }
  func.func @transform_1(%arg0: i32) -> (i32, i32) {
    %c0_i32 = arith.constant 0 : i32
    %c0_i32_0 = arith.constant 0 : i32
    %c0_i32_1 = arith.constant 0 : i32
    return %c0_i32, %c0_i32_0 : i32, i32
  }
  func.func @transform_2(%arg0: i32) -> (i32, i32) {
    %c0_i32 = arith.constant 0 : i32
    %c0_i32_0 = arith.constant 0 : i32
    %c0_i32_1 = arith.constant 0 : i32
    return %c0_i32, %c0_i32_0 : i32, i32
  }
  func.func @transform_3(%arg0: i32) -> (i32, i32) {
    %c0_i32 = arith.constant 0 : i32
    %c0_i32_0 = arith.constant 0 : i32
    %c0_i32_1 = arith.constant 0 : i32
    return %c0_i32, %c0_i32_0 : i32, i32
  }
  func.func @transform_4(%arg0: i32) -> (i32, i32) {
    %c0_i32 = arith.constant 0 : i32
    %c0_i32_0 = arith.constant 0 : i32
    %c0_i32_1 = arith.constant 0 : i32
    return %c0_i32, %c0_i32_0 : i32, i32
  }
  func.func @transform_5(%arg0: i32) -> (i32, i32) {
    %c0_i32 = arith.constant 0 : i32
    %c0_i32_0 = arith.constant 0 : i32
    %c0_i32_1 = arith.constant 0 : i32
    return %c0_i32, %c0_i32_0 : i32, i32
  }
  func.func @transform_6(%arg0: i32) -> (i32, i32) {
    %c0_i32 = arith.constant 0 : i32
    %c0_i32_0 = arith.constant 0 : i32
    %c0_i32_1 = arith.constant 0 : i32
    return %c0_i32, %c0_i32_0 : i32, i32
  }
  func.func @transform_7(%arg0: i32) -> (i32, i32) {
    %c0_i32 = arith.constant 0 : i32
    %c0_i32_0 = arith.constant 0 : i32
    return %arg0, %c0_i32 : i32, i32
  }
}

</mosaic_0001>

<llo_original>
// kernel: simple_nn_forward.1
$region0: #{simple_nn_forward.1}
  #allocation0 [shape = 'u32[]', space=smem, size = 0x4, offset = 0x4, fixed_abs, tag = 'smem constant byte address 0x4 - core index']
  #allocation1 [shape = 'u32[144,128]{1,0:T(1,128)}', space=vmem, size = 0x12000, scoped, tag = 'internal scratch']
  %s0 = inlined_call_operand.vmem [shape: f32[8,784], index: 0, kind: input, shape index: {}]
  %s1 = inlined_call_operand.hbm [shape: f32[784,1000], index: 1, kind: input, shape index: {}]
  %s2 = inlined_call_operand.hbm [shape: f32[1,1000], index: 2, kind: input, shape index: {}]
  %s3 = inlined_call_operand.hbm [shape: f32[1000,2000], index: 3, kind: input, shape index: {}]
  %s4 = inlined_call_operand.hbm [shape: f32[1,2000], index: 4, kind: input, shape index: {}]
  %s5 = inlined_call_operand.hbm [shape: f32[2000,128], index: 5, kind: input, shape index: {}]
  %s6 = inlined_call_operand.hbm [shape: f32[1,128], index: 6, kind: input, shape index: {}]
  %s7 = inlined_call_operand.vmem [shape: f32[8,128], index: 7, kind: output, shape index: {}]
  %s8 = sld [smem:[#allocation0]]
  $region62: #{simple_nn_forward.1} parent=0
    _
  %s10 = ssub.s32 1, %s8
  %s11 = scalar_select 0, %s10, %s8
  $region1: #{simple_nn_forward.1} parent=0
    #allocation2 [shape = 'u8[3211264]{0}', space=vmem, size = 0x310000, scoped, tag = 'input window, operand 1, single buffered']
    #allocation3 [shape = 's32[1]{0}', space=sflag, size = 0x4, scoped, tag = 'scoped memory for simple_nn_forward.1']
    #allocation4 [shape = 'u8[4096]{0}', space=vmem, size = 0x1000, scoped, tag = 'input window, operand 2, single buffered']
    #allocation5 [shape = 's32[1]{0}', space=sflag, size = 0x4, scoped, tag = 'scoped memory for simple_nn_forward.1']
    #allocation6 [shape = 'u8[8192000]{0}', space=vmem, size = 0x7d0000, scoped, tag = 'input window, operand 3, single buffered']
    #allocation7 [shape = 'u8[8192]{0}', space=vmem, size = 0x2000, scoped, tag = 'input window, operand 4, single buffered']
    #allocation8 [shape = 's32[1]{0}', space=sflag, size = 0x4, scoped, tag = 'scoped memory for simple_nn_forward.1']
    #allocation9 [shape = 'u8[1024000]{0}', space=vmem, size = 0xfa000, scoped, tag = 'input window, operand 5, single buffered']
    #allocation10 [shape = 'u8[512]{0}', space=vmem, size = 0x400, scoped, tag = 'input window, operand 6, single buffered']
    #allocation11 [shape = 's32[1]{0}', space=sflag, size = 0x4, scoped, tag = 'scoped memory for simple_nn_forward.1']
    %12 = vsyncpa [#allocation3], 0
    %13 = vsyncpa [#allocation5], 0
    %14 = vsyncpa [#allocation8], 0
    %15 = vsyncpa [#allocation11], 0
    // Predicated region
    $region2: #{simple_nn_forward.1} parent=1 // pred_check
      _
    $region3: #{simple_nn_forward.1} parent=1 // pred_check_branch
      %17 = sbr.rel (0) target = $region5
    $region4: #{simple_nn_forward.1} parent=1 // pred_region
      _
    $region5: #{simple_nn_forward.1} parent=1 // pred_fallthru
      _
    // Predicated region
    $region6: #{simple_nn_forward.1} parent=1 // pred_check
      _
    $region7: #{simple_nn_forward.1} parent=1 // pred_check_branch
      %19 = sbr.rel (0) target = $region9
    $region8: #{simple_nn_forward.1} parent=1 // pred_region
      %s21 = ssub.s32 100352, 100352
      %22 = vsyncadd [#allocation3], %s21
      %s23 = sshll.u32 [#allocation2], 4
      %s24 = int_to_ptr.vmem [resolvable:$true] %s23
      %29 = dma.hbm_to_vmem [thread:$0]  %s1, 100352, %s24, [#allocation3], 1024, 1024, 64
    $region9: #{simple_nn_forward.1} parent=1 // pred_fallthru
      _
    // Predicated region
    $region10: #{simple_nn_forward.1} parent=1 // pred_check
      _
    $region11: #{simple_nn_forward.1} parent=1 // pred_check_branch
      %31 = sbr.rel (0) target = $region13
    $region12: #{simple_nn_forward.1} parent=1 // pred_region
      %s33 = ssub.s32 128, 128
      %34 = vsyncadd [#allocation5], %s33
      %s36 = sshll.u32 [#allocation4], 4
      %s37 = int_to_ptr.vmem [resolvable:$true] %s36
      %39 = dma.hbm_to_vmem [thread:$0]  %s2, 128, %s37, [#allocation5]
    $region13: #{simple_nn_forward.1} parent=1 // pred_fallthru
      _
    // Predicated region
    $region14: #{simple_nn_forward.1} parent=1 // pred_check
      _
    $region15: #{simple_nn_forward.1} parent=1 // pred_check_branch
      %41 = sbr.rel (0) target = $region17
    $region16: #{simple_nn_forward.1} parent=1 // pred_region
      %s43 = ssub.s32 256000, 256000
      %44 = vsyncadd [#allocation5], %s43
      %s45 = sshll.u32 [#allocation6], 4
      %s46 = int_to_ptr.vmem [resolvable:$true] %s45
      %51 = dma.hbm_to_vmem [thread:$0]  %s3, 256000, %s46, [#allocation5], 2048, 2048, 128
    $region17: #{simple_nn_forward.1} parent=1 // pred_fallthru
      _
    // Predicated region
    $region18: #{simple_nn_forward.1} parent=1 // pred_check
      _
    $region19: #{simple_nn_forward.1} parent=1 // pred_check_branch
      %53 = sbr.rel (0) target = $region21
    $region20: #{simple_nn_forward.1} parent=1 // pred_region
      %s55 = ssub.s32 256, 256
      %56 = vsyncadd [#allocation8], %s55
      %s58 = sshll.u32 [#allocation7], 4
      %s59 = int_to_ptr.vmem [resolvable:$true] %s58
      %61 = dma.hbm_to_vmem [thread:$0]  %s4, 256, %s59, [#allocation8]
    $region21: #{simple_nn_forward.1} parent=1 // pred_fallthru
      _
    // Predicated region
    $region22: #{simple_nn_forward.1} parent=1 // pred_check
      _
    $region23: #{simple_nn_forward.1} parent=1 // pred_check_branch
      %63 = sbr.rel (0) target = $region25
    $region24: #{simple_nn_forward.1} parent=1 // pred_region
      %s65 = ssub.s32 32000, 32000
      %66 = vsyncadd [#allocation8], %s65
      %s67 = sshll.u32 [#allocation9], 4
      %s68 = int_to_ptr.vmem [resolvable:$true] %s67
      %73 = dma.hbm_to_vmem [thread:$0]  %s5, 32000, %s68, [#allocation8], 128, 128, 8
    $region25: #{simple_nn_forward.1} parent=1 // pred_fallthru
      _
    // Predicated region
    $region26: #{simple_nn_forward.1} parent=1 // pred_check
      _
    $region27: #{simple_nn_forward.1} parent=1 // pred_check_branch
      %75 = sbr.rel (0) target = $region29
    $region28: #{simple_nn_forward.1} parent=1 // pred_region
      %s77 = ssub.s32 16, 16
      %78 = vsyncadd [#allocation11], %s77
      %s80 = sshll.u32 [#allocation10], 4
      %s81 = int_to_ptr.vmem [resolvable:$true] %s80
      %83 = dma.hbm_to_vmem [thread:$0]  %s6, 16, %s81, [#allocation11]
    $region29: #{simple_nn_forward.1} parent=1 // pred_fallthru
      _
    // Predicated region
    $region30: #{simple_nn_forward.1} parent=1 // pred_check
      _
    $region31: #{simple_nn_forward.1} parent=1 // pred_check_branch
      %85 = sbr.rel (0) target = $region33
    $region32: #{simple_nn_forward.1} parent=1 // pred_region
      %86 = dma.done [#allocation3], 100352
    $region33: #{simple_nn_forward.1} parent=1 // pred_fallthru
      _
    // Predicated region
    $region34: #{simple_nn_forward.1} parent=1 // pred_check
      _
    $region35: #{simple_nn_forward.1} parent=1 // pred_check_branch
      %88 = sbr.rel (0) target = $region37
    $region36: #{simple_nn_forward.1} parent=1 // pred_region
      %89 = dma.done [#allocation5], 128
    $region37: #{simple_nn_forward.1} parent=1 // pred_fallthru
      _
    // Predicated region
    $region38: #{simple_nn_forward.1} parent=1 // pred_check
      _
    $region39: #{simple_nn_forward.1} parent=1 // pred_check_branch
      %91 = sbr.rel (0) target = $region41
    $region40: #{simple_nn_forward.1} parent=1 // pred_region
      %92 = dma.done [#allocation5], 256000
    $region41: #{simple_nn_forward.1} parent=1 // pred_fallthru
      _
    // Predicated region
    $region42: #{simple_nn_forward.1} parent=1 // pred_check
      _
    $region43: #{simple_nn_forward.1} parent=1 // pred_check_branch
      %94 = sbr.rel (0) target = $region45
    $region44: #{simple_nn_forward.1} parent=1 // pred_region
      %95 = dma.done [#allocation8], 256
    $region45: #{simple_nn_forward.1} parent=1 // pred_fallthru
      _
    // Predicated region
    $region46: #{simple_nn_forward.1} parent=1 // pred_check
      _
    $region47: #{simple_nn_forward.1} parent=1 // pred_check_branch
      %97 = sbr.rel (0) target = $region49
    $region48: #{simple_nn_forward.1} parent=1 // pred_region
      %98 = dma.done [#allocation8], 32000
    $region49: #{simple_nn_forward.1} parent=1 // pred_fallthru
      _
    // Predicated region
    $region50: #{simple_nn_forward.1} parent=1 // pred_check
      _
    $region51: #{simple_nn_forward.1} parent=1 // pred_check_branch
      %100 = sbr.rel (0) target = $region53
    $region52: #{simple_nn_forward.1} parent=1 // pred_region
      %101 = dma.done [#allocation11], 16
    $region53: #{simple_nn_forward.1} parent=1 // pred_fallthru
      _
    %v102 = vld [vmem:[%s0] sm:$0xff]
    %v103 = vld [vmem:[%s0 + $0x8] sm:$0xff]
    %v104 = vld [vmem:[%s0 + $0x10] sm:$0xff]
    %v105 = vld [vmem:[%s0 + $0x18] sm:$0xff]
    %v106 = vld [vmem:[%s0 + $0x20] sm:$0xff]
    %v107 = vld [vmem:[%s0 + $0x28] sm:$0xff]
    %v108 = vld [vmem:[%s0 + $0x30] sm:$0xff]
    %v109 = vld [vmem:[#allocation2] sm:$0xff]
    %v110 = vld [vmem:[#allocation2 + $0x8] sm:$0xff]
    %v111 = vld [vmem:[#allocation2 + $0x10] sm:$0xff]
    %v112 = vld [vmem:[#allocation2 + $0x18] sm:$0xff]
    %v113 = vld [vmem:[#allocation2 + $0x20] sm:$0xff]
    %v114 = vld [vmem:[#allocation2 + $0x28] sm:$0xff]
    %v115 = vld [vmem:[#allocation2 + $0x30] sm:$0xff]
    %v116 = vld [vmem:[#allocation2 + $0x38] sm:$0xff]
    %v117 = vld [vmem:[#allocation2 + $0x40] sm:$0xff]
    %v118 = vld [vmem:[#allocation2 + $0x48] sm:$0xff]
    %v119 = vld [vmem:[#allocation2 + $0x50] sm:$0xff]
    %v120 = vld [vmem:[#allocation2 + $0x58] sm:$0xff]
    %v121 = vld [vmem:[#allocation2 + $0x60] sm:$0xff]
    %v122 = vld [vmem:[#allocation2 + $0x68] sm:$0xff]
    %v123 = vld [vmem:[#allocation2 + $0x70] sm:$0xff]
    %v124 = vld [vmem:[#allocation2 + $0x78] sm:$0xff]
    %v125 = vld [vmem:[#allocation2 + $0x80] sm:$0xff]
    %v126 = vld [vmem:[#allocation2 + $0x88] sm:$0xff]
    %v127 = vld [vmem:[#allocation2 + $0x90] sm:$0xff]
    %v128 = vld [vmem:[#allocation2 + $0x98] sm:$0xff]
    %v129 = vld [vmem:[#allocation2 + $0xa0] sm:$0xff]
    %v130 = vld [vmem:[#allocation2 + $0xa8] sm:$0xff]
    %v131 = vld [vmem:[#allocation2 + $0xb0] sm:$0xff]
    %v132 = vld [vmem:[#allocation2 + $0xb8] sm:$0xff]
    %v133 = vld [vmem:[#allocation2 + $0xc0] sm:$0xff]
    %v134 = vld [vmem:[#allocation2 + $0xc8] sm:$0xff]
    %v135 = vld [vmem:[#allocation2 + $0xd0] sm:$0xff]
    %v136 = vld [vmem:[#allocation2 + $0xd8] sm:$0xff]
    %v137 = vld [vmem:[#allocation2 + $0xe0] sm:$0xff]
    %v138 = vld [vmem:[#allocation2 + $0xe8] sm:$0xff]
    %v139 = vld [vmem:[#allocation2 + $0xf0] sm:$0xff]
    %v140 = vld [vmem:[#allocation2 + $0xf8] sm:$0xff]
    %v141 = vld [vmem:[#allocation2 + $0x100] sm:$0xff]
    %v142 = vld [vmem:[#allocation2 + $0x108] sm:$0xff]
    %v143 = vld [vmem:[#allocation2 + $0x110] sm:$0xff]
    %v144 = vld [vmem:[#allocation2 + $0x118] sm:$0xff]
    %v145 = vld [vmem:[#allocation2 + $0x120] sm:$0xff]
    %v146 = vld [vmem:[#allocation2 + $0x128] sm:$0xff]
    %v147 = vld [vmem:[#allocation2 + $0x130] sm:$0xff]
    %v148 = vld [vmem:[#allocation2 + $0x138] sm:$0xff]
    %v149 = vld [vmem:[#allocation2 + $0x140] sm:$0xff]
    %v150 = vld [vmem:[#allocation2 + $0x148] sm:$0xff]
    %v151 = vld [vmem:[#allocation2 + $0x150] sm:$0xff]
    %v152 = vld [vmem:[#allocation2 + $0x158] sm:$0xff]
    %v153 = vld [vmem:[#allocation2 + $0x160] sm:$0xff]
    %v154 = vld [vmem:[#allocation2 + $0x168] sm:$0xff]
    %v155 = vld [vmem:[#allocation2 + $0x170] sm:$0xff]
    %v156 = vld [vmem:[#allocation2 + $0x178] sm:$0xff]
    %v157 = vld [vmem:[#allocation2 + $0x180] sm:$0xff]
    %v158 = vld [vmem:[#allocation2 + $0x188] sm:$0xff]
    %v159 = vld [vmem:[#allocation2 + $0x190] sm:$0xff]
    %v160 = vld [vmem:[#allocation2 + $0x198] sm:$0xff]
    %v161 = vld [vmem:[#allocation2 + $0x1a0] sm:$0xff]
    %v162 = vld [vmem:[#allocation2 + $0x1a8] sm:$0xff]
    %v163 = vld [vmem:[#allocation2 + $0x1b0] sm:$0xff]
    %v164 = vld [vmem:[#allocation2 + $0x1b8] sm:$0xff]
    %v165 = vld [vmem:[#allocation2 + $0x1c0] sm:$0xff]
    %v166 = vld [vmem:[#allocation2 + $0x1c8] sm:$0xff]
    %v167 = vld [vmem:[#allocation2 + $0x1d0] sm:$0xff]
    %v168 = vld [vmem:[#allocation2 + $0x1d8] sm:$0xff]
    %v169 = vld [vmem:[#allocation2 + $0x1e0] sm:$0xff]
    %v170 = vld [vmem:[#allocation2 + $0x1e8] sm:$0xff]
    %v171 = vld [vmem:[#allocation2 + $0x1f0] sm:$0xff]
    %v172 = vld [vmem:[#allocation2 + $0x1f8] sm:$0xff]
    %v173 = vld [vmem:[#allocation2 + $0x200] sm:$0xff]
    %v174 = vld [vmem:[#allocation2 + $0x208] sm:$0xff]
    %v175 = vld [vmem:[#allocation2 + $0x210] sm:$0xff]
    %v176 = vld [vmem:[#allocation2 + $0x218] sm:$0xff]
    %v177 = vld [vmem:[#allocation2 + $0x220] sm:$0xff]
    %v178 = vld [vmem:[#allocation2 + $0x228] sm:$0xff]
    %v179 = vld [vmem:[#allocation2 + $0x230] sm:$0xff]
    %v180 = vld [vmem:[#allocation2 + $0x238] sm:$0xff]
    %v181 = vld [vmem:[#allocation2 + $0x240] sm:$0xff]
    %v182 = vld [vmem:[#allocation2 + $0x248] sm:$0xff]
    %v183 = vld [vmem:[#allocation2 + $0x250] sm:$0xff]
    %v184 = vld [vmem:[#allocation2 + $0x258] sm:$0xff]
    %v185 = vld [vmem:[#allocation2 + $0x260] sm:$0xff]
    %v186 = vld [vmem:[#allocation2 + $0x268] sm:$0xff]
    %v187 = vld [vmem:[#allocation2 + $0x270] sm:$0xff]
    %v188 = vld [vmem:[#allocation2 + $0x278] sm:$0xff]
    %v189 = vld [vmem:[#allocation2 + $0x280] sm:$0xff]
    %v190 = vld [vmem:[#allocation2 + $0x288] sm:$0xff]
    %v191 = vld [vmem:[#allocation2 + $0x290] sm:$0xff]
    %v192 = vld [vmem:[#allocation2 + $0x298] sm:$0xff]
    %v193 = vld [vmem:[#allocation2 + $0x2a0] sm:$0xff]
    %v194 = vld [vmem:[#allocation2 + $0x2a8] sm:$0xff]
    %v195 = vld [vmem:[#allocation2 + $0x2b0] sm:$0xff]
    %v196 = vld [vmem:[#allocation2 + $0x2b8] sm:$0xff]
    %v197 = vld [vmem:[#allocation2 + $0x2c0] sm:$0xff]
    %v198 = vld [vmem:[#allocation2 + $0x2c8] sm:$0xff]
    %v199 = vld [vmem:[#allocation2 + $0x2d0] sm:$0xff]
    %v200 = vld [vmem:[#allocation2 + $0x2d8] sm:$0xff]
    %v201 = vld [vmem:[#allocation2 + $0x2e0] sm:$0xff]
    %v202 = vld [vmem:[#allocation2 + $0x2e8] sm:$0xff]
    %v203 = vld [vmem:[#allocation2 + $0x2f0] sm:$0xff]
    %v204 = vld [vmem:[#allocation2 + $0x2f8] sm:$0xff]
    %v205 = vld [vmem:[#allocation2 + $0x300] sm:$0xff]
    %v206 = vld [vmem:[#allocation2 + $0x308] sm:$0xff]
    %v207 = vld [vmem:[#allocation2 + $0x310] sm:$0xff]
    %v208 = vld [vmem:[#allocation2 + $0x318] sm:$0xff]
    %v209 = vld [vmem:[#allocation2 + $0x320] sm:$0xff]
    %v210 = vld [vmem:[#allocation2 + $0x328] sm:$0xff]
    %v211 = vld [vmem:[#allocation2 + $0x330] sm:$0xff]
    %v212 = vld [vmem:[#allocation2 + $0x338] sm:$0xff]
    %v213 = vld [vmem:[#allocation2 + $0x340] sm:$0xff]
    %v214 = vld [vmem:[#allocation2 + $0x348] sm:$0xff]
    %v215 = vld [vmem:[#allocation2 + $0x350] sm:$0xff]
    %v216 = vld [vmem:[#allocation2 + $0x358] sm:$0xff]
    %v217 = vld [vmem:[#allocation2 + $0x360] sm:$0xff]
    %v218 = vld [vmem:[#allocation2 + $0x368] sm:$0xff]
    %v219 = vld [vmem:[#allocation2 + $0x370] sm:$0xff]
    %v220 = vld [vmem:[#allocation2 + $0x378] sm:$0xff]
    %v221 = vld [vmem:[#allocation2 + $0x380] sm:$0xff]
    %v222 = vld [vmem:[#allocation2 + $0x388] sm:$0xff]
    %v223 = vld [vmem:[#allocation2 + $0x390] sm:$0xff]
    %v224 = vld [vmem:[#allocation2 + $0x398] sm:$0xff]
    %v225 = vld [vmem:[#allocation2 + $0x3a0] sm:$0xff]
    %v226 = vld [vmem:[#allocation2 + $0x3a8] sm:$0xff]
    %v227 = vld [vmem:[#allocation2 + $0x3b0] sm:$0xff]
    %v228 = vld [vmem:[#allocation2 + $0x3b8] sm:$0xff]
    %v229 = vld [vmem:[#allocation2 + $0x3c0] sm:$0xff]
    %v230 = vld [vmem:[#allocation2 + $0x3c8] sm:$0xff]
    %v231 = vld [vmem:[#allocation2 + $0x3d0] sm:$0xff]
    %v232 = vld [vmem:[#allocation2 + $0x3d8] sm:$0xff]
    %v233 = vld [vmem:[#allocation2 + $0x3e0] sm:$0xff]
    %v234 = vld [vmem:[#allocation2 + $0x3e8] sm:$0xff]
    %v235 = vld [vmem:[#allocation2 + $0x3f0] sm:$0xff]
    %v236 = vld [vmem:[#allocation2 + $0x3f8] sm:$0xff]
    %v237 = vld [vmem:[#allocation2 + $0x400] sm:$0xff]
    %v238 = vld [vmem:[#allocation2 + $0x408] sm:$0xff]
    %v239 = vld [vmem:[#allocation2 + $0x410] sm:$0xff]
    %v240 = vld [vmem:[#allocation2 + $0x418] sm:$0xff]
    %v241 = vld [vmem:[#allocation2 + $0x420] sm:$0xff]
    %v242 = vld [vmem:[#allocation2 + $0x428] sm:$0xff]
    %v243 = vld [vmem:[#allocation2 + $0x430] sm:$0xff]
    %v244 = vld [vmem:[#allocation2 + $0x438] sm:$0xff]
    %v245 = vld [vmem:[#allocation2 + $0x440] sm:$0xff]
    %v246 = vld [vmem:[#allocation2 + $0x448] sm:$0xff]
    %v247 = vld [vmem:[#allocation2 + $0x450] sm:$0xff]
    %v248 = vld [vmem:[#allocation2 + $0x458] sm:$0xff]
    %v249 = vld [vmem:[#allocation2 + $0x460] sm:$0xff]
    %v250 = vld [vmem:[#allocation2 + $0x468] sm:$0xff]
    %v251 = vld [vmem:[#allocation2 + $0x470] sm:$0xff]
    %v252 = vld [vmem:[#allocation2 + $0x478] sm:$0xff]
    %v253 = vld [vmem:[#allocation2 + $0x480] sm:$0xff]
    %v254 = vld [vmem:[#allocation2 + $0x488] sm:$0xff]
    %v255 = vld [vmem:[#allocation2 + $0x490] sm:$0xff]
    %v256 = vld [vmem:[#allocation2 + $0x498] sm:$0xff]
    %v257 = vld [vmem:[#allocation2 + $0x4a0] sm:$0xff]
    %v258 = vld [vmem:[#allocation2 + $0x4a8] sm:$0xff]
    %v259 = vld [vmem:[#allocation2 + $0x4b0] sm:$0xff]
    %v260 = vld [vmem:[#allocation2 + $0x4b8] sm:$0xff]
    %v261 = vld [vmem:[#allocation2 + $0x4c0] sm:$0xff]
    %v262 = vld [vmem:[#allocation2 + $0x4c8] sm:$0xff]
    %v263 = vld [vmem:[#allocation2 + $0x4d0] sm:$0xff]
    %v264 = vld [vmem:[#allocation2 + $0x4d8] sm:$0xff]
    %v265 = vld [vmem:[#allocation2 + $0x4e0] sm:$0xff]
    %v266 = vld [vmem:[#allocation2 + $0x4e8] sm:$0xff]
    %v267 = vld [vmem:[#allocation2 + $0x4f0] sm:$0xff]
    %v268 = vld [vmem:[#allocation2 + $0x4f8] sm:$0xff]
    %v269 = vld [vmem:[#allocation2 + $0x500] sm:$0xff]
    %v270 = vld [vmem:[#allocation2 + $0x508] sm:$0xff]
    %v271 = vld [vmem:[#allocation2 + $0x510] sm:$0xff]
    %v272 = vld [vmem:[#allocation2 + $0x518] sm:$0xff]
    %v273 = vld [vmem:[#allocation2 + $0x520] sm:$0xff]
    %v274 = vld [vmem:[#allocation2 + $0x528] sm:$0xff]
    %v275 = vld [vmem:[#allocation2 + $0x530] sm:$0xff]
    %v276 = vld [vmem:[#allocation2 + $0x538] sm:$0xff]
    %v277 = vld [vmem:[#allocation2 + $0x540] sm:$0xff]
    %v278 = vld [vmem:[#allocation2 + $0x548] sm:$0xff]
    %v279 = vld [vmem:[#allocation2 + $0x550] sm:$0xff]
    %v280 = vld [vmem:[#allocation2 + $0x558] sm:$0xff]
    %v281 = vld [vmem:[#allocation2 + $0x560] sm:$0xff]
    %v282 = vld [vmem:[#allocation2 + $0x568] sm:$0xff]
    %v283 = vld [vmem:[#allocation2 + $0x570] sm:$0xff]
    %v284 = vld [vmem:[#allocation2 + $0x578] sm:$0xff]
    %v285 = vld [vmem:[#allocation2 + $0x580] sm:$0xff]
    %v286 = vld [vmem:[#allocation2 + $0x588] sm:$0xff]
    %v287 = vld [vmem:[#allocation2 + $0x590] sm:$0xff]
    %v288 = vld [vmem:[#allocation2 + $0x598] sm:$0xff]
    %v289 = vld [vmem:[#allocation2 + $0x5a0] sm:$0xff]
    %v290 = vld [vmem:[#allocation2 + $0x5a8] sm:$0xff]
    %v291 = vld [vmem:[#allocation2 + $0x5b0] sm:$0xff]
    %v292 = vld [vmem:[#allocation2 + $0x5b8] sm:$0xff]
    %v293 = vld [vmem:[#allocation2 + $0x5c0] sm:$0xff]
    %v294 = vld [vmem:[#allocation2 + $0x5c8] sm:$0xff]
    %v295 = vld [vmem:[#allocation2 + $0x5d0] sm:$0xff]
    %v296 = vld [vmem:[#allocation2 + $0x5d8] sm:$0xff]
    %v297 = vld [vmem:[#allocation2 + $0x5e0] sm:$0xff]
    %v298 = vld [vmem:[#allocation2 + $0x5e8] sm:$0xff]
    %v299 = vld [vmem:[#allocation2 + $0x5f0] sm:$0xff]
    %v300 = vld [vmem:[#allocation2 + $0x5f8] sm:$0xff]
    %v301 = vld [vmem:[#allocation2 + $0x600] sm:$0xff]
    %v302 = vld [vmem:[#allocation2 + $0x608] sm:$0xff]
    %v303 = vld [vmem:[#allocation2 + $0x610] sm:$0xff]
    %v304 = vld [vmem:[#allocation2 + $0x618] sm:$0xff]
    %v305 = vld [vmem:[#allocation2 + $0x620] sm:$0xff]
    %v306 = vld [vmem:[#allocation2 + $0x628] sm:$0xff]
    %v307 = vld [vmem:[#allocation2 + $0x630] sm:$0xff]
    %v308 = vld [vmem:[#allocation2 + $0x638] sm:$0xff]
    %v309 = vld [vmem:[#allocation2 + $0x640] sm:$0xff]
    %v310 = vld [vmem:[#allocation2 + $0x648] sm:$0xff]
    %v311 = vld [vmem:[#allocation2 + $0x650] sm:$0xff]
    %v312 = vld [vmem:[#allocation2 + $0x658] sm:$0xff]
    %v313 = vld [vmem:[#allocation2 + $0x660] sm:$0xff]
    %v314 = vld [vmem:[#allocation2 + $0x668] sm:$0xff]
    %v315 = vld [vmem:[#allocation2 + $0x670] sm:$0xff]
    %v316 = vld [vmem:[#allocation2 + $0x678] sm:$0xff]
    %v317 = vld [vmem:[#allocation2 + $0x680] sm:$0xff]
    %v318 = vld [vmem:[#allocation2 + $0x688] sm:$0xff]
    %v319 = vld [vmem:[#allocation2 + $0x690] sm:$0xff]
    %v320 = vld [vmem:[#allocation2 + $0x698] sm:$0xff]
    %v321 = vld [vmem:[#allocation2 + $0x6a0] sm:$0xff]
    %v322 = vld [vmem:[#allocation2 + $0x6a8] sm:$0xff]
    %v323 = vld [vmem:[#allocation2 + $0x6b0] sm:$0xff]
    %v324 = vld [vmem:[#allocation2 + $0x6b8] sm:$0xff]
    %v325 = vld [vmem:[#allocation2 + $0x6c0] sm:$0xff]
    %v326 = vld [vmem:[#allocation2 + $0x6c8] sm:$0xff]
    %v327 = vld [vmem:[#allocation2 + $0x6d0] sm:$0xff]
    %v328 = vld [vmem:[#allocation2 + $0x6d8] sm:$0xff]
    %v329 = vld [vmem:[#allocation2 + $0x6e0] sm:$0xff]
    %v330 = vld [vmem:[#allocation2 + $0x6e8] sm:$0xff]
    %v331 = vld [vmem:[#allocation2 + $0x6f0] sm:$0xff]
    %v332 = vld [vmem:[#allocation2 + $0x6f8] sm:$0xff]
    %v333 = vld [vmem:[#allocation2 + $0x700] sm:$0xff]
    %v334 = vld [vmem:[#allocation2 + $0x708] sm:$0xff]
    %v335 = vld [vmem:[#allocation2 + $0x710] sm:$0xff]
    %v336 = vld [vmem:[#allocation2 + $0x718] sm:$0xff]
    %v337 = vld [vmem:[#allocation2 + $0x720] sm:$0xff]
    %v338 = vld [vmem:[#allocation2 + $0x728] sm:$0xff]
    %v339 = vld [vmem:[#allocation2 + $0x730] sm:$0xff]
    %v340 = vld [vmem:[#allocation2 + $0x738] sm:$0xff]
    %v341 = vld [vmem:[#allocation2 + $0x740] sm:$0xff]
    %v342 = vld [vmem:[#allocation2 + $0x748] sm:$0xff]
    %v343 = vld [vmem:[#allocation2 + $0x750] sm:$0xff]
    %v344 = vld [vmem:[#allocation2 + $0x758] sm:$0xff]
    %v345 = vld [vmem:[#allocation2 + $0x760] sm:$0xff]
    %v346 = vld [vmem:[#allocation2 + $0x768] sm:$0xff]
    %v347 = vld [vmem:[#allocation2 + $0x770] sm:$0xff]
    %v348 = vld [vmem:[#allocation2 + $0x778] sm:$0xff]
    %v349 = vld [vmem:[#allocation2 + $0x780] sm:$0xff]
    %v350 = vld [vmem:[#allocation2 + $0x788] sm:$0xff]
    %v351 = vld [vmem:[#allocation2 + $0x790] sm:$0xff]
    %v352 = vld [vmem:[#allocation2 + $0x798] sm:$0xff]
    %v353 = vld [vmem:[#allocation2 + $0x7a0] sm:$0xff]
    %v354 = vld [vmem:[#allocation2 + $0x7a8] sm:$0xff]
    %v355 = vld [vmem:[#allocation2 + $0x7b0] sm:$0xff]
    %v356 = vld [vmem:[#allocation2 + $0x7b8] sm:$0xff]
    %v357 = vld [vmem:[#allocation2 + $0x7c0] sm:$0xff]
    %v358 = vld [vmem:[#allocation2 + $0x7c8] sm:$0xff]
    %v359 = vld [vmem:[#allocation2 + $0x7d0] sm:$0xff]
    %v360 = vld [vmem:[#allocation2 + $0x7d8] sm:$0xff]
    %v361 = vld [vmem:[#allocation2 + $0x7e0] sm:$0xff]
    %v362 = vld [vmem:[#allocation2 + $0x7e8] sm:$0xff]
    %v363 = vld [vmem:[#allocation2 + $0x7f0] sm:$0xff]
    %v364 = vld [vmem:[#allocation2 + $0x7f8] sm:$0xff]
    %v365 = vld [vmem:[#allocation2 + $0x800] sm:$0xff]
    %v366 = vld [vmem:[#allocation2 + $0x808] sm:$0xff]
    %v367 = vld [vmem:[#allocation2 + $0x810] sm:$0xff]
    %v368 = vld [vmem:[#allocation2 + $0x818] sm:$0xff]
    %v369 = vld [vmem:[#allocation2 + $0x820] sm:$0xff]
    %v370 = vld [vmem:[#allocation2 + $0x828] sm:$0xff]
    %v371 = vld [vmem:[#allocation2 + $0x830] sm:$0xff]
    %v372 = vld [vmem:[#allocation2 + $0x838] sm:$0xff]
    %v373 = vld [vmem:[#allocation2 + $0x840] sm:$0xff]
    %v374 = vld [vmem:[#allocation2 + $0x848] sm:$0xff]
    %v375 = vld [vmem:[#allocation2 + $0x850] sm:$0xff]
    %v376 = vld [vmem:[#allocation2 + $0x858] sm:$0xff]
    %v377 = vld [vmem:[#allocation2 + $0x860] sm:$0xff]
    %v378 = vld [vmem:[#allocation2 + $0x868] sm:$0xff]
    %v379 = vld [vmem:[#allocation2 + $0x870] sm:$0xff]
    %v380 = vld [vmem:[#allocation2 + $0x878] sm:$0xff]
    %v381 = vld [vmem:[#allocation2 + $0x880] sm:$0xff]
    %v382 = vld [vmem:[#allocation2 + $0x888] sm:$0xff]
    %v383 = vld [vmem:[#allocation2 + $0x890] sm:$0xff]
    %v384 = vld [vmem:[#allocation2 + $0x898] sm:$0xff]
    %v385 = vld [vmem:[#allocation2 + $0x8a0] sm:$0xff]
    %v386 = vld [vmem:[#allocation2 + $0x8a8] sm:$0xff]
    %v387 = vld [vmem:[#allocation2 + $0x8b0] sm:$0xff]
    %v388 = vld [vmem:[#allocation2 + $0x8b8] sm:$0xff]
    %v389 = vld [vmem:[#allocation2 + $0x8c0] sm:$0xff]
    %v390 = vld [vmem:[#allocation2 + $0x8c8] sm:$0xff]
    %v391 = vld [vmem:[#allocation2 + $0x8d0] sm:$0xff]
    %v392 = vld [vmem:[#allocation2 + $0x8d8] sm:$0xff]
    %v393 = vld [vmem:[#allocation2 + $0x8e0] sm:$0xff]
    %v394 = vld [vmem:[#allocation2 + $0x8e8] sm:$0xff]
    %v395 = vld [vmem:[#allocation2 + $0x8f0] sm:$0xff]
    %v396 = vld [vmem:[#allocation2 + $0x8f8] sm:$0xff]
    %v397 = vld [vmem:[#allocation2 + $0x900] sm:$0xff]
    %v398 = vld [vmem:[#allocation2 + $0x908] sm:$0xff]
    %v399 = vld [vmem:[#allocation2 + $0x910] sm:$0xff]
    %v400 = vld [vmem:[#allocation2 + $0x918] sm:$0xff]
    %v401 = vld [vmem:[#allocation2 + $0x920] sm:$0xff]
    %v402 = vld [vmem:[#allocation2 + $0x928] sm:$0xff]
    %v403 = vld [vmem:[#allocation2 + $0x930] sm:$0xff]
    %v404 = vld [vmem:[#allocation2 + $0x938] sm:$0xff]
    %v405 = vld [vmem:[#allocation2 + $0x940] sm:$0xff]
    %v406 = vld [vmem:[#allocation2 + $0x948] sm:$0xff]
    %v407 = vld [vmem:[#allocation2 + $0x950] sm:$0xff]
    %v408 = vld [vmem:[#allocation2 + $0x958] sm:$0xff]
    %v409 = vld [vmem:[#allocation2 + $0x960] sm:$0xff]
    %v410 = vld [vmem:[#allocation2 + $0x968] sm:$0xff]
    %v411 = vld [vmem:[#allocation2 + $0x970] sm:$0xff]
    %v412 = vld [vmem:[#allocation2 + $0x978] sm:$0xff]
    %v413 = vld [vmem:[#allocation2 + $0x980] sm:$0xff]
    %v414 = vld [vmem:[#allocation2 + $0x988] sm:$0xff]
    %v415 = vld [vmem:[#allocation2 + $0x990] sm:$0xff]
    %v416 = vld [vmem:[#allocation2 + $0x998] sm:$0xff]
    %v417 = vld [vmem:[#allocation2 + $0x9a0] sm:$0xff]
    %v418 = vld [vmem:[#allocation2 + $0x9a8] sm:$0xff]
    %v419 = vld [vmem:[#allocation2 + $0x9b0] sm:$0xff]
    %v420 = vld [vmem:[#allocation2 + $0x9b8] sm:$0xff]
    %v421 = vld [vmem:[#allocation2 + $0x9c0] sm:$0xff]
    %v422 = vld [vmem:[#allocation2 + $0x9c8] sm:$0xff]
    %v423 = vld [vmem:[#allocation2 + $0x9d0] sm:$0xff]
    %v424 = vld [vmem:[#allocation2 + $0x9d8] sm:$0xff]
    %v425 = vld [vmem:[#allocation2 + $0x9e0] sm:$0xff]
    %v426 = vld [vmem:[#allocation2 + $0x9e8] sm:$0xff]
    %v427 = vld [vmem:[#allocation2 + $0x9f0] sm:$0xff]
    %v428 = vld [vmem:[#allocation2 + $0x9f8] sm:$0xff]
    %v429 = vld [vmem:[#allocation2 + $0xa00] sm:$0xff]
    %v430 = vld [vmem:[#allocation2 + $0xa08] sm:$0xff]
    %v431 = vld [vmem:[#allocation2 + $0xa10] sm:$0xff]
    %v432 = vld [vmem:[#allocation2 + $0xa18] sm:$0xff]
    %v433 = vld [vmem:[#allocation2 + $0xa20] sm:$0xff]
    %v434 = vld [vmem:[#allocation2 + $0xa28] sm:$0xff]
    %v435 = vld [vmem:[#allocation2 + $0xa30] sm:$0xff]
    %v436 = vld [vmem:[#allocation2 + $0xa38] sm:$0xff]
    %v437 = vld [vmem:[#allocation2 + $0xa40] sm:$0xff]
    %v438 = vld [vmem:[#allocation2 + $0xa48] sm:$0xff]
    %v439 = vld [vmem:[#allocation2 + $0xa50] sm:$0xff]
    %v440 = vld [vmem:[#allocation2 + $0xa58] sm:$0xff]
    %v441 = vld [vmem:[#allocation2 + $0xa60] sm:$0xff]
    %v442 = vld [vmem:[#allocation2 + $0xa68] sm:$0xff]
    %v443 = vld [vmem:[#allocation2 + $0xa70] sm:$0xff]
    %v444 = vld [vmem:[#allocation2 + $0xa78] sm:$0xff]
    %v445 = vld [vmem:[#allocation2 + $0xa80] sm:$0xff]
    %v446 = vld [vmem:[#allocation2 + $0xa88] sm:$0xff]
    %v447 = vld [vmem:[#allocation2 + $0xa90] sm:$0xff]
    %v448 = vld [vmem:[#allocation2 + $0xa98] sm:$0xff]
    %v449 = vld [vmem:[#allocation2 + $0xaa0] sm:$0xff]
    %v450 = vld [vmem:[#allocation2 + $0xaa8] sm:$0xff]
    %v451 = vld [vmem:[#allocation2 + $0xab0] sm:$0xff]
    %v452 = vld [vmem:[#allocation2 + $0xab8] sm:$0xff]
    %v453 = vld [vmem:[#allocation2 + $0xac0] sm:$0xff]
    %v454 = vld [vmem:[#allocation2 + $0xac8] sm:$0xff]
    %v455 = vld [vmem:[#allocation2 + $0xad0] sm:$0xff]
    %v456 = vld [vmem:[#allocation2 + $0xad8] sm:$0xff]
    %v457 = vld [vmem:[#allocation2 + $0xae0] sm:$0xff]
    %v458 = vld [vmem:[#allocation2 + $0xae8] sm:$0xff]
    %v459 = vld [vmem:[#allocation2 + $0xaf0] sm:$0xff]
    %v460 = vld [vmem:[#allocation2 + $0xaf8] sm:$0xff]
    %v461 = vld [vmem:[#allocation2 + $0xb00] sm:$0xff]
    %v462 = vld [vmem:[#allocation2 + $0xb08] sm:$0xff]
    %v463 = vld [vmem:[#allocation2 + $0xb10] sm:$0xff]
    %v464 = vld [vmem:[#allocation2 + $0xb18] sm:$0xff]
    %v465 = vld [vmem:[#allocation2 + $0xb20] sm:$0xff]
    %v466 = vld [vmem:[#allocation2 + $0xb28] sm:$0xff]
    %v467 = vld [vmem:[#allocation2 + $0xb30] sm:$0xff]
    %v468 = vld [vmem:[#allocation2 + $0xb38] sm:$0xff]
    %v469 = vld [vmem:[#allocation2 + $0xb40] sm:$0xff]
    %v470 = vld [vmem:[#allocation2 + $0xb48] sm:$0xff]
    %v471 = vld [vmem:[#allocation2 + $0xb50] sm:$0xff]
    %v472 = vld [vmem:[#allocation2 + $0xb58] sm:$0xff]
    %v473 = vld [vmem:[#allocation2 + $0xb60] sm:$0xff]
    %v474 = vld [vmem:[#allocation2 + $0xb68] sm:$0xff]
    %v475 = vld [vmem:[#allocation2 + $0xb70] sm:$0xff]
    %v476 = vld [vmem:[#allocation2 + $0xb78] sm:$0xff]
    %v477 = vld [vmem:[#allocation2 + $0xb80] sm:$0xff]
    %v478 = vld [vmem:[#allocation2 + $0xb88] sm:$0xff]
    %v479 = vld [vmem:[#allocation2 + $0xb90] sm:$0xff]
    %v480 = vld [vmem:[#allocation2 + $0xb98] sm:$0xff]
    %v481 = vld [vmem:[#allocation2 + $0xba0] sm:$0xff]
    %v482 = vld [vmem:[#allocation2 + $0xba8] sm:$0xff]
    %v483 = vld [vmem:[#allocation2 + $0xbb0] sm:$0xff]
    %v484 = vld [vmem:[#allocation2 + $0xbb8] sm:$0xff]
    %v485 = vld [vmem:[#allocation2 + $0xbc0] sm:$0xff]
    %v486 = vld [vmem:[#allocation2 + $0xbc8] sm:$0xff]
    %v487 = vld [vmem:[#allocation2 + $0xbd0] sm:$0xff]
    %v488 = vld [vmem:[#allocation2 + $0xbd8] sm:$0xff]
    %v489 = vld [vmem:[#allocation2 + $0xbe0] sm:$0xff]
    %v490 = vld [vmem:[#allocation2 + $0xbe8] sm:$0xff]
    %v491 = vld [vmem:[#allocation2 + $0xbf0] sm:$0xff]
    %v492 = vld [vmem:[#allocation2 + $0xbf8] sm:$0xff]
    %v493 = vld [vmem:[#allocation2 + $0xc00] sm:$0xff]
    %v494 = vld [vmem:[#allocation2 + $0xc08] sm:$0xff]
    %v495 = vld [vmem:[#allocation2 + $0xc10] sm:$0xff]
    %v496 = vld [vmem:[#allocation2 + $0xc18] sm:$0xff]
    %v497 = vld [vmem:[#allocation2 + $0xc20] sm:$0xff]
    %v498 = vld [vmem:[#allocation2 + $0xc28] sm:$0xff]
    %v499 = vld [vmem:[#allocation2 + $0xc30] sm:$0xff]
    %v500 = vld [vmem:[#allocation2 + $0xc38] sm:$0xff]
    %v501 = vld [vmem:[#allocation2 + $0xc40] sm:$0xff]
    %v502 = vld [vmem:[#allocation2 + $0xc48] sm:$0xff]
    %v503 = vld [vmem:[#allocation2 + $0xc50] sm:$0xff]
    %v504 = vld [vmem:[#allocation2 + $0xc58] sm:$0xff]
    %v505 = vld [vmem:[#allocation2 + $0xc60] sm:$0xff]
    %v506 = vld [vmem:[#allocation2 + $0xc68] sm:$0xff]
    %v507 = vld [vmem:[#allocation2 + $0xc70] sm:$0xff]
    %v508 = vld [vmem:[#allocation2 + $0xc78] sm:$0xff]
    %v509 = vld [vmem:[#allocation2 + $0xc80] sm:$0xff]
    %v510 = vld [vmem:[#allocation2 + $0xc88] sm:$0xff]
    %v511 = vld [vmem:[#allocation2 + $0xc90] sm:$0xff]
    %v512 = vld [vmem:[#allocation2 + $0xc98] sm:$0xff]
    %v513 = vld [vmem:[#allocation2 + $0xca0] sm:$0xff]
    %v514 = vld [vmem:[#allocation2 + $0xca8] sm:$0xff]
    %v515 = vld [vmem:[#allocation2 + $0xcb0] sm:$0xff]
    %v516 = vld [vmem:[#allocation2 + $0xcb8] sm:$0xff]
    %v517 = vld [vmem:[#allocation2 + $0xcc0] sm:$0xff]
    %v518 = vld [vmem:[#allocation2 + $0xcc8] sm:$0xff]
    %v519 = vld [vmem:[#allocation2 + $0xcd0] sm:$0xff]
    %v520 = vld [vmem:[#allocation2 + $0xcd8] sm:$0xff]
    %v521 = vld [vmem:[#allocation2 + $0xce0] sm:$0xff]
    %v522 = vld [vmem:[#allocation2 + $0xce8] sm:$0xff]
    %v523 = vld [vmem:[#allocation2 + $0xcf0] sm:$0xff]
    %v524 = vld [vmem:[#allocation2 + $0xcf8] sm:$0xff]
    %v525 = vld [vmem:[#allocation2 + $0xd00] sm:$0xff]
    %v526 = vld [vmem:[#allocation2 + $0xd08] sm:$0xff]
    %v527 = vld [vmem:[#allocation2 + $0xd10] sm:$0xff]
    %v528 = vld [vmem:[#allocation2 + $0xd18] sm:$0xff]
    %v529 = vld [vmem:[#allocation2 + $0xd20] sm:$0xff]
    %v530 = vld [vmem:[#allocation2 + $0xd28] sm:$0xff]
    %v531 = vld [vmem:[#allocation2 + $0xd30] sm:$0xff]
    %v532 = vld [vmem:[#allocation2 + $0xd38] sm:$0xff]
    %v533 = vld [vmem:[#allocation2 + $0xd40] sm:$0xff]
    %v534 = vld [vmem:[#allocation2 + $0xd48] sm:$0xff]
    %v535 = vld [vmem:[#allocation2 + $0xd50] sm:$0xff]
    %v536 = vld [vmem:[#allocation2 + $0xd58] sm:$0xff]
    %v537 = vld [vmem:[#allocation2 + $0xd60] sm:$0xff]
    %v538 = vld [vmem:[#allocation2 + $0xd68] sm:$0xff]
    %v539 = vld [vmem:[#allocation2 + $0xd70] sm:$0xff]
    %v540 = vld [vmem:[#allocation2 + $0xd78] sm:$0xff]
    %v541 = vld [vmem:[#allocation2 + $0xd80] sm:$0xff]
    %v542 = vld [vmem:[#allocation2 + $0xd88] sm:$0xff]
    %v543 = vld [vmem:[#allocation2 + $0xd90] sm:$0xff]
    %v544 = vld [vmem:[#allocation2 + $0xd98] sm:$0xff]
    %v545 = vld [vmem:[#allocation2 + $0xda0] sm:$0xff]
    %v546 = vld [vmem:[#allocation2 + $0xda8] sm:$0xff]
    %v547 = vld [vmem:[#allocation2 + $0xdb0] sm:$0xff]
    %v548 = vld [vmem:[#allocation2 + $0xdb8] sm:$0xff]
    %v549 = vld [vmem:[#allocation2 + $0xdc0] sm:$0xff]
    %v550 = vld [vmem:[#allocation2 + $0xdc8] sm:$0xff]
    %v551 = vld [vmem:[#allocation2 + $0xdd0] sm:$0xff]
    %v552 = vld [vmem:[#allocation2 + $0xdd8] sm:$0xff]
    %v553 = vld [vmem:[#allocation2 + $0xde0] sm:$0xff]
    %v554 = vld [vmem:[#allocation2 + $0xde8] sm:$0xff]
    %v555 = vld [vmem:[#allocation2 + $0xdf0] sm:$0xff]
    %v556 = vld [vmem:[#allocation2 + $0xdf8] sm:$0xff]
    %v557 = vld [vmem:[#allocation2 + $0xe00] sm:$0xff]
    %v558 = vld [vmem:[#allocation2 + $0xe08] sm:$0xff]
    %v559 = vld [vmem:[#allocation2 + $0xe10] sm:$0xff]
    %v560 = vld [vmem:[#allocation2 + $0xe18] sm:$0xff]
    %v561 = vld [vmem:[#allocation2 + $0xe20] sm:$0xff]
    %v562 = vld [vmem:[#allocation2 + $0xe28] sm:$0xff]
    %v563 = vld [vmem:[#allocation2 + $0xe30] sm:$0xff]
    %v564 = vld [vmem:[#allocation2 + $0xe38] sm:$0xff]
    %v565 = vld [vmem:[#allocation2 + $0xe40] sm:$0xff]
    %v566 = vld [vmem:[#allocation2 + $0xe48] sm:$0xff]
    %v567 = vld [vmem:[#allocation2 + $0xe50] sm:$0xff]
    %v568 = vld [vmem:[#allocation2 + $0xe58] sm:$0xff]
    %v569 = vld [vmem:[#allocation2 + $0xe60] sm:$0xff]
    %v570 = vld [vmem:[#allocation2 + $0xe68] sm:$0xff]
    %v571 = vld [vmem:[#allocation2 + $0xe70] sm:$0xff]
    %v572 = vld [vmem:[#allocation2 + $0xe78] sm:$0xff]
    %v573 = vld [vmem:[#allocation2 + $0xe80] sm:$0xff]
    %v574 = vld [vmem:[#allocation2 + $0xe88] sm:$0xff]
    %v575 = vld [vmem:[#allocation2 + $0xe90] sm:$0xff]
    %v576 = vld [vmem:[#allocation2 + $0xe98] sm:$0xff]
    %v577 = vld [vmem:[#allocation2 + $0xea0] sm:$0xff]
    %v578 = vld [vmem:[#allocation2 + $0xea8] sm:$0xff]
    %v579 = vld [vmem:[#allocation2 + $0xeb0] sm:$0xff]
    %v580 = vld [vmem:[#allocation2 + $0xeb8] sm:$0xff]
    %v581 = vld [vmem:[#allocation2 + $0xec0] sm:$0xff]
    %v582 = vld [vmem:[#allocation2 + $0xec8] sm:$0xff]
    %v583 = vld [vmem:[#allocation2 + $0xed0] sm:$0xff]
    %v584 = vld [vmem:[#allocation2 + $0xed8] sm:$0xff]
    %v585 = vld [vmem:[#allocation2 + $0xee0] sm:$0xff]
    %v586 = vld [vmem:[#allocation2 + $0xee8] sm:$0xff]
    %v587 = vld [vmem:[#allocation2 + $0xef0] sm:$0xff]
    %v588 = vld [vmem:[#allocation2 + $0xef8] sm:$0xff]
    %v589 = vld [vmem:[#allocation2 + $0xf00] sm:$0xff]
    %v590 = vld [vmem:[#allocation2 + $0xf08] sm:$0xff]
    %v591 = vld [vmem:[#allocation2 + $0xf10] sm:$0xff]
    %v592 = vld [vmem:[#allocation2 + $0xf18] sm:$0xff]
    %v593 = vld [vmem:[#allocation2 + $0xf20] sm:$0xff]
    %v594 = vld [vmem:[#allocation2 + $0xf28] sm:$0xff]
    %v595 = vld [vmem:[#allocation2 + $0xf30] sm:$0xff]
    %v596 = vld [vmem:[#allocation2 + $0xf38] sm:$0xff]
    %v597 = vld [vmem:[#allocation2 + $0xf40] sm:$0xff]
    %v598 = vld [vmem:[#allocation2 + $0xf48] sm:$0xff]
    %v599 = vld [vmem:[#allocation2 + $0xf50] sm:$0xff]
    %v600 = vld [vmem:[#allocation2 + $0xf58] sm:$0xff]
    %v601 = vld [vmem:[#allocation2 + $0xf60] sm:$0xff]
    %v602 = vld [vmem:[#allocation2 + $0xf68] sm:$0xff]
    %v603 = vld [vmem:[#allocation2 + $0xf70] sm:$0xff]
    %v604 = vld [vmem:[#allocation2 + $0xf78] sm:$0xff]
    %v605 = vld [vmem:[#allocation2 + $0xf80] sm:$0xff]
    %v606 = vld [vmem:[#allocation2 + $0xf88] sm:$0xff]
    %v607 = vld [vmem:[#allocation2 + $0xf90] sm:$0xff]
    %v608 = vld [vmem:[#allocation2 + $0xf98] sm:$0xff]
    %v609 = vld [vmem:[#allocation2 + $0xfa0] sm:$0xff]
    %v610 = vld [vmem:[#allocation2 + $0xfa8] sm:$0xff]
    %v611 = vld [vmem:[#allocation2 + $0xfb0] sm:$0xff]
    %v612 = vld [vmem:[#allocation2 + $0xfb8] sm:$0xff]
    %v613 = vld [vmem:[#allocation2 + $0xfc0] sm:$0xff]
    %v614 = vld [vmem:[#allocation2 + $0xfc8] sm:$0xff]
    %v615 = vld [vmem:[#allocation2 + $0xfd0] sm:$0xff]
    %v616 = vld [vmem:[#allocation2 + $0xfd8] sm:$0xff]
    %v617 = vld [vmem:[#allocation2 + $0xfe0] sm:$0xff]
    %v618 = vld [vmem:[#allocation2 + $0xfe8] sm:$0xff]
    %v619 = vld [vmem:[#allocation2 + $0xff0] sm:$0xff]
    %v620 = vld [vmem:[#allocation2 + $0xff8] sm:$0xff]
    %v621 = vld [vmem:[#allocation2 + $0x1000] sm:$0xff]
    %v622 = vld [vmem:[#allocation2 + $0x1008] sm:$0xff]
    %v623 = vld [vmem:[#allocation2 + $0x1010] sm:$0xff]
    %v624 = vld [vmem:[#allocation2 + $0x1018] sm:$0xff]
    %v625 = vld [vmem:[#allocation2 + $0x1020] sm:$0xff]
    %v626 = vld [vmem:[#allocation2 + $0x1028] sm:$0xff]
    %v627 = vld [vmem:[#allocation2 + $0x1030] sm:$0xff]
    %v628 = vld [vmem:[#allocation2 + $0x1038] sm:$0xff]
    %v629 = vld [vmem:[#allocation2 + $0x1040] sm:$0xff]
    %v630 = vld [vmem:[#allocation2 + $0x1048] sm:$0xff]
    %v631 = vld [vmem:[#allocation2 + $0x1050] sm:$0xff]
    %v632 = vld [vmem:[#allocation2 + $0x1058] sm:$0xff]
    %v633 = vld [vmem:[#allocation2 + $0x1060] sm:$0xff]
    %v634 = vld [vmem:[#allocation2 + $0x1068] sm:$0xff]
    %v635 = vld [vmem:[#allocation2 + $0x1070] sm:$0xff]
    %v636 = vld [vmem:[#allocation2 + $0x1078] sm:$0xff]
    %v637 = vld [vmem:[#allocation2 + $0x1080] sm:$0xff]
    %v638 = vld [vmem:[#allocation2 + $0x1088] sm:$0xff]
    %v639 = vld [vmem:[#allocation2 + $0x1090] sm:$0xff]
    %v640 = vld [vmem:[#allocation2 + $0x1098] sm:$0xff]
    %v641 = vld [vmem:[#allocation2 + $0x10a0] sm:$0xff]
    %v642 = vld [vmem:[#allocation2 + $0x10a8] sm:$0xff]
    %v643 = vld [vmem:[#allocation2 + $0x10b0] sm:$0xff]
    %v644 = vld [vmem:[#allocation2 + $0x10b8] sm:$0xff]
    %v645 = vld [vmem:[#allocation2 + $0x10c0] sm:$0xff]
    %v646 = vld [vmem:[#allocation2 + $0x10c8] sm:$0xff]
    %v647 = vld [vmem:[#allocation2 + $0x10d0] sm:$0xff]
    %v648 = vld [vmem:[#allocation2 + $0x10d8] sm:$0xff]
    %v649 = vld [vmem:[#allocation2 + $0x10e0] sm:$0xff]
    %v650 = vld [vmem:[#allocation2 + $0x10e8] sm:$0xff]
    %v651 = vld [vmem:[#allocation2 + $0x10f0] sm:$0xff]
    %v652 = vld [vmem:[#allocation2 + $0x10f8] sm:$0xff]
    %v653 = vld [vmem:[#allocation2 + $0x1100] sm:$0xff]
    %v654 = vld [vmem:[#allocation2 + $0x1108] sm:$0xff]
    %v655 = vld [vmem:[#allocation2 + $0x1110] sm:$0xff]
    %v656 = vld [vmem:[#allocation2 + $0x1118] sm:$0xff]
    %v657 = vld [vmem:[#allocation2 + $0x1120] sm:$0xff]
    %v658 = vld [vmem:[#allocation2 + $0x1128] sm:$0xff]
    %v659 = vld [vmem:[#allocation2 + $0x1130] sm:$0xff]
    %v660 = vld [vmem:[#allocation2 + $0x1138] sm:$0xff]
    %v661 = vld [vmem:[#allocation2 + $0x1140] sm:$0xff]
    %v662 = vld [vmem:[#allocation2 + $0x1148] sm:$0xff]
    %v663 = vld [vmem:[#allocation2 + $0x1150] sm:$0xff]
    %v664 = vld [vmem:[#allocation2 + $0x1158] sm:$0xff]
    %v665 = vld [vmem:[#allocation2 + $0x1160] sm:$0xff]
    %v666 = vld [vmem:[#allocation2 + $0x1168] sm:$0xff]
    %v667 = vld [vmem:[#allocation2 + $0x1170] sm:$0xff]
    %v668 = vld [vmem:[#allocation2 + $0x1178] sm:$0xff]
    %v669 = vld [vmem:[#allocation2 + $0x1180] sm:$0xff]
    %v670 = vld [vmem:[#allocation2 + $0x1188] sm:$0xff]
    %v671 = vld [vmem:[#allocation2 + $0x1190] sm:$0xff]
    %v672 = vld [vmem:[#allocation2 + $0x1198] sm:$0xff]
    %v673 = vld [vmem:[#allocation2 + $0x11a0] sm:$0xff]
    %v674 = vld [vmem:[#allocation2 + $0x11a8] sm:$0xff]
    %v675 = vld [vmem:[#allocation2 + $0x11b0] sm:$0xff]
    %v676 = vld [vmem:[#allocation2 + $0x11b8] sm:$0xff]
    %v677 = vld [vmem:[#allocation2 + $0x11c0] sm:$0xff]
    %v678 = vld [vmem:[#allocation2 + $0x11c8] sm:$0xff]
    %v679 = vld [vmem:[#allocation2 + $0x11d0] sm:$0xff]
    %v680 = vld [vmem:[#allocation2 + $0x11d8] sm:$0xff]
    %v681 = vld [vmem:[#allocation2 + $0x11e0] sm:$0xff]
    %v682 = vld [vmem:[#allocation2 + $0x11e8] sm:$0xff]
    %v683 = vld [vmem:[#allocation2 + $0x11f0] sm:$0xff]
    %v684 = vld [vmem:[#allocation2 + $0x11f8] sm:$0xff]
    %v685 = vld [vmem:[#allocation2 + $0x1200] sm:$0xff]
    %v686 = vld [vmem:[#allocation2 + $0x1208] sm:$0xff]
    %v687 = vld [vmem:[#allocation2 + $0x1210] sm:$0xff]
    %v688 = vld [vmem:[#allocation2 + $0x1218] sm:$0xff]
    %v689 = vld [vmem:[#allocation2 + $0x1220] sm:$0xff]
    %v690 = vld [vmem:[#allocation2 + $0x1228] sm:$0xff]
    %v691 = vld [vmem:[#allocation2 + $0x1230] sm:$0xff]
    %v692 = vld [vmem:[#allocation2 + $0x1238] sm:$0xff]
    %v693 = vld [vmem:[#allocation2 + $0x1240] sm:$0xff]
    %v694 = vld [vmem:[#allocation2 + $0x1248] sm:$0xff]
    %v695 = vld [vmem:[#allocation2 + $0x1250] sm:$0xff]
    %v696 = vld [vmem:[#allocation2 + $0x1258] sm:$0xff]
    %v697 = vld [vmem:[#allocation2 + $0x1260] sm:$0xff]
    %v698 = vld [vmem:[#allocation2 + $0x1268] sm:$0xff]
    %v699 = vld [vmem:[#allocation2 + $0x1270] sm:$0xff]
    %v700 = vld [vmem:[#allocation2 + $0x1278] sm:$0xff]
    %v701 = vld [vmem:[#allocation2 + $0x1280] sm:$0xff]
    %v702 = vld [vmem:[#allocation2 + $0x1288] sm:$0xff]
    %v703 = vld [vmem:[#allocation2 + $0x1290] sm:$0xff]
    %v704 = vld [vmem:[#allocation2 + $0x1298] sm:$0xff]
    %v705 = vld [vmem:[#allocation2 + $0x12a0] sm:$0xff]
    %v706 = vld [vmem:[#allocation2 + $0x12a8] sm:$0xff]
    %v707 = vld [vmem:[#allocation2 + $0x12b0] sm:$0xff]
    %v708 = vld [vmem:[#allocation2 + $0x12b8] sm:$0xff]
    %v709 = vld [vmem:[#allocation2 + $0x12c0] sm:$0xff]
    %v710 = vld [vmem:[#allocation2 + $0x12c8] sm:$0xff]
    %v711 = vld [vmem:[#allocation2 + $0x12d0] sm:$0xff]
    %v712 = vld [vmem:[#allocation2 + $0x12d8] sm:$0xff]
    %v713 = vld [vmem:[#allocation2 + $0x12e0] sm:$0xff]
    %v714 = vld [vmem:[#allocation2 + $0x12e8] sm:$0xff]
    %v715 = vld [vmem:[#allocation2 + $0x12f0] sm:$0xff]
    %v716 = vld [vmem:[#allocation2 + $0x12f8] sm:$0xff]
    %v717 = vld [vmem:[#allocation2 + $0x1300] sm:$0xff]
    %v718 = vld [vmem:[#allocation2 + $0x1308] sm:$0xff]
    %v719 = vld [vmem:[#allocation2 + $0x1310] sm:$0xff]
    %v720 = vld [vmem:[#allocation2 + $0x1318] sm:$0xff]
    %v721 = vld [vmem:[#allocation2 + $0x1320] sm:$0xff]
    %v722 = vld [vmem:[#allocation2 + $0x1328] sm:$0xff]
    %v723 = vld [vmem:[#allocation2 + $0x1330] sm:$0xff]
    %v724 = vld [vmem:[#allocation2 + $0x1338] sm:$0xff]
    %v725 = vld [vmem:[#allocation2 + $0x1340] sm:$0xff]
    %v726 = vld [vmem:[#allocation2 + $0x1348] sm:$0xff]
    %v727 = vld [vmem:[#allocation2 + $0x1350] sm:$0xff]
    %v728 = vld [vmem:[#allocation2 + $0x1358] sm:$0xff]
    %v729 = vld [vmem:[#allocation2 + $0x1360] sm:$0xff]
    %v730 = vld [vmem:[#allocation2 + $0x1368] sm:$0xff]
    %v731 = vld [vmem:[#allocation2 + $0x1370] sm:$0xff]
    %v732 = vld [vmem:[#allocation2 + $0x1378] sm:$0xff]
    %v733 = vld [vmem:[#allocation2 + $0x1380] sm:$0xff]
    %v734 = vld [vmem:[#allocation2 + $0x1388] sm:$0xff]
    %v735 = vld [vmem:[#allocation2 + $0x1390] sm:$0xff]
    %v736 = vld [vmem:[#allocation2 + $0x1398] sm:$0xff]
    %v737 = vld [vmem:[#allocation2 + $0x13a0] sm:$0xff]
    %v738 = vld [vmem:[#allocation2 + $0x13a8] sm:$0xff]
    %v739 = vld [vmem:[#allocation2 + $0x13b0] sm:$0xff]
    %v740 = vld [vmem:[#allocation2 + $0x13b8] sm:$0xff]
    %v741 = vld [vmem:[#allocation2 + $0x13c0] sm:$0xff]
    %v742 = vld [vmem:[#allocation2 + $0x13c8] sm:$0xff]
    %v743 = vld [vmem:[#allocation2 + $0x13d0] sm:$0xff]
    %v744 = vld [vmem:[#allocation2 + $0x13d8] sm:$0xff]
    %v745 = vld [vmem:[#allocation2 + $0x13e0] sm:$0xff]
    %v746 = vld [vmem:[#allocation2 + $0x13e8] sm:$0xff]
    %v747 = vld [vmem:[#allocation2 + $0x13f0] sm:$0xff]
    %v748 = vld [vmem:[#allocation2 + $0x13f8] sm:$0xff]
    %v749 = vld [vmem:[#allocation2 + $0x1400] sm:$0xff]
    %v750 = vld [vmem:[#allocation2 + $0x1408] sm:$0xff]
    %v751 = vld [vmem:[#allocation2 + $0x1410] sm:$0xff]
    %v752 = vld [vmem:[#allocation2 + $0x1418] sm:$0xff]
    %v753 = vld [vmem:[#allocation2 + $0x1420] sm:$0xff]
    %v754 = vld [vmem:[#allocation2 + $0x1428] sm:$0xff]
    %v755 = vld [vmem:[#allocation2 + $0x1430] sm:$0xff]
    %v756 = vld [vmem:[#allocation2 + $0x1438] sm:$0xff]
    %v757 = vld [vmem:[#allocation2 + $0x1440] sm:$0xff]
    %v758 = vld [vmem:[#allocation2 + $0x1448] sm:$0xff]
    %v759 = vld [vmem:[#allocation2 + $0x1450] sm:$0xff]
    %v760 = vld [vmem:[#allocation2 + $0x1458] sm:$0xff]
    %v761 = vld [vmem:[#allocation2 + $0x1460] sm:$0xff]
    %v762 = vld [vmem:[#allocation2 + $0x1468] sm:$0xff]
    %v763 = vld [vmem:[#allocation2 + $0x1470] sm:$0xff]
    %v764 = vld [vmem:[#allocation2 + $0x1478] sm:$0xff]
    %v765 = vld [vmem:[#allocation2 + $0x1480] sm:$0xff]
    %v766 = vld [vmem:[#allocation2 + $0x1488] sm:$0xff]
    %v767 = vld [vmem:[#allocation2 + $0x1490] sm:$0xff]
    %v768 = vld [vmem:[#allocation2 + $0x1498] sm:$0xff]
    %v769 = vld [vmem:[#allocation2 + $0x14a0] sm:$0xff]
    %v770 = vld [vmem:[#allocation2 + $0x14a8] sm:$0xff]
    %v771 = vld [vmem:[#allocation2 + $0x14b0] sm:$0xff]
    %v772 = vld [vmem:[#allocation2 + $0x14b8] sm:$0xff]
    %v773 = vld [vmem:[#allocation2 + $0x14c0] sm:$0xff]
    %v774 = vld [vmem:[#allocation2 + $0x14c8] sm:$0xff]
    %v775 = vld [vmem:[#allocation2 + $0x14d0] sm:$0xff]
    %v776 = vld [vmem:[#allocation2 + $0x14d8] sm:$0xff]
    %v777 = vld [vmem:[#allocation2 + $0x14e0] sm:$0xff]
    %v778 = vld [vmem:[#allocation2 + $0x14e8] sm:$0xff]
    %v779 = vld [vmem:[#allocation2 + $0x14f0] sm:$0xff]
    %v780 = vld [vmem:[#allocation2 + $0x14f8] sm:$0xff]
    %v781 = vld [vmem:[#allocation2 + $0x1500] sm:$0xff]
    %v782 = vld [vmem:[#allocation2 + $0x1508] sm:$0xff]
    %v783 = vld [vmem:[#allocation2 + $0x1510] sm:$0xff]
    %v784 = vld [vmem:[#allocation2 + $0x1518] sm:$0xff]
    %v785 = vld [vmem:[#allocation2 + $0x1520] sm:$0xff]
    %v786 = vld [vmem:[#allocation2 + $0x1528] sm:$0xff]
    %v787 = vld [vmem:[#allocation2 + $0x1530] sm:$0xff]
    %v788 = vld [vmem:[#allocation2 + $0x1538] sm:$0xff]
    %v789 = vld [vmem:[#allocation2 + $0x1540] sm:$0xff]
    %v790 = vld [vmem:[#allocation2 + $0x1548] sm:$0xff]
    %v791 = vld [vmem:[#allocation2 + $0x1550] sm:$0xff]
    %v792 = vld [vmem:[#allocation2 + $0x1558] sm:$0xff]
    %v793 = vld [vmem:[#allocation2 + $0x1560] sm:$0xff]
    %v794 = vld [vmem:[#allocation2 + $0x1568] sm:$0xff]
    %v795 = vld [vmem:[#allocation2 + $0x1570] sm:$0xff]
    %v796 = vld [vmem:[#allocation2 + $0x1578] sm:$0xff]
    %v797 = vld [vmem:[#allocation2 + $0x1580] sm:$0xff]
    %v798 = vld [vmem:[#allocation2 + $0x1588] sm:$0xff]
    %v799 = vld [vmem:[#allocation2 + $0x1590] sm:$0xff]
    %v800 = vld [vmem:[#allocation2 + $0x1598] sm:$0xff]
    %v801 = vld [vmem:[#allocation2 + $0x15a0] sm:$0xff]
    %v802 = vld [vmem:[#allocation2 + $0x15a8] sm:$0xff]
    %v803 = vld [vmem:[#allocation2 + $0x15b0] sm:$0xff]
    %v804 = vld [vmem:[#allocation2 + $0x15b8] sm:$0xff]
    %v805 = vld [vmem:[#allocation2 + $0x15c0] sm:$0xff]
    %v806 = vld [vmem:[#allocation2 + $0x15c8] sm:$0xff]
    %v807 = vld [vmem:[#allocation2 + $0x15d0] sm:$0xff]
    %v808 = vld [vmem:[#allocation2 + $0x15d8] sm:$0xff]
    %v809 = vld [vmem:[#allocation2 + $0x15e0] sm:$0xff]
    %v810 = vld [vmem:[#allocation2 + $0x15e8] sm:$0xff]
    %v811 = vld [vmem:[#allocation2 + $0x15f0] sm:$0xff]
    %v812 = vld [vmem:[#allocation2 + $0x15f8] sm:$0xff]
    %v813 = vld [vmem:[#allocation2 + $0x1600] sm:$0xff]
    %v814 = vld [vmem:[#allocation2 + $0x1608] sm:$0xff]
    %v815 = vld [vmem:[#allocation2 + $0x1610] sm:$0xff]
    %v816 = vld [vmem:[#allocation2 + $0x1618] sm:$0xff]
    %v817 = vld [vmem:[#allocation2 + $0x1620] sm:$0xff]
    %v818 = vld [vmem:[#allocation2 + $0x1628] sm:$0xff]
    %v819 = vld [vmem:[#allocation2 + $0x1630] sm:$0xff]
    %v820 = vld [vmem:[#allocation2 + $0x1638] sm:$0xff]
    %v821 = vld [vmem:[#allocation2 + $0x1640] sm:$0xff]
    %v822 = vld [vmem:[#allocation2 + $0x1648] sm:$0xff]
    %v823 = vld [vmem:[#allocation2 + $0x1650] sm:$0xff]
    %v824 = vld [vmem:[#allocation2 + $0x1658] sm:$0xff]
    %v825 = vld [vmem:[#allocation2 + $0x1660] sm:$0xff]
    %v826 = vld [vmem:[#allocation2 + $0x1668] sm:$0xff]
    %v827 = vld [vmem:[#allocation2 + $0x1670] sm:$0xff]
    %v828 = vld [vmem:[#allocation2 + $0x1678] sm:$0xff]
    %v829 = vld [vmem:[#allocation2 + $0x1680] sm:$0xff]
    %v830 = vld [vmem:[#allocation2 + $0x1688] sm:$0xff]
    %v831 = vld [vmem:[#allocation2 + $0x1690] sm:$0xff]
    %v832 = vld [vmem:[#allocation2 + $0x1698] sm:$0xff]
    %v833 = vld [vmem:[#allocation2 + $0x16a0] sm:$0xff]
    %v834 = vld [vmem:[#allocation2 + $0x16a8] sm:$0xff]
    %v835 = vld [vmem:[#allocation2 + $0x16b0] sm:$0xff]
    %v836 = vld [vmem:[#allocation2 + $0x16b8] sm:$0xff]
    %v837 = vld [vmem:[#allocation2 + $0x16c0] sm:$0xff]
    %v838 = vld [vmem:[#allocation2 + $0x16c8] sm:$0xff]
    %v839 = vld [vmem:[#allocation2 + $0x16d0] sm:$0xff]
    %v840 = vld [vmem:[#allocation2 + $0x16d8] sm:$0xff]
    %v841 = vld [vmem:[#allocation2 + $0x16e0] sm:$0xff]
    %v842 = vld [vmem:[#allocation2 + $0x16e8] sm:$0xff]
    %v843 = vld [vmem:[#allocation2 + $0x16f0] sm:$0xff]
    %v844 = vld [vmem:[#allocation2 + $0x16f8] sm:$0xff]
    %v845 = vld [vmem:[#allocation2 + $0x1700] sm:$0xff]
    %v846 = vld [vmem:[#allocation2 + $0x1708] sm:$0xff]
    %v847 = vld [vmem:[#allocation2 + $0x1710] sm:$0xff]
    %v848 = vld [vmem:[#allocation2 + $0x1718] sm:$0xff]
    %v849 = vld [vmem:[#allocation2 + $0x1720] sm:$0xff]
    %v850 = vld [vmem:[#allocation2 + $0x1728] sm:$0xff]
    %v851 = vld [vmem:[#allocation2 + $0x1730] sm:$0xff]
    %v852 = vld [vmem:[#allocation2 + $0x1738] sm:$0xff]
    %v853 = vld [vmem:[#allocation2 + $0x1740] sm:$0xff]
    %v854 = vld [vmem:[#allocation2 + $0x1748] sm:$0xff]
    %v855 = vld [vmem:[#allocation2 + $0x1750] sm:$0xff]
    %v856 = vld [vmem:[#allocation2 + $0x1758] sm:$0xff]
    %v857 = vld [vmem:[#allocation2 + $0x1760] sm:$0xff]
    %v858 = vld [vmem:[#allocation2 + $0x1768] sm:$0xff]
    %v859 = vld [vmem:[#allocation2 + $0x1770] sm:$0xff]
    %v860 = vld [vmem:[#allocation2 + $0x1778] sm:$0xff]
    %v861 = vld [vmem:[#allocation2 + $0x1780] sm:$0xff]
    %v862 = vld [vmem:[#allocation2 + $0x1788] sm:$0xff]
    %v863 = vld [vmem:[#allocation2 + $0x1790] sm:$0xff]
    %v864 = vld [vmem:[#allocation2 + $0x1798] sm:$0xff]
    %v865 = vld [vmem:[#allocation2 + $0x17a0] sm:$0xff]
    %v866 = vld [vmem:[#allocation2 + $0x17a8] sm:$0xff]
    %v867 = vld [vmem:[#allocation2 + $0x17b0] sm:$0xff]
    %v868 = vld [vmem:[#allocation2 + $0x17b8] sm:$0xff]
    %v869 = vld [vmem:[#allocation2 + $0x17c0] sm:$0xff]
    %v870 = vld [vmem:[#allocation2 + $0x17c8] sm:$0xff]
    %v871 = vld [vmem:[#allocation2 + $0x17d0] sm:$0xff]
    %v872 = vld [vmem:[#allocation2 + $0x17d8] sm:$0xff]
    %v873 = vld [vmem:[#allocation2 + $0x17e0] sm:$0xff]
    %v874 = vld [vmem:[#allocation2 + $0x17e8] sm:$0xff]
    %v875 = vld [vmem:[#allocation2 + $0x17f0] sm:$0xff]
    %v876 = vld [vmem:[#allocation2 + $0x17f8] sm:$0xff]
    %v877 = vld [vmem:[#allocation2 + $0x1800] sm:$0xff]
    %v878 = vld [vmem:[#allocation2 + $0x1808] sm:$0xff]
    %v879 = vld [vmem:[#allocation2 + $0x1810] sm:$0xff]
    %v880 = vld [vmem:[#allocation2 + $0x1818] sm:$0xff]
    %v881 = vld [vmem:[#allocation2 + $0x1820] sm:$0xff]
    %v882 = vld [vmem:[#allocation2 + $0x1828] sm:$0xff]
    %v883 = vld [vmem:[#allocation2 + $0x1830] sm:$0xff]
    %v884 = vld [vmem:[#allocation2 + $0x1838] sm:$0xff]
    %v885 = vld [vmem:[#allocation2 + $0x1840] sm:$0xff]
    %v886 = vld [vmem:[#allocation2 + $0x1848] sm:$0xff]
    %v887 = vld [vmem:[#allocation2 + $0x1850] sm:$0xff]
    %v888 = vld [vmem:[#allocation2 + $0x1858] sm:$0xff]
    %v889 = vld [vmem:[#allocation2 + $0x1860] sm:$0xff]
    %v890 = vld [vmem:[#allocation2 + $0x1868] sm:$0xff]
    %v891 = vld [vmem:[#allocation2 + $0x1870] sm:$0xff]
    %v892 = vld [vmem:[#allocation2 + $0x1878] sm:$0xff]
    %v893 = vld [vmem:[#allocation4] sm:$0xff]
    %v895 = vlaneseq
    %v896 = vshrl.u32 %v895, 7
    %v897 = vsub.s32 0, %v896
    %v898 = vrot.slane %v893, %v897
    %v899 = vlaneseq
    %v900 = vshrl.u32 %v899, 7
    %v901 = vsub.s32 1, %v900
    %v902 = vrot.slane %v893, %v901
    %v903 = vlaneseq
    %v904 = vshrl.u32 %v903, 7
    %v905 = vsub.s32 2, %v904
    %v906 = vrot.slane %v893, %v905
    %v907 = vlaneseq
    %v908 = vshrl.u32 %v907, 7
    %v909 = vsub.s32 3, %v908
    %v910 = vrot.slane %v893, %v909
    %v911 = vlaneseq
    %v912 = vshrl.u32 %v911, 7
    %v913 = vsub.s32 4, %v912
    %v914 = vrot.slane %v893, %v913
    %v915 = vlaneseq
    %v916 = vshrl.u32 %v915, 7
    %v917 = vsub.s32 5, %v916
    %v918 = vrot.slane %v893, %v917
    %v919 = vlaneseq
    %v920 = vshrl.u32 %v919, 7
    %v921 = vsub.s32 6, %v920
    %v922 = vrot.slane %v893, %v921
    %v923 = vlaneseq
    %v924 = vshrl.u32 %v923, 7
    %v925 = vsub.s32 7, %v924
    %v926 = vrot.slane %v893, %v925
    %vm935 = vcmask 130048
    %v937 = vsel %vm935, %v108, 0
    %939 = vmatprep.subr.mxu0 %v110
    %940 = vmatpush1.msra.mxu0 %v109
    %941 = vmatprep.subr.mxu0 %v118
    %942 = vmatpush1.msra.mxu0 %v117
    %943 = vmatprep.subr.mxu0 %v126
    %944 = vmatpush1.msra.mxu0 %v125
    %945 = vmatprep.subr.mxu0 %v134
    %946 = vmatpush1.msra.mxu0 %v133
    %947 = vmatprep.subr.mxu0 %v142
    %948 = vmatpush1.msra.mxu0 %v141
    %949 = vmatprep.subr.mxu0 %v150
    %950 = vmatpush1.msra.mxu0 %v149
    %951 = vmatprep.subr.mxu0 %v158
    %952 = vmatpush1.msra.mxu0 %v157
    %953 = vmatprep.subr.mxu0 %v166
    %954 = vmatpush1.msra.mxu0 %v165
    %955 = vmatprep.subr.mxu0 %v174
    %956 = vmatpush1.msra.mxu0 %v173
    %957 = vmatprep.subr.mxu0 %v182
    %958 = vmatpush1.msra.mxu0 %v181
    %959 = vmatprep.subr.mxu0 %v190
    %960 = vmatpush1.msra.mxu0 %v189
    %961 = vmatprep.subr.mxu0 %v198
    %962 = vmatpush1.msra.mxu0 %v197
    %963 = vmatprep.subr.mxu0 %v206
    %964 = vmatpush1.msra.mxu0 %v205
    %965 = vmatprep.subr.mxu0 %v214
    %966 = vmatpush1.msra.mxu0 %v213
    %967 = vmatprep.subr.mxu0 %v222
    %968 = vmatpush1.msra.mxu0 %v221
    %969 = vmatprep.subr.mxu0 %v230
    %970 = vmatpush1.msra.mxu0 %v229
    %971 = vmatprep.subr.mxu0 %v238
    %972 = vmatpush1.msra.mxu0 %v237
    %973 = vmatprep.subr.mxu0 %v246
    %974 = vmatpush1.msra.mxu0 %v245
    %975 = vmatprep.subr.mxu0 %v254
    %976 = vmatpush1.msra.mxu0 %v253
    %977 = vmatprep.subr.mxu0 %v262
    %978 = vmatpush1.msra.mxu0 %v261
    %979 = vmatprep.subr.mxu0 %v270
    %980 = vmatpush1.msra.mxu0 %v269
    %981 = vmatprep.subr.mxu0 %v278
    %982 = vmatpush1.msra.mxu0 %v277
    %983 = vmatprep.subr.mxu0 %v286
    %984 = vmatpush1.msra.mxu0 %v285
    %985 = vmatprep.subr.mxu0 %v294
    %986 = vmatpush1.msra.mxu0 %v293
    %987 = vmatprep.subr.mxu0 %v302
    %988 = vmatpush1.msra.mxu0 %v301
    %989 = vmatprep.subr.mxu0 %v310
    %990 = vmatpush1.msra.mxu0 %v309
    %991 = vmatprep.subr.mxu0 %v318
    %992 = vmatpush1.msra.mxu0 %v317
    %993 = vmatprep.subr.mxu0 %v326
    %994 = vmatpush1.msra.mxu0 %v325
    %995 = vmatprep.subr.mxu0 %v334
    %996 = vmatpush1.msra.mxu0 %v333
    %997 = vmatprep.subr.mxu0 %v342
    %998 = vmatpush1.msra.mxu0 %v341
    %999 = vmatprep.subr.mxu0 %v350
    %1000 = vmatpush1.msra.mxu0 %v349
    %1001 = vmatprep.subr.mxu0 %v358
    %1002 = vmatpush1.msra.mxu0 %v357
    %1003 = vmatprep.mubr.f32.mxu0 %v103
    %1004 = vmatmul.mubr.f32.gmra.mrb[0].mxu0 %v102
    %v1005 = vpop.f32.mrb[0].mxu0
    %v1006 = vadd.f32 %v898, %v1005
    %v1007 = vpop.f32.mrb[0].mxu0
    %v1008 = vadd.f32 %v902, %v1007
    %1009 = vdwg.mxu0
    %1010 = vmatprep.subr.mxu0 %v366
    %1011 = vmatpush1.msra.mxu0 %v365
    %1012 = vmatprep.subr.mxu0 %v374
    %1013 = vmatpush1.msra.mxu0 %v373
    %1014 = vmatprep.subr.mxu0 %v382
    %1015 = vmatpush1.msra.mxu0 %v381
    %1016 = vmatprep.subr.mxu0 %v390
    %1017 = vmatpush1.msra.mxu0 %v389
    %1018 = vmatprep.subr.mxu0 %v398
    %1019 = vmatpush1.msra.mxu0 %v397
    %1020 = vmatprep.subr.mxu0 %v406
    %1021 = vmatpush1.msra.mxu0 %v405
    %1022 = vmatprep.subr.mxu0 %v414
    %1023 = vmatpush1.msra.mxu0 %v413
    %1024 = vmatprep.subr.mxu0 %v422
    %1025 = vmatpush1.msra.mxu0 %v421
    %1026 = vmatprep.subr.mxu0 %v430
    %1027 = vmatpush1.msra.mxu0 %v429
    %1028 = vmatprep.subr.mxu0 %v438
    %1029 = vmatpush1.msra.mxu0 %v437
    %1030 = vmatprep.subr.mxu0 %v446
    %1031 = vmatpush1.msra.mxu0 %v445
    %1032 = vmatprep.subr.mxu0 %v454
    %1033 = vmatpush1.msra.mxu0 %v453
    %1034 = vmatprep.subr.mxu0 %v462
    %1035 = vmatpush1.msra.mxu0 %v461
    %1036 = vmatprep.subr.mxu0 %v470
    %1037 = vmatpush1.msra.mxu0 %v469
    %1038 = vmatprep.subr.mxu0 %v478
    %1039 = vmatpush1.msra.mxu0 %v477
    %1040 = vmatprep.subr.mxu0 %v486
    %1041 = vmatpush1.msra.mxu0 %v485
    %1042 = vmatprep.subr.mxu0 %v494
    %1043 = vmatpush1.msra.mxu0 %v493
    %1044 = vmatprep.subr.mxu0 %v502
    %1045 = vmatpush1.msra.mxu0 %v501
    %1046 = vmatprep.subr.mxu0 %v510
    %1047 = vmatpush1.msra.mxu0 %v509
    %1048 = vmatprep.subr.mxu0 %v518
    %1049 = vmatpush1.msra.mxu0 %v517
    %1050 = vmatprep.subr.mxu0 %v526
    %1051 = vmatpush1.msra.mxu0 %v525
    %1052 = vmatprep.subr.mxu0 %v534
    %1053 = vmatpush1.msra.mxu0 %v533
    %1054 = vmatprep.subr.mxu0 %v542
    %1055 = vmatpush1.msra.mxu0 %v541
    %1056 = vmatprep.subr.mxu0 %v550
    %1057 = vmatpush1.msra.mxu0 %v549
    %1058 = vmatprep.subr.mxu0 %v558
    %1059 = vmatpush1.msra.mxu0 %v557
    %1060 = vmatprep.subr.mxu0 %v566
    %1061 = vmatpush1.msra.mxu0 %v565
    %1062 = vmatprep.subr.mxu0 %v574
    %1063 = vmatpush1.msra.mxu0 %v573
    %1064 = vmatprep.subr.mxu0 %v582
    %1065 = vmatpush1.msra.mxu0 %v581
    %1066 = vmatprep.subr.mxu0 %v590
    %1067 = vmatpush1.msra.mxu0 %v589
    %1068 = vmatprep.subr.mxu0 %v598
    %1069 = vmatpush1.msra.mxu0 %v597
    %1070 = vmatprep.subr.mxu0 %v606
    %1071 = vmatpush1.msra.mxu0 %v605
    %1072 = vmatprep.subr.mxu0 %v614
    %1073 = vmatpush1.msra.mxu0 %v613
    %1074 = vmatprep.mubr.f32.mxu0 %v105
    %1075 = vmatmul.mubr.f32.gmra.mrb[0].mxu0 %v104
    %v1076 = vpop.f32.mrb[0].mxu0
    %v1077 = vadd.f32 %v1006, %v1076
    %v1078 = vpop.f32.mrb[0].mxu0
    %v1079 = vadd.f32 %v1008, %v1078
    %1080 = vdwg.mxu0
    %1081 = vmatprep.subr.mxu0 %v622
    %1082 = vmatpush1.msra.mxu0 %v621
    %1083 = vmatprep.subr.mxu0 %v630
    %1084 = vmatpush1.msra.mxu0 %v629
    %1085 = vmatprep.subr.mxu0 %v638
    %1086 = vmatpush1.msra.mxu0 %v637
    %1087 = vmatprep.subr.mxu0 %v646
    %1088 = vmatpush1.msra.mxu0 %v645
    %1089 = vmatprep.subr.mxu0 %v654
    %1090 = vmatpush1.msra.mxu0 %v653
    %1091 = vmatprep.subr.mxu0 %v662
    %1092 = vmatpush1.msra.mxu0 %v661
    %1093 = vmatprep.subr.mxu0 %v670
    %1094 = vmatpush1.msra.mxu0 %v669
    %1095 = vmatprep.subr.mxu0 %v678
    %1096 = vmatpush1.msra.mxu0 %v677
    %1097 = vmatprep.subr.mxu0 %v686
    %1098 = vmatpush1.msra.mxu0 %v685
    %1099 = vmatprep.subr.mxu0 %v694
    %1100 = vmatpush1.msra.mxu0 %v693
    %1101 = vmatprep.subr.mxu0 %v702
    %1102 = vmatpush1.msra.mxu0 %v701
    %1103 = vmatprep.subr.mxu0 %v710
    %1104 = vmatpush1.msra.mxu0 %v709
    %1105 = vmatprep.subr.mxu0 %v718
    %1106 = vmatpush1.msra.mxu0 %v717
    %1107 = vmatprep.subr.mxu0 %v726
    %1108 = vmatpush1.msra.mxu0 %v725
    %1109 = vmatprep.subr.mxu0 %v734
    %1110 = vmatpush1.msra.mxu0 %v733
    %1111 = vmatprep.subr.mxu0 %v742
    %1112 = vmatpush1.msra.mxu0 %v741
    %1113 = vmatprep.subr.mxu0 %v750
    %1114 = vmatpush1.msra.mxu0 %v749
    %1115 = vmatprep.subr.mxu0 %v758
    %1116 = vmatpush1.msra.mxu0 %v757
    %1117 = vmatprep.subr.mxu0 %v766
    %1118 = vmatpush1.msra.mxu0 %v765
    %1119 = vmatprep.subr.mxu0 %v774
    %1120 = vmatpush1.msra.mxu0 %v773
    %1121 = vmatprep.subr.mxu0 %v782
    %1122 = vmatpush1.msra.mxu0 %v781
    %1123 = vmatprep.subr.mxu0 %v790
    %1124 = vmatpush1.msra.mxu0 %v789
    %1125 = vmatprep.subr.mxu0 %v798
    %1126 = vmatpush1.msra.mxu0 %v797
    %1127 = vmatprep.subr.mxu0 %v806
    %1128 = vmatpush1.msra.mxu0 %v805
    %1129 = vmatprep.subr.mxu0 %v814
    %1130 = vmatpush1.msra.mxu0 %v813
    %1131 = vmatprep.subr.mxu0 %v822
    %1132 = vmatpush1.msra.mxu0 %v821
    %1133 = vmatprep.subr.mxu0 %v830
    %1134 = vmatpush1.msra.mxu0 %v829
    %1135 = vmatprep.subr.mxu0 %v838
    %1136 = vmatpush1.msra.mxu0 %v837
    %1137 = vmatprep.subr.mxu0 %v846
    %1138 = vmatpush1.msra.mxu0 %v845
    %1139 = vmatprep.subr.mxu0 %v854
    %1140 = vmatpush1.msra.mxu0 %v853
    %1141 = vmatprep.subr.mxu0 %v862
    %1142 = vmatpush1.msra.mxu0 %v861
    %1143 = vmatprep.subr.mxu0 %v870
    %1144 = vmatpush1.msra.mxu0 %v869
    %1145 = vmatprep.mubr.f32.mxu0 %v107
    %1146 = vmatmul.mubr.f32.gmra.mrb[0].mxu0 %v106
    %v1147 = vpop.f32.mrb[0].mxu0
    %v1148 = vadd.f32 %v1077, %v1147
    %v1149 = vpop.f32.mrb[0].mxu0
    %v1150 = vadd.f32 %v1079, %v1149
    %1151 = vdwg.mxu0
    %1152 = vmatprep.subr.mxu0 %v878
    %1153 = vmatpush1.msra.mxu0 %v877
    %1154 = vmatprep.subr.mxu0 %v886
    %1155 = vmatpush1.msra.mxu0 %v885
    %1156 = vmatprep.subr.mxu0 0.0
    %1157 = vmatpush1.msra.mxu0 0.0
    %1158 = vmatprep.subr.mxu0 0.0
    %1159 = vmatpush1.msra.mxu0 0.0
    %1160 = vmatprep.subr.mxu0 0.0
    %1161 = vmatpush1.msra.mxu0 0.0
    %1162 = vmatprep.subr.mxu0 0.0
    %1163 = vmatpush1.msra.mxu0 0.0
    %1164 = vmatprep.subr.mxu0 0.0
    %1165 = vmatpush1.msra.mxu0 0.0
    %1166 = vmatprep.subr.mxu0 0.0
    %1167 = vmatpush1.msra.mxu0 0.0
    %1168 = vmatprep.subr.mxu0 0.0
    %1169 = vmatpush1.msra.mxu0 0.0
    %1170 = vmatprep.subr.mxu0 0.0
    %1171 = vmatpush1.msra.mxu0 0.0
    %1172 = vmatprep.subr.mxu0 0.0
    %1173 = vmatpush1.msra.mxu0 0.0
    %1174 = vmatprep.subr.mxu0 0.0
    %1175 = vmatpush1.msra.mxu0 0.0
    %1176 = vmatprep.subr.mxu0 0.0
    %1177 = vmatpush1.msra.mxu0 0.0
    %1178 = vmatprep.subr.mxu0 0.0
    %1179 = vmatpush1.msra.mxu0 0.0
    %1180 = vmatprep.subr.mxu0 0.0
    %1181 = vmatpush1.msra.mxu0 0.0
    %1182 = vmatprep.subr.mxu0 0.0
    %1183 = vmatpush1.msra.mxu0 0.0
    %1184 = vmatprep.subr.mxu0 0.0
    %1185 = vmatpush1.msra.mxu0 0.0
    %1186 = vmatprep.subr.mxu0 0.0
    %1187 = vmatpush1.msra.mxu0 0.0
    %1188 = vmatprep.subr.mxu0 0.0
    %1189 = vmatpush1.msra.mxu0 0.0
    %1190 = vmatprep.subr.mxu0 0.0
    %1191 = vmatpush1.msra.mxu0 0.0
    %1192 = vmatprep.subr.mxu0 0.0
    %1193 = vmatpush1.msra.mxu0 0.0
    %1194 = vmatprep.subr.mxu0 0.0
    %1195 = vmatpush1.msra.mxu0 0.0
    %1196 = vmatprep.subr.mxu0 0.0
    %1197 = vmatpush1.msra.mxu0 0.0
    %1198 = vmatprep.subr.mxu0 0.0
    %1199 = vmatpush1.msra.mxu0 0.0
    %1200 = vmatprep.subr.mxu0 0.0
    %1201 = vmatpush1.msra.mxu0 0.0
    %1202 = vmatprep.subr.mxu0 0.0
    %1203 = vmatpush1.msra.mxu0 0.0
    %1204 = vmatprep.subr.mxu0 0.0
    %1205 = vmatpush1.msra.mxu0 0.0
    %1206 = vmatprep.subr.mxu0 0.0
    %1207 = vmatpush1.msra.mxu0 0.0
    %1208 = vmatprep.subr.mxu0 0.0
    %1209 = vmatpush1.msra.mxu0 0.0
    %1210 = vmatprep.subr.mxu0 0.0
    %1211 = vmatpush1.msra.mxu0 0.0
    %1212 = vmatprep.subr.mxu0 0.0
    %1213 = vmatpush1.msra.mxu0 0.0
    %1214 = vmatprep.subr.mxu0 0.0
    %1215 = vmatpush1.msra.mxu0 0.0
    %1216 = vmatprep.mubr.f32.mxu0 0.0
    %1217 = vmatmul.mubr.f32.gmra.mrb[0].mxu0 %v937
    %v1218 = vpop.f32.mrb[0].mxu0
    %v1219 = vadd.f32 %v1148, %v1218
    %v1220 = vpop.f32.mrb[0].mxu0
    %v1221 = vadd.f32 %v1150, %v1220
    %1222 = vdwg.mxu0
    %1223 = vmatprep.subr.mxu0 %v112
    %1224 = vmatpush1.msra.mxu0 %v111
    %1225 = vmatprep.subr.mxu0 %v120
    %1226 = vmatpush1.msra.mxu0 %v119
    %1227 = vmatprep.subr.mxu0 %v128
    %1228 = vmatpush1.msra.mxu0 %v127
    %1229 = vmatprep.subr.mxu0 %v136
    %1230 = vmatpush1.msra.mxu0 %v135
    %1231 = vmatprep.subr.mxu0 %v144
    %1232 = vmatpush1.msra.mxu0 %v143
    %1233 = vmatprep.subr.mxu0 %v152
    %1234 = vmatpush1.msra.mxu0 %v151
    %1235 = vmatprep.subr.mxu0 %v160
    %1236 = vmatpush1.msra.mxu0 %v159
    %1237 = vmatprep.subr.mxu0 %v168
    %1238 = vmatpush1.msra.mxu0 %v167
    %1239 = vmatprep.subr.mxu0 %v176
    %1240 = vmatpush1.msra.mxu0 %v175
    %1241 = vmatprep.subr.mxu0 %v184
    %1242 = vmatpush1.msra.mxu0 %v183
    %1243 = vmatprep.subr.mxu0 %v192
    %1244 = vmatpush1.msra.mxu0 %v191
    %1245 = vmatprep.subr.mxu0 %v200
    %1246 = vmatpush1.msra.mxu0 %v199
    %1247 = vmatprep.subr.mxu0 %v208
    %1248 = vmatpush1.msra.mxu0 %v207
    %1249 = vmatprep.subr.mxu0 %v216
    %1250 = vmatpush1.msra.mxu0 %v215
    %1251 = vmatprep.subr.mxu0 %v224
    %1252 = vmatpush1.msra.mxu0 %v223
    %1253 = vmatprep.subr.mxu0 %v232
    %1254 = vmatpush1.msra.mxu0 %v231
    %1255 = vmatprep.subr.mxu0 %v240
    %1256 = vmatpush1.msra.mxu0 %v239
    %1257 = vmatprep.subr.mxu0 %v248
    %1258 = vmatpush1.msra.mxu0 %v247
    %1259 = vmatprep.subr.mxu0 %v256
    %1260 = vmatpush1.msra.mxu0 %v255
    %1261 = vmatprep.subr.mxu0 %v264
    %1262 = vmatpush1.msra.mxu0 %v263
    %1263 = vmatprep.subr.mxu0 %v272
    %1264 = vmatpush1.msra.mxu0 %v271
    %1265 = vmatprep.subr.mxu0 %v280
    %1266 = vmatpush1.msra.mxu0 %v279
    %1267 = vmatprep.subr.mxu0 %v288
    %1268 = vmatpush1.msra.mxu0 %v287
    %1269 = vmatprep.subr.mxu0 %v296
    %1270 = vmatpush1.msra.mxu0 %v295
    %1271 = vmatprep.subr.mxu0 %v304
    %1272 = vmatpush1.msra.mxu0 %v303
    %1273 = vmatprep.subr.mxu0 %v312
    %1274 = vmatpush1.msra.mxu0 %v311
    %1275 = vmatprep.subr.mxu0 %v320
    %1276 = vmatpush1.msra.mxu0 %v319
    %1277 = vmatprep.subr.mxu0 %v328
    %1278 = vmatpush1.msra.mxu0 %v327
    %1279 = vmatprep.subr.mxu0 %v336
    %1280 = vmatpush1.msra.mxu0 %v335
    %1281 = vmatprep.subr.mxu0 %v344
    %1282 = vmatpush1.msra.mxu0 %v343
    %1283 = vmatprep.subr.mxu0 %v352
    %1284 = vmatpush1.msra.mxu0 %v351
    %1285 = vmatprep.subr.mxu0 %v360
    %1286 = vmatpush1.msra.mxu0 %v359
    %1287 = vmatprep.mubr.f32.mxu0 %v103
    %1288 = vmatmul.mubr.f32.gmra.mrb[0].mxu0 %v102
    %v1289 = vpop.f32.mrb[0].mxu0
    %v1290 = vadd.f32 %v906, %v1289
    %v1291 = vpop.f32.mrb[0].mxu0
    %v1292 = vadd.f32 %v910, %v1291
    %1293 = vdwg.mxu0
    %1294 = vmatprep.subr.mxu0 %v368
    %1295 = vmatpush1.msra.mxu0 %v367
    %1296 = vmatprep.subr.mxu0 %v376
    %1297 = vmatpush1.msra.mxu0 %v375
    %1298 = vmatprep.subr.mxu0 %v384
    %1299 = vmatpush1.msra.mxu0 %v383
    %1300 = vmatprep.subr.mxu0 %v392
    %1301 = vmatpush1.msra.mxu0 %v391
    %1302 = vmatprep.subr.mxu0 %v400
    %1303 = vmatpush1.msra.mxu0 %v399
    %1304 = vmatprep.subr.mxu0 %v408
    %1305 = vmatpush1.msra.mxu0 %v407
    %1306 = vmatprep.subr.mxu0 %v416
    %1307 = vmatpush1.msra.mxu0 %v415
    %1308 = vmatprep.subr.mxu0 %v424
    %1309 = vmatpush1.msra.mxu0 %v423
    %1310 = vmatprep.subr.mxu0 %v432
    %1311 = vmatpush1.msra.mxu0 %v431
    %1312 = vmatprep.subr.mxu0 %v440
    %1313 = vmatpush1.msra.mxu0 %v439
    %1314 = vmatprep.subr.mxu0 %v448
    %1315 = vmatpush1.msra.mxu0 %v447
    %1316 = vmatprep.subr.mxu0 %v456
    %1317 = vmatpush1.msra.mxu0 %v455
    %1318 = vmatprep.subr.mxu0 %v464
    %1319 = vmatpush1.msra.mxu0 %v463
    %1320 = vmatprep.subr.mxu0 %v472
    %1321 = vmatpush1.msra.mxu0 %v471
    %1322 = vmatprep.subr.mxu0 %v480
    %1323 = vmatpush1.msra.mxu0 %v479
    %1324 = vmatprep.subr.mxu0 %v488
    %1325 = vmatpush1.msra.mxu0 %v487
    %1326 = vmatprep.subr.mxu0 %v496
    %1327 = vmatpush1.msra.mxu0 %v495
    %1328 = vmatprep.subr.mxu0 %v504
    %1329 = vmatpush1.msra.mxu0 %v503
    %1330 = vmatprep.subr.mxu0 %v512
    %1331 = vmatpush1.msra.mxu0 %v511
    %1332 = vmatprep.subr.mxu0 %v520
    %1333 = vmatpush1.msra.mxu0 %v519
    %1334 = vmatprep.subr.mxu0 %v528
    %1335 = vmatpush1.msra.mxu0 %v527
    %1336 = vmatprep.subr.mxu0 %v536
    %1337 = vmatpush1.msra.mxu0 %v535
    %1338 = vmatprep.subr.mxu0 %v544
    %1339 = vmatpush1.msra.mxu0 %v543
    %1340 = vmatprep.subr.mxu0 %v552
    %1341 = vmatpush1.msra.mxu0 %v551
    %1342 = vmatprep.subr.mxu0 %v560
    %1343 = vmatpush1.msra.mxu0 %v559
    %1344 = vmatprep.subr.mxu0 %v568
    %1345 = vmatpush1.msra.mxu0 %v567
    %1346 = vmatprep.subr.mxu0 %v576
    %1347 = vmatpush1.msra.mxu0 %v575
    %1348 = vmatprep.subr.mxu0 %v584
    %1349 = vmatpush1.msra.mxu0 %v583
    %1350 = vmatprep.subr.mxu0 %v592
    %1351 = vmatpush1.msra.mxu0 %v591
    %1352 = vmatprep.subr.mxu0 %v600
    %1353 = vmatpush1.msra.mxu0 %v599
    %1354 = vmatprep.subr.mxu0 %v608
    %1355 = vmatpush1.msra.mxu0 %v607
    %1356 = vmatprep.subr.mxu0 %v616
    %1357 = vmatpush1.msra.mxu0 %v615
    %1358 = vmatprep.mubr.f32.mxu0 %v105
    %1359 = vmatmul.mubr.f32.gmra.mrb[0].mxu0 %v104
    %v1360 = vpop.f32.mrb[0].mxu0
    %v1361 = vadd.f32 %v1290, %v1360
    %v1362 = vpop.f32.mrb[0].mxu0
    %v1363 = vadd.f32 %v1292, %v1362
    %1364 = vdwg.mxu0
    %1365 = vmatprep.subr.mxu0 %v624
    %1366 = vmatpush1.msra.mxu0 %v623
    %1367 = vmatprep.subr.mxu0 %v632
    %1368 = vmatpush1.msra.mxu0 %v631
    %1369 = vmatprep.subr.mxu0 %v640
    %1370 = vmatpush1.msra.mxu0 %v639
    %1371 = vmatprep.subr.mxu0 %v648
    %1372 = vmatpush1.msra.mxu0 %v647
    %1373 = vmatprep.subr.mxu0 %v656
    %1374 = vmatpush1.msra.mxu0 %v655
    %1375 = vmatprep.subr.mxu0 %v664
    %1376 = vmatpush1.msra.mxu0 %v663
    %1377 = vmatprep.subr.mxu0 %v672
    %1378 = vmatpush1.msra.mxu0 %v671
    %1379 = vmatprep.subr.mxu0 %v680
    %1380 = vmatpush1.msra.mxu0 %v679
    %1381 = vmatprep.subr.mxu0 %v688
    %1382 = vmatpush1.msra.mxu0 %v687
    %1383 = vmatprep.subr.mxu0 %v696
    %1384 = vmatpush1.msra.mxu0 %v695
    %1385 = vmatprep.subr.mxu0 %v704
    %1386 = vmatpush1.msra.mxu0 %v703
    %1387 = vmatprep.subr.mxu0 %v712
    %1388 = vmatpush1.msra.mxu0 %v711
    %1389 = vmatprep.subr.mxu0 %v720
    %1390 = vmatpush1.msra.mxu0 %v719
    %1391 = vmatprep.subr.mxu0 %v728
    %1392 = vmatpush1.msra.mxu0 %v727
    %1393 = vmatprep.subr.mxu0 %v736
    %1394 = vmatpush1.msra.mxu0 %v735
    %1395 = vmatprep.subr.mxu0 %v744
    %1396 = vmatpush1.msra.mxu0 %v743
    %1397 = vmatprep.subr.mxu0 %v752
    %1398 = vmatpush1.msra.mxu0 %v751
    %1399 = vmatprep.subr.mxu0 %v760
    %1400 = vmatpush1.msra.mxu0 %v759
    %1401 = vmatprep.subr.mxu0 %v768
    %1402 = vmatpush1.msra.mxu0 %v767
    %1403 = vmatprep.subr.mxu0 %v776
    %1404 = vmatpush1.msra.mxu0 %v775
    %1405 = vmatprep.subr.mxu0 %v784
    %1406 = vmatpush1.msra.mxu0 %v783
    %1407 = vmatprep.subr.mxu0 %v792
    %1408 = vmatpush1.msra.mxu0 %v791
    %1409 = vmatprep.subr.mxu0 %v800
    %1410 = vmatpush1.msra.mxu0 %v799
    %1411 = vmatprep.subr.mxu0 %v808
    %1412 = vmatpush1.msra.mxu0 %v807
    %1413 = vmatprep.subr.mxu0 %v816
    %1414 = vmatpush1.msra.mxu0 %v815
    %1415 = vmatprep.subr.mxu0 %v824
    %1416 = vmatpush1.msra.mxu0 %v823
    %1417 = vmatprep.subr.mxu0 %v832
    %1418 = vmatpush1.msra.mxu0 %v831
    %1419 = vmatprep.subr.mxu0 %v840
    %1420 = vmatpush1.msra.mxu0 %v839
    %1421 = vmatprep.subr.mxu0 %v848
    %1422 = vmatpush1.msra.mxu0 %v847
    %1423 = vmatprep.subr.mxu0 %v856
    %1424 = vmatpush1.msra.mxu0 %v855
    %1425 = vmatprep.subr.mxu0 %v864
    %1426 = vmatpush1.msra.mxu0 %v863
    %1427 = vmatprep.subr.mxu0 %v872
    %1428 = vmatpush1.msra.mxu0 %v871
    %1429 = vmatprep.mubr.f32.mxu0 %v107
    %1430 = vmatmul.mubr.f32.gmra.mrb[0].mxu0 %v106
    %v1431 = vpop.f32.mrb[0].mxu0
    %v1432 = vadd.f32 %v1361, %v1431
    %v1433 = vpop.f32.mrb[0].mxu0
    %v1434 = vadd.f32 %v1363, %v1433
    %1435 = vdwg.mxu0
    %1436 = vmatprep.subr.mxu0 %v880
    %1437 = vmatpush1.msra.mxu0 %v879
    %1438 = vmatprep.subr.mxu0 %v888
    %1439 = vmatpush1.msra.mxu0 %v887
    %1440 = vmatprep.subr.mxu0 0.0
    %1441 = vmatpush1.msra.mxu0 0.0
    %1442 = vmatprep.subr.mxu0 0.0
    %1443 = vmatpush1.msra.mxu0 0.0
    %1444 = vmatprep.subr.mxu0 0.0
    %1445 = vmatpush1.msra.mxu0 0.0
    %1446 = vmatprep.subr.mxu0 0.0
    %1447 = vmatpush1.msra.mxu0 0.0
    %1448 = vmatprep.subr.mxu0 0.0
    %1449 = vmatpush1.msra.mxu0 0.0
    %1450 = vmatprep.subr.mxu0 0.0
    %1451 = vmatpush1.msra.mxu0 0.0
    %1452 = vmatprep.subr.mxu0 0.0
    %1453 = vmatpush1.msra.mxu0 0.0
    %1454 = vmatprep.subr.mxu0 0.0
    %1455 = vmatpush1.msra.mxu0 0.0
    %1456 = vmatprep.subr.mxu0 0.0
    %1457 = vmatpush1.msra.mxu0 0.0
    %1458 = vmatprep.subr.mxu0 0.0
    %1459 = vmatpush1.msra.mxu0 0.0
    %1460 = vmatprep.subr.mxu0 0.0
    %1461 = vmatpush1.msra.mxu0 0.0
    %1462 = vmatprep.subr.mxu0 0.0
    %1463 = vmatpush1.msra.mxu0 0.0
    %1464 = vmatprep.subr.mxu0 0.0
    %1465 = vmatpush1.msra.mxu0 0.0
    %1466 = vmatprep.subr.mxu0 0.0
    %1467 = vmatpush1.msra.mxu0 0.0
    %1468 = vmatprep.subr.mxu0 0.0
    %1469 = vmatpush1.msra.mxu0 0.0
    %1470 = vmatprep.subr.mxu0 0.0
    %1471 = vmatpush1.msra.mxu0 0.0
    %1472 = vmatprep.subr.mxu0 0.0
    %1473 = vmatpush1.msra.mxu0 0.0
    %1474 = vmatprep.subr.mxu0 0.0
    %1475 = vmatpush1.msra.mxu0 0.0
    %1476 = vmatprep.subr.mxu0 0.0
    %1477 = vmatpush1.msra.mxu0 0.0
    %1478 = vmatprep.subr.mxu0 0.0
    %1479 = vmatpush1.msra.mxu0 0.0
    %1480 = vmatprep.subr.mxu0 0.0
    %1481 = vmatpush1.msra.mxu0 0.0
    %1482 = vmatprep.subr.mxu0 0.0
    %1483 = vmatpush1.msra.mxu0 0.0
    %1484 = vmatprep.subr.mxu0 0.0
    %1485 = vmatpush1.msra.mxu0 0.0
    %1486 = vmatprep.subr.mxu0 0.0
    %1487 = vmatpush1.msra.mxu0 0.0
    %1488 = vmatprep.subr.mxu0 0.0
    %1489 = vmatpush1.msra.mxu0 0.0
    %1490 = vmatprep.subr.mxu0 0.0
    %1491 = vmatpush1.msra.mxu0 0.0
    %1492 = vmatprep.subr.mxu0 0.0
    %1493 = vmatpush1.msra.mxu0 0.0
    %1494 = vmatprep.subr.mxu0 0.0
    %1495 = vmatpush1.msra.mxu0 0.0
    %1496 = vmatprep.subr.mxu0 0.0
    %1497 = vmatpush1.msra.mxu0 0.0
    %1498 = vmatprep.subr.mxu0 0.0
    %1499 = vmatpush1.msra.mxu0 0.0
    %1500 = vmatprep.mubr.f32.mxu0 0.0
    %1501 = vmatmul.mubr.f32.gmra.mrb[0].mxu0 %v937
    %v1502 = vpop.f32.mrb[0].mxu0
    %v1503 = vadd.f32 %v1432, %v1502
    %v1504 = vpop.f32.mrb[0].mxu0
    %v1505 = vadd.f32 %v1434, %v1504
    %1506 = vdwg.mxu0
    %1507 = vmatprep.subr.mxu0 %v114
    %1508 = vmatpush1.msra.mxu0 %v113
    %1509 = vmatprep.subr.mxu0 %v122
    %1510 = vmatpush1.msra.mxu0 %v121
    %1511 = vmatprep.subr.mxu0 %v130
    %1512 = vmatpush1.msra.mxu0 %v129
    %1513 = vmatprep.subr.mxu0 %v138
    %1514 = vmatpush1.msra.mxu0 %v137
    %1515 = vmatprep.subr.mxu0 %v146
    %1516 = vmatpush1.msra.mxu0 %v145
    %1517 = vmatprep.subr.mxu0 %v154
    %1518 = vmatpush1.msra.mxu0 %v153
    %1519 = vmatprep.subr.mxu0 %v162
    %1520 = vmatpush1.msra.mxu0 %v161
    %1521 = vmatprep.subr.mxu0 %v170
    %1522 = vmatpush1.msra.mxu0 %v169
    %1523 = vmatprep.subr.mxu0 %v178
    %1524 = vmatpush1.msra.mxu0 %v177
    %1525 = vmatprep.subr.mxu0 %v186
    %1526 = vmatpush1.msra.mxu0 %v185
    %1527 = vmatprep.subr.mxu0 %v194
    %1528 = vmatpush1.msra.mxu0 %v193
    %1529 = vmatprep.subr.mxu0 %v202
    %1530 = vmatpush1.msra.mxu0 %v201
    %1531 = vmatprep.subr.mxu0 %v210
    %1532 = vmatpush1.msra.mxu0 %v209
    %1533 = vmatprep.subr.mxu0 %v218
    %1534 = vmatpush1.msra.mxu0 %v217
    %1535 = vmatprep.subr.mxu0 %v226
    %1536 = vmatpush1.msra.mxu0 %v225
    %1537 = vmatprep.subr.mxu0 %v234
    %1538 = vmatpush1.msra.mxu0 %v233
    %1539 = vmatprep.subr.mxu0 %v242
    %1540 = vmatpush1.msra.mxu0 %v241
    %1541 = vmatprep.subr.mxu0 %v250
    %1542 = vmatpush1.msra.mxu0 %v249
    %1543 = vmatprep.subr.mxu0 %v258
    %1544 = vmatpush1.msra.mxu0 %v257
    %1545 = vmatprep.subr.mxu0 %v266
    %1546 = vmatpush1.msra.mxu0 %v265
    %1547 = vmatprep.subr.mxu0 %v274
    %1548 = vmatpush1.msra.mxu0 %v273
    %1549 = vmatprep.subr.mxu0 %v282
    %1550 = vmatpush1.msra.mxu0 %v281
    %1551 = vmatprep.subr.mxu0 %v290
    %1552 = vmatpush1.msra.mxu0 %v289
    %1553 = vmatprep.subr.mxu0 %v298
    %1554 = vmatpush1.msra.mxu0 %v297
    %1555 = vmatprep.subr.mxu0 %v306
    %1556 = vmatpush1.msra.mxu0 %v305
    %1557 = vmatprep.subr.mxu0 %v314
    %1558 = vmatpush1.msra.mxu0 %v313
    %1559 = vmatprep.subr.mxu0 %v322
    %1560 = vmatpush1.msra.mxu0 %v321
    %1561 = vmatprep.subr.mxu0 %v330
    %1562 = vmatpush1.msra.mxu0 %v329
    %1563 = vmatprep.subr.mxu0 %v338
    %1564 = vmatpush1.msra.mxu0 %v337
    %1565 = vmatprep.subr.mxu0 %v346
    %1566 = vmatpush1.msra.mxu0 %v345
    %1567 = vmatprep.subr.mxu0 %v354
    %1568 = vmatpush1.msra.mxu0 %v353
    %1569 = vmatprep.subr.mxu0 %v362
    %1570 = vmatpush1.msra.mxu0 %v361
    %1571 = vmatprep.mubr.f32.mxu0 %v103
    %1572 = vmatmul.mubr.f32.gmra.mrb[0].mxu0 %v102
    %v1573 = vpop.f32.mrb[0].mxu0
    %v1574 = vadd.f32 %v914, %v1573
    %v1575 = vpop.f32.mrb[0].mxu0
    %v1576 = vadd.f32 %v918, %v1575
    %1577 = vdwg.mxu0
    %1578 = vmatprep.subr.mxu0 %v370
    %1579 = vmatpush1.msra.mxu0 %v369
    %1580 = vmatprep.subr.mxu0 %v378
    %1581 = vmatpush1.msra.mxu0 %v377
    %1582 = vmatprep.subr.mxu0 %v386
    %1583 = vmatpush1.msra.mxu0 %v385
    %1584 = vmatprep.subr.mxu0 %v394
    %1585 = vmatpush1.msra.mxu0 %v393
    %1586 = vmatprep.subr.mxu0 %v402
    %1587 = vmatpush1.msra.mxu0 %v401
    %1588 = vmatprep.subr.mxu0 %v410
    %1589 = vmatpush1.msra.mxu0 %v409
    %1590 = vmatprep.subr.mxu0 %v418
    %1591 = vmatpush1.msra.mxu0 %v417
    %1592 = vmatprep.subr.mxu0 %v426
    %1593 = vmatpush1.msra.mxu0 %v425
    %1594 = vmatprep.subr.mxu0 %v434
    %1595 = vmatpush1.msra.mxu0 %v433
    %1596 = vmatprep.subr.mxu0 %v442
    %1597 = vmatpush1.msra.mxu0 %v441
    %1598 = vmatprep.subr.mxu0 %v450
    %1599 = vmatpush1.msra.mxu0 %v449
    %1600 = vmatprep.subr.mxu0 %v458
    %1601 = vmatpush1.msra.mxu0 %v457
    %1602 = vmatprep.subr.mxu0 %v466
    %1603 = vmatpush1.msra.mxu0 %v465
    %1604 = vmatprep.subr.mxu0 %v474
    %1605 = vmatpush1.msra.mxu0 %v473
    %1606 = vmatprep.subr.mxu0 %v482
    %1607 = vmatpush1.msra.mxu0 %v481
    %1608 = vmatprep.subr.mxu0 %v490
    %1609 = vmatpush1.msra.mxu0 %v489
    %1610 = vmatprep.subr.mxu0 %v498
    %1611 = vmatpush1.msra.mxu0 %v497
    %1612 = vmatprep.subr.mxu0 %v506
    %1613 = vmatpush1.msra.mxu0 %v505
    %1614 = vmatprep.subr.mxu0 %v514
    %1615 = vmatpush1.msra.mxu0 %v513
    %1616 = vmatprep.subr.mxu0 %v522
    %1617 = vmatpush1.msra.mxu0 %v521
    %1618 = vmatprep.subr.mxu0 %v530
    %1619 = vmatpush1.msra.mxu0 %v529
    %1620 = vmatprep.subr.mxu0 %v538
    %1621 = vmatpush1.msra.mxu0 %v537
    %1622 = vmatprep.subr.mxu0 %v546
    %1623 = vmatpush1.msra.mxu0 %v545
    %1624 = vmatprep.subr.mxu0 %v554
    %1625 = vmatpush1.msra.mxu0 %v553
    %1626 = vmatprep.subr.mxu0 %v562
    %1627 = vmatpush1.msra.mxu0 %v561
    %1628 = vmatprep.subr.mxu0 %v570
    %1629 = vmatpush1.msra.mxu0 %v569
    %1630 = vmatprep.subr.mxu0 %v578
    %1631 = vmatpush1.msra.mxu0 %v577
    %1632 = vmatprep.subr.mxu0 %v586
    %1633 = vmatpush1.msra.mxu0 %v585
    %1634 = vmatprep.subr.mxu0 %v594
    %1635 = vmatpush1.msra.mxu0 %v593
    %1636 = vmatprep.subr.mxu0 %v602
    %1637 = vmatpush1.msra.mxu0 %v601
    %1638 = vmatprep.subr.mxu0 %v610
    %1639 = vmatpush1.msra.mxu0 %v609
    %1640 = vmatprep.subr.mxu0 %v618
    %1641 = vmatpush1.msra.mxu0 %v617
    %1642 = vmatprep.mubr.f32.mxu0 %v105
    %1643 = vmatmul.mubr.f32.gmra.mrb[0].mxu0 %v104
    %v1644 = vpop.f32.mrb[0].mxu0
    %v1645 = vadd.f32 %v1574, %v1644
    %v1646 = vpop.f32.mrb[0].mxu0
    %v1647 = vadd.f32 %v1576, %v1646
    %1648 = vdwg.mxu0
    %1649 = vmatprep.subr.mxu0 %v626
    %1650 = vmatpush1.msra.mxu0 %v625
    %1651 = vmatprep.subr.mxu0 %v634
    %1652 = vmatpush1.msra.mxu0 %v633
    %1653 = vmatprep.subr.mxu0 %v642
    %1654 = vmatpush1.msra.mxu0 %v641
    %1655 = vmatprep.subr.mxu0 %v650
    %1656 = vmatpush1.msra.mxu0 %v649
    %1657 = vmatprep.subr.mxu0 %v658
    %1658 = vmatpush1.msra.mxu0 %v657
    %1659 = vmatprep.subr.mxu0 %v666
    %1660 = vmatpush1.msra.mxu0 %v665
    %1661 = vmatprep.subr.mxu0 %v674
    %1662 = vmatpush1.msra.mxu0 %v673
    %1663 = vmatprep.subr.mxu0 %v682
    %1664 = vmatpush1.msra.mxu0 %v681
    %1665 = vmatprep.subr.mxu0 %v690
    %1666 = vmatpush1.msra.mxu0 %v689
    %1667 = vmatprep.subr.mxu0 %v698
    %1668 = vmatpush1.msra.mxu0 %v697
    %1669 = vmatprep.subr.mxu0 %v706
    %1670 = vmatpush1.msra.mxu0 %v705
    %1671 = vmatprep.subr.mxu0 %v714
    %1672 = vmatpush1.msra.mxu0 %v713
    %1673 = vmatprep.subr.mxu0 %v722
    %1674 = vmatpush1.msra.mxu0 %v721
    %1675 = vmatprep.subr.mxu0 %v730
    %1676 = vmatpush1.msra.mxu0 %v729
    %1677 = vmatprep.subr.mxu0 %v738
    %1678 = vmatpush1.msra.mxu0 %v737
    %1679 = vmatprep.subr.mxu0 %v746
    %1680 = vmatpush1.msra.mxu0 %v745
    %1681 = vmatprep.subr.mxu0 %v754
    %1682 = vmatpush1.msra.mxu0 %v753
    %1683 = vmatprep.subr.mxu0 %v762
    %1684 = vmatpush1.msra.mxu0 %v761
    %1685 = vmatprep.subr.mxu0 %v770
    %1686 = vmatpush1.msra.mxu0 %v769
    %1687 = vmatprep.subr.mxu0 %v778
    %1688 = vmatpush1.msra.mxu0 %v777
    %1689 = vmatprep.subr.mxu0 %v786
    %1690 = vmatpush1.msra.mxu0 %v785
    %1691 = vmatprep.subr.mxu0 %v794
    %1692 = vmatpush1.msra.mxu0 %v793
    %1693 = vmatprep.subr.mxu0 %v802
    %1694 = vmatpush1.msra.mxu0 %v801
    %1695 = vmatprep.subr.mxu0 %v810
    %1696 = vmatpush1.msra.mxu0 %v809
    %1697 = vmatprep.subr.mxu0 %v818
    %1698 = vmatpush1.msra.mxu0 %v817
    %1699 = vmatprep.subr.mxu0 %v826
    %1700 = vmatpush1.msra.mxu0 %v825
    %1701 = vmatprep.subr.mxu0 %v834
    %1702 = vmatpush1.msra.mxu0 %v833
    %1703 = vmatprep.subr.mxu0 %v842
    %1704 = vmatpush1.msra.mxu0 %v841
    %1705 = vmatprep.subr.mxu0 %v850
    %1706 = vmatpush1.msra.mxu0 %v849
    %1707 = vmatprep.subr.mxu0 %v858
    %1708 = vmatpush1.msra.mxu0 %v857
    %1709 = vmatprep.subr.mxu0 %v866
    %1710 = vmatpush1.msra.mxu0 %v865
    %1711 = vmatprep.subr.mxu0 %v874
    %1712 = vmatpush1.msra.mxu0 %v873
    %1713 = vmatprep.mubr.f32.mxu0 %v107
    %1714 = vmatmul.mubr.f32.gmra.mrb[0].mxu0 %v106
    %v1715 = vpop.f32.mrb[0].mxu0
    %v1716 = vadd.f32 %v1645, %v1715
    %v1717 = vpop.f32.mrb[0].mxu0
    %v1718 = vadd.f32 %v1647, %v1717
    %1719 = vdwg.mxu0
    %1720 = vmatprep.subr.mxu0 %v882
    %1721 = vmatpush1.msra.mxu0 %v881
    %1722 = vmatprep.subr.mxu0 %v890
    %1723 = vmatpush1.msra.mxu0 %v889
    %1724 = vmatprep.subr.mxu0 0.0
    %1725 = vmatpush1.msra.mxu0 0.0
    %1726 = vmatprep.subr.mxu0 0.0
    %1727 = vmatpush1.msra.mxu0 0.0
    %1728 = vmatprep.subr.mxu0 0.0
    %1729 = vmatpush1.msra.mxu0 0.0
    %1730 = vmatprep.subr.mxu0 0.0
    %1731 = vmatpush1.msra.mxu0 0.0
    %1732 = vmatprep.subr.mxu0 0.0
    %1733 = vmatpush1.msra.mxu0 0.0
    %1734 = vmatprep.subr.mxu0 0.0
    %1735 = vmatpush1.msra.mxu0 0.0
    %1736 = vmatprep.subr.mxu0 0.0
    %1737 = vmatpush1.msra.mxu0 0.0
    %1738 = vmatprep.subr.mxu0 0.0
    %1739 = vmatpush1.msra.mxu0 0.0
    %1740 = vmatprep.subr.mxu0 0.0
    %1741 = vmatpush1.msra.mxu0 0.0
    %1742 = vmatprep.subr.mxu0 0.0
    %1743 = vmatpush1.msra.mxu0 0.0
    %1744 = vmatprep.subr.mxu0 0.0
    %1745 = vmatpush1.msra.mxu0 0.0
    %1746 = vmatprep.subr.mxu0 0.0
    %1747 = vmatpush1.msra.mxu0 0.0
    %1748 = vmatprep.subr.mxu0 0.0
    %1749 = vmatpush1.msra.mxu0 0.0
    %1750 = vmatprep.subr.mxu0 0.0
    %1751 = vmatpush1.msra.mxu0 0.0
    %1752 = vmatprep.subr.mxu0 0.0
    %1753 = vmatpush1.msra.mxu0 0.0
    %1754 = vmatprep.subr.mxu0 0.0
    %1755 = vmatpush1.msra.mxu0 0.0
    %1756 = vmatprep.subr.mxu0 0.0
    %1757 = vmatpush1.msra.mxu0 0.0
    %1758 = vmatprep.subr.mxu0 0.0
    %1759 = vmatpush1.msra.mxu0 0.0
    %1760 = vmatprep.subr.mxu0 0.0
    %1761 = vmatpush1.msra.mxu0 0.0
    %1762 = vmatprep.subr.mxu0 0.0
    %1763 = vmatpush1.msra.mxu0 0.0
    %1764 = vmatprep.subr.mxu0 0.0
    %1765 = vmatpush1.msra.mxu0 0.0
    %1766 = vmatprep.subr.mxu0 0.0
    %1767 = vmatpush1.msra.mxu0 0.0
    %1768 = vmatprep.subr.mxu0 0.0
    %1769 = vmatpush1.msra.mxu0 0.0
    %1770 = vmatprep.subr.mxu0 0.0
    %1771 = vmatpush1.msra.mxu0 0.0
    %1772 = vmatprep.subr.mxu0 0.0
    %1773 = vmatpush1.msra.mxu0 0.0
    %1774 = vmatprep.subr.mxu0 0.0
    %1775 = vmatpush1.msra.mxu0 0.0
    %1776 = vmatprep.subr.mxu0 0.0
    %1777 = vmatpush1.msra.mxu0 0.0
    %1778 = vmatprep.subr.mxu0 0.0
    %1779 = vmatpush1.msra.mxu0 0.0
    %1780 = vmatprep.subr.mxu0 0.0
    %1781 = vmatpush1.msra.mxu0 0.0
    %1782 = vmatprep.subr.mxu0 0.0
    %1783 = vmatpush1.msra.mxu0 0.0
    %1784 = vmatprep.mubr.f32.mxu0 0.0
    %1785 = vmatmul.mubr.f32.gmra.mrb[0].mxu0 %v937
    %v1786 = vpop.f32.mrb[0].mxu0
    %v1787 = vadd.f32 %v1716, %v1786
    %v1788 = vpop.f32.mrb[0].mxu0
    %v1789 = vadd.f32 %v1718, %v1788
    %1790 = vdwg.mxu0
    %1791 = vmatprep.subr.mxu0 %v116
    %1792 = vmatpush1.msra.mxu0 %v115
    %1793 = vmatprep.subr.mxu0 %v124
    %1794 = vmatpush1.msra.mxu0 %v123
    %1795 = vmatprep.subr.mxu0 %v132
    %1796 = vmatpush1.msra.mxu0 %v131
    %1797 = vmatprep.subr.mxu0 %v140
    %1798 = vmatpush1.msra.mxu0 %v139
    %1799 = vmatprep.subr.mxu0 %v148
    %1800 = vmatpush1.msra.mxu0 %v147
    %1801 = vmatprep.subr.mxu0 %v156
    %1802 = vmatpush1.msra.mxu0 %v155
    %1803 = vmatprep.subr.mxu0 %v164
    %1804 = vmatpush1.msra.mxu0 %v163
    %1805 = vmatprep.subr.mxu0 %v172
    %1806 = vmatpush1.msra.mxu0 %v171
    %1807 = vmatprep.subr.mxu0 %v180
    %1808 = vmatpush1.msra.mxu0 %v179
    %1809 = vmatprep.subr.mxu0 %v188
    %1810 = vmatpush1.msra.mxu0 %v187
    %1811 = vmatprep.subr.mxu0 %v196
    %1812 = vmatpush1.msra.mxu0 %v195
    %1813 = vmatprep.subr.mxu0 %v204
    %1814 = vmatpush1.msra.mxu0 %v203
    %1815 = vmatprep.subr.mxu0 %v212
    %1816 = vmatpush1.msra.mxu0 %v211
    %1817 = vmatprep.subr.mxu0 %v220
    %1818 = vmatpush1.msra.mxu0 %v219
    %1819 = vmatprep.subr.mxu0 %v228
    %1820 = vmatpush1.msra.mxu0 %v227
    %1821 = vmatprep.subr.mxu0 %v236
    %1822 = vmatpush1.msra.mxu0 %v235
    %1823 = vmatprep.subr.mxu0 %v244
    %1824 = vmatpush1.msra.mxu0 %v243
    %1825 = vmatprep.subr.mxu0 %v252
    %1826 = vmatpush1.msra.mxu0 %v251
    %1827 = vmatprep.subr.mxu0 %v260
    %1828 = vmatpush1.msra.mxu0 %v259
    %1829 = vmatprep.subr.mxu0 %v268
    %1830 = vmatpush1.msra.mxu0 %v267
    %1831 = vmatprep.subr.mxu0 %v276
    %1832 = vmatpush1.msra.mxu0 %v275
    %1833 = vmatprep.subr.mxu0 %v284
    %1834 = vmatpush1.msra.mxu0 %v283
    %1835 = vmatprep.subr.mxu0 %v292
    %1836 = vmatpush1.msra.mxu0 %v291
    %1837 = vmatprep.subr.mxu0 %v300
    %1838 = vmatpush1.msra.mxu0 %v299
    %1839 = vmatprep.subr.mxu0 %v308
    %1840 = vmatpush1.msra.mxu0 %v307
    %1841 = vmatprep.subr.mxu0 %v316
    %1842 = vmatpush1.msra.mxu0 %v315
    %1843 = vmatprep.subr.mxu0 %v324
    %1844 = vmatpush1.msra.mxu0 %v323
    %1845 = vmatprep.subr.mxu0 %v332
    %1846 = vmatpush1.msra.mxu0 %v331
    %1847 = vmatprep.subr.mxu0 %v340
    %1848 = vmatpush1.msra.mxu0 %v339
    %1849 = vmatprep.subr.mxu0 %v348
    %1850 = vmatpush1.msra.mxu0 %v347
    %1851 = vmatprep.subr.mxu0 %v356
    %1852 = vmatpush1.msra.mxu0 %v355
    %1853 = vmatprep.subr.mxu0 %v364
    %1854 = vmatpush1.msra.mxu0 %v363
    %1855 = vmatprep.mubr.f32.mxu0 %v103
    %1856 = vmatmul.mubr.f32.gmra.mrb[0].mxu0 %v102
    %v1857 = vpop.f32.mrb[0].mxu0
    %v1858 = vadd.f32 %v922, %v1857
    %v1859 = vpop.f32.mrb[0].mxu0
    %v1860 = vadd.f32 %v926, %v1859
    %1861 = vdwg.mxu0
    %1862 = vmatprep.subr.mxu0 %v372
    %1863 = vmatpush1.msra.mxu0 %v371
    %1864 = vmatprep.subr.mxu0 %v380
    %1865 = vmatpush1.msra.mxu0 %v379
    %1866 = vmatprep.subr.mxu0 %v388
    %1867 = vmatpush1.msra.mxu0 %v387
    %1868 = vmatprep.subr.mxu0 %v396
    %1869 = vmatpush1.msra.mxu0 %v395
    %1870 = vmatprep.subr.mxu0 %v404
    %1871 = vmatpush1.msra.mxu0 %v403
    %1872 = vmatprep.subr.mxu0 %v412
    %1873 = vmatpush1.msra.mxu0 %v411
    %1874 = vmatprep.subr.mxu0 %v420
    %1875 = vmatpush1.msra.mxu0 %v419
    %1876 = vmatprep.subr.mxu0 %v428
    %1877 = vmatpush1.msra.mxu0 %v427
    %1878 = vmatprep.subr.mxu0 %v436
    %1879 = vmatpush1.msra.mxu0 %v435
    %1880 = vmatprep.subr.mxu0 %v444
    %1881 = vmatpush1.msra.mxu0 %v443
    %1882 = vmatprep.subr.mxu0 %v452
    %1883 = vmatpush1.msra.mxu0 %v451
    %1884 = vmatprep.subr.mxu0 %v460
    %1885 = vmatpush1.msra.mxu0 %v459
    %1886 = vmatprep.subr.mxu0 %v468
    %1887 = vmatpush1.msra.mxu0 %v467
    %1888 = vmatprep.subr.mxu0 %v476
    %1889 = vmatpush1.msra.mxu0 %v475
    %1890 = vmatprep.subr.mxu0 %v484
    %1891 = vmatpush1.msra.mxu0 %v483
    %1892 = vmatprep.subr.mxu0 %v492
    %1893 = vmatpush1.msra.mxu0 %v491
    %1894 = vmatprep.subr.mxu0 %v500
    %1895 = vmatpush1.msra.mxu0 %v499
    %1896 = vmatprep.subr.mxu0 %v508
    %1897 = vmatpush1.msra.mxu0 %v507
    %1898 = vmatprep.subr.mxu0 %v516
    %1899 = vmatpush1.msra.mxu0 %v515
    %1900 = vmatprep.subr.mxu0 %v524
    %1901 = vmatpush1.msra.mxu0 %v523
    %1902 = vmatprep.subr.mxu0 %v532
    %1903 = vmatpush1.msra.mxu0 %v531
    %1904 = vmatprep.subr.mxu0 %v540
    %1905 = vmatpush1.msra.mxu0 %v539
    %1906 = vmatprep.subr.mxu0 %v548
    %1907 = vmatpush1.msra.mxu0 %v547
    %1908 = vmatprep.subr.mxu0 %v556
    %1909 = vmatpush1.msra.mxu0 %v555
    %1910 = vmatprep.subr.mxu0 %v564
    %1911 = vmatpush1.msra.mxu0 %v563
    %1912 = vmatprep.subr.mxu0 %v572
    %1913 = vmatpush1.msra.mxu0 %v571
    %1914 = vmatprep.subr.mxu0 %v580
    %1915 = vmatpush1.msra.mxu0 %v579
    %1916 = vmatprep.subr.mxu0 %v588
    %1917 = vmatpush1.msra.mxu0 %v587
    %1918 = vmatprep.subr.mxu0 %v596
    %1919 = vmatpush1.msra.mxu0 %v595
    %1920 = vmatprep.subr.mxu0 %v604
    %1921 = vmatpush1.msra.mxu0 %v603
    %1922 = vmatprep.subr.mxu0 %v612
    %1923 = vmatpush1.msra.mxu0 %v611
    %1924 = vmatprep.subr.mxu0 %v620
    %1925 = vmatpush1.msra.mxu0 %v619
    %1926 = vmatprep.mubr.f32.mxu0 %v105
    %1927 = vmatmul.mubr.f32.gmra.mrb[0].mxu0 %v104
    %v1928 = vpop.f32.mrb[0].mxu0
    %v1929 = vadd.f32 %v1858, %v1928
    %v1930 = vpop.f32.mrb[0].mxu0
    %v1931 = vadd.f32 %v1860, %v1930
    %1932 = vdwg.mxu0
    %1933 = vmatprep.subr.mxu0 %v628
    %1934 = vmatpush1.msra.mxu0 %v627
    %1935 = vmatprep.subr.mxu0 %v636
    %1936 = vmatpush1.msra.mxu0 %v635
    %1937 = vmatprep.subr.mxu0 %v644
    %1938 = vmatpush1.msra.mxu0 %v643
    %1939 = vmatprep.subr.mxu0 %v652
    %1940 = vmatpush1.msra.mxu0 %v651
    %1941 = vmatprep.subr.mxu0 %v660
    %1942 = vmatpush1.msra.mxu0 %v659
    %1943 = vmatprep.subr.mxu0 %v668
    %1944 = vmatpush1.msra.mxu0 %v667
    %1945 = vmatprep.subr.mxu0 %v676
    %1946 = vmatpush1.msra.mxu0 %v675
    %1947 = vmatprep.subr.mxu0 %v684
    %1948 = vmatpush1.msra.mxu0 %v683
    %1949 = vmatprep.subr.mxu0 %v692
    %1950 = vmatpush1.msra.mxu0 %v691
    %1951 = vmatprep.subr.mxu0 %v700
    %1952 = vmatpush1.msra.mxu0 %v699
    %1953 = vmatprep.subr.mxu0 %v708
    %1954 = vmatpush1.msra.mxu0 %v707
    %1955 = vmatprep.subr.mxu0 %v716
    %1956 = vmatpush1.msra.mxu0 %v715
    %1957 = vmatprep.subr.mxu0 %v724
    %1958 = vmatpush1.msra.mxu0 %v723
    %1959 = vmatprep.subr.mxu0 %v732
    %1960 = vmatpush1.msra.mxu0 %v731
    %1961 = vmatprep.subr.mxu0 %v740
    %1962 = vmatpush1.msra.mxu0 %v739
    %1963 = vmatprep.subr.mxu0 %v748
    %1964 = vmatpush1.msra.mxu0 %v747
    %1965 = vmatprep.subr.mxu0 %v756
    %1966 = vmatpush1.msra.mxu0 %v755
    %1967 = vmatprep.subr.mxu0 %v764
    %1968 = vmatpush1.msra.mxu0 %v763
    %1969 = vmatprep.subr.mxu0 %v772
    %1970 = vmatpush1.msra.mxu0 %v771
    %1971 = vmatprep.subr.mxu0 %v780
    %1972 = vmatpush1.msra.mxu0 %v779
    %1973 = vmatprep.subr.mxu0 %v788
    %1974 = vmatpush1.msra.mxu0 %v787
    %1975 = vmatprep.subr.mxu0 %v796
    %1976 = vmatpush1.msra.mxu0 %v795
    %1977 = vmatprep.subr.mxu0 %v804
    %1978 = vmatpush1.msra.mxu0 %v803
    %1979 = vmatprep.subr.mxu0 %v812
    %1980 = vmatpush1.msra.mxu0 %v811
    %1981 = vmatprep.subr.mxu0 %v820
    %1982 = vmatpush1.msra.mxu0 %v819
    %1983 = vmatprep.subr.mxu0 %v828
    %1984 = vmatpush1.msra.mxu0 %v827
    %1985 = vmatprep.subr.mxu0 %v836
    %1986 = vmatpush1.msra.mxu0 %v835
    %1987 = vmatprep.subr.mxu0 %v844
    %1988 = vmatpush1.msra.mxu0 %v843
    %1989 = vmatprep.subr.mxu0 %v852
    %1990 = vmatpush1.msra.mxu0 %v851
    %1991 = vmatprep.subr.mxu0 %v860
    %1992 = vmatpush1.msra.mxu0 %v859
    %1993 = vmatprep.subr.mxu0 %v868
    %1994 = vmatpush1.msra.mxu0 %v867
    %1995 = vmatprep.subr.mxu0 %v876
    %1996 = vmatpush1.msra.mxu0 %v875
    %1997 = vmatprep.mubr.f32.mxu0 %v107
    %1998 = vmatmul.mubr.f32.gmra.mrb[0].mxu0 %v106
    %v1999 = vpop.f32.mrb[0].mxu0
    %v2000 = vadd.f32 %v1929, %v1999
    %v2001 = vpop.f32.mrb[0].mxu0
    %v2002 = vadd.f32 %v1931, %v2001
    %2003 = vdwg.mxu0
    %2004 = vmatprep.subr.mxu0 %v884
    %2005 = vmatpush1.msra.mxu0 %v883
    %2006 = vmatprep.subr.mxu0 %v892
    %2007 = vmatpush1.msra.mxu0 %v891
    %2008 = vmatprep.subr.mxu0 0.0
    %2009 = vmatpush1.msra.mxu0 0.0
    %2010 = vmatprep.subr.mxu0 0.0
    %2011 = vmatpush1.msra.mxu0 0.0
    %2012 = vmatprep.subr.mxu0 0.0
    %2013 = vmatpush1.msra.mxu0 0.0
    %2014 = vmatprep.subr.mxu0 0.0
    %2015 = vmatpush1.msra.mxu0 0.0
    %2016 = vmatprep.subr.mxu0 0.0
    %2017 = vmatpush1.msra.mxu0 0.0
    %2018 = vmatprep.subr.mxu0 0.0
    %2019 = vmatpush1.msra.mxu0 0.0
    %2020 = vmatprep.subr.mxu0 0.0
    %2021 = vmatpush1.msra.mxu0 0.0
    %2022 = vmatprep.subr.mxu0 0.0
    %2023 = vmatpush1.msra.mxu0 0.0
    %2024 = vmatprep.subr.mxu0 0.0
    %2025 = vmatpush1.msra.mxu0 0.0
    %2026 = vmatprep.subr.mxu0 0.0
    %2027 = vmatpush1.msra.mxu0 0.0
    %2028 = vmatprep.subr.mxu0 0.0
    %2029 = vmatpush1.msra.mxu0 0.0
    %2030 = vmatprep.subr.mxu0 0.0
    %2031 = vmatpush1.msra.mxu0 0.0
    %2032 = vmatprep.subr.mxu0 0.0
    %2033 = vmatpush1.msra.mxu0 0.0
    %2034 = vmatprep.subr.mxu0 0.0
    %2035 = vmatpush1.msra.mxu0 0.0
    %2036 = vmatprep.subr.mxu0 0.0
    %2037 = vmatpush1.msra.mxu0 0.0
    %2038 = vmatprep.subr.mxu0 0.0
    %2039 = vmatpush1.msra.mxu0 0.0
    %2040 = vmatprep.subr.mxu0 0.0
    %2041 = vmatpush1.msra.mxu0 0.0
    %2042 = vmatprep.subr.mxu0 0.0
    %2043 = vmatpush1.msra.mxu0 0.0
    %2044 = vmatprep.subr.mxu0 0.0
    %2045 = vmatpush1.msra.mxu0 0.0
    %2046 = vmatprep.subr.mxu0 0.0
    %2047 = vmatpush1.msra.mxu0 0.0
    %2048 = vmatprep.subr.mxu0 0.0
    %2049 = vmatpush1.msra.mxu0 0.0
    %2050 = vmatprep.subr.mxu0 0.0
    %2051 = vmatpush1.msra.mxu0 0.0
    %2052 = vmatprep.subr.mxu0 0.0
    %2053 = vmatpush1.msra.mxu0 0.0
    %2054 = vmatprep.subr.mxu0 0.0
    %2055 = vmatpush1.msra.mxu0 0.0
    %2056 = vmatprep.subr.mxu0 0.0
    %2057 = vmatpush1.msra.mxu0 0.0
    %2058 = vmatprep.subr.mxu0 0.0
    %2059 = vmatpush1.msra.mxu0 0.0
    %2060 = vmatprep.subr.mxu0 0.0
    %2061 = vmatpush1.msra.mxu0 0.0
    %2062 = vmatprep.subr.mxu0 0.0
    %2063 = vmatpush1.msra.mxu0 0.0
    %2064 = vmatprep.subr.mxu0 0.0
    %2065 = vmatpush1.msra.mxu0 0.0
    %2066 = vmatprep.subr.mxu0 0.0
    %2067 = vmatpush1.msra.mxu0 0.0
    %2068 = vmatprep.mubr.f32.mxu0 0.0
    %2069 = vmatmul.mubr.f32.gmra.mrb[0].mxu0 %v937
    %v2070 = vpop.f32.mrb[0].mxu0
    %v2071 = vadd.f32 %v2000, %v2070
    %v2072 = vpop.f32.mrb[0].mxu0
    %v2073 = vadd.f32 %v2002, %v2072
    %2074 = vdwg.mxu0
    %v2075 = vmax.f32 %v1219, 0.0
    %v2076 = vmax.f32 %v1221, 0.0
    %v2077 = vmax.f32 %v1503, 0.0
    %v2078 = vmax.f32 %v1505, 0.0
    %v2079 = vmax.f32 %v1787, 0.0
    %v2080 = vmax.f32 %v1789, 0.0
    %v2081 = vmax.f32 %v2071, 0.0
    %v2082 = vmax.f32 %v2073, 0.0
    %v2083 = vld [vmem:[#allocation6] sm:$0xff]
    %v2084 = vld [vmem:[#allocation6 + $0x8] sm:$0xff]
    %v2085 = vld [vmem:[#allocation6 + $0x10] sm:$0xff]
    %v2086 = vld [vmem:[#allocation6 + $0x18] sm:$0xff]
    %v2087 = vld [vmem:[#allocation6 + $0x20] sm:$0xff]
    %v2088 = vld [vmem:[#allocation6 + $0x28] sm:$0xff]
    %v2089 = vld [vmem:[#allocation6 + $0x30] sm:$0xff]
    %v2090 = vld [vmem:[#allocation6 + $0x38] sm:$0xff]
    %v2091 = vld [vmem:[#allocation6 + $0x40] sm:$0xff]
    %v2092 = vld [vmem:[#allocation6 + $0x48] sm:$0xff]
    %v2093 = vld [vmem:[#allocation6 + $0x50] sm:$0xff]
    %v2094 = vld [vmem:[#allocation6 + $0x58] sm:$0xff]
    %v2095 = vld [vmem:[#allocation6 + $0x60] sm:$0xff]
    %v2096 = vld [vmem:[#allocation6 + $0x68] sm:$0xff]
    %v2097 = vld [vmem:[#allocation6 + $0x70] sm:$0xff]
    %v2098 = vld [vmem:[#allocation6 + $0x78] sm:$0xff]
    %v2099 = vld [vmem:[#allocation6 + $0x80] sm:$0xff]
    %v2100 = vld [vmem:[#allocation6 + $0x88] sm:$0xff]
    %v2101 = vld [vmem:[#allocation6 + $0x90] sm:$0xff]
    %v2102 = vld [vmem:[#allocation6 + $0x98] sm:$0xff]
    %v2103 = vld [vmem:[#allocation6 + $0xa0] sm:$0xff]
    %v2104 = vld [vmem:[#allocation6 + $0xa8] sm:$0xff]
    %v2105 = vld [vmem:[#allocation6 + $0xb0] sm:$0xff]
    %v2106 = vld [vmem:[#allocation6 + $0xb8] sm:$0xff]
    %v2107 = vld [vmem:[#allocation6 + $0xc0] sm:$0xff]
    %v2108 = vld [vmem:[#allocation6 + $0xc8] sm:$0xff]
    %v2109 = vld [vmem:[#allocation6 + $0xd0] sm:$0xff]
    %v2110 = vld [vmem:[#allocation6 + $0xd8] sm:$0xff]
    %v2111 = vld [vmem:[#allocation6 + $0xe0] sm:$0xff]
    %v2112 = vld [vmem:[#allocation6 + $0xe8] sm:$0xff]
    %v2113 = vld [vmem:[#allocation6 + $0xf0] sm:$0xff]
    %v2114 = vld [vmem:[#allocation6 + $0xf8] sm:$0xff]
    %v2115 = vld [vmem:[#allocation6 + $0x100] sm:$0xff]
    %v2116 = vld [vmem:[#allocation6 + $0x108] sm:$0xff]
    %v2117 = vld [vmem:[#allocation6 + $0x110] sm:$0xff]
    %v2118 = vld [vmem:[#allocation6 + $0x118] sm:$0xff]
    %v2119 = vld [vmem:[#allocation6 + $0x120] sm:$0xff]
    %v2120 = vld [vmem:[#allocation6 + $0x128] sm:$0xff]
    %v2121 = vld [vmem:[#allocation6 + $0x130] sm:$0xff]
    %v2122 = vld [vmem:[#allocation6 + $0x138] sm:$0xff]
    %v2123 = vld [vmem:[#allocation6 + $0x140] sm:$0xff]
    %v2124 = vld [vmem:[#allocation6 + $0x148] sm:$0xff]
    %v2125 = vld [vmem:[#allocation6 + $0x150] sm:$0xff]
    %v2126 = vld [vmem:[#allocation6 + $0x158] sm:$0xff]
    %v2127 = vld [vmem:[#allocation6 + $0x160] sm:$0xff]
    %v2128 = vld [vmem:[#allocation6 + $0x168] sm:$0xff]
    %v2129 = vld [vmem:[#allocation6 + $0x170] sm:$0xff]
    %v2130 = vld [vmem:[#allocation6 + $0x178] sm:$0xff]
    %v2131 = vld [vmem:[#allocation6 + $0x180] sm:$0xff]
    %v2132 = vld [vmem:[#allocation6 + $0x188] sm:$0xff]
    %v2133 = vld [vmem:[#allocation6 + $0x190] sm:$0xff]
    %v2134 = vld [vmem:[#allocation6 + $0x198] sm:$0xff]
    %v2135 = vld [vmem:[#allocation6 + $0x1a0] sm:$0xff]
    %v2136 = vld [vmem:[#allocation6 + $0x1a8] sm:$0xff]
    %v2137 = vld [vmem:[#allocation6 + $0x1b0] sm:$0xff]
    %v2138 = vld [vmem:[#allocation6 + $0x1b8] sm:$0xff]
    %v2139 = vld [vmem:[#allocation6 + $0x1c0] sm:$0xff]
    %v2140 = vld [vmem:[#allocation6 + $0x1c8] sm:$0xff]
    %v2141 = vld [vmem:[#allocation6 + $0x1d0] sm:$0xff]
    %v2142 = vld [vmem:[#allocation6 + $0x1d8] sm:$0xff]
    %v2143 = vld [vmem:[#allocation6 + $0x1e0] sm:$0xff]
    %v2144 = vld [vmem:[#allocation6 + $0x1e8] sm:$0xff]
    %v2145 = vld [vmem:[#allocation6 + $0x1f0] sm:$0xff]
    %v2146 = vld [vmem:[#allocation6 + $0x1f8] sm:$0xff]
    %v2147 = vld [vmem:[#allocation6 + $0x200] sm:$0xff]
    %v2148 = vld [vmem:[#allocation6 + $0x208] sm:$0xff]
    %v2149 = vld [vmem:[#allocation6 + $0x210] sm:$0xff]
    %v2150 = vld [vmem:[#allocation6 + $0x218] sm:$0xff]
    %v2151 = vld [vmem:[#allocation6 + $0x220] sm:$0xff]
    %v2152 = vld [vmem:[#allocation6 + $0x228] sm:$0xff]
    %v2153 = vld [vmem:[#allocation6 + $0x230] sm:$0xff]
    %v2154 = vld [vmem:[#allocation6 + $0x238] sm:$0xff]
    %v2155 = vld [vmem:[#allocation6 + $0x240] sm:$0xff]
    %v2156 = vld [vmem:[#allocation6 + $0x248] sm:$0xff]
    %v2157 = vld [vmem:[#allocation6 + $0x250] sm:$0xff]
    %v2158 = vld [vmem:[#allocation6 + $0x258] sm:$0xff]
    %v2159 = vld [vmem:[#allocation6 + $0x260] sm:$0xff]
    %v2160 = vld [vmem:[#allocation6 + $0x268] sm:$0xff]
    %v2161 = vld [vmem:[#allocation6 + $0x270] sm:$0xff]
    %v2162 = vld [vmem:[#allocation6 + $0x278] sm:$0xff]
    %v2163 = vld [vmem:[#allocation6 + $0x280] sm:$0xff]
    %v2164 = vld [vmem:[#allocation6 + $0x288] sm:$0xff]
    %v2165 = vld [vmem:[#allocation6 + $0x290] sm:$0xff]
    %v2166 = vld [vmem:[#allocation6 + $0x298] sm:$0xff]
    %v2167 = vld [vmem:[#allocation6 + $0x2a0] sm:$0xff]
    %v2168 = vld [vmem:[#allocation6 + $0x2a8] sm:$0xff]
    %v2169 = vld [vmem:[#allocation6 + $0x2b0] sm:$0xff]
    %v2170 = vld [vmem:[#allocation6 + $0x2b8] sm:$0xff]
    %v2171 = vld [vmem:[#allocation6 + $0x2c0] sm:$0xff]
    %v2172 = vld [vmem:[#allocation6 + $0x2c8] sm:$0xff]
    %v2173 = vld [vmem:[#allocation6 + $0x2d0] sm:$0xff]
    %v2174 = vld [vmem:[#allocation6 + $0x2d8] sm:$0xff]
    %v2175 = vld [vmem:[#allocation6 + $0x2e0] sm:$0xff]
    %v2176 = vld [vmem:[#allocation6 + $0x2e8] sm:$0xff]
    %v2177 = vld [vmem:[#allocation6 + $0x2f0] sm:$0xff]
    %v2178 = vld [vmem:[#allocation6 + $0x2f8] sm:$0xff]
    %v2179 = vld [vmem:[#allocation6 + $0x300] sm:$0xff]
    %v2180 = vld [vmem:[#allocation6 + $0x308] sm:$0xff]
    %v2181 = vld [vmem:[#allocation6 + $0x310] sm:$0xff]
    %v2182 = vld [vmem:[#allocation6 + $0x318] sm:$0xff]
    %v2183 = vld [vmem:[#allocation6 + $0x320] sm:$0xff]
    %v2184 = vld [vmem:[#allocation6 + $0x328] sm:$0xff]
    %v2185 = vld [vmem:[#allocation6 + $0x330] sm:$0xff]
    %v2186 = vld [vmem:[#allocation6 + $0x338] sm:$0xff]
    %v2187 = vld [vmem:[#allocation6 + $0x340] sm:$0xff]
    %v2188 = vld [vmem:[#allocation6 + $0x348] sm:$0xff]
    %v2189 = vld [vmem:[#allocation6 + $0x350] sm:$0xff]
    %v2190 = vld [vmem:[#allocation6 + $0x358] sm:$0xff]
    %v2191 = vld [vmem:[#allocation6 + $0x360] sm:$0xff]
    %v2192 = vld [vmem:[#allocation6 + $0x368] sm:$0xff]
    %v2193 = vld [vmem:[#allocation6 + $0x370] sm:$0xff]
    %v2194 = vld [vmem:[#allocation6 + $0x378] sm:$0xff]
    %v2195 = vld [vmem:[#allocation6 + $0x380] sm:$0xff]
    %v2196 = vld [vmem:[#allocation6 + $0x388] sm:$0xff]
    %v2197 = vld [vmem:[#allocation6 + $0x390] sm:$0xff]
    %v2198 = vld [vmem:[#allocation6 + $0x398] sm:$0xff]
    %v2199 = vld [vmem:[#allocation6 + $0x3a0] sm:$0xff]
    %v2200 = vld [vmem:[#allocation6 + $0x3a8] sm:$0xff]
    %v2201 = vld [vmem:[#allocation6 + $0x3b0] sm:$0xff]
    %v2202 = vld [vmem:[#allocation6 + $0x3b8] sm:$0xff]
    %v2203 = vld [vmem:[#allocation6 + $0x3c0] sm:$0xff]
    %v2204 = vld [vmem:[#allocation6 + $0x3c8] sm:$0xff]
    %v2205 = vld [vmem:[#allocation6 + $0x3d0] sm:$0xff]
    %v2206 = vld [vmem:[#allocation6 + $0x3d8] sm:$0xff]
    %v2207 = vld [vmem:[#allocation6 + $0x3e0] sm:$0xff]
    %v2208 = vld [vmem:[#allocation6 + $0x3e8] sm:$0xff]
    %v2209 = vld [vmem:[#allocation6 + $0x3f0] sm:$0xff]
    %v2210 = vld [vmem:[#allocation6 + $0x3f8] sm:$0xff]
    %v2211 = vld [vmem:[#allocation6 + $0x400] sm:$0xff]
    %v2212 = vld [vmem:[#allocation6 + $0x408] sm:$0xff]
    %v2213 = vld [vmem:[#allocation6 + $0x410] sm:$0xff]
    %v2214 = vld [vmem:[#allocation6 + $0x418] sm:$0xff]
    %v2215 = vld [vmem:[#allocation6 + $0x420] sm:$0xff]
    %v2216 = vld [vmem:[#allocation6 + $0x428] sm:$0xff]
    %v2217 = vld [vmem:[#allocation6 + $0x430] sm:$0xff]
    %v2218 = vld [vmem:[#allocation6 + $0x438] sm:$0xff]
    %v2219 = vld [vmem:[#allocation6 + $0x440] sm:$0xff]
    %v2220 = vld [vmem:[#allocation6 + $0x448] sm:$0xff]
    %v2221 = vld [vmem:[#allocation6 + $0x450] sm:$0xff]
    %v2222 = vld [vmem:[#allocation6 + $0x458] sm:$0xff]
    %v2223 = vld [vmem:[#allocation6 + $0x460] sm:$0xff]
    %v2224 = vld [vmem:[#allocation6 + $0x468] sm:$0xff]
    %v2225 = vld [vmem:[#allocation6 + $0x470] sm:$0xff]
    %v2226 = vld [vmem:[#allocation6 + $0x478] sm:$0xff]
    %v2227 = vld [vmem:[#allocation6 + $0x480] sm:$0xff]
    %v2228 = vld [vmem:[#allocation6 + $0x488] sm:$0xff]
    %v2229 = vld [vmem:[#allocation6 + $0x490] sm:$0xff]
    %v2230 = vld [vmem:[#allocation6 + $0x498] sm:$0xff]
    %v2231 = vld [vmem:[#allocation6 + $0x4a0] sm:$0xff]
    %v2232 = vld [vmem:[#allocation6 + $0x4a8] sm:$0xff]
    %v2233 = vld [vmem:[#allocation6 + $0x4b0] sm:$0xff]
    %v2234 = vld [vmem:[#allocation6 + $0x4b8] sm:$0xff]
    %v2235 = vld [vmem:[#allocation6 + $0x4c0] sm:$0xff]
    %v2236 = vld [vmem:[#allocation6 + $0x4c8] sm:$0xff]
    %v2237 = vld [vmem:[#allocation6 + $0x4d0] sm:$0xff]
    %v2238 = vld [vmem:[#allocation6 + $0x4d8] sm:$0xff]
    %v2239 = vld [vmem:[#allocation6 + $0x4e0] sm:$0xff]
    %v2240 = vld [vmem:[#allocation6 + $0x4e8] sm:$0xff]
    %v2241 = vld [vmem:[#allocation6 + $0x4f0] sm:$0xff]
    %v2242 = vld [vmem:[#allocation6 + $0x4f8] sm:$0xff]
    %v2243 = vld [vmem:[#allocation6 + $0x500] sm:$0xff]
    %v2244 = vld [vmem:[#allocation6 + $0x508] sm:$0xff]
    %v2245 = vld [vmem:[#allocation6 + $0x510] sm:$0xff]
    %v2246 = vld [vmem:[#allocation6 + $0x518] sm:$0xff]
    %v2247 = vld [vmem:[#allocation6 + $0x520] sm:$0xff]
    %v2248 = vld [vmem:[#allocation6 + $0x528] sm:$0xff]
    %v2249 = vld [vmem:[#allocation6 + $0x530] sm:$0xff]
    %v2250 = vld [vmem:[#allocation6 + $0x538] sm:$0xff]
    %v2251 = vld [vmem:[#allocation6 + $0x540] sm:$0xff]
    %v2252 = vld [vmem:[#allocation6 + $0x548] sm:$0xff]
    %v2253 = vld [vmem:[#allocation6 + $0x550] sm:$0xff]
    %v2254 = vld [vmem:[#allocation6 + $0x558] sm:$0xff]
    %v2255 = vld [vmem:[#allocation6 + $0x560] sm:$0xff]
    %v2256 = vld [vmem:[#allocation6 + $0x568] sm:$0xff]
    %v2257 = vld [vmem:[#allocation6 + $0x570] sm:$0xff]
    %v2258 = vld [vmem:[#allocation6 + $0x578] sm:$0xff]
    %v2259 = vld [vmem:[#allocation6 + $0x580] sm:$0xff]
    %v2260 = vld [vmem:[#allocation6 + $0x588] sm:$0xff]
    %v2261 = vld [vmem:[#allocation6 + $0x590] sm:$0xff]
    %v2262 = vld [vmem:[#allocation6 + $0x598] sm:$0xff]
    %v2263 = vld [vmem:[#allocation6 + $0x5a0] sm:$0xff]
    %v2264 = vld [vmem:[#allocation6 + $0x5a8] sm:$0xff]
    %v2265 = vld [vmem:[#allocation6 + $0x5b0] sm:$0xff]
    %v2266 = vld [vmem:[#allocation6 + $0x5b8] sm:$0xff]
    %v2267 = vld [vmem:[#allocation6 + $0x5c0] sm:$0xff]
    %v2268 = vld [vmem:[#allocation6 + $0x5c8] sm:$0xff]
    %v2269 = vld [vmem:[#allocation6 + $0x5d0] sm:$0xff]
    %v2270 = vld [vmem:[#allocation6 + $0x5d8] sm:$0xff]
    %v2271 = vld [vmem:[#allocation6 + $0x5e0] sm:$0xff]
    %v2272 = vld [vmem:[#allocation6 + $0x5e8] sm:$0xff]
    %v2273 = vld [vmem:[#allocation6 + $0x5f0] sm:$0xff]
    %v2274 = vld [vmem:[#allocation6 + $0x5f8] sm:$0xff]
    %v2275 = vld [vmem:[#allocation6 + $0x600] sm:$0xff]
    %v2276 = vld [vmem:[#allocation6 + $0x608] sm:$0xff]
    %v2277 = vld [vmem:[#allocation6 + $0x610] sm:$0xff]
    %v2278 = vld [vmem:[#allocation6 + $0x618] sm:$0xff]
    %v2279 = vld [vmem:[#allocation6 + $0x620] sm:$0xff]
    %v2280 = vld [vmem:[#allocation6 + $0x628] sm:$0xff]
    %v2281 = vld [vmem:[#allocation6 + $0x630] sm:$0xff]
    %v2282 = vld [vmem:[#allocation6 + $0x638] sm:$0xff]
    %v2283 = vld [vmem:[#allocation6 + $0x640] sm:$0xff]
    %v2284 = vld [vmem:[#allocation6 + $0x648] sm:$0xff]
    %v2285 = vld [vmem:[#allocation6 + $0x650] sm:$0xff]
    %v2286 = vld [vmem:[#allocation6 + $0x658] sm:$0xff]
    %v2287 = vld [vmem:[#allocation6 + $0x660] sm:$0xff]
    %v2288 = vld [vmem:[#allocation6 + $0x668] sm:$0xff]
    %v2289 = vld [vmem:[#allocation6 + $0x670] sm:$0xff]
    %v2290 = vld [vmem:[#allocation6 + $0x678] sm:$0xff]
    %v2291 = vld [vmem:[#allocation6 + $0x680] sm:$0xff]
    %v2292 = vld [vmem:[#allocation6 + $0x688] sm:$0xff]
    %v2293 = vld [vmem:[#allocation6 + $0x690] sm:$0xff]
    %v2294 = vld [vmem:[#allocation6 + $0x698] sm:$0xff]
    %v2295 = vld [vmem:[#allocation6 + $0x6a0] sm:$0xff]
    %v2296 = vld [vmem:[#allocation6 + $0x6a8] sm:$0xff]
    %v2297 = vld [vmem:[#allocation6 + $0x6b0] sm:$0xff]
    %v2298 = vld [vmem:[#allocation6 + $0x6b8] sm:$0xff]
    %v2299 = vld [vmem:[#allocation6 + $0x6c0] sm:$0xff]
    %v2300 = vld [vmem:[#allocation6 + $0x6c8] sm:$0xff]
    %v2301 = vld [vmem:[#allocation6 + $0x6d0] sm:$0xff]
    %v2302 = vld [vmem:[#allocation6 + $0x6d8] sm:$0xff]
    %v2303 = vld [vmem:[#allocation6 + $0x6e0] sm:$0xff]
    %v2304 = vld [vmem:[#allocation6 + $0x6e8] sm:$0xff]
    %v2305 = vld [vmem:[#allocation6 + $0x6f0] sm:$0xff]
    %v2306 = vld [vmem:[#allocation6 + $0x6f8] sm:$0xff]
    %v2307 = vld [vmem:[#allocation6 + $0x700] sm:$0xff]
    %v2308 = vld [vmem:[#allocation6 + $0x708] sm:$0xff]
    %v2309 = vld [vmem:[#allocation6 + $0x710] sm:$0xff]
    %v2310 = vld [vmem:[#allocation6 + $0x718] sm:$0xff]
    %v2311 = vld [vmem:[#allocation6 + $0x720] sm:$0xff]
    %v2312 = vld [vmem:[#allocation6 + $0x728] sm:$0xff]
    %v2313 = vld [vmem:[#allocation6 + $0x730] sm:$0xff]
    %v2314 = vld [vmem:[#allocation6 + $0x738] sm:$0xff]
    %v2315 = vld [vmem:[#allocation6 + $0x740] sm:$0xff]
    %v2316 = vld [vmem:[#allocation6 + $0x748] sm:$0xff]
    %v2317 = vld [vmem:[#allocation6 + $0x750] sm:$0xff]
    %v2318 = vld [vmem:[#allocation6 + $0x758] sm:$0xff]
    %v2319 = vld [vmem:[#allocation6 + $0x760] sm:$0xff]
    %v2320 = vld [vmem:[#allocation6 + $0x768] sm:$0xff]
    %v2321 = vld [vmem:[#allocation6 + $0x770] sm:$0xff]
    %v2322 = vld [vmem:[#allocation6 + $0x778] sm:$0xff]
    %v2323 = vld [vmem:[#allocation6 + $0x780] sm:$0xff]
    %v2324 = vld [vmem:[#allocation6 + $0x788] sm:$0xff]
    %v2325 = vld [vmem:[#allocation6 + $0x790] sm:$0xff]
    %v2326 = vld [vmem:[#allocation6 + $0x798] sm:$0xff]
    %v2327 = vld [vmem:[#allocation6 + $0x7a0] sm:$0xff]
    %v2328 = vld [vmem:[#allocation6 + $0x7a8] sm:$0xff]
    %v2329 = vld [vmem:[#allocation6 + $0x7b0] sm:$0xff]
    %v2330 = vld [vmem:[#allocation6 + $0x7b8] sm:$0xff]
    %v2331 = vld [vmem:[#allocation6 + $0x7c0] sm:$0xff]
    %v2332 = vld [vmem:[#allocation6 + $0x7c8] sm:$0xff]
    %v2333 = vld [vmem:[#allocation6 + $0x7d0] sm:$0xff]
    %v2334 = vld [vmem:[#allocation6 + $0x7d8] sm:$0xff]
    %v2335 = vld [vmem:[#allocation6 + $0x7e0] sm:$0xff]
    %v2336 = vld [vmem:[#allocation6 + $0x7e8] sm:$0xff]
    %v2337 = vld [vmem:[#allocation6 + $0x7f0] sm:$0xff]
    %v2338 = vld [vmem:[#allocation6 + $0x7f8] sm:$0xff]
    %v2339 = vld [vmem:[#allocation6 + $0x800] sm:$0xff]
    %v2340 = vld [vmem:[#allocation6 + $0x808] sm:$0xff]
    %v2341 = vld [vmem:[#allocation6 + $0x810] sm:$0xff]
    %v2342 = vld [vmem:[#allocation6 + $0x818] sm:$0xff]
    %v2343 = vld [vmem:[#allocation6 + $0x820] sm:$0xff]
    %v2344 = vld [vmem:[#allocation6 + $0x828] sm:$0xff]
    %v2345 = vld [vmem:[#allocation6 + $0x830] sm:$0xff]
    %v2346 = vld [vmem:[#allocation6 + $0x838] sm:$0xff]
    %v2347 = vld [vmem:[#allocation6 + $0x840] sm:$0xff]
    %v2348 = vld [vmem:[#allocation6 + $0x848] sm:$0xff]
    %v2349 = vld [vmem:[#allocation6 + $0x850] sm:$0xff]
    %v2350 = vld [vmem:[#allocation6 + $0x858] sm:$0xff]
    %v2351 = vld [vmem:[#allocation6 + $0x860] sm:$0xff]
    %v2352 = vld [vmem:[#allocation6 + $0x868] sm:$0xff]
    %v2353 = vld [vmem:[#allocation6 + $0x870] sm:$0xff]
    %v2354 = vld [vmem:[#allocation6 + $0x878] sm:$0xff]
    %v2355 = vld [vmem:[#allocation6 + $0x880] sm:$0xff]
    %v2356 = vld [vmem:[#allocation6 + $0x888] sm:$0xff]
    %v2357 = vld [vmem:[#allocation6 + $0x890] sm:$0xff]
    %v2358 = vld [vmem:[#allocation6 + $0x898] sm:$0xff]
    %v2359 = vld [vmem:[#allocation6 + $0x8a0] sm:$0xff]
    %v2360 = vld [vmem:[#allocation6 + $0x8a8] sm:$0xff]
    %v2361 = vld [vmem:[#allocation6 + $0x8b0] sm:$0xff]
    %v2362 = vld [vmem:[#allocation6 + $0x8b8] sm:$0xff]
    %v2363 = vld [vmem:[#allocation6 + $0x8c0] sm:$0xff]
    %v2364 = vld [vmem:[#allocation6 + $0x8c8] sm:$0xff]
    %v2365 = vld [vmem:[#allocation6 + $0x8d0] sm:$0xff]
    %v2366 = vld [vmem:[#allocation6 + $0x8d8] sm:$0xff]
    %v2367 = vld [vmem:[#allocation6 + $0x8e0] sm:$0xff]
    %v2368 = vld [vmem:[#allocation6 + $0x8e8] sm:$0xff]
    %v2369 = vld [vmem:[#allocation6 + $0x8f0] sm:$0xff]
    %v2370 = vld [vmem:[#allocation6 + $0x8f8] sm:$0xff]
    %v2371 = vld [vmem:[#allocation6 + $0x900] sm:$0xff]
    %v2372 = vld [vmem:[#allocation6 + $0x908] sm:$0xff]
    %v2373 = vld [vmem:[#allocation6 + $0x910] sm:$0xff]
    %v2374 = vld [vmem:[#allocation6 + $0x918] sm:$0xff]
    %v2375 = vld [vmem:[#allocation6 + $0x920] sm:$0xff]
    %v2376 = vld [vmem:[#allocation6 + $0x928] sm:$0xff]
    %v2377 = vld [vmem:[#allocation6 + $0x930] sm:$0xff]
    %v2378 = vld [vmem:[#allocation6 + $0x938] sm:$0xff]
    %v2379 = vld [vmem:[#allocation6 + $0x940] sm:$0xff]
    %v2380 = vld [vmem:[#allocation6 + $0x948] sm:$0xff]
    %v2381 = vld [vmem:[#allocation6 + $0x950] sm:$0xff]
    %v2382 = vld [vmem:[#allocation6 + $0x958] sm:$0xff]
    %v2383 = vld [vmem:[#allocation6 + $0x960] sm:$0xff]
    %v2384 = vld [vmem:[#allocation6 + $0x968] sm:$0xff]
    %v2385 = vld [vmem:[#allocation6 + $0x970] sm:$0xff]
    %v2386 = vld [vmem:[#allocation6 + $0x978] sm:$0xff]
    %v2387 = vld [vmem:[#allocation6 + $0x980] sm:$0xff]
    %v2388 = vld [vmem:[#allocation6 + $0x988] sm:$0xff]
    %v2389 = vld [vmem:[#allocation6 + $0x990] sm:$0xff]
    %v2390 = vld [vmem:[#allocation6 + $0x998] sm:$0xff]
    %v2391 = vld [vmem:[#allocation6 + $0x9a0] sm:$0xff]
    %v2392 = vld [vmem:[#allocation6 + $0x9a8] sm:$0xff]
    %v2393 = vld [vmem:[#allocation6 + $0x9b0] sm:$0xff]
    %v2394 = vld [vmem:[#allocation6 + $0x9b8] sm:$0xff]
    %v2395 = vld [vmem:[#allocation6 + $0x9c0] sm:$0xff]
    %v2396 = vld [vmem:[#allocation6 + $0x9c8] sm:$0xff]
    %v2397 = vld [vmem:[#allocation6 + $0x9d0] sm:$0xff]
    %v2398 = vld [vmem:[#allocation6 + $0x9d8] sm:$0xff]
    %v2399 = vld [vmem:[#allocation6 + $0x9e0] sm:$0xff]
    %v2400 = vld [vmem:[#allocation6 + $0x9e8] sm:$0xff]
    %v2401 = vld [vmem:[#allocation6 + $0x9f0] sm:$0xff]
    %v2402 = vld [vmem:[#allocation6 + $0x9f8] sm:$0xff]
    %v2403 = vld [vmem:[#allocation6 + $0xa00] sm:$0xff]
    %v2404 = vld [vmem:[#allocation6 + $0xa08] sm:$0xff]
    %v2405 = vld [vmem:[#allocation6 + $0xa10] sm:$0xff]
    %v2406 = vld [vmem:[#allocation6 + $0xa18] sm:$0xff]
    %v2407 = vld [vmem:[#allocation6 + $0xa20] sm:$0xff]
    %v2408 = vld [vmem:[#allocation6 + $0xa28] sm:$0xff]
    %v2409 = vld [vmem:[#allocation6 + $0xa30] sm:$0xff]
    %v2410 = vld [vmem:[#allocation6 + $0xa38] sm:$0xff]
    %v2411 = vld [vmem:[#allocation6 + $0xa40] sm:$0xff]
    %v2412 = vld [vmem:[#allocation6 + $0xa48] sm:$0xff]
    %v2413 = vld [vmem:[#allocation6 + $0xa50] sm:$0xff]
    %v2414 = vld [vmem:[#allocation6 + $0xa58] sm:$0xff]
    %v2415 = vld [vmem:[#allocation6 + $0xa60] sm:$0xff]
    %v2416 = vld [vmem:[#allocation6 + $0xa68] sm:$0xff]
    %v2417 = vld [vmem:[#allocation6 + $0xa70] sm:$0xff]
    %v2418 = vld [vmem:[#allocation6 + $0xa78] sm:$0xff]
    %v2419 = vld [vmem:[#allocation6 + $0xa80] sm:$0xff]
    %v2420 = vld [vmem:[#allocation6 + $0xa88] sm:$0xff]
    %v2421 = vld [vmem:[#allocation6 + $0xa90] sm:$0xff]
    %v2422 = vld [vmem:[#allocation6 + $0xa98] sm:$0xff]
    %v2423 = vld [vmem:[#allocation6 + $0xaa0] sm:$0xff]
    %v2424 = vld [vmem:[#allocation6 + $0xaa8] sm:$0xff]
    %v2425 = vld [vmem:[#allocation6 + $0xab0] sm:$0xff]
    %v2426 = vld [vmem:[#allocation6 + $0xab8] sm:$0xff]
    %v2427 = vld [vmem:[#allocation6 + $0xac0] sm:$0xff]
    %v2428 = vld [vmem:[#allocation6 + $0xac8] sm:$0xff]
    %v2429 = vld [vmem:[#allocation6 + $0xad0] sm:$0xff]
    %v2430 = vld [vmem:[#allocation6 + $0xad8] sm:$0xff]
    %v2431 = vld [vmem:[#allocation6 + $0xae0] sm:$0xff]
    %v2432 = vld [vmem:[#allocation6 + $0xae8] sm:$0xff]
    %v2433 = vld [vmem:[#allocation6 + $0xaf0] sm:$0xff]
    %v2434 = vld [vmem:[#allocation6 + $0xaf8] sm:$0xff]
    %v2435 = vld [vmem:[#allocation6 + $0xb00] sm:$0xff]
    %v2436 = vld [vmem:[#allocation6 + $0xb08] sm:$0xff]
    %v2437 = vld [vmem:[#allocation6 + $0xb10] sm:$0xff]
    %v2438 = vld [vmem:[#allocation6 + $0xb18] sm:$0xff]
    %v2439 = vld [vmem:[#allocation6 + $0xb20] sm:$0xff]
    %v2440 = vld [vmem:[#allocation6 + $0xb28] sm:$0xff]
    %v2441 = vld [vmem:[#allocation6 + $0xb30] sm:$0xff]
    %v2442 = vld [vmem:[#allocation6 + $0xb38] sm:$0xff]
    %v2443 = vld [vmem:[#allocation6 + $0xb40] sm:$0xff]
    %v2444 = vld [vmem:[#allocation6 + $0xb48] sm:$0xff]
    %v2445 = vld [vmem:[#allocation6 + $0xb50] sm:$0xff]
    %v2446 = vld [vmem:[#allocation6 + $0xb58] sm:$0xff]
    %v2447 = vld [vmem:[#allocation6 + $0xb60] sm:$0xff]
    %v2448 = vld [vmem:[#allocation6 + $0xb68] sm:$0xff]
    %v2449 = vld [vmem:[#allocation6 + $0xb70] sm:$0xff]
    %v2450 = vld [vmem:[#allocation6 + $0xb78] sm:$0xff]
    %v2451 = vld [vmem:[#allocation6 + $0xb80] sm:$0xff]
    %v2452 = vld [vmem:[#allocation6 + $0xb88] sm:$0xff]
    %v2453 = vld [vmem:[#allocation6 + $0xb90] sm:$0xff]
    %v2454 = vld [vmem:[#allocation6 + $0xb98] sm:$0xff]
    %v2455 = vld [vmem:[#allocation6 + $0xba0] sm:$0xff]
    %v2456 = vld [vmem:[#allocation6 + $0xba8] sm:$0xff]
    %v2457 = vld [vmem:[#allocation6 + $0xbb0] sm:$0xff]
    %v2458 = vld [vmem:[#allocation6 + $0xbb8] sm:$0xff]
    %v2459 = vld [vmem:[#allocation6 + $0xbc0] sm:$0xff]
    %v2460 = vld [vmem:[#allocation6 + $0xbc8] sm:$0xff]
    %v2461 = vld [vmem:[#allocation6 + $0xbd0] sm:$0xff]
    %v2462 = vld [vmem:[#allocation6 + $0xbd8] sm:$0xff]
    %v2463 = vld [vmem:[#allocation6 + $0xbe0] sm:$0xff]
    %v2464 = vld [vmem:[#allocation6 + $0xbe8] sm:$0xff]
    %v2465 = vld [vmem:[#allocation6 + $0xbf0] sm:$0xff]
    %v2466 = vld [vmem:[#allocation6 + $0xbf8] sm:$0xff]
    %v2467 = vld [vmem:[#allocation6 + $0xc00] sm:$0xff]
    %v2468 = vld [vmem:[#allocation6 + $0xc08] sm:$0xff]
    %v2469 = vld [vmem:[#allocation6 + $0xc10] sm:$0xff]
    %v2470 = vld [vmem:[#allocation6 + $0xc18] sm:$0xff]
    %v2471 = vld [vmem:[#allocation6 + $0xc20] sm:$0xff]
    %v2472 = vld [vmem:[#allocation6 + $0xc28] sm:$0xff]
    %v2473 = vld [vmem:[#allocation6 + $0xc30] sm:$0xff]
    %v2474 = vld [vmem:[#allocation6 + $0xc38] sm:$0xff]
    %v2475 = vld [vmem:[#allocation6 + $0xc40] sm:$0xff]
    %v2476 = vld [vmem:[#allocation6 + $0xc48] sm:$0xff]
    %v2477 = vld [vmem:[#allocation6 + $0xc50] sm:$0xff]
    %v2478 = vld [vmem:[#allocation6 + $0xc58] sm:$0xff]
    %v2479 = vld [vmem:[#allocation6 + $0xc60] sm:$0xff]
    %v2480 = vld [vmem:[#allocation6 + $0xc68] sm:$0xff]
    %v2481 = vld [vmem:[#allocation6 + $0xc70] sm:$0xff]
    %v2482 = vld [vmem:[#allocation6 + $0xc78] sm:$0xff]
    %v2483 = vld [vmem:[#allocation6 + $0xc80] sm:$0xff]
    %v2484 = vld [vmem:[#allocation6 + $0xc88] sm:$0xff]
    %v2485 = vld [vmem:[#allocation6 + $0xc90] sm:$0xff]
    %v2486 = vld [vmem:[#allocation6 + $0xc98] sm:$0xff]
    %v2487 = vld [vmem:[#allocation6 + $0xca0] sm:$0xff]
    %v2488 = vld [vmem:[#allocation6 + $0xca8] sm:$0xff]
    %v2489 = vld [vmem:[#allocation6 + $0xcb0] sm:$0xff]
    %v2490 = vld [vmem:[#allocation6 + $0xcb8] sm:$0xff]
    %v2491 = vld [vmem:[#allocation6 + $0xcc0] sm:$0xff]
    %v2492 = vld [vmem:[#allocation6 + $0xcc8] sm:$0xff]
    %v2493 = vld [vmem:[#allocation6 + $0xcd0] sm:$0xff]
    %v2494 = vld [vmem:[#allocation6 + $0xcd8] sm:$0xff]
    %v2495 = vld [vmem:[#allocation6 + $0xce0] sm:$0xff]
    %v2496 = vld [vmem:[#allocation6 + $0xce8] sm:$0xff]
    %v2497 = vld [vmem:[#allocation6 + $0xcf0] sm:$0xff]
    %v2498 = vld [vmem:[#allocation6 + $0xcf8] sm:$0xff]
    %v2499 = vld [vmem:[#allocation6 + $0xd00] sm:$0xff]
    %v2500 = vld [vmem:[#allocation6 + $0xd08] sm:$0xff]
    %v2501 = vld [vmem:[#allocation6 + $0xd10] sm:$0xff]
    %v2502 = vld [vmem:[#allocation6 + $0xd18] sm:$0xff]
    %v2503 = vld [vmem:[#allocation6 + $0xd20] sm:$0xff]
    %v2504 = vld [vmem:[#allocation6 + $0xd28] sm:$0xff]
    %v2505 = vld [vmem:[#allocation6 + $0xd30] sm:$0xff]
    %v2506 = vld [vmem:[#allocation6 + $0xd38] sm:$0xff]
    %v2507 = vld [vmem:[#allocation6 + $0xd40] sm:$0xff]
    %v2508 = vld [vmem:[#allocation6 + $0xd48] sm:$0xff]
    %v2509 = vld [vmem:[#allocation6 + $0xd50] sm:$0xff]
    %v2510 = vld [vmem:[#allocation6 + $0xd58] sm:$0xff]
    %v2511 = vld [vmem:[#allocation6 + $0xd60] sm:$0xff]
    %v2512 = vld [vmem:[#allocation6 + $0xd68] sm:$0xff]
    %v2513 = vld [vmem:[#allocation6 + $0xd70] sm:$0xff]
    %v2514 = vld [vmem:[#allocation6 + $0xd78] sm:$0xff]
    %v2515 = vld [vmem:[#allocation6 + $0xd80] sm:$0xff]
    %v2516 = vld [vmem:[#allocation6 + $0xd88] sm:$0xff]
    %v2517 = vld [vmem:[#allocation6 + $0xd90] sm:$0xff]
    %v2518 = vld [vmem:[#allocation6 + $0xd98] sm:$0xff]
    %v2519 = vld [vmem:[#allocation6 + $0xda0] sm:$0xff]
    %v2520 = vld [vmem:[#allocation6 + $0xda8] sm:$0xff]
    %v2521 = vld [vmem:[#allocation6 + $0xdb0] sm:$0xff]
    %v2522 = vld [vmem:[#allocation6 + $0xdb8] sm:$0xff]
    %v2523 = vld [vmem:[#allocation6 + $0xdc0] sm:$0xff]
    %v2524 = vld [vmem:[#allocation6 + $0xdc8] sm:$0xff]
    %v2525 = vld [vmem:[#allocation6 + $0xdd0] sm:$0xff]
    %v2526 = vld [vmem:[#allocation6 + $0xdd8] sm:$0xff]
    %v2527 = vld [vmem:[#allocation6 + $0xde0] sm:$0xff]
    %v2528 = vld [vmem:[#allocation6 + $0xde8] sm:$0xff]
    %v2529 = vld [vmem:[#allocation6 + $0xdf0] sm:$0xff]
    %v2530 = vld [vmem:[#allocation6 + $0xdf8] sm:$0xff]
    %v2531 = vld [vmem:[#allocation6 + $0xe00] sm:$0xff]
    %v2532 = vld [vmem:[#allocation6 + $0xe08] sm:$0xff]
    %v2533 = vld [vmem:[#allocation6 + $0xe10] sm:$0xff]
    %v2534 = vld [vmem:[#allocation6 + $0xe18] sm:$0xff]
    %v2535 = vld [vmem:[#allocation6 + $0xe20] sm:$0xff]
    %v2536 = vld [vmem:[#allocation6 + $0xe28] sm:$0xff]
    %v2537 = vld [vmem:[#allocation6 + $0xe30] sm:$0xff]
    %v2538 = vld [vmem:[#allocation6 + $0xe38] sm:$0xff]
    %v2539 = vld [vmem:[#allocation6 + $0xe40] sm:$0xff]
    %v2540 = vld [vmem:[#allocation6 + $0xe48] sm:$0xff]
    %v2541 = vld [vmem:[#allocation6 + $0xe50] sm:$0xff]
    %v2542 = vld [vmem:[#allocation6 + $0xe58] sm:$0xff]
    %v2543 = vld [vmem:[#allocation6 + $0xe60] sm:$0xff]
    %v2544 = vld [vmem:[#allocation6 + $0xe68] sm:$0xff]
    %v2545 = vld [vmem:[#allocation6 + $0xe70] sm:$0xff]
    %v2546 = vld [vmem:[#allocation6 + $0xe78] sm:$0xff]
    %v2547 = vld [vmem:[#allocation6 + $0xe80] sm:$0xff]
    %v2548 = vld [vmem:[#allocation6 + $0xe88] sm:$0xff]
    %v2549 = vld [vmem:[#allocation6 + $0xe90] sm:$0xff]
    %v2550 = vld [vmem:[#allocation6 + $0xe98] sm:$0xff]
    %v2551 = vld [vmem:[#allocation6 + $0xea0] sm:$0xff]
    %v2552 = vld [vmem:[#allocation6 + $0xea8] sm:$0xff]
    %v2553 = vld [vmem:[#allocation6 + $0xeb0] sm:$0xff]
    %v2554 = vld [vmem:[#allocation6 + $0xeb8] sm:$0xff]
    %v2555 = vld [vmem:[#allocation6 + $0xec0] sm:$0xff]
    %v2556 = vld [vmem:[#allocation6 + $0xec8] sm:$0xff]
    %v2557 = vld [vmem:[#allocation6 + $0xed0] sm:$0xff]
    %v2558 = vld [vmem:[#allocation6 + $0xed8] sm:$0xff]
    %v2559 = vld [vmem:[#allocation6 + $0xee0] sm:$0xff]
    %v2560 = vld [vmem:[#allocation6 + $0xee8] sm:$0xff]
    %v2561 = vld [vmem:[#allocation6 + $0xef0] sm:$0xff]
    %v2562 = vld [vmem:[#allocation6 + $0xef8] sm:$0xff]
    %v2563 = vld [vmem:[#allocation6 + $0xf00] sm:$0xff]
    %v2564 = vld [vmem:[#allocation6 + $0xf08] sm:$0xff]
    %v2565 = vld [vmem:[#allocation6 + $0xf10] sm:$0xff]
    %v2566 = vld [vmem:[#allocation6 + $0xf18] sm:$0xff]
    %v2567 = vld [vmem:[#allocation6 + $0xf20] sm:$0xff]
    %v2568 = vld [vmem:[#allocation6 + $0xf28] sm:$0xff]
    %v2569 = vld [vmem:[#allocation6 + $0xf30] sm:$0xff]
    %v2570 = vld [vmem:[#allocation6 + $0xf38] sm:$0xff]
    %v2571 = vld [vmem:[#allocation6 + $0xf40] sm:$0xff]
    %v2572 = vld [vmem:[#allocation6 + $0xf48] sm:$0xff]
    %v2573 = vld [vmem:[#allocation6 + $0xf50] sm:$0xff]
    %v2574 = vld [vmem:[#allocation6 + $0xf58] sm:$0xff]
    %v2575 = vld [vmem:[#allocation6 + $0xf60] sm:$0xff]
    %v2576 = vld [vmem:[#allocation6 + $0xf68] sm:$0xff]
    %v2577 = vld [vmem:[#allocation6 + $0xf70] sm:$0xff]
    %v2578 = vld [vmem:[#allocation6 + $0xf78] sm:$0xff]
    %v2579 = vld [vmem:[#allocation6 + $0xf80] sm:$0xff]
    %v2580 = vld [vmem:[#allocation6 + $0xf88] sm:$0xff]
    %v2581 = vld [vmem:[#allocation6 + $0xf90] sm:$0xff]
    %v2582 = vld [vmem:[#allocation6 + $0xf98] sm:$0xff]
    %v2583 = vld [vmem:[#allocation6 + $0xfa0] sm:$0xff]
    %v2584 = vld [vmem:[#allocation6 + $0xfa8] sm:$0xff]
    %v2585 = vld [vmem:[#allocation6 + $0xfb0] sm:$0xff]
    %v2586 = vld [vmem:[#allocation6 + $0xfb8] sm:$0xff]
    %v2587 = vld [vmem:[#allocation6 + $0xfc0] sm:$0xff]
    %v2588 = vld [vmem:[#allocation6 + $0xfc8] sm:$0xff]
    %v2589 = vld [vmem:[#allocation6 + $0xfd0] sm:$0xff]
    %v2590 = vld [vmem:[#allocation6 + $0xfd8] sm:$0xff]
    %v2591 = vld [vmem:[#allocation6 + $0xfe0] sm:$0xff]
    %v2592 = vld [vmem:[#allocation6 + $0xfe8] sm:$0xff]
    %v2593 = vld [vmem:[#allocation6 + $0xff0] sm:$0xff]
    %v2594 = vld [vmem:[#allocation6 + $0xff8] sm:$0xff]
    %v2595 = vld [vmem:[#allocation6 + $0x1000] sm:$0xff]
    %v2596 = vld [vmem:[#allocation6 + $0x1008] sm:$0xff]
    %v2597 = vld [vmem:[#allocation6 + $0x1010] sm:$0xff]
    %v2598 = vld [vmem:[#allocation6 + $0x1018] sm:$0xff]
    %v2599 = vld [vmem:[#allocation6 + $0x1020] sm:$0xff]
    %v2600 = vld [vmem:[#allocation6 + $0x1028] sm:$0xff]
    %v2601 = vld [vmem:[#allocation6 + $0x1030] sm:$0xff]
    %v2602 = vld [vmem:[#allocation6 + $0x1038] sm:$0xff]
    %v2603 = vld [vmem:[#allocation6 + $0x1040] sm:$0xff]
    %v2604 = vld [vmem:[#allocation6 + $0x1048] sm:$0xff]
    %v2605 = vld [vmem:[#allocation6 + $0x1050] sm:$0xff]
    %v2606 = vld [vmem:[#allocation6 + $0x1058] sm:$0xff]
    %v2607 = vld [vmem:[#allocation6 + $0x1060] sm:$0xff]
    %v2608 = vld [vmem:[#allocation6 + $0x1068] sm:$0xff]
    %v2609 = vld [vmem:[#allocation6 + $0x1070] sm:$0xff]
    %v2610 = vld [vmem:[#allocation6 + $0x1078] sm:$0xff]
    %v2611 = vld [vmem:[#allocation6 + $0x1080] sm:$0xff]
    %v2612 = vld [vmem:[#allocation6 + $0x1088] sm:$0xff]
    %v2613 = vld [vmem:[#allocation6 + $0x1090] sm:$0xff]
    %v2614 = vld [vmem:[#allocation6 + $0x1098] sm:$0xff]
    %v2615 = vld [vmem:[#allocation6 + $0x10a0] sm:$0xff]
    %v2616 = vld [vmem:[#allocation6 + $0x10a8] sm:$0xff]
    %v2617 = vld [vmem:[#allocation6 + $0x10b0] sm:$0xff]
    %v2618 = vld [vmem:[#allocation6 + $0x10b8] sm:$0xff]
    %v2619 = vld [vmem:[#allocation6 + $0x10c0] sm:$0xff]
    %v2620 = vld [vmem:[#allocation6 + $0x10c8] sm:$0xff]
    %v2621 = vld [vmem:[#allocation6 + $0x10d0] sm:$0xff]
    %v2622 = vld [vmem:[#allocation6 + $0x10d8] sm:$0xff]
    %v2623 = vld [vmem:[#allocation6 + $0x10e0] sm:$0xff]
    %v2624 = vld [vmem:[#allocation6 + $0x10e8] sm:$0xff]
    %v2625 = vld [vmem:[#allocation6 + $0x10f0] sm:$0xff]
    %v2626 = vld [vmem:[#allocation6 + $0x10f8] sm:$0xff]
    %v2627 = vld [vmem:[#allocation6 + $0x1100] sm:$0xff]
    %v2628 = vld [vmem:[#allocation6 + $0x1108] sm:$0xff]
    %v2629 = vld [vmem:[#allocation6 + $0x1110] sm:$0xff]
    %v2630 = vld [vmem:[#allocation6 + $0x1118] sm:$0xff]
    %v2631 = vld [vmem:[#allocation6 + $0x1120] sm:$0xff]
    %v2632 = vld [vmem:[#allocation6 + $0x1128] sm:$0xff]
    %v2633 = vld [vmem:[#allocation6 + $0x1130] sm:$0xff]
    %v2634 = vld [vmem:[#allocation6 + $0x1138] sm:$0xff]
    %v2635 = vld [vmem:[#allocation6 + $0x1140] sm:$0xff]
    %v2636 = vld [vmem:[#allocation6 + $0x1148] sm:$0xff]
    %v2637 = vld [vmem:[#allocation6 + $0x1150] sm:$0xff]
    %v2638 = vld [vmem:[#allocation6 + $0x1158] sm:$0xff]
    %v2639 = vld [vmem:[#allocation6 + $0x1160] sm:$0xff]
    %v2640 = vld [vmem:[#allocation6 + $0x1168] sm:$0xff]
    %v2641 = vld [vmem:[#allocation6 + $0x1170] sm:$0xff]
    %v2642 = vld [vmem:[#allocation6 + $0x1178] sm:$0xff]
    %v2643 = vld [vmem:[#allocation6 + $0x1180] sm:$0xff]
    %v2644 = vld [vmem:[#allocation6 + $0x1188] sm:$0xff]
    %v2645 = vld [vmem:[#allocation6 + $0x1190] sm:$0xff]
    %v2646 = vld [vmem:[#allocation6 + $0x1198] sm:$0xff]
    %v2647 = vld [vmem:[#allocation6 + $0x11a0] sm:$0xff]
    %v2648 = vld [vmem:[#allocation6 + $0x11a8] sm:$0xff]
    %v2649 = vld [vmem:[#allocation6 + $0x11b0] sm:$0xff]
    %v2650 = vld [vmem:[#allocation6 + $0x11b8] sm:$0xff]
    %v2651 = vld [vmem:[#allocation6 + $0x11c0] sm:$0xff]
    %v2652 = vld [vmem:[#allocation6 + $0x11c8] sm:$0xff]
    %v2653 = vld [vmem:[#allocation6 + $0x11d0] sm:$0xff]
    %v2654 = vld [vmem:[#allocation6 + $0x11d8] sm:$0xff]
    %v2655 = vld [vmem:[#allocation6 + $0x11e0] sm:$0xff]
    %v2656 = vld [vmem:[#allocation6 + $0x11e8] sm:$0xff]
    %v2657 = vld [vmem:[#allocation6 + $0x11f0] sm:$0xff]
    %v2658 = vld [vmem:[#allocation6 + $0x11f8] sm:$0xff]
    %v2659 = vld [vmem:[#allocation6 + $0x1200] sm:$0xff]
    %v2660 = vld [vmem:[#allocation6 + $0x1208] sm:$0xff]
    %v2661 = vld [vmem:[#allocation6 + $0x1210] sm:$0xff]
    %v2662 = vld [vmem:[#allocation6 + $0x1218] sm:$0xff]
    %v2663 = vld [vmem:[#allocation6 + $0x1220] sm:$0xff]
    %v2664 = vld [vmem:[#allocation6 + $0x1228] sm:$0xff]
    %v2665 = vld [vmem:[#allocation6 + $0x1230] sm:$0xff]
    %v2666 = vld [vmem:[#allocation6 + $0x1238] sm:$0xff]
    %v2667 = vld [vmem:[#allocation6 + $0x1240] sm:$0xff]
    %v2668 = vld [vmem:[#allocation6 + $0x1248] sm:$0xff]
    %v2669 = vld [vmem:[#allocation6 + $0x1250] sm:$0xff]
    %v2670 = vld [vmem:[#allocation6 + $0x1258] sm:$0xff]
    %v2671 = vld [vmem:[#allocation6 + $0x1260] sm:$0xff]
    %v2672 = vld [vmem:[#allocation6 + $0x1268] sm:$0xff]
    %v2673 = vld [vmem:[#allocation6 + $0x1270] sm:$0xff]
    %v2674 = vld [vmem:[#allocation6 + $0x1278] sm:$0xff]
    %v2675 = vld [vmem:[#allocation6 + $0x1280] sm:$0xff]
    %v2676 = vld [vmem:[#allocation6 + $0x1288] sm:$0xff]
    %v2677 = vld [vmem:[#allocation6 + $0x1290] sm:$0xff]
    %v2678 = vld [vmem:[#allocation6 + $0x1298] sm:$0xff]
    %v2679 = vld [vmem:[#allocation6 + $0x12a0] sm:$0xff]
    %v2680 = vld [vmem:[#allocation6 + $0x12a8] sm:$0xff]
    %v2681 = vld [vmem:[#allocation6 + $0x12b0] sm:$0xff]
    %v2682 = vld [vmem:[#allocation6 + $0x12b8] sm:$0xff]
    %v2683 = vld [vmem:[#allocation6 + $0x12c0] sm:$0xff]
    %v2684 = vld [vmem:[#allocation6 + $0x12c8] sm:$0xff]
    %v2685 = vld [vmem:[#allocation6 + $0x12d0] sm:$0xff]
    %v2686 = vld [vmem:[#allocation6 + $0x12d8] sm:$0xff]
    %v2687 = vld [vmem:[#allocation6 + $0x12e0] sm:$0xff]
    %v2688 = vld [vmem:[#allocation6 + $0x12e8] sm:$0xff]
    %v2689 = vld [vmem:[#allocation6 + $0x12f0] sm:$0xff]
    %v2690 = vld [vmem:[#allocation6 + $0x12f8] sm:$0xff]
    %v2691 = vld [vmem:[#allocation6 + $0x1300] sm:$0xff]
    %v2692 = vld [vmem:[#allocation6 + $0x1308] sm:$0xff]
    %v2693 = vld [vmem:[#allocation6 + $0x1310] sm:$0xff]
    %v2694 = vld [vmem:[#allocation6 + $0x1318] sm:$0xff]
    %v2695 = vld [vmem:[#allocation6 + $0x1320] sm:$0xff]
    %v2696 = vld [vmem:[#allocation6 + $0x1328] sm:$0xff]
    %v2697 = vld [vmem:[#allocation6 + $0x1330] sm:$0xff]
    %v2698 = vld [vmem:[#allocation6 + $0x1338] sm:$0xff]
    %v2699 = vld [vmem:[#allocation6 + $0x1340] sm:$0xff]
    %v2700 = vld [vmem:[#allocation6 + $0x1348] sm:$0xff]
    %v2701 = vld [vmem:[#allocation6 + $0x1350] sm:$0xff]
    %v2702 = vld [vmem:[#allocation6 + $0x1358] sm:$0xff]
    %v2703 = vld [vmem:[#allocation6 + $0x1360] sm:$0xff]
    %v2704 = vld [vmem:[#allocation6 + $0x1368] sm:$0xff]
    %v2705 = vld [vmem:[#allocation6 + $0x1370] sm:$0xff]
    %v2706 = vld [vmem:[#allocation6 + $0x1378] sm:$0xff]
    %v2707 = vld [vmem:[#allocation6 + $0x1380] sm:$0xff]
    %v2708 = vld [vmem:[#allocation6 + $0x1388] sm:$0xff]
    %v2709 = vld [vmem:[#allocation6 + $0x1390] sm:$0xff]
    %v2710 = vld [vmem:[#allocation6 + $0x1398] sm:$0xff]
    %v2711 = vld [vmem:[#allocation6 + $0x13a0] sm:$0xff]
    %v2712 = vld [vmem:[#allocation6 + $0x13a8] sm:$0xff]
    %v2713 = vld [vmem:[#allocation6 + $0x13b0] sm:$0xff]
    %v2714 = vld [vmem:[#allocation6 + $0x13b8] sm:$0xff]
    %v2715 = vld [vmem:[#allocation6 + $0x13c0] sm:$0xff]
    %v2716 = vld [vmem:[#allocation6 + $0x13c8] sm:$0xff]
    %v2717 = vld [vmem:[#allocation6 + $0x13d0] sm:$0xff]
    %v2718 = vld [vmem:[#allocation6 + $0x13d8] sm:$0xff]
    %v2719 = vld [vmem:[#allocation6 + $0x13e0] sm:$0xff]
    %v2720 = vld [vmem:[#allocation6 + $0x13e8] sm:$0xff]
    %v2721 = vld [vmem:[#allocation6 + $0x13f0] sm:$0xff]
    %v2722 = vld [vmem:[#allocation6 + $0x13f8] sm:$0xff]
    %v2723 = vld [vmem:[#allocation6 + $0x1400] sm:$0xff]
    %v2724 = vld [vmem:[#allocation6 + $0x1408] sm:$0xff]
    %v2725 = vld [vmem:[#allocation6 + $0x1410] sm:$0xff]
    %v2726 = vld [vmem:[#allocation6 + $0x1418] sm:$0xff]
    %v2727 = vld [vmem:[#allocation6 + $0x1420] sm:$0xff]
    %v2728 = vld [vmem:[#allocation6 + $0x1428] sm:$0xff]
    %v2729 = vld [vmem:[#allocation6 + $0x1430] sm:$0xff]
    %v2730 = vld [vmem:[#allocation6 + $0x1438] sm:$0xff]
    %v2731 = vld [vmem:[#allocation6 + $0x1440] sm:$0xff]
    %v2732 = vld [vmem:[#allocation6 + $0x1448] sm:$0xff]
    %v2733 = vld [vmem:[#allocation6 + $0x1450] sm:$0xff]
    %v2734 = vld [vmem:[#allocation6 + $0x1458] sm:$0xff]
    %v2735 = vld [vmem:[#allocation6 + $0x1460] sm:$0xff]
    %v2736 = vld [vmem:[#allocation6 + $0x1468] sm:$0xff]
    %v2737 = vld [vmem:[#allocation6 + $0x1470] sm:$0xff]
    %v2738 = vld [vmem:[#allocation6 + $0x1478] sm:$0xff]
    %v2739 = vld [vmem:[#allocation6 + $0x1480] sm:$0xff]
    %v2740 = vld [vmem:[#allocation6 + $0x1488] sm:$0xff]
    %v2741 = vld [vmem:[#allocation6 + $0x1490] sm:$0xff]
    %v2742 = vld [vmem:[#allocation6 + $0x1498] sm:$0xff]
    %v2743 = vld [vmem:[#allocation6 + $0x14a0] sm:$0xff]
    %v2744 = vld [vmem:[#allocation6 + $0x14a8] sm:$0xff]
    %v2745 = vld [vmem:[#allocation6 + $0x14b0] sm:$0xff]
    %v2746 = vld [vmem:[#allocation6 + $0x14b8] sm:$0xff]
    %v2747 = vld [vmem:[#allocation6 + $0x14c0] sm:$0xff]
    %v2748 = vld [vmem:[#allocation6 + $0x14c8] sm:$0xff]
    %v2749 = vld [vmem:[#allocation6 + $0x14d0] sm:$0xff]
    %v2750 = vld [vmem:[#allocation6 + $0x14d8] sm:$0xff]
    %v2751 = vld [vmem:[#allocation6 + $0x14e0] sm:$0xff]
    %v2752 = vld [vmem:[#allocation6 + $0x14e8] sm:$0xff]
    %v2753 = vld [vmem:[#allocation6 + $0x14f0] sm:$0xff]
    %v2754 = vld [vmem:[#allocation6 + $0x14f8] sm:$0xff]
    %v2755 = vld [vmem:[#allocation6 + $0x1500] sm:$0xff]
    %v2756 = vld [vmem:[#allocation6 + $0x1508] sm:$0xff]
    %v2757 = vld [vmem:[#allocation6 + $0x1510] sm:$0xff]
    %v2758 = vld [vmem:[#allocation6 + $0x1518] sm:$0xff]
    %v2759 = vld [vmem:[#allocation6 + $0x1520] sm:$0xff]
    %v2760 = vld [vmem:[#allocation6 + $0x1528] sm:$0xff]
    %v2761 = vld [vmem:[#allocation6 + $0x1530] sm:$0xff]
    %v2762 = vld [vmem:[#allocation6 + $0x1538] sm:$0xff]
    %v2763 = vld [vmem:[#allocation6 + $0x1540] sm:$0xff]
    %v2764 = vld [vmem:[#allocation6 + $0x1548] sm:$0xff]
    %v2765 = vld [vmem:[#allocation6 + $0x1550] sm:$0xff]
    %v2766 = vld [vmem:[#allocation6 + $0x1558] sm:$0xff]
    %v2767 = vld [vmem:[#allocation6 + $0x1560] sm:$0xff]
    %v2768 = vld [vmem:[#allocation6 + $0x1568] sm:$0xff]
    %v2769 = vld [vmem:[#allocation6 + $0x1570] sm:$0xff]
    %v2770 = vld [vmem:[#allocation6 + $0x1578] sm:$0xff]
    %v2771 = vld [vmem:[#allocation6 + $0x1580] sm:$0xff]
    %v2772 = vld [vmem:[#allocation6 + $0x1588] sm:$0xff]
    %v2773 = vld [vmem:[#allocation6 + $0x1590] sm:$0xff]
    %v2774 = vld [vmem:[#allocation6 + $0x1598] sm:$0xff]
    %v2775 = vld [vmem:[#allocation6 + $0x15a0] sm:$0xff]
    %v2776 = vld [vmem:[#allocation6 + $0x15a8] sm:$0xff]
    %v2777 = vld [vmem:[#allocation6 + $0x15b0] sm:$0xff]
    %v2778 = vld [vmem:[#allocation6 + $0x15b8] sm:$0xff]
    %v2779 = vld [vmem:[#allocation6 + $0x15c0] sm:$0xff]
    %v2780 = vld [vmem:[#allocation6 + $0x15c8] sm:$0xff]
    %v2781 = vld [vmem:[#allocation6 + $0x15d0] sm:$0xff]
    %v2782 = vld [vmem:[#allocation6 + $0x15d8] sm:$0xff]
    %v2783 = vld [vmem:[#allocation6 + $0x15e0] sm:$0xff]
    %v2784 = vld [vmem:[#allocation6 + $0x15e8] sm:$0xff]
    %v2785 = vld [vmem:[#allocation6 + $0x15f0] sm:$0xff]
    %v2786 = vld [vmem:[#allocation6 + $0x15f8] sm:$0xff]
    %v2787 = vld [vmem:[#allocation6 + $0x1600] sm:$0xff]
    %v2788 = vld [vmem:[#allocation6 + $0x1608] sm:$0xff]
    %v2789 = vld [vmem:[#allocation6 + $0x1610] sm:$0xff]
    %v2790 = vld [vmem:[#allocation6 + $0x1618] sm:$0xff]
    %v2791 = vld [vmem:[#allocation6 + $0x1620] sm:$0xff]
    %v2792 = vld [vmem:[#allocation6 + $0x1628] sm:$0xff]
    %v2793 = vld [vmem:[#allocation6 + $0x1630] sm:$0xff]
    %v2794 = vld [vmem:[#allocation6 + $0x1638] sm:$0xff]
    %v2795 = vld [vmem:[#allocation6 + $0x1640] sm:$0xff]
    %v2796 = vld [vmem:[#allocation6 + $0x1648] sm:$0xff]
    %v2797 = vld [vmem:[#allocation6 + $0x1650] sm:$0xff]
    %v2798 = vld [vmem:[#allocation6 + $0x1658] sm:$0xff]
    %v2799 = vld [vmem:[#allocation6 + $0x1660] sm:$0xff]
    %v2800 = vld [vmem:[#allocation6 + $0x1668] sm:$0xff]
    %v2801 = vld [vmem:[#allocation6 + $0x1670] sm:$0xff]
    %v2802 = vld [vmem:[#allocation6 + $0x1678] sm:$0xff]
    %v2803 = vld [vmem:[#allocation6 + $0x1680] sm:$0xff]
    %v2804 = vld [vmem:[#allocation6 + $0x1688] sm:$0xff]
    %v2805 = vld [vmem:[#allocation6 + $0x1690] sm:$0xff]
    %v2806 = vld [vmem:[#allocation6 + $0x1698] sm:$0xff]
    %v2807 = vld [vmem:[#allocation6 + $0x16a0] sm:$0xff]
    %v2808 = vld [vmem:[#allocation6 + $0x16a8] sm:$0xff]
    %v2809 = vld [vmem:[#allocation6 + $0x16b0] sm:$0xff]
    %v2810 = vld [vmem:[#allocation6 + $0x16b8] sm:$0xff]
    %v2811 = vld [vmem:[#allocation6 + $0x16c0] sm:$0xff]
    %v2812 = vld [vmem:[#allocation6 + $0x16c8] sm:$0xff]
    %v2813 = vld [vmem:[#allocation6 + $0x16d0] sm:$0xff]
    %v2814 = vld [vmem:[#allocation6 + $0x16d8] sm:$0xff]
    %v2815 = vld [vmem:[#allocation6 + $0x16e0] sm:$0xff]
    %v2816 = vld [vmem:[#allocation6 + $0x16e8] sm:$0xff]
    %v2817 = vld [vmem:[#allocation6 + $0x16f0] sm:$0xff]
    %v2818 = vld [vmem:[#allocation6 + $0x16f8] sm:$0xff]
    %v2819 = vld [vmem:[#allocation6 + $0x1700] sm:$0xff]
    %v2820 = vld [vmem:[#allocation6 + $0x1708] sm:$0xff]
    %v2821 = vld [vmem:[#allocation6 + $0x1710] sm:$0xff]
    %v2822 = vld [vmem:[#allocation6 + $0x1718] sm:$0xff]
    %v2823 = vld [vmem:[#allocation6 + $0x1720] sm:$0xff]
    %v2824 = vld [vmem:[#allocation6 + $0x1728] sm:$0xff]
    %v2825 = vld [vmem:[#allocation6 + $0x1730] sm:$0xff]
    %v2826 = vld [vmem:[#allocation6 + $0x1738] sm:$0xff]
    %v2827 = vld [vmem:[#allocation6 + $0x1740] sm:$0xff]
    %v2828 = vld [vmem:[#allocation6 + $0x1748] sm:$0xff]
    %v2829 = vld [vmem:[#allocation6 + $0x1750] sm:$0xff]
    %v2830 = vld [vmem:[#allocation6 + $0x1758] sm:$0xff]
    %v2831 = vld [vmem:[#allocation6 + $0x1760] sm:$0xff]
    %v2832 = vld [vmem:[#allocation6 + $0x1768] sm:$0xff]
    %v2833 = vld [vmem:[#allocation6 + $0x1770] sm:$0xff]
    %v2834 = vld [vmem:[#allocation6 + $0x1778] sm:$0xff]
    %v2835 = vld [vmem:[#allocation6 + $0x1780] sm:$0xff]
    %v2836 = vld [vmem:[#allocation6 + $0x1788] sm:$0xff]
    %v2837 = vld [vmem:[#allocation6 + $0x1790] sm:$0xff]
    %v2838 = vld [vmem:[#allocation6 + $0x1798] sm:$0xff]
    %v2839 = vld [vmem:[#allocation6 + $0x17a0] sm:$0xff]
    %v2840 = vld [vmem:[#allocation6 + $0x17a8] sm:$0xff]
    %v2841 = vld [vmem:[#allocation6 + $0x17b0] sm:$0xff]
    %v2842 = vld [vmem:[#allocation6 + $0x17b8] sm:$0xff]
    %v2843 = vld [vmem:[#allocation6 + $0x17c0] sm:$0xff]
    %v2844 = vld [vmem:[#allocation6 + $0x17c8] sm:$0xff]
    %v2845 = vld [vmem:[#allocation6 + $0x17d0] sm:$0xff]
    %v2846 = vld [vmem:[#allocation6 + $0x17d8] sm:$0xff]
    %v2847 = vld [vmem:[#allocation6 + $0x17e0] sm:$0xff]
    %v2848 = vld [vmem:[#allocation6 + $0x17e8] sm:$0xff]
    %v2849 = vld [vmem:[#allocation6 + $0x17f0] sm:$0xff]
    %v2850 = vld [vmem:[#allocation6 + $0x17f8] sm:$0xff]
    %v2851 = vld [vmem:[#allocation6 + $0x1800] sm:$0xff]
    %v2852 = vld [vmem:[#allocation6 + $0x1808] sm:$0xff]
    %v2853 = vld [vmem:[#allocation6 + $0x1810] sm:$0xff]
    %v2854 = vld [vmem:[#allocation6 + $0x1818] sm:$0xff]
    %v2855 = vld [vmem:[#allocation6 + $0x1820] sm:$0xff]
    %v2856 = vld [vmem:[#allocation6 + $0x1828] sm:$0xff]
    %v2857 = vld [vmem:[#allocation6 + $0x1830] sm:$0xff]
    %v2858 = vld [vmem:[#allocation6 + $0x1838] sm:$0xff]
    %v2859 = vld [vmem:[#allocation6 + $0x1840] sm:$0xff]
    %v2860 = vld [vmem:[#allocation6 + $0x1848] sm:$0xff]
    %v2861 = vld [vmem:[#allocation6 + $0x1850] sm:$0xff]
    %v2862 = vld [vmem:[#allocation6 + $0x1858] sm:$0xff]
    %v2863 = vld [vmem:[#allocation6 + $0x1860] sm:$0xff]
    %v2864 = vld [vmem:[#allocation6 + $0x1868] sm:$0xff]
    %v2865 = vld [vmem:[#allocation6 + $0x1870] sm:$0xff]
    %v2866 = vld [vmem:[#allocation6 + $0x1878] sm:$0xff]
    %v2867 = vld [vmem:[#allocation6 + $0x1880] sm:$0xff]
    %v2868 = vld [vmem:[#allocation6 + $0x1888] sm:$0xff]
    %v2869 = vld [vmem:[#allocation6 + $0x1890] sm:$0xff]
    %v2870 = vld [vmem:[#allocation6 + $0x1898] sm:$0xff]
    %v2871 = vld [vmem:[#allocation6 + $0x18a0] sm:$0xff]
    %v2872 = vld [vmem:[#allocation6 + $0x18a8] sm:$0xff]
    %v2873 = vld [vmem:[#allocation6 + $0x18b0] sm:$0xff]
    %v2874 = vld [vmem:[#allocation6 + $0x18b8] sm:$0xff]
    %v2875 = vld [vmem:[#allocation6 + $0x18c0] sm:$0xff]
    %v2876 = vld [vmem:[#allocation6 + $0x18c8] sm:$0xff]
    %v2877 = vld [vmem:[#allocation6 + $0x18d0] sm:$0xff]
    %v2878 = vld [vmem:[#allocation6 + $0x18d8] sm:$0xff]
    %v2879 = vld [vmem:[#allocation6 + $0x18e0] sm:$0xff]
    %v2880 = vld [vmem:[#allocation6 + $0x18e8] sm:$0xff]
    %v2881 = vld [vmem:[#allocation6 + $0x18f0] sm:$0xff]
    %v2882 = vld [vmem:[#allocation6 + $0x18f8] sm:$0xff]
    %v2883 = vld [vmem:[#allocation6 + $0x1900] sm:$0xff]
    %v2884 = vld [vmem:[#allocation6 + $0x1908] sm:$0xff]
    %v2885 = vld [vmem:[#allocation6 + $0x1910] sm:$0xff]
    %v2886 = vld [vmem:[#allocation6 + $0x1918] sm:$0xff]
    %v2887 = vld [vmem:[#allocation6 + $0x1920] sm:$0xff]
    %v2888 = vld [vmem:[#allocation6 + $0x1928] sm:$0xff]
    %v2889 = vld [vmem:[#allocation6 + $0x1930] sm:$0xff]
    %v2890 = vld [vmem:[#allocation6 + $0x1938] sm:$0xff]
    %v2891 = vld [vmem:[#allocation6 + $0x1940] sm:$0xff]
    %v2892 = vld [vmem:[#allocation6 + $0x1948] sm:$0xff]
    %v2893 = vld [vmem:[#allocation6 + $0x1950] sm:$0xff]
    %v2894 = vld [vmem:[#allocation6 + $0x1958] sm:$0xff]
    %v2895 = vld [vmem:[#allocation6 + $0x1960] sm:$0xff]
    %v2896 = vld [vmem:[#allocation6 + $0x1968] sm:$0xff]
    %v2897 = vld [vmem:[#allocation6 + $0x1970] sm:$0xff]
    %v2898 = vld [vmem:[#allocation6 + $0x1978] sm:$0xff]
    %v2899 = vld [vmem:[#allocation6 + $0x1980] sm:$0xff]
    %v2900 = vld [vmem:[#allocation6 + $0x1988] sm:$0xff]
    %v2901 = vld [vmem:[#allocation6 + $0x1990] sm:$0xff]
    %v2902 = vld [vmem:[#allocation6 + $0x1998] sm:$0xff]
    %v2903 = vld [vmem:[#allocation6 + $0x19a0] sm:$0xff]
    %v2904 = vld [vmem:[#allocation6 + $0x19a8] sm:$0xff]
    %v2905 = vld [vmem:[#allocation6 + $0x19b0] sm:$0xff]
    %v2906 = vld [vmem:[#allocation6 + $0x19b8] sm:$0xff]
    %v2907 = vld [vmem:[#allocation6 + $0x19c0] sm:$0xff]
    %v2908 = vld [vmem:[#allocation6 + $0x19c8] sm:$0xff]
    %v2909 = vld [vmem:[#allocation6 + $0x19d0] sm:$0xff]
    %v2910 = vld [vmem:[#allocation6 + $0x19d8] sm:$0xff]
    %v2911 = vld [vmem:[#allocation6 + $0x19e0] sm:$0xff]
    %v2912 = vld [vmem:[#allocation6 + $0x19e8] sm:$0xff]
    %v2913 = vld [vmem:[#allocation6 + $0x19f0] sm:$0xff]
    %v2914 = vld [vmem:[#allocation6 + $0x19f8] sm:$0xff]
    %v2915 = vld [vmem:[#allocation6 + $0x1a00] sm:$0xff]
    %v2916 = vld [vmem:[#allocation6 + $0x1a08] sm:$0xff]
    %v2917 = vld [vmem:[#allocation6 + $0x1a10] sm:$0xff]
    %v2918 = vld [vmem:[#allocation6 + $0x1a18] sm:$0xff]
    %v2919 = vld [vmem:[#allocation6 + $0x1a20] sm:$0xff]
    %v2920 = vld [vmem:[#allocation6 + $0x1a28] sm:$0xff]
    %v2921 = vld [vmem:[#allocation6 + $0x1a30] sm:$0xff]
    %v2922 = vld [vmem:[#allocation6 + $0x1a38] sm:$0xff]
    %v2923 = vld [vmem:[#allocation6 + $0x1a40] sm:$0xff]
    %v2924 = vld [vmem:[#allocation6 + $0x1a48] sm:$0xff]
    %v2925 = vld [vmem:[#allocation6 + $0x1a50] sm:$0xff]
    %v2926 = vld [vmem:[#allocation6 + $0x1a58] sm:$0xff]
    %v2927 = vld [vmem:[#allocation6 + $0x1a60] sm:$0xff]
    %v2928 = vld [vmem:[#allocation6 + $0x1a68] sm:$0xff]
    %v2929 = vld [vmem:[#allocation6 + $0x1a70] sm:$0xff]
    %v2930 = vld [vmem:[#allocation6 + $0x1a78] sm:$0xff]
    %v2931 = vld [vmem:[#allocation6 + $0x1a80] sm:$0xff]
    %v2932 = vld [vmem:[#allocation6 + $0x1a88] sm:$0xff]
    %v2933 = vld [vmem:[#allocation6 + $0x1a90] sm:$0xff]
    %v2934 = vld [vmem:[#allocation6 + $0x1a98] sm:$0xff]
    %v2935 = vld [vmem:[#allocation6 + $0x1aa0] sm:$0xff]
    %v2936 = vld [vmem:[#allocation6 + $0x1aa8] sm:$0xff]
    %v2937 = vld [vmem:[#allocation6 + $0x1ab0] sm:$0xff]
    %v2938 = vld [vmem:[#allocation6 + $0x1ab8] sm:$0xff]
    %v2939 = vld [vmem:[#allocation6 + $0x1ac0] sm:$0xff]
    %v2940 = vld [vmem:[#allocation6 + $0x1ac8] sm:$0xff]
    %v2941 = vld [vmem:[#allocation6 + $0x1ad0] sm:$0xff]
    %v2942 = vld [vmem:[#allocation6 + $0x1ad8] sm:$0xff]
    %v2943 = vld [vmem:[#allocation6 + $0x1ae0] sm:$0xff]
    %v2944 = vld [vmem:[#allocation6 + $0x1ae8] sm:$0xff]
    %v2945 = vld [vmem:[#allocation6 + $0x1af0] sm:$0xff]
    %v2946 = vld [vmem:[#allocation6 + $0x1af8] sm:$0xff]
    %v2947 = vld [vmem:[#allocation6 + $0x1b00] sm:$0xff]
    %v2948 = vld [vmem:[#allocation6 + $0x1b08] sm:$0xff]
    %v2949 = vld [vmem:[#allocation6 + $0x1b10] sm:$0xff]
    %v2950 = vld [vmem:[#allocation6 + $0x1b18] sm:$0xff]
    %v2951 = vld [vmem:[#allocation6 + $0x1b20] sm:$0xff]
    %v2952 = vld [vmem:[#allocation6 + $0x1b28] sm:$0xff]
    %v2953 = vld [vmem:[#allocation6 + $0x1b30] sm:$0xff]
    %v2954 = vld [vmem:[#allocation6 + $0x1b38] sm:$0xff]
    %v2955 = vld [vmem:[#allocation6 + $0x1b40] sm:$0xff]
    %v2956 = vld [vmem:[#allocation6 + $0x1b48] sm:$0xff]
    %v2957 = vld [vmem:[#allocation6 + $0x1b50] sm:$0xff]
    %v2958 = vld [vmem:[#allocation6 + $0x1b58] sm:$0xff]
    %v2959 = vld [vmem:[#allocation6 + $0x1b60] sm:$0xff]
    %v2960 = vld [vmem:[#allocation6 + $0x1b68] sm:$0xff]
    %v2961 = vld [vmem:[#allocation6 + $0x1b70] sm:$0xff]
    %v2962 = vld [vmem:[#allocation6 + $0x1b78] sm:$0xff]
    %v2963 = vld [vmem:[#allocation6 + $0x1b80] sm:$0xff]
    %v2964 = vld [vmem:[#allocation6 + $0x1b88] sm:$0xff]
    %v2965 = vld [vmem:[#allocation6 + $0x1b90] sm:$0xff]
    %v2966 = vld [vmem:[#allocation6 + $0x1b98] sm:$0xff]
    %v2967 = vld [vmem:[#allocation6 + $0x1ba0] sm:$0xff]
    %v2968 = vld [vmem:[#allocation6 + $0x1ba8] sm:$0xff]
    %v2969 = vld [vmem:[#allocation6 + $0x1bb0] sm:$0xff]
    %v2970 = vld [vmem:[#allocation6 + $0x1bb8] sm:$0xff]
    %v2971 = vld [vmem:[#allocation6 + $0x1bc0] sm:$0xff]
    %v2972 = vld [vmem:[#allocation6 + $0x1bc8] sm:$0xff]
    %v2973 = vld [vmem:[#allocation6 + $0x1bd0] sm:$0xff]
    %v2974 = vld [vmem:[#allocation6 + $0x1bd8] sm:$0xff]
    %v2975 = vld [vmem:[#allocation6 + $0x1be0] sm:$0xff]
    %v2976 = vld [vmem:[#allocation6 + $0x1be8] sm:$0xff]
    %v2977 = vld [vmem:[#allocation6 + $0x1bf0] sm:$0xff]
    %v2978 = vld [vmem:[#allocation6 + $0x1bf8] sm:$0xff]
    %v2979 = vld [vmem:[#allocation6 + $0x1c00] sm:$0xff]
    %v2980 = vld [vmem:[#allocation6 + $0x1c08] sm:$0xff]
    %v2981 = vld [vmem:[#allocation6 + $0x1c10] sm:$0xff]
    %v2982 = vld [vmem:[#allocation6 + $0x1c18] sm:$0xff]
    %v2983 = vld [vmem:[#allocation6 + $0x1c20] sm:$0xff]
    %v2984 = vld [vmem:[#allocation6 + $0x1c28] sm:$0xff]
    %v2985 = vld [vmem:[#allocation6 + $0x1c30] sm:$0xff]
    %v2986 = vld [vmem:[#allocation6 + $0x1c38] sm:$0xff]
    %v2987 = vld [vmem:[#allocation6 + $0x1c40] sm:$0xff]
    %v2988 = vld [vmem:[#allocation6 + $0x1c48] sm:$0xff]
    %v2989 = vld [vmem:[#allocation6 + $0x1c50] sm:$0xff]
    %v2990 = vld [vmem:[#allocation6 + $0x1c58] sm:$0xff]
    %v2991 = vld [vmem:[#allocation6 + $0x1c60] sm:$0xff]
    %v2992 = vld [vmem:[#allocation6 + $0x1c68] sm:$0xff]
    %v2993 = vld [vmem:[#allocation6 + $0x1c70] sm:$0xff]
    %v2994 = vld [vmem:[#allocation6 + $0x1c78] sm:$0xff]
    %v2995 = vld [vmem:[#allocation6 + $0x1c80] sm:$0xff]
    %v2996 = vld [vmem:[#allocation6 + $0x1c88] sm:$0xff]
    %v2997 = vld [vmem:[#allocation6 + $0x1c90] sm:$0xff]
    %v2998 = vld [vmem:[#allocation6 + $0x1c98] sm:$0xff]
    %v2999 = vld [vmem:[#allocation6 + $0x1ca0] sm:$0xff]
    %v3000 = vld [vmem:[#allocation6 + $0x1ca8] sm:$0xff]
    %v3001 = vld [vmem:[#allocation6 + $0x1cb0] sm:$0xff]
    %v3002 = vld [vmem:[#allocation6 + $0x1cb8] sm:$0xff]
    %v3003 = vld [vmem:[#allocation6 + $0x1cc0] sm:$0xff]
    %v3004 = vld [vmem:[#allocation6 + $0x1cc8] sm:$0xff]
    %v3005 = vld [vmem:[#allocation6 + $0x1cd0] sm:$0xff]
    %v3006 = vld [vmem:[#allocation6 + $0x1cd8] sm:$0xff]
    %v3007 = vld [vmem:[#allocation6 + $0x1ce0] sm:$0xff]
    %v3008 = vld [vmem:[#allocation6 + $0x1ce8] sm:$0xff]
    %v3009 = vld [vmem:[#allocation6 + $0x1cf0] sm:$0xff]
    %v3010 = vld [vmem:[#allocation6 + $0x1cf8] sm:$0xff]
    %v3011 = vld [vmem:[#allocation6 + $0x1d00] sm:$0xff]
    %v3012 = vld [vmem:[#allocation6 + $0x1d08] sm:$0xff]
    %v3013 = vld [vmem:[#allocation6 + $0x1d10] sm:$0xff]
    %v3014 = vld [vmem:[#allocation6 + $0x1d18] sm:$0xff]
    %v3015 = vld [vmem:[#allocation6 + $0x1d20] sm:$0xff]
    %v3016 = vld [vmem:[#allocation6 + $0x1d28] sm:$0xff]
    %v3017 = vld [vmem:[#allocation6 + $0x1d30] sm:$0xff]
    %v3018 = vld [vmem:[#allocation6 + $0x1d38] sm:$0xff]
    %v3019 = vld [vmem:[#allocation6 + $0x1d40] sm:$0xff]
    %v3020 = vld [vmem:[#allocation6 + $0x1d48] sm:$0xff]
    %v3021 = vld [vmem:[#allocation6 + $0x1d50] sm:$0xff]
    %v3022 = vld [vmem:[#allocation6 + $0x1d58] sm:$0xff]
    %v3023 = vld [vmem:[#allocation6 + $0x1d60] sm:$0xff]
    %v3024 = vld [vmem:[#allocation6 + $0x1d68] sm:$0xff]
    %v3025 = vld [vmem:[#allocation6 + $0x1d70] sm:$0xff]
    %v3026 = vld [vmem:[#allocation6 + $0x1d78] sm:$0xff]
    %v3027 = vld [vmem:[#allocation6 + $0x1d80] sm:$0xff]
    %v3028 = vld [vmem:[#allocation6 + $0x1d88] sm:$0xff]
    %v3029 = vld [vmem:[#allocation6 + $0x1d90] sm:$0xff]
    %v3030 = vld [vmem:[#allocation6 + $0x1d98] sm:$0xff]
    %v3031 = vld [vmem:[#allocation6 + $0x1da0] sm:$0xff]
    %v3032 = vld [vmem:[#allocation6 + $0x1da8] sm:$0xff]
    %v3033 = vld [vmem:[#allocation6 + $0x1db0] sm:$0xff]
    %v3034 = vld [vmem:[#allocation6 + $0x1db8] sm:$0xff]
    %v3035 = vld [vmem:[#allocation6 + $0x1dc0] sm:$0xff]
    %v3036 = vld [vmem:[#allocation6 + $0x1dc8] sm:$0xff]
    %v3037 = vld [vmem:[#allocation6 + $0x1dd0] sm:$0xff]
    %v3038 = vld [vmem:[#allocation6 + $0x1dd8] sm:$0xff]
    %v3039 = vld [vmem:[#allocation6 + $0x1de0] sm:$0xff]
    %v3040 = vld [vmem:[#allocation6 + $0x1de8] sm:$0xff]
    %v3041 = vld [vmem:[#allocation6 + $0x1df0] sm:$0xff]
    %v3042 = vld [vmem:[#allocation6 + $0x1df8] sm:$0xff]
    %v3043 = vld [vmem:[#allocation6 + $0x1e00] sm:$0xff]
    %v3044 = vld [vmem:[#allocation6 + $0x1e08] sm:$0xff]
    %v3045 = vld [vmem:[#allocation6 + $0x1e10] sm:$0xff]
    %v3046 = vld [vmem:[#allocation6 + $0x1e18] sm:$0xff]
    %v3047 = vld [vmem:[#allocation6 + $0x1e20] sm:$0xff]
    %v3048 = vld [vmem:[#allocation6 + $0x1e28] sm:$0xff]
    %v3049 = vld [vmem:[#allocation6 + $0x1e30] sm:$0xff]
    %v3050 = vld [vmem:[#allocation6 + $0x1e38] sm:$0xff]
    %v3051 = vld [vmem:[#allocation6 + $0x1e40] sm:$0xff]
    %v3052 = vld [vmem:[#allocation6 + $0x1e48] sm:$0xff]
    %v3053 = vld [vmem:[#allocation6 + $0x1e50] sm:$0xff]
    %v3054 = vld [vmem:[#allocation6 + $0x1e58] sm:$0xff]
    %v3055 = vld [vmem:[#allocation6 + $0x1e60] sm:$0xff]
    %v3056 = vld [vmem:[#allocation6 + $0x1e68] sm:$0xff]
    %v3057 = vld [vmem:[#allocation6 + $0x1e70] sm:$0xff]
    %v3058 = vld [vmem:[#allocation6 + $0x1e78] sm:$0xff]
    %v3059 = vld [vmem:[#allocation6 + $0x1e80] sm:$0xff]
    %v3060 = vld [vmem:[#allocation6 + $0x1e88] sm:$0xff]
    %v3061 = vld [vmem:[#allocation6 + $0x1e90] sm:$0xff]
    %v3062 = vld [vmem:[#allocation6 + $0x1e98] sm:$0xff]
    %v3063 = vld [vmem:[#allocation6 + $0x1ea0] sm:$0xff]
    %v3064 = vld [vmem:[#allocation6 + $0x1ea8] sm:$0xff]
    %v3065 = vld [vmem:[#allocation6 + $0x1eb0] sm:$0xff]
    %v3066 = vld [vmem:[#allocation6 + $0x1eb8] sm:$0xff]
    %v3067 = vld [vmem:[#allocation6 + $0x1ec0] sm:$0xff]
    %v3068 = vld [vmem:[#allocation6 + $0x1ec8] sm:$0xff]
    %v3069 = vld [vmem:[#allocation6 + $0x1ed0] sm:$0xff]
    %v3070 = vld [vmem:[#allocation6 + $0x1ed8] sm:$0xff]
    %v3071 = vld [vmem:[#allocation6 + $0x1ee0] sm:$0xff]
    %v3072 = vld [vmem:[#allocation6 + $0x1ee8] sm:$0xff]
    %v3073 = vld [vmem:[#allocation6 + $0x1ef0] sm:$0xff]
    %v3074 = vld [vmem:[#allocation6 + $0x1ef8] sm:$0xff]
    %v3075 = vld [vmem:[#allocation6 + $0x1f00] sm:$0xff]
    %v3076 = vld [vmem:[#allocation6 + $0x1f08] sm:$0xff]
    %v3077 = vld [vmem:[#allocation6 + $0x1f10] sm:$0xff]
    %v3078 = vld [vmem:[#allocation6 + $0x1f18] sm:$0xff]
    %v3079 = vld [vmem:[#allocation6 + $0x1f20] sm:$0xff]
    %v3080 = vld [vmem:[#allocation6 + $0x1f28] sm:$0xff]
    %v3081 = vld [vmem:[#allocation6 + $0x1f30] sm:$0xff]
    %v3082 = vld [vmem:[#allocation6 + $0x1f38] sm:$0xff]
    %v3083 = vld [vmem:[#allocation6 + $0x1f40] sm:$0xff]
    %v3084 = vld [vmem:[#allocation6 + $0x1f48] sm:$0xff]
    %v3085 = vld [vmem:[#allocation6 + $0x1f50] sm:$0xff]
    %v3086 = vld [vmem:[#allocation6 + $0x1f58] sm:$0xff]
    %v3087 = vld [vmem:[#allocation6 + $0x1f60] sm:$0xff]
    %v3088 = vld [vmem:[#allocation6 + $0x1f68] sm:$0xff]
    %v3089 = vld [vmem:[#allocation6 + $0x1f70] sm:$0xff]
    %v3090 = vld [vmem:[#allocation6 + $0x1f78] sm:$0xff]
    %v3091 = vld [vmem:[#allocation6 + $0x1f80] sm:$0xff]
    %v3092 = vld [vmem:[#allocation6 + $0x1f88] sm:$0xff]
    %v3093 = vld [vmem:[#allocation6 + $0x1f90] sm:$0xff]
    %v3094 = vld [vmem:[#allocation6 + $0x1f98] sm:$0xff]
    %v3095 = vld [vmem:[#allocation6 + $0x1fa0] sm:$0xff]
    %v3096 = vld [vmem:[#allocation6 + $0x1fa8] sm:$0xff]
    %v3097 = vld [vmem:[#allocation6 + $0x1fb0] sm:$0xff]
    %v3098 = vld [vmem:[#allocation6 + $0x1fb8] sm:$0xff]
    %v3099 = vld [vmem:[#allocation6 + $0x1fc0] sm:$0xff]
    %v3100 = vld [vmem:[#allocation6 + $0x1fc8] sm:$0xff]
    %v3101 = vld [vmem:[#allocation6 + $0x1fd0] sm:$0xff]
    %v3102 = vld [vmem:[#allocation6 + $0x1fd8] sm:$0xff]
    %v3103 = vld [vmem:[#allocation6 + $0x1fe0] sm:$0xff]
    %v3104 = vld [vmem:[#allocation6 + $0x1fe8] sm:$0xff]
    %v3105 = vld [vmem:[#allocation6 + $0x1ff0] sm:$0xff]
    %v3106 = vld [vmem:[#allocation6 + $0x1ff8] sm:$0xff]
    %v3107 = vld [vmem:[#allocation6 + $0x2000] sm:$0xff]
    %v3108 = vld [vmem:[#allocation6 + $0x2008] sm:$0xff]
    %v3109 = vld [vmem:[#allocation6 + $0x2010] sm:$0xff]
    %v3110 = vld [vmem:[#allocation6 + $0x2018] sm:$0xff]
    %v3111 = vld [vmem:[#allocation6 + $0x2020] sm:$0xff]
    %v3112 = vld [vmem:[#allocation6 + $0x2028] sm:$0xff]
    %v3113 = vld [vmem:[#allocation6 + $0x2030] sm:$0xff]
    %v3114 = vld [vmem:[#allocation6 + $0x2038] sm:$0xff]
    %v3115 = vld [vmem:[#allocation6 + $0x2040] sm:$0xff]
    %v3116 = vld [vmem:[#allocation6 + $0x2048] sm:$0xff]
    %v3117 = vld [vmem:[#allocation6 + $0x2050] sm:$0xff]
    %v3118 = vld [vmem:[#allocation6 + $0x2058] sm:$0xff]
    %v3119 = vld [vmem:[#allocation6 + $0x2060] sm:$0xff]
    %v3120 = vld [vmem:[#allocation6 + $0x2068] sm:$0xff]
    %v3121 = vld [vmem:[#allocation6 + $0x2070] sm:$0xff]
    %v3122 = vld [vmem:[#allocation6 + $0x2078] sm:$0xff]
    %v3123 = vld [vmem:[#allocation6 + $0x2080] sm:$0xff]
    %v3124 = vld [vmem:[#allocation6 + $0x2088] sm:$0xff]
    %v3125 = vld [vmem:[#allocation6 + $0x2090] sm:$0xff]
    %v3126 = vld [vmem:[#allocation6 + $0x2098] sm:$0xff]
    %v3127 = vld [vmem:[#allocation6 + $0x20a0] sm:$0xff]
    %v3128 = vld [vmem:[#allocation6 + $0x20a8] sm:$0xff]
    %v3129 = vld [vmem:[#allocation6 + $0x20b0] sm:$0xff]
    %v3130 = vld [vmem:[#allocation6 + $0x20b8] sm:$0xff]
    %v3131 = vld [vmem:[#allocation6 + $0x20c0] sm:$0xff]
    %v3132 = vld [vmem:[#allocation6 + $0x20c8] sm:$0xff]
    %v3133 = vld [vmem:[#allocation6 + $0x20d0] sm:$0xff]
    %v3134 = vld [vmem:[#allocation6 + $0x20d8] sm:$0xff]
    %v3135 = vld [vmem:[#allocation6 + $0x20e0] sm:$0xff]
    %v3136 = vld [vmem:[#allocation6 + $0x20e8] sm:$0xff]
    %v3137 = vld [vmem:[#allocation6 + $0x20f0] sm:$0xff]
    %v3138 = vld [vmem:[#allocation6 + $0x20f8] sm:$0xff]
    %v3139 = vld [vmem:[#allocation6 + $0x2100] sm:$0xff]
    %v3140 = vld [vmem:[#allocation6 + $0x2108] sm:$0xff]
    %v3141 = vld [vmem:[#allocation6 + $0x2110] sm:$0xff]
    %v3142 = vld [vmem:[#allocation6 + $0x2118] sm:$0xff]
    %v3143 = vld [vmem:[#allocation6 + $0x2120] sm:$0xff]
    %v3144 = vld [vmem:[#allocation6 + $0x2128] sm:$0xff]
    %v3145 = vld [vmem:[#allocation6 + $0x2130] sm:$0xff]
    %v3146 = vld [vmem:[#allocation6 + $0x2138] sm:$0xff]
    %v3147 = vld [vmem:[#allocation6 + $0x2140] sm:$0xff]
    %v3148 = vld [vmem:[#allocation6 + $0x2148] sm:$0xff]
    %v3149 = vld [vmem:[#allocation6 + $0x2150] sm:$0xff]
    %v3150 = vld [vmem:[#allocation6 + $0x2158] sm:$0xff]
    %v3151 = vld [vmem:[#allocation6 + $0x2160] sm:$0xff]
    %v3152 = vld [vmem:[#allocation6 + $0x2168] sm:$0xff]
    %v3153 = vld [vmem:[#allocation6 + $0x2170] sm:$0xff]
    %v3154 = vld [vmem:[#allocation6 + $0x2178] sm:$0xff]
    %v3155 = vld [vmem:[#allocation6 + $0x2180] sm:$0xff]
    %v3156 = vld [vmem:[#allocation6 + $0x2188] sm:$0xff]
    %v3157 = vld [vmem:[#allocation6 + $0x2190] sm:$0xff]
    %v3158 = vld [vmem:[#allocation6 + $0x2198] sm:$0xff]
    %v3159 = vld [vmem:[#allocation6 + $0x21a0] sm:$0xff]
    %v3160 = vld [vmem:[#allocation6 + $0x21a8] sm:$0xff]
    %v3161 = vld [vmem:[#allocation6 + $0x21b0] sm:$0xff]
    %v3162 = vld [vmem:[#allocation6 + $0x21b8] sm:$0xff]
    %v3163 = vld [vmem:[#allocation6 + $0x21c0] sm:$0xff]
    %v3164 = vld [vmem:[#allocation6 + $0x21c8] sm:$0xff]
    %v3165 = vld [vmem:[#allocation6 + $0x21d0] sm:$0xff]
    %v3166 = vld [vmem:[#allocation6 + $0x21d8] sm:$0xff]
    %v3167 = vld [vmem:[#allocation6 + $0x21e0] sm:$0xff]
    %v3168 = vld [vmem:[#allocation6 + $0x21e8] sm:$0xff]
    %v3169 = vld [vmem:[#allocation6 + $0x21f0] sm:$0xff]
    %v3170 = vld [vmem:[#allocation6 + $0x21f8] sm:$0xff]
    %v3171 = vld [vmem:[#allocation6 + $0x2200] sm:$0xff]
    %v3172 = vld [vmem:[#allocation6 + $0x2208] sm:$0xff]
    %v3173 = vld [vmem:[#allocation6 + $0x2210] sm:$0xff]
    %v3174 = vld [vmem:[#allocation6 + $0x2218] sm:$0xff]
    %v3175 = vld [vmem:[#allocation6 + $0x2220] sm:$0xff]
    %v3176 = vld [vmem:[#allocation6 + $0x2228] sm:$0xff]
    %v3177 = vld [vmem:[#allocation6 + $0x2230] sm:$0xff]
    %v3178 = vld [vmem:[#allocation6 + $0x2238] sm:$0xff]
    %v3179 = vld [vmem:[#allocation6 + $0x2240] sm:$0xff]
    %v3180 = vld [vmem:[#allocation6 + $0x2248] sm:$0xff]
    %v3181 = vld [vmem:[#allocation6 + $0x2250] sm:$0xff]
    %v3182 = vld [vmem:[#allocation6 + $0x2258] sm:$0xff]
    %v3183 = vld [vmem:[#allocation6 + $0x2260] sm:$0xff]
    %v3184 = vld [vmem:[#allocation6 + $0x2268] sm:$0xff]
    %v3185 = vld [vmem:[#allocation6 + $0x2270] sm:$0xff]
    %v3186 = vld [vmem:[#allocation6 + $0x2278] sm:$0xff]
    %v3187 = vld [vmem:[#allocation6 + $0x2280] sm:$0xff]
    %v3188 = vld [vmem:[#allocation6 + $0x2288] sm:$0xff]
    %v3189 = vld [vmem:[#allocation6 + $0x2290] sm:$0xff]
    %v3190 = vld [vmem:[#allocation6 + $0x2298] sm:$0xff]
    %v3191 = vld [vmem:[#allocation6 + $0x22a0] sm:$0xff]
    %v3192 = vld [vmem:[#allocation6 + $0x22a8] sm:$0xff]
    %v3193 = vld [vmem:[#allocation6 + $0x22b0] sm:$0xff]
    %v3194 = vld [vmem:[#allocation6 + $0x22b8] sm:$0xff]
    %v3195 = vld [vmem:[#allocation6 + $0x22c0] sm:$0xff]
    %v3196 = vld [vmem:[#allocation6 + $0x22c8] sm:$0xff]
    %v3197 = vld [vmem:[#allocation6 + $0x22d0] sm:$0xff]
    %v3198 = vld [vmem:[#allocation6 + $0x22d8] sm:$0xff]
    %v3199 = vld [vmem:[#allocation6 + $0x22e0] sm:$0xff]
    %v3200 = vld [vmem:[#allocation6 + $0x22e8] sm:$0xff]
    %v3201 = vld [vmem:[#allocation6 + $0x22f0] sm:$0xff]
    %v3202 = vld [vmem:[#allocation6 + $0x22f8] sm:$0xff]
    %v3203 = vld [vmem:[#allocation6 + $0x2300] sm:$0xff]
    %v3204 = vld [vmem:[#allocation6 + $0x2308] sm:$0xff]
    %v3205 = vld [vmem:[#allocation6 + $0x2310] sm:$0xff]
    %v3206 = vld [vmem:[#allocation6 + $0x2318] sm:$0xff]
    %v3207 = vld [vmem:[#allocation6 + $0x2320] sm:$0xff]
    %v3208 = vld [vmem:[#allocation6 + $0x2328] sm:$0xff]
    %v3209 = vld [vmem:[#allocation6 + $0x2330] sm:$0xff]
    %v3210 = vld [vmem:[#allocation6 + $0x2338] sm:$0xff]
    %v3211 = vld [vmem:[#allocation6 + $0x2340] sm:$0xff]
    %v3212 = vld [vmem:[#allocation6 + $0x2348] sm:$0xff]
    %v3213 = vld [vmem:[#allocation6 + $0x2350] sm:$0xff]
    %v3214 = vld [vmem:[#allocation6 + $0x2358] sm:$0xff]
    %v3215 = vld [vmem:[#allocation6 + $0x2360] sm:$0xff]
    %v3216 = vld [vmem:[#allocation6 + $0x2368] sm:$0xff]
    %v3217 = vld [vmem:[#allocation6 + $0x2370] sm:$0xff]
    %v3218 = vld [vmem:[#allocation6 + $0x2378] sm:$0xff]
    %v3219 = vld [vmem:[#allocation6 + $0x2380] sm:$0xff]
    %v3220 = vld [vmem:[#allocation6 + $0x2388] sm:$0xff]
    %v3221 = vld [vmem:[#allocation6 + $0x2390] sm:$0xff]
    %v3222 = vld [vmem:[#allocation6 + $0x2398] sm:$0xff]
    %v3223 = vld [vmem:[#allocation6 + $0x23a0] sm:$0xff]
    %v3224 = vld [vmem:[#allocation6 + $0x23a8] sm:$0xff]
    %v3225 = vld [vmem:[#allocation6 + $0x23b0] sm:$0xff]
    %v3226 = vld [vmem:[#allocation6 + $0x23b8] sm:$0xff]
    %v3227 = vld [vmem:[#allocation6 + $0x23c0] sm:$0xff]
    %v3228 = vld [vmem:[#allocation6 + $0x23c8] sm:$0xff]
    %v3229 = vld [vmem:[#allocation6 + $0x23d0] sm:$0xff]
    %v3230 = vld [vmem:[#allocation6 + $0x23d8] sm:$0xff]
    %v3231 = vld [vmem:[#allocation6 + $0x23e0] sm:$0xff]
    %v3232 = vld [vmem:[#allocation6 + $0x23e8] sm:$0xff]
    %v3233 = vld [vmem:[#allocation6 + $0x23f0] sm:$0xff]
    %v3234 = vld [vmem:[#allocation6 + $0x23f8] sm:$0xff]
    %v3235 = vld [vmem:[#allocation6 + $0x2400] sm:$0xff]
    %v3236 = vld [vmem:[#allocation6 + $0x2408] sm:$0xff]
    %v3237 = vld [vmem:[#allocation6 + $0x2410] sm:$0xff]
    %v3238 = vld [vmem:[#allocation6 + $0x2418] sm:$0xff]
    %v3239 = vld [vmem:[#allocation6 + $0x2420] sm:$0xff]
    %v3240 = vld [vmem:[#allocation6 + $0x2428] sm:$0xff]
    %v3241 = vld [vmem:[#allocation6 + $0x2430] sm:$0xff]
    %v3242 = vld [vmem:[#allocation6 + $0x2438] sm:$0xff]
    %v3243 = vld [vmem:[#allocation6 + $0x2440] sm:$0xff]
    %v3244 = vld [vmem:[#allocation6 + $0x2448] sm:$0xff]
    %v3245 = vld [vmem:[#allocation6 + $0x2450] sm:$0xff]
    %v3246 = vld [vmem:[#allocation6 + $0x2458] sm:$0xff]
    %v3247 = vld [vmem:[#allocation6 + $0x2460] sm:$0xff]
    %v3248 = vld [vmem:[#allocation6 + $0x2468] sm:$0xff]
    %v3249 = vld [vmem:[#allocation6 + $0x2470] sm:$0xff]
    %v3250 = vld [vmem:[#allocation6 + $0x2478] sm:$0xff]
    %v3251 = vld [vmem:[#allocation6 + $0x2480] sm:$0xff]
    %v3252 = vld [vmem:[#allocation6 + $0x2488] sm:$0xff]
    %v3253 = vld [vmem:[#allocation6 + $0x2490] sm:$0xff]
    %v3254 = vld [vmem:[#allocation6 + $0x2498] sm:$0xff]
    %v3255 = vld [vmem:[#allocation6 + $0x24a0] sm:$0xff]
    %v3256 = vld [vmem:[#allocation6 + $0x24a8] sm:$0xff]
    %v3257 = vld [vmem:[#allocation6 + $0x24b0] sm:$0xff]
    %v3258 = vld [vmem:[#allocation6 + $0x24b8] sm:$0xff]
    %v3259 = vld [vmem:[#allocation6 + $0x24c0] sm:$0xff]
    %v3260 = vld [vmem:[#allocation6 + $0x24c8] sm:$0xff]
    %v3261 = vld [vmem:[#allocation6 + $0x24d0] sm:$0xff]
    %v3262 = vld [vmem:[#allocation6 + $0x24d8] sm:$0xff]
    %v3263 = vld [vmem:[#allocation6 + $0x24e0] sm:$0xff]
    %v3264 = vld [vmem:[#allocation6 + $0x24e8] sm:$0xff]
    %v3265 = vld [vmem:[#allocation6 + $0x24f0] sm:$0xff]
    %v3266 = vld [vmem:[#allocation6 + $0x24f8] sm:$0xff]
    %v3267 = vld [vmem:[#allocation6 + $0x2500] sm:$0xff]
    %v3268 = vld [vmem:[#allocation6 + $0x2508] sm:$0xff]
    %v3269 = vld [vmem:[#allocation6 + $0x2510] sm:$0xff]
    %v3270 = vld [vmem:[#allocation6 + $0x2518] sm:$0xff]
    %v3271 = vld [vmem:[#allocation6 + $0x2520] sm:$0xff]
    %v3272 = vld [vmem:[#allocation6 + $0x2528] sm:$0xff]
    %v3273 = vld [vmem:[#allocation6 + $0x2530] sm:$0xff]
    %v3274 = vld [vmem:[#allocation6 + $0x2538] sm:$0xff]
    %v3275 = vld [vmem:[#allocation6 + $0x2540] sm:$0xff]
    %v3276 = vld [vmem:[#allocation6 + $0x2548] sm:$0xff]
    %v3277 = vld [vmem:[#allocation6 + $0x2550] sm:$0xff]
    %v3278 = vld [vmem:[#allocation6 + $0x2558] sm:$0xff]
    %v3279 = vld [vmem:[#allocation6 + $0x2560] sm:$0xff]
    %v3280 = vld [vmem:[#allocation6 + $0x2568] sm:$0xff]
    %v3281 = vld [vmem:[#allocation6 + $0x2570] sm:$0xff]
    %v3282 = vld [vmem:[#allocation6 + $0x2578] sm:$0xff]
    %v3283 = vld [vmem:[#allocation6 + $0x2580] sm:$0xff]
    %v3284 = vld [vmem:[#allocation6 + $0x2588] sm:$0xff]
    %v3285 = vld [vmem:[#allocation6 + $0x2590] sm:$0xff]
    %v3286 = vld [vmem:[#allocation6 + $0x2598] sm:$0xff]
    %v3287 = vld [vmem:[#allocation6 + $0x25a0] sm:$0xff]
    %v3288 = vld [vmem:[#allocation6 + $0x25a8] sm:$0xff]
    %v3289 = vld [vmem:[#allocation6 + $0x25b0] sm:$0xff]
    %v3290 = vld [vmem:[#allocation6 + $0x25b8] sm:$0xff]
    %v3291 = vld [vmem:[#allocation6 + $0x25c0] sm:$0xff]
    %v3292 = vld [vmem:[#allocation6 + $0x25c8] sm:$0xff]
    %v3293 = vld [vmem:[#allocation6 + $0x25d0] sm:$0xff]
    %v3294 = vld [vmem:[#allocation6 + $0x25d8] sm:$0xff]
    %v3295 = vld [vmem:[#allocation6 + $0x25e0] sm:$0xff]
    %v3296 = vld [vmem:[#allocation6 + $0x25e8] sm:$0xff]
    %v3297 = vld [vmem:[#allocation6 + $0x25f0] sm:$0xff]
    %v3298 = vld [vmem:[#allocation6 + $0x25f8] sm:$0xff]
    %v3299 = vld [vmem:[#allocation6 + $0x2600] sm:$0xff]
    %v3300 = vld [vmem:[#allocation6 + $0x2608] sm:$0xff]
    %v3301 = vld [vmem:[#allocation6 + $0x2610] sm:$0xff]
    %v3302 = vld [vmem:[#allocation6 + $0x2618] sm:$0xff]
    %v3303 = vld [vmem:[#allocation6 + $0x2620] sm:$0xff]
    %v3304 = vld [vmem:[#allocation6 + $0x2628] sm:$0xff]
    %v3305 = vld [vmem:[#allocation6 + $0x2630] sm:$0xff]
    %v3306 = vld [vmem:[#allocation6 + $0x2638] sm:$0xff]
    %v3307 = vld [vmem:[#allocation6 + $0x2640] sm:$0xff]
    %v3308 = vld [vmem:[#allocation6 + $0x2648] sm:$0xff]
    %v3309 = vld [vmem:[#allocation6 + $0x2650] sm:$0xff]
    %v3310 = vld [vmem:[#allocation6 + $0x2658] sm:$0xff]
    %v3311 = vld [vmem:[#allocation6 + $0x2660] sm:$0xff]
    %v3312 = vld [vmem:[#allocation6 + $0x2668] sm:$0xff]
    %v3313 = vld [vmem:[#allocation6 + $0x2670] sm:$0xff]
    %v3314 = vld [vmem:[#allocation6 + $0x2678] sm:$0xff]
    %v3315 = vld [vmem:[#allocation6 + $0x2680] sm:$0xff]
    %v3316 = vld [vmem:[#allocation6 + $0x2688] sm:$0xff]
    %v3317 = vld [vmem:[#allocation6 + $0x2690] sm:$0xff]
    %v3318 = vld [vmem:[#allocation6 + $0x2698] sm:$0xff]
    %v3319 = vld [vmem:[#allocation6 + $0x26a0] sm:$0xff]
    %v3320 = vld [vmem:[#allocation6 + $0x26a8] sm:$0xff]
    %v3321 = vld [vmem:[#allocation6 + $0x26b0] sm:$0xff]
    %v3322 = vld [vmem:[#allocation6 + $0x26b8] sm:$0xff]
    %v3323 = vld [vmem:[#allocation6 + $0x26c0] sm:$0xff]
    %v3324 = vld [vmem:[#allocation6 + $0x26c8] sm:$0xff]
    %v3325 = vld [vmem:[#allocation6 + $0x26d0] sm:$0xff]
    %v3326 = vld [vmem:[#allocation6 + $0x26d8] sm:$0xff]
    %v3327 = vld [vmem:[#allocation6 + $0x26e0] sm:$0xff]
    %v3328 = vld [vmem:[#allocation6 + $0x26e8] sm:$0xff]
    %v3329 = vld [vmem:[#allocation6 + $0x26f0] sm:$0xff]
    %v3330 = vld [vmem:[#allocation6 + $0x26f8] sm:$0xff]
    %v3331 = vld [vmem:[#allocation6 + $0x2700] sm:$0xff]
    %v3332 = vld [vmem:[#allocation6 + $0x2708] sm:$0xff]
    %v3333 = vld [vmem:[#allocation6 + $0x2710] sm:$0xff]
    %v3334 = vld [vmem:[#allocation6 + $0x2718] sm:$0xff]
    %v3335 = vld [vmem:[#allocation6 + $0x2720] sm:$0xff]
    %v3336 = vld [vmem:[#allocation6 + $0x2728] sm:$0xff]
    %v3337 = vld [vmem:[#allocation6 + $0x2730] sm:$0xff]
    %v3338 = vld [vmem:[#allocation6 + $0x2738] sm:$0xff]
    %v3339 = vld [vmem:[#allocation6 + $0x2740] sm:$0xff]
    %v3340 = vld [vmem:[#allocation6 + $0x2748] sm:$0xff]
    %v3341 = vld [vmem:[#allocation6 + $0x2750] sm:$0xff]
    %v3342 = vld [vmem:[#allocation6 + $0x2758] sm:$0xff]
    %v3343 = vld [vmem:[#allocation6 + $0x2760] sm:$0xff]
    %v3344 = vld [vmem:[#allocation6 + $0x2768] sm:$0xff]
    %v3345 = vld [vmem:[#allocation6 + $0x2770] sm:$0xff]
    %v3346 = vld [vmem:[#allocation6 + $0x2778] sm:$0xff]
    %v3347 = vld [vmem:[#allocation6 + $0x2780] sm:$0xff]
    %v3348 = vld [vmem:[#allocation6 + $0x2788] sm:$0xff]
    %v3349 = vld [vmem:[#allocation6 + $0x2790] sm:$0xff]
    %v3350 = vld [vmem:[#allocation6 + $0x2798] sm:$0xff]
    %v3351 = vld [vmem:[#allocation6 + $0x27a0] sm:$0xff]
    %v3352 = vld [vmem:[#allocation6 + $0x27a8] sm:$0xff]
    %v3353 = vld [vmem:[#allocation6 + $0x27b0] sm:$0xff]
    %v3354 = vld [vmem:[#allocation6 + $0x27b8] sm:$0xff]
    %v3355 = vld [vmem:[#allocation6 + $0x27c0] sm:$0xff]
    %v3356 = vld [vmem:[#allocation6 + $0x27c8] sm:$0xff]
    %v3357 = vld [vmem:[#allocation6 + $0x27d0] sm:$0xff]
    %v3358 = vld [vmem:[#allocation6 + $0x27d8] sm:$0xff]
    %v3359 = vld [vmem:[#allocation6 + $0x27e0] sm:$0xff]
    %v3360 = vld [vmem:[#allocation6 + $0x27e8] sm:$0xff]
    %v3361 = vld [vmem:[#allocation6 + $0x27f0] sm:$0xff]
    %v3362 = vld [vmem:[#allocation6 + $0x27f8] sm:$0xff]
    %v3363 = vld [vmem:[#allocation6 + $0x2800] sm:$0xff]
    %v3364 = vld [vmem:[#allocation6 + $0x2808] sm:$0xff]
    %v3365 = vld [vmem:[#allocation6 + $0x2810] sm:$0xff]
    %v3366 = vld [vmem:[#allocation6 + $0x2818] sm:$0xff]
    %v3367 = vld [vmem:[#allocation6 + $0x2820] sm:$0xff]
    %v3368 = vld [vmem:[#allocation6 + $0x2828] sm:$0xff]
    %v3369 = vld [vmem:[#allocation6 + $0x2830] sm:$0xff]
    %v3370 = vld [vmem:[#allocation6 + $0x2838] sm:$0xff]
    %v3371 = vld [vmem:[#allocation6 + $0x2840] sm:$0xff]
    %v3372 = vld [vmem:[#allocation6 + $0x2848] sm:$0xff]
    %v3373 = vld [vmem:[#allocation6 + $0x2850] sm:$0xff]
    %v3374 = vld [vmem:[#allocation6 + $0x2858] sm:$0xff]
    %v3375 = vld [vmem:[#allocation6 + $0x2860] sm:$0xff]
    %v3376 = vld [vmem:[#allocation6 + $0x2868] sm:$0xff]
    %v3377 = vld [vmem:[#allocation6 + $0x2870] sm:$0xff]
    %v3378 = vld [vmem:[#allocation6 + $0x2878] sm:$0xff]
    %v3379 = vld [vmem:[#allocation6 + $0x2880] sm:$0xff]
    %v3380 = vld [vmem:[#allocation6 + $0x2888] sm:$0xff]
    %v3381 = vld [vmem:[#allocation6 + $0x2890] sm:$0xff]
    %v3382 = vld [vmem:[#allocation6 + $0x2898] sm:$0xff]
    %v3383 = vld [vmem:[#allocation6 + $0x28a0] sm:$0xff]
    %v3384 = vld [vmem:[#allocation6 + $0x28a8] sm:$0xff]
    %v3385 = vld [vmem:[#allocation6 + $0x28b0] sm:$0xff]
    %v3386 = vld [vmem:[#allocation6 + $0x28b8] sm:$0xff]
    %v3387 = vld [vmem:[#allocation6 + $0x28c0] sm:$0xff]
    %v3388 = vld [vmem:[#allocation6 + $0x28c8] sm:$0xff]
    %v3389 = vld [vmem:[#allocation6 + $0x28d0] sm:$0xff]
    %v3390 = vld [vmem:[#allocation6 + $0x28d8] sm:$0xff]
    %v3391 = vld [vmem:[#allocation6 + $0x28e0] sm:$0xff]
    %v3392 = vld [vmem:[#allocation6 + $0x28e8] sm:$0xff]
    %v3393 = vld [vmem:[#allocation6 + $0x28f0] sm:$0xff]
    %v3394 = vld [vmem:[#allocation6 + $0x28f8] sm:$0xff]
    %v3395 = vld [vmem:[#allocation6 + $0x2900] sm:$0xff]
    %v3396 = vld [vmem:[#allocation6 + $0x2908] sm:$0xff]
    %v3397 = vld [vmem:[#allocation6 + $0x2910] sm:$0xff]
    %v3398 = vld [vmem:[#allocation6 + $0x2918] sm:$0xff]
    %v3399 = vld [vmem:[#allocation6 + $0x2920] sm:$0xff]
    %v3400 = vld [vmem:[#allocation6 + $0x2928] sm:$0xff]
    %v3401 = vld [vmem:[#allocation6 + $0x2930] sm:$0xff]
    %v3402 = vld [vmem:[#allocation6 + $0x2938] sm:$0xff]
    %v3403 = vld [vmem:[#allocation6 + $0x2940] sm:$0xff]
    %v3404 = vld [vmem:[#allocation6 + $0x2948] sm:$0xff]
    %v3405 = vld [vmem:[#allocation6 + $0x2950] sm:$0xff]
    %v3406 = vld [vmem:[#allocation6 + $0x2958] sm:$0xff]
    %v3407 = vld [vmem:[#allocation6 + $0x2960] sm:$0xff]
    %v3408 = vld [vmem:[#allocation6 + $0x2968] sm:$0xff]
    %v3409 = vld [vmem:[#allocation6 + $0x2970] sm:$0xff]
    %v3410 = vld [vmem:[#allocation6 + $0x2978] sm:$0xff]
    %v3411 = vld [vmem:[#allocation6 + $0x2980] sm:$0xff]
    %v3412 = vld [vmem:[#allocation6 + $0x2988] sm:$0xff]
    %v3413 = vld [vmem:[#allocation6 + $0x2990] sm:$0xff]
    %v3414 = vld [vmem:[#allocation6 + $0x2998] sm:$0xff]
    %v3415 = vld [vmem:[#allocation6 + $0x29a0] sm:$0xff]
    %v3416 = vld [vmem:[#allocation6 + $0x29a8] sm:$0xff]
    %v3417 = vld [vmem:[#allocation6 + $0x29b0] sm:$0xff]
    %v3418 = vld [vmem:[#allocation6 + $0x29b8] sm:$0xff]
    %v3419 = vld [vmem:[#allocation6 + $0x29c0] sm:$0xff]
    %v3420 = vld [vmem:[#allocation6 + $0x29c8] sm:$0xff]
    %v3421 = vld [vmem:[#allocation6 + $0x29d0] sm:$0xff]
    %v3422 = vld [vmem:[#allocation6 + $0x29d8] sm:$0xff]
    %v3423 = vld [vmem:[#allocation6 + $0x29e0] sm:$0xff]
    %v3424 = vld [vmem:[#allocation6 + $0x29e8] sm:$0xff]
    %v3425 = vld [vmem:[#allocation6 + $0x29f0] sm:$0xff]
    %v3426 = vld [vmem:[#allocation6 + $0x29f8] sm:$0xff]
    %v3427 = vld [vmem:[#allocation6 + $0x2a00] sm:$0xff]
    %v3428 = vld [vmem:[#allocation6 + $0x2a08] sm:$0xff]
    %v3429 = vld [vmem:[#allocation6 + $0x2a10] sm:$0xff]
    %v3430 = vld [vmem:[#allocation6 + $0x2a18] sm:$0xff]
    %v3431 = vld [vmem:[#allocation6 + $0x2a20] sm:$0xff]
    %v3432 = vld [vmem:[#allocation6 + $0x2a28] sm:$0xff]
    %v3433 = vld [vmem:[#allocation6 + $0x2a30] sm:$0xff]
    %v3434 = vld [vmem:[#allocation6 + $0x2a38] sm:$0xff]
    %v3435 = vld [vmem:[#allocation6 + $0x2a40] sm:$0xff]
    %v3436 = vld [vmem:[#allocation6 + $0x2a48] sm:$0xff]
    %v3437 = vld [vmem:[#allocation6 + $0x2a50] sm:$0xff]
    %v3438 = vld [vmem:[#allocation6 + $0x2a58] sm:$0xff]
    %v3439 = vld [vmem:[#allocation6 + $0x2a60] sm:$0xff]
    %v3440 = vld [vmem:[#allocation6 + $0x2a68] sm:$0xff]
    %v3441 = vld [vmem:[#allocation6 + $0x2a70] sm:$0xff]
    %v3442 = vld [vmem:[#allocation6 + $0x2a78] sm:$0xff]
    %v3443 = vld [vmem:[#allocation6 + $0x2a80] sm:$0xff]
    %v3444 = vld [vmem:[#allocation6 + $0x2a88] sm:$0xff]
    %v3445 = vld [vmem:[#allocation6 + $0x2a90] sm:$0xff]
    %v3446 = vld [vmem:[#allocation6 + $0x2a98] sm:$0xff]
    %v3447 = vld [vmem:[#allocation6 + $0x2aa0] sm:$0xff]
    %v3448 = vld [vmem:[#allocation6 + $0x2aa8] sm:$0xff]
    %v3449 = vld [vmem:[#allocation6 + $0x2ab0] sm:$0xff]
    %v3450 = vld [vmem:[#allocation6 + $0x2ab8] sm:$0xff]
    %v3451 = vld [vmem:[#allocation6 + $0x2ac0] sm:$0xff]
    %v3452 = vld [vmem:[#allocation6 + $0x2ac8] sm:$0xff]
    %v3453 = vld [vmem:[#allocation6 + $0x2ad0] sm:$0xff]
    %v3454 = vld [vmem:[#allocation6 + $0x2ad8] sm:$0xff]
    %v3455 = vld [vmem:[#allocation6 + $0x2ae0] sm:$0xff]
    %v3456 = vld [vmem:[#allocation6 + $0x2ae8] sm:$0xff]
    %v3457 = vld [vmem:[#allocation6 + $0x2af0] sm:$0xff]
    %v3458 = vld [vmem:[#allocation6 + $0x2af8] sm:$0xff]
    %v3459 = vld [vmem:[#allocation6 + $0x2b00] sm:$0xff]
    %v3460 = vld [vmem:[#allocation6 + $0x2b08] sm:$0xff]
    %v3461 = vld [vmem:[#allocation6 + $0x2b10] sm:$0xff]
    %v3462 = vld [vmem:[#allocation6 + $0x2b18] sm:$0xff]
    %v3463 = vld [vmem:[#allocation6 + $0x2b20] sm:$0xff]
    %v3464 = vld [vmem:[#allocation6 + $0x2b28] sm:$0xff]
    %v3465 = vld [vmem:[#allocation6 + $0x2b30] sm:$0xff]
    %v3466 = vld [vmem:[#allocation6 + $0x2b38] sm:$0xff]
    %v3467 = vld [vmem:[#allocation6 + $0x2b40] sm:$0xff]
    %v3468 = vld [vmem:[#allocation6 + $0x2b48] sm:$0xff]
    %v3469 = vld [vmem:[#allocation6 + $0x2b50] sm:$0xff]
    %v3470 = vld [vmem:[#allocation6 + $0x2b58] sm:$0xff]
    %v3471 = vld [vmem:[#allocation6 + $0x2b60] sm:$0xff]
    %v3472 = vld [vmem:[#allocation6 + $0x2b68] sm:$0xff]
    %v3473 = vld [vmem:[#allocation6 + $0x2b70] sm:$0xff]
    %v3474 = vld [vmem:[#allocation6 + $0x2b78] sm:$0xff]
    %v3475 = vld [vmem:[#allocation6 + $0x2b80] sm:$0xff]
    %v3476 = vld [vmem:[#allocation6 + $0x2b88] sm:$0xff]
    %v3477 = vld [vmem:[#allocation6 + $0x2b90] sm:$0xff]
    %v3478 = vld [vmem:[#allocation6 + $0x2b98] sm:$0xff]
    %v3479 = vld [vmem:[#allocation6 + $0x2ba0] sm:$0xff]
    %v3480 = vld [vmem:[#allocation6 + $0x2ba8] sm:$0xff]
    %v3481 = vld [vmem:[#allocation6 + $0x2bb0] sm:$0xff]
    %v3482 = vld [vmem:[#allocation6 + $0x2bb8] sm:$0xff]
    %v3483 = vld [vmem:[#allocation6 + $0x2bc0] sm:$0xff]
    %v3484 = vld [vmem:[#allocation6 + $0x2bc8] sm:$0xff]
    %v3485 = vld [vmem:[#allocation6 + $0x2bd0] sm:$0xff]
    %v3486 = vld [vmem:[#allocation6 + $0x2bd8] sm:$0xff]
    %v3487 = vld [vmem:[#allocation6 + $0x2be0] sm:$0xff]
    %v3488 = vld [vmem:[#allocation6 + $0x2be8] sm:$0xff]
    %v3489 = vld [vmem:[#allocation6 + $0x2bf0] sm:$0xff]
    %v3490 = vld [vmem:[#allocation6 + $0x2bf8] sm:$0xff]
    %v3491 = vld [vmem:[#allocation6 + $0x2c00] sm:$0xff]
    %v3492 = vld [vmem:[#allocation6 + $0x2c08] sm:$0xff]
    %v3493 = vld [vmem:[#allocation6 + $0x2c10] sm:$0xff]
    %v3494 = vld [vmem:[#allocation6 + $0x2c18] sm:$0xff]
    %v3495 = vld [vmem:[#allocation6 + $0x2c20] sm:$0xff]
    %v3496 = vld [vmem:[#allocation6 + $0x2c28] sm:$0xff]
    %v3497 = vld [vmem:[#allocation6 + $0x2c30] sm:$0xff]
    %v3498 = vld [vmem:[#allocation6 + $0x2c38] sm:$0xff]
    %v3499 = vld [vmem:[#allocation6 + $0x2c40] sm:$0xff]
    %v3500 = vld [vmem:[#allocation6 + $0x2c48] sm:$0xff]
    %v3501 = vld [vmem:[#allocation6 + $0x2c50] sm:$0xff]
    %v3502 = vld [vmem:[#allocation6 + $0x2c58] sm:$0xff]
    %v3503 = vld [vmem:[#allocation6 + $0x2c60] sm:$0xff]
    %v3504 = vld [vmem:[#allocation6 + $0x2c68] sm:$0xff]
    %v3505 = vld [vmem:[#allocation6 + $0x2c70] sm:$0xff]
    %v3506 = vld [vmem:[#allocation6 + $0x2c78] sm:$0xff]
    %v3507 = vld [vmem:[#allocation6 + $0x2c80] sm:$0xff]
    %v3508 = vld [vmem:[#allocation6 + $0x2c88] sm:$0xff]
    %v3509 = vld [vmem:[#allocation6 + $0x2c90] sm:$0xff]
    %v3510 = vld [vmem:[#allocation6 + $0x2c98] sm:$0xff]
    %v3511 = vld [vmem:[#allocation6 + $0x2ca0] sm:$0xff]
    %v3512 = vld [vmem:[#allocation6 + $0x2ca8] sm:$0xff]
    %v3513 = vld [vmem:[#allocation6 + $0x2cb0] sm:$0xff]
    %v3514 = vld [vmem:[#allocation6 + $0x2cb8] sm:$0xff]
    %v3515 = vld [vmem:[#allocation6 + $0x2cc0] sm:$0xff]
    %v3516 = vld [vmem:[#allocation6 + $0x2cc8] sm:$0xff]
    %v3517 = vld [vmem:[#allocation6 + $0x2cd0] sm:$0xff]
    %v3518 = vld [vmem:[#allocation6 + $0x2cd8] sm:$0xff]
    %v3519 = vld [vmem:[#allocation6 + $0x2ce0] sm:$0xff]
    %v3520 = vld [vmem:[#allocation6 + $0x2ce8] sm:$0xff]
    %v3521 = vld [vmem:[#allocation6 + $0x2cf0] sm:$0xff]
    %v3522 = vld [vmem:[#allocation6 + $0x2cf8] sm:$0xff]
    %v3523 = vld [vmem:[#allocation6 + $0x2d00] sm:$0xff]
    %v3524 = vld [vmem:[#allocation6 + $0x2d08] sm:$0xff]
    %v3525 = vld [vmem:[#allocation6 + $0x2d10] sm:$0xff]
    %v3526 = vld [vmem:[#allocation6 + $0x2d18] sm:$0xff]
    %v3527 = vld [vmem:[#allocation6 + $0x2d20] sm:$0xff]
    %v3528 = vld [vmem:[#allocation6 + $0x2d28] sm:$0xff]
    %v3529 = vld [vmem:[#allocation6 + $0x2d30] sm:$0xff]
    %v3530 = vld [vmem:[#allocation6 + $0x2d38] sm:$0xff]
    %v3531 = vld [vmem:[#allocation6 + $0x2d40] sm:$0xff]
    %v3532 = vld [vmem:[#allocation6 + $0x2d48] sm:$0xff]
    %v3533 = vld [vmem:[#allocation6 + $0x2d50] sm:$0xff]
    %v3534 = vld [vmem:[#allocation6 + $0x2d58] sm:$0xff]
    %v3535 = vld [vmem:[#allocation6 + $0x2d60] sm:$0xff]
    %v3536 = vld [vmem:[#allocation6 + $0x2d68] sm:$0xff]
    %v3537 = vld [vmem:[#allocation6 + $0x2d70] sm:$0xff]
    %v3538 = vld [vmem:[#allocation6 + $0x2d78] sm:$0xff]
    %v3539 = vld [vmem:[#allocation6 + $0x2d80] sm:$0xff]
    %v3540 = vld [vmem:[#allocation6 + $0x2d88] sm:$0xff]
    %v3541 = vld [vmem:[#allocation6 + $0x2d90] sm:$0xff]
    %v3542 = vld [vmem:[#allocation6 + $0x2d98] sm:$0xff]
    %v3543 = vld [vmem:[#allocation6 + $0x2da0] sm:$0xff]
    %v3544 = vld [vmem:[#allocation6 + $0x2da8] sm:$0xff]
    %v3545 = vld [vmem:[#allocation6 + $0x2db0] sm:$0xff]
    %v3546 = vld [vmem:[#allocation6 + $0x2db8] sm:$0xff]
    %v3547 = vld [vmem:[#allocation6 + $0x2dc0] sm:$0xff]
    %v3548 = vld [vmem:[#allocation6 + $0x2dc8] sm:$0xff]
    %v3549 = vld [vmem:[#allocation6 + $0x2dd0] sm:$0xff]
    %v3550 = vld [vmem:[#allocation6 + $0x2dd8] sm:$0xff]
    %v3551 = vld [vmem:[#allocation6 + $0x2de0] sm:$0xff]
    %v3552 = vld [vmem:[#allocation6 + $0x2de8] sm:$0xff]
    %v3553 = vld [vmem:[#allocation6 + $0x2df0] sm:$0xff]
    %v3554 = vld [vmem:[#allocation6 + $0x2df8] sm:$0xff]
    %v3555 = vld [vmem:[#allocation6 + $0x2e00] sm:$0xff]
    %v3556 = vld [vmem:[#allocation6 + $0x2e08] sm:$0xff]
    %v3557 = vld [vmem:[#allocation6 + $0x2e10] sm:$0xff]
    %v3558 = vld [vmem:[#allocation6 + $0x2e18] sm:$0xff]
    %v3559 = vld [vmem:[#allocation6 + $0x2e20] sm:$0xff]
    %v3560 = vld [vmem:[#allocation6 + $0x2e28] sm:$0xff]
    %v3561 = vld [vmem:[#allocation6 + $0x2e30] sm:$0xff]
    %v3562 = vld [vmem:[#allocation6 + $0x2e38] sm:$0xff]
    %v3563 = vld [vmem:[#allocation6 + $0x2e40] sm:$0xff]
    %v3564 = vld [vmem:[#allocation6 + $0x2e48] sm:$0xff]
    %v3565 = vld [vmem:[#allocation6 + $0x2e50] sm:$0xff]
    %v3566 = vld [vmem:[#allocation6 + $0x2e58] sm:$0xff]
    %v3567 = vld [vmem:[#allocation6 + $0x2e60] sm:$0xff]
    %v3568 = vld [vmem:[#allocation6 + $0x2e68] sm:$0xff]
    %v3569 = vld [vmem:[#allocation6 + $0x2e70] sm:$0xff]
    %v3570 = vld [vmem:[#allocation6 + $0x2e78] sm:$0xff]
    %v3571 = vld [vmem:[#allocation6 + $0x2e80] sm:$0xff]
    %v3572 = vld [vmem:[#allocation6 + $0x2e88] sm:$0xff]
    %v3573 = vld [vmem:[#allocation6 + $0x2e90] sm:$0xff]
    %v3574 = vld [vmem:[#allocation6 + $0x2e98] sm:$0xff]
    %v3575 = vld [vmem:[#allocation6 + $0x2ea0] sm:$0xff]
    %v3576 = vld [vmem:[#allocation6 + $0x2ea8] sm:$0xff]
    %v3577 = vld [vmem:[#allocation6 + $0x2eb0] sm:$0xff]
    %v3578 = vld [vmem:[#allocation6 + $0x2eb8] sm:$0xff]
    %v3579 = vld [vmem:[#allocation6 + $0x2ec0] sm:$0xff]
    %v3580 = vld [vmem:[#allocation6 + $0x2ec8] sm:$0xff]
    %v3581 = vld [vmem:[#allocation6 + $0x2ed0] sm:$0xff]
    %v3582 = vld [vmem:[#allocation6 + $0x2ed8] sm:$0xff]
    %v3583 = vld [vmem:[#allocation6 + $0x2ee0] sm:$0xff]
    %v3584 = vld [vmem:[#allocation6 + $0x2ee8] sm:$0xff]
    %v3585 = vld [vmem:[#allocation6 + $0x2ef0] sm:$0xff]
    %v3586 = vld [vmem:[#allocation6 + $0x2ef8] sm:$0xff]
    %v3587 = vld [vmem:[#allocation6 + $0x2f00] sm:$0xff]
    %v3588 = vld [vmem:[#allocation6 + $0x2f08] sm:$0xff]
    %v3589 = vld [vmem:[#allocation6 + $0x2f10] sm:$0xff]
    %v3590 = vld [vmem:[#allocation6 + $0x2f18] sm:$0xff]
    %v3591 = vld [vmem:[#allocation6 + $0x2f20] sm:$0xff]
    %v3592 = vld [vmem:[#allocation6 + $0x2f28] sm:$0xff]
    %v3593 = vld [vmem:[#allocation6 + $0x2f30] sm:$0xff]
    %v3594 = vld [vmem:[#allocation6 + $0x2f38] sm:$0xff]
    %v3595 = vld [vmem:[#allocation6 + $0x2f40] sm:$0xff]
    %v3596 = vld [vmem:[#allocation6 + $0x2f48] sm:$0xff]
    %v3597 = vld [vmem:[#allocation6 + $0x2f50] sm:$0xff]
    %v3598 = vld [vmem:[#allocation6 + $0x2f58] sm:$0xff]
    %v3599 = vld [vmem:[#allocation6 + $0x2f60] sm:$0xff]
    %v3600 = vld [vmem:[#allocation6 + $0x2f68] sm:$0xff]
    %v3601 = vld [vmem:[#allocation6 + $0x2f70] sm:$0xff]
    %v3602 = vld [vmem:[#allocation6 + $0x2f78] sm:$0xff]
    %v3603 = vld [vmem:[#allocation6 + $0x2f80] sm:$0xff]
    %v3604 = vld [vmem:[#allocation6 + $0x2f88] sm:$0xff]
    %v3605 = vld [vmem:[#allocation6 + $0x2f90] sm:$0xff]
    %v3606 = vld [vmem:[#allocation6 + $0x2f98] sm:$0xff]
    %v3607 = vld [vmem:[#allocation6 + $0x2fa0] sm:$0xff]
    %v3608 = vld [vmem:[#allocation6 + $0x2fa8] sm:$0xff]
    %v3609 = vld [vmem:[#allocation6 + $0x2fb0] sm:$0xff]
    %v3610 = vld [vmem:[#allocation6 + $0x2fb8] sm:$0xff]
    %v3611 = vld [vmem:[#allocation6 + $0x2fc0] sm:$0xff]
    %v3612 = vld [vmem:[#allocation6 + $0x2fc8] sm:$0xff]
    %v3613 = vld [vmem:[#allocation6 + $0x2fd0] sm:$0xff]
    %v3614 = vld [vmem:[#allocation6 + $0x2fd8] sm:$0xff]
    %v3615 = vld [vmem:[#allocation6 + $0x2fe0] sm:$0xff]
    %v3616 = vld [vmem:[#allocation6 + $0x2fe8] sm:$0xff]
    %v3617 = vld [vmem:[#allocation6 + $0x2ff0] sm:$0xff]
    %v3618 = vld [vmem:[#allocation6 + $0x2ff8] sm:$0xff]
    %v3619 = vld [vmem:[#allocation6 + $0x3000] sm:$0xff]
    %v3620 = vld [vmem:[#allocation6 + $0x3008] sm:$0xff]
    %v3621 = vld [vmem:[#allocation6 + $0x3010] sm:$0xff]
    %v3622 = vld [vmem:[#allocation6 + $0x3018] sm:$0xff]
    %v3623 = vld [vmem:[#allocation6 + $0x3020] sm:$0xff]
    %v3624 = vld [vmem:[#allocation6 + $0x3028] sm:$0xff]
    %v3625 = vld [vmem:[#allocation6 + $0x3030] sm:$0xff]
    %v3626 = vld [vmem:[#allocation6 + $0x3038] sm:$0xff]
    %v3627 = vld [vmem:[#allocation6 + $0x3040] sm:$0xff]
    %v3628 = vld [vmem:[#allocation6 + $0x3048] sm:$0xff]
    %v3629 = vld [vmem:[#allocation6 + $0x3050] sm:$0xff]
    %v3630 = vld [vmem:[#allocation6 + $0x3058] sm:$0xff]
    %v3631 = vld [vmem:[#allocation6 + $0x3060] sm:$0xff]
    %v3632 = vld [vmem:[#allocation6 + $0x3068] sm:$0xff]
    %v3633 = vld [vmem:[#allocation6 + $0x3070] sm:$0xff]
    %v3634 = vld [vmem:[#allocation6 + $0x3078] sm:$0xff]
    %v3635 = vld [vmem:[#allocation6 + $0x3080] sm:$0xff]
    %v3636 = vld [vmem:[#allocation6 + $0x3088] sm:$0xff]
    %v3637 = vld [vmem:[#allocation6 + $0x3090] sm:$0xff]
    %v3638 = vld [vmem:[#allocation6 + $0x3098] sm:$0xff]
    %v3639 = vld [vmem:[#allocation6 + $0x30a0] sm:$0xff]
    %v3640 = vld [vmem:[#allocation6 + $0x30a8] sm:$0xff]
    %v3641 = vld [vmem:[#allocation6 + $0x30b0] sm:$0xff]
    %v3642 = vld [vmem:[#allocation6 + $0x30b8] sm:$0xff]
    %v3643 = vld [vmem:[#allocation6 + $0x30c0] sm:$0xff]
    %v3644 = vld [vmem:[#allocation6 + $0x30c8] sm:$0xff]
    %v3645 = vld [vmem:[#allocation6 + $0x30d0] sm:$0xff]
    %v3646 = vld [vmem:[#allocation6 + $0x30d8] sm:$0xff]
    %v3647 = vld [vmem:[#allocation6 + $0x30e0] sm:$0xff]
    %v3648 = vld [vmem:[#allocation6 + $0x30e8] sm:$0xff]
    %v3649 = vld [vmem:[#allocation6 + $0x30f0] sm:$0xff]
    %v3650 = vld [vmem:[#allocation6 + $0x30f8] sm:$0xff]
    %v3651 = vld [vmem:[#allocation6 + $0x3100] sm:$0xff]
    %v3652 = vld [vmem:[#allocation6 + $0x3108] sm:$0xff]
    %v3653 = vld [vmem:[#allocation6 + $0x3110] sm:$0xff]
    %v3654 = vld [vmem:[#allocation6 + $0x3118] sm:$0xff]
    %v3655 = vld [vmem:[#allocation6 + $0x3120] sm:$0xff]
    %v3656 = vld [vmem:[#allocation6 + $0x3128] sm:$0xff]
    %v3657 = vld [vmem:[#allocation6 + $0x3130] sm:$0xff]
    %v3658 = vld [vmem:[#allocation6 + $0x3138] sm:$0xff]
    %v3659 = vld [vmem:[#allocation6 + $0x3140] sm:$0xff]
    %v3660 = vld [vmem:[#allocation6 + $0x3148] sm:$0xff]
    %v3661 = vld [vmem:[#allocation6 + $0x3150] sm:$0xff]
    %v3662 = vld [vmem:[#allocation6 + $0x3158] sm:$0xff]
    %v3663 = vld [vmem:[#allocation6 + $0x3160] sm:$0xff]
    %v3664 = vld [vmem:[#allocation6 + $0x3168] sm:$0xff]
    %v3665 = vld [vmem:[#allocation6 + $0x3170] sm:$0xff]
    %v3666 = vld [vmem:[#allocation6 + $0x3178] sm:$0xff]
    %v3667 = vld [vmem:[#allocation6 + $0x3180] sm:$0xff]
    %v3668 = vld [vmem:[#allocation6 + $0x3188] sm:$0xff]
    %v3669 = vld [vmem:[#allocation6 + $0x3190] sm:$0xff]
    %v3670 = vld [vmem:[#allocation6 + $0x3198] sm:$0xff]
    %v3671 = vld [vmem:[#allocation6 + $0x31a0] sm:$0xff]
    %v3672 = vld [vmem:[#allocation6 + $0x31a8] sm:$0xff]
    %v3673 = vld [vmem:[#allocation6 + $0x31b0] sm:$0xff]
    %v3674 = vld [vmem:[#allocation6 + $0x31b8] sm:$0xff]
    %v3675 = vld [vmem:[#allocation6 + $0x31c0] sm:$0xff]
    %v3676 = vld [vmem:[#allocation6 + $0x31c8] sm:$0xff]
    %v3677 = vld [vmem:[#allocation6 + $0x31d0] sm:$0xff]
    %v3678 = vld [vmem:[#allocation6 + $0x31d8] sm:$0xff]
    %v3679 = vld [vmem:[#allocation6 + $0x31e0] sm:$0xff]
    %v3680 = vld [vmem:[#allocation6 + $0x31e8] sm:$0xff]
    %v3681 = vld [vmem:[#allocation6 + $0x31f0] sm:$0xff]
    %v3682 = vld [vmem:[#allocation6 + $0x31f8] sm:$0xff]
    %v3683 = vld [vmem:[#allocation6 + $0x3200] sm:$0xff]
    %v3684 = vld [vmem:[#allocation6 + $0x3208] sm:$0xff]
    %v3685 = vld [vmem:[#allocation6 + $0x3210] sm:$0xff]
    %v3686 = vld [vmem:[#allocation6 + $0x3218] sm:$0xff]
    %v3687 = vld [vmem:[#allocation6 + $0x3220] sm:$0xff]
    %v3688 = vld [vmem:[#allocation6 + $0x3228] sm:$0xff]
    %v3689 = vld [vmem:[#allocation6 + $0x3230] sm:$0xff]
    %v3690 = vld [vmem:[#allocation6 + $0x3238] sm:$0xff]
    %v3691 = vld [vmem:[#allocation6 + $0x3240] sm:$0xff]
    %v3692 = vld [vmem:[#allocation6 + $0x3248] sm:$0xff]
    %v3693 = vld [vmem:[#allocation6 + $0x3250] sm:$0xff]
    %v3694 = vld [vmem:[#allocation6 + $0x3258] sm:$0xff]
    %v3695 = vld [vmem:[#allocation6 + $0x3260] sm:$0xff]
    %v3696 = vld [vmem:[#allocation6 + $0x3268] sm:$0xff]
    %v3697 = vld [vmem:[#allocation6 + $0x3270] sm:$0xff]
    %v3698 = vld [vmem:[#allocation6 + $0x3278] sm:$0xff]
    %v3699 = vld [vmem:[#allocation6 + $0x3280] sm:$0xff]
    %v3700 = vld [vmem:[#allocation6 + $0x3288] sm:$0xff]
    %v3701 = vld [vmem:[#allocation6 + $0x3290] sm:$0xff]
    %v3702 = vld [vmem:[#allocation6 + $0x3298] sm:$0xff]
    %v3703 = vld [vmem:[#allocation6 + $0x32a0] sm:$0xff]
    %v3704 = vld [vmem:[#allocation6 + $0x32a8] sm:$0xff]
    %v3705 = vld [vmem:[#allocation6 + $0x32b0] sm:$0xff]
    %v3706 = vld [vmem:[#allocation6 + $0x32b8] sm:$0xff]
    %v3707 = vld [vmem:[#allocation6 + $0x32c0] sm:$0xff]
    %v3708 = vld [vmem:[#allocation6 + $0x32c8] sm:$0xff]
    %v3709 = vld [vmem:[#allocation6 + $0x32d0] sm:$0xff]
    %v3710 = vld [vmem:[#allocation6 + $0x32d8] sm:$0xff]
    %v3711 = vld [vmem:[#allocation6 + $0x32e0] sm:$0xff]
    %v3712 = vld [vmem:[#allocation6 + $0x32e8] sm:$0xff]
    %v3713 = vld [vmem:[#allocation6 + $0x32f0] sm:$0xff]
    %v3714 = vld [vmem:[#allocation6 + $0x32f8] sm:$0xff]
    %v3715 = vld [vmem:[#allocation6 + $0x3300] sm:$0xff]
    %v3716 = vld [vmem:[#allocation6 + $0x3308] sm:$0xff]
    %v3717 = vld [vmem:[#allocation6 + $0x3310] sm:$0xff]
    %v3718 = vld [vmem:[#allocation6 + $0x3318] sm:$0xff]
    %v3719 = vld [vmem:[#allocation6 + $0x3320] sm:$0xff]
    %v3720 = vld [vmem:[#allocation6 + $0x3328] sm:$0xff]
    %v3721 = vld [vmem:[#allocation6 + $0x3330] sm:$0xff]
    %v3722 = vld [vmem:[#allocation6 + $0x3338] sm:$0xff]
    %v3723 = vld [vmem:[#allocation6 + $0x3340] sm:$0xff]
    %v3724 = vld [vmem:[#allocation6 + $0x3348] sm:$0xff]
    %v3725 = vld [vmem:[#allocation6 + $0x3350] sm:$0xff]
    %v3726 = vld [vmem:[#allocation6 + $0x3358] sm:$0xff]
    %v3727 = vld [vmem:[#allocation6 + $0x3360] sm:$0xff]
    %v3728 = vld [vmem:[#allocation6 + $0x3368] sm:$0xff]
    %v3729 = vld [vmem:[#allocation6 + $0x3370] sm:$0xff]
    %v3730 = vld [vmem:[#allocation6 + $0x3378] sm:$0xff]
    %v3731 = vld [vmem:[#allocation6 + $0x3380] sm:$0xff]
    %v3732 = vld [vmem:[#allocation6 + $0x3388] sm:$0xff]
    %v3733 = vld [vmem:[#allocation6 + $0x3390] sm:$0xff]
    %v3734 = vld [vmem:[#allocation6 + $0x3398] sm:$0xff]
    %v3735 = vld [vmem:[#allocation6 + $0x33a0] sm:$0xff]
    %v3736 = vld [vmem:[#allocation6 + $0x33a8] sm:$0xff]
    %v3737 = vld [vmem:[#allocation6 + $0x33b0] sm:$0xff]
    %v3738 = vld [vmem:[#allocation6 + $0x33b8] sm:$0xff]
    %v3739 = vld [vmem:[#allocation6 + $0x33c0] sm:$0xff]
    %v3740 = vld [vmem:[#allocation6 + $0x33c8] sm:$0xff]
    %v3741 = vld [vmem:[#allocation6 + $0x33d0] sm:$0xff]
    %v3742 = vld [vmem:[#allocation6 + $0x33d8] sm:$0xff]
    %v3743 = vld [vmem:[#allocation6 + $0x33e0] sm:$0xff]
    %v3744 = vld [vmem:[#allocation6 + $0x33e8] sm:$0xff]
    %v3745 = vld [vmem:[#allocation6 + $0x33f0] sm:$0xff]
    %v3746 = vld [vmem:[#allocation6 + $0x33f8] sm:$0xff]
    %v3747 = vld [vmem:[#allocation6 + $0x3400] sm:$0xff]
    %v3748 = vld [vmem:[#allocation6 + $0x3408] sm:$0xff]
    %v3749 = vld [vmem:[#allocation6 + $0x3410] sm:$0xff]
    %v3750 = vld [vmem:[#allocation6 + $0x3418] sm:$0xff]
    %v3751 = vld [vmem:[#allocation6 + $0x3420] sm:$0xff]
    %v3752 = vld [vmem:[#allocation6 + $0x3428] sm:$0xff]
    %v3753 = vld [vmem:[#allocation6 + $0x3430] sm:$0xff]
    %v3754 = vld [vmem:[#allocation6 + $0x3438] sm:$0xff]
    %v3755 = vld [vmem:[#allocation6 + $0x3440] sm:$0xff]
    %v3756 = vld [vmem:[#allocation6 + $0x3448] sm:$0xff]
    %v3757 = vld [vmem:[#allocation6 + $0x3450] sm:$0xff]
    %v3758 = vld [vmem:[#allocation6 + $0x3458] sm:$0xff]
    %v3759 = vld [vmem:[#allocation6 + $0x3460] sm:$0xff]
    %v3760 = vld [vmem:[#allocation6 + $0x3468] sm:$0xff]
    %v3761 = vld [vmem:[#allocation6 + $0x3470] sm:$0xff]
    %v3762 = vld [vmem:[#allocation6 + $0x3478] sm:$0xff]
    %v3763 = vld [vmem:[#allocation6 + $0x3480] sm:$0xff]
    %v3764 = vld [vmem:[#allocation6 + $0x3488] sm:$0xff]
    %v3765 = vld [vmem:[#allocation6 + $0x3490] sm:$0xff]
    %v3766 = vld [vmem:[#allocation6 + $0x3498] sm:$0xff]
    %v3767 = vld [vmem:[#allocation6 + $0x34a0] sm:$0xff]
    %v3768 = vld [vmem:[#allocation6 + $0x34a8] sm:$0xff]
    %v3769 = vld [vmem:[#allocation6 + $0x34b0] sm:$0xff]
    %v3770 = vld [vmem:[#allocation6 + $0x34b8] sm:$0xff]
    %v3771 = vld [vmem:[#allocation6 + $0x34c0] sm:$0xff]
    %v3772 = vld [vmem:[#allocation6 + $0x34c8] sm:$0xff]
    %v3773 = vld [vmem:[#allocation6 + $0x34d0] sm:$0xff]
    %v3774 = vld [vmem:[#allocation6 + $0x34d8] sm:$0xff]
    %v3775 = vld [vmem:[#allocation6 + $0x34e0] sm:$0xff]
    %v3776 = vld [vmem:[#allocation6 + $0x34e8] sm:$0xff]
    %v3777 = vld [vmem:[#allocation6 + $0x34f0] sm:$0xff]
    %v3778 = vld [vmem:[#allocation6 + $0x34f8] sm:$0xff]
    %v3779 = vld [vmem:[#allocation6 + $0x3500] sm:$0xff]
    %v3780 = vld [vmem:[#allocation6 + $0x3508] sm:$0xff]
    %v3781 = vld [vmem:[#allocation6 + $0x3510] sm:$0xff]
    %v3782 = vld [vmem:[#allocation6 + $0x3518] sm:$0xff]
    %v3783 = vld [vmem:[#allocation6 + $0x3520] sm:$0xff]
    %v3784 = vld [vmem:[#allocation6 + $0x3528] sm:$0xff]
    %v3785 = vld [vmem:[#allocation6 + $0x3530] sm:$0xff]
    %v3786 = vld [vmem:[#allocation6 + $0x3538] sm:$0xff]
    %v3787 = vld [vmem:[#allocation6 + $0x3540] sm:$0xff]
    %v3788 = vld [vmem:[#allocation6 + $0x3548] sm:$0xff]
    %v3789 = vld [vmem:[#allocation6 + $0x3550] sm:$0xff]
    %v3790 = vld [vmem:[#allocation6 + $0x3558] sm:$0xff]
    %v3791 = vld [vmem:[#allocation6 + $0x3560] sm:$0xff]
    %v3792 = vld [vmem:[#allocation6 + $0x3568] sm:$0xff]
    %v3793 = vld [vmem:[#allocation6 + $0x3570] sm:$0xff]
    %v3794 = vld [vmem:[#allocation6 + $0x3578] sm:$0xff]
    %v3795 = vld [vmem:[#allocation6 + $0x3580] sm:$0xff]
    %v3796 = vld [vmem:[#allocation6 + $0x3588] sm:$0xff]
    %v3797 = vld [vmem:[#allocation6 + $0x3590] sm:$0xff]
    %v3798 = vld [vmem:[#allocation6 + $0x3598] sm:$0xff]
    %v3799 = vld [vmem:[#allocation6 + $0x35a0] sm:$0xff]
    %v3800 = vld [vmem:[#allocation6 + $0x35a8] sm:$0xff]
    %v3801 = vld [vmem:[#allocation6 + $0x35b0] sm:$0xff]
    %v3802 = vld [vmem:[#allocation6 + $0x35b8] sm:$0xff]
    %v3803 = vld [vmem:[#allocation6 + $0x35c0] sm:$0xff]
    %v3804 = vld [vmem:[#allocation6 + $0x35c8] sm:$0xff]
    %v3805 = vld [vmem:[#allocation6 + $0x35d0] sm:$0xff]
    %v3806 = vld [vmem:[#allocation6 + $0x35d8] sm:$0xff]
    %v3807 = vld [vmem:[#allocation6 + $0x35e0] sm:$0xff]
    %v3808 = vld [vmem:[#allocation6 + $0x35e8] sm:$0xff]
    %v3809 = vld [vmem:[#allocation6 + $0x35f0] sm:$0xff]
    %v3810 = vld [vmem:[#allocation6 + $0x35f8] sm:$0xff]
    %v3811 = vld [vmem:[#allocation6 + $0x3600] sm:$0xff]
    %v3812 = vld [vmem:[#allocation6 + $0x3608] sm:$0xff]
    %v3813 = vld [vmem:[#allocation6 + $0x3610] sm:$0xff]
    %v3814 = vld [vmem:[#allocation6 + $0x3618] sm:$0xff]
    %v3815 = vld [vmem:[#allocation6 + $0x3620] sm:$0xff]
    %v3816 = vld [vmem:[#allocation6 + $0x3628] sm:$0xff]
    %v3817 = vld [vmem:[#allocation6 + $0x3630] sm:$0xff]
    %v3818 = vld [vmem:[#allocation6 + $0x3638] sm:$0xff]
    %v3819 = vld [vmem:[#allocation6 + $0x3640] sm:$0xff]
    %v3820 = vld [vmem:[#allocation6 + $0x3648] sm:$0xff]
    %v3821 = vld [vmem:[#allocation6 + $0x3650] sm:$0xff]
    %v3822 = vld [vmem:[#allocation6 + $0x3658] sm:$0xff]
    %v3823 = vld [vmem:[#allocation6 + $0x3660] sm:$0xff]
    %v3824 = vld [vmem:[#allocation6 + $0x3668] sm:$0xff]
    %v3825 = vld [vmem:[#allocation6 + $0x3670] sm:$0xff]
    %v3826 = vld [vmem:[#allocation6 + $0x3678] sm:$0xff]
    %v3827 = vld [vmem:[#allocation6 + $0x3680] sm:$0xff]
    %v3828 = vld [vmem:[#allocation6 + $0x3688] sm:$0xff]
    %v3829 = vld [vmem:[#allocation6 + $0x3690] sm:$0xff]
    %v3830 = vld [vmem:[#allocation6 + $0x3698] sm:$0xff]
    %v3831 = vld [vmem:[#allocation6 + $0x36a0] sm:$0xff]
    %v3832 = vld [vmem:[#allocation6 + $0x36a8] sm:$0xff]
    %v3833 = vld [vmem:[#allocation6 + $0x36b0] sm:$0xff]
    %v3834 = vld [vmem:[#allocation6 + $0x36b8] sm:$0xff]
    %v3835 = vld [vmem:[#allocation6 + $0x36c0] sm:$0xff]
    %v3836 = vld [vmem:[#allocation6 + $0x36c8] sm:$0xff]
    %v3837 = vld [vmem:[#allocation6 + $0x36d0] sm:$0xff]
    %v3838 = vld [vmem:[#allocation6 + $0x36d8] sm:$0xff]
    %v3839 = vld [vmem:[#allocation6 + $0x36e0] sm:$0xff]
    %v3840 = vld [vmem:[#allocation6 + $0x36e8] sm:$0xff]
    %v3841 = vld [vmem:[#allocation6 + $0x36f0] sm:$0xff]
    %v3842 = vld [vmem:[#allocation6 + $0x36f8] sm:$0xff]
    %v3843 = vld [vmem:[#allocation6 + $0x3700] sm:$0xff]
    %v3844 = vld [vmem:[#allocation6 + $0x3708] sm:$0xff]
    %v3845 = vld [vmem:[#allocation6 + $0x3710] sm:$0xff]
    %v3846 = vld [vmem:[#allocation6 + $0x3718] sm:$0xff]
    %v3847 = vld [vmem:[#allocation6 + $0x3720] sm:$0xff]
    %v3848 = vld [vmem:[#allocation6 + $0x3728] sm:$0xff]
    %v3849 = vld [vmem:[#allocation6 + $0x3730] sm:$0xff]
    %v3850 = vld [vmem:[#allocation6 + $0x3738] sm:$0xff]
    %v3851 = vld [vmem:[#allocation6 + $0x3740] sm:$0xff]
    %v3852 = vld [vmem:[#allocation6 + $0x3748] sm:$0xff]
    %v3853 = vld [vmem:[#allocation6 + $0x3750] sm:$0xff]
    %v3854 = vld [vmem:[#allocation6 + $0x3758] sm:$0xff]
    %v3855 = vld [vmem:[#allocation6 + $0x3760] sm:$0xff]
    %v3856 = vld [vmem:[#allocation6 + $0x3768] sm:$0xff]
    %v3857 = vld [vmem:[#allocation6 + $0x3770] sm:$0xff]
    %v3858 = vld [vmem:[#allocation6 + $0x3778] sm:$0xff]
    %v3859 = vld [vmem:[#allocation6 + $0x3780] sm:$0xff]
    %v3860 = vld [vmem:[#allocation6 + $0x3788] sm:$0xff]
    %v3861 = vld [vmem:[#allocation6 + $0x3790] sm:$0xff]
    %v3862 = vld [vmem:[#allocation6 + $0x3798] sm:$0xff]
    %v3863 = vld [vmem:[#allocation6 + $0x37a0] sm:$0xff]
    %v3864 = vld [vmem:[#allocation6 + $0x37a8] sm:$0xff]
    %v3865 = vld [vmem:[#allocation6 + $0x37b0] sm:$0xff]
    %v3866 = vld [vmem:[#allocation6 + $0x37b8] sm:$0xff]
    %v3867 = vld [vmem:[#allocation6 + $0x37c0] sm:$0xff]
    %v3868 = vld [vmem:[#allocation6 + $0x37c8] sm:$0xff]
    %v3869 = vld [vmem:[#allocation6 + $0x37d0] sm:$0xff]
    %v3870 = vld [vmem:[#allocation6 + $0x37d8] sm:$0xff]
    %v3871 = vld [vmem:[#allocation6 + $0x37e0] sm:$0xff]
    %v3872 = vld [vmem:[#allocation6 + $0x37e8] sm:$0xff]
    %v3873 = vld [vmem:[#allocation6 + $0x37f0] sm:$0xff]
    %v3874 = vld [vmem:[#allocation6 + $0x37f8] sm:$0xff]
    %v3875 = vld [vmem:[#allocation6 + $0x3800] sm:$0xff]
    %v3876 = vld [vmem:[#allocation6 + $0x3808] sm:$0xff]
    %v3877 = vld [vmem:[#allocation6 + $0x3810] sm:$0xff]
    %v3878 = vld [vmem:[#allocation6 + $0x3818] sm:$0xff]
    %v3879 = vld [vmem:[#allocation6 + $0x3820] sm:$0xff]
    %v3880 = vld [vmem:[#allocation6 + $0x3828] sm:$0xff]
    %v3881 = vld [vmem:[#allocation6 + $0x3830] sm:$0xff]
    %v3882 = vld [vmem:[#allocation6 + $0x3838] sm:$0xff]
    %v3883 = vld [vmem:[#allocation6 + $0x3840] sm:$0xff]
    %v3884 = vld [vmem:[#allocation6 + $0x3848] sm:$0xff]
    %v3885 = vld [vmem:[#allocation6 + $0x3850] sm:$0xff]
    %v3886 = vld [vmem:[#allocation6 + $0x3858] sm:$0xff]
    %v3887 = vld [vmem:[#allocation6 + $0x3860] sm:$0xff]
    %v3888 = vld [vmem:[#allocation6 + $0x3868] sm:$0xff]
    %v3889 = vld [vmem:[#allocation6 + $0x3870] sm:$0xff]
    %v3890 = vld [vmem:[#allocation6 + $0x3878] sm:$0xff]
    %v3891 = vld [vmem:[#allocation6 + $0x3880] sm:$0xff]
    %v3892 = vld [vmem:[#allocation6 + $0x3888] sm:$0xff]
    %v3893 = vld [vmem:[#allocation6 + $0x3890] sm:$0xff]
    %v3894 = vld [vmem:[#allocation6 + $0x3898] sm:$0xff]
    %v3895 = vld [vmem:[#allocation6 + $0x38a0] sm:$0xff]
    %v3896 = vld [vmem:[#allocation6 + $0x38a8] sm:$0xff]
    %v3897 = vld [vmem:[#allocation6 + $0x38b0] sm:$0xff]
    %v3898 = vld [vmem:[#allocation6 + $0x38b8] sm:$0xff]
    %v3899 = vld [vmem:[#allocation6 + $0x38c0] sm:$0xff]
    %v3900 = vld [vmem:[#allocation6 + $0x38c8] sm:$0xff]
    %v3901 = vld [vmem:[#allocation6 + $0x38d0] sm:$0xff]
    %v3902 = vld [vmem:[#allocation6 + $0x38d8] sm:$0xff]
    %v3903 = vld [vmem:[#allocation6 + $0x38e0] sm:$0xff]
    %v3904 = vld [vmem:[#allocation6 + $0x38e8] sm:$0xff]
    %v3905 = vld [vmem:[#allocation6 + $0x38f0] sm:$0xff]
    %v3906 = vld [vmem:[#allocation6 + $0x38f8] sm:$0xff]
    %v3907 = vld [vmem:[#allocation6 + $0x3900] sm:$0xff]
    %v3908 = vld [vmem:[#allocation6 + $0x3908] sm:$0xff]
    %v3909 = vld [vmem:[#allocation6 + $0x3910] sm:$0xff]
    %v3910 = vld [vmem:[#allocation6 + $0x3918] sm:$0xff]
    %v3911 = vld [vmem:[#allocation6 + $0x3920] sm:$0xff]
    %v3912 = vld [vmem:[#allocation6 + $0x3928] sm:$0xff]
    %v3913 = vld [vmem:[#allocation6 + $0x3930] sm:$0xff]
    %v3914 = vld [vmem:[#allocation6 + $0x3938] sm:$0xff]
    %v3915 = vld [vmem:[#allocation6 + $0x3940] sm:$0xff]
    %v3916 = vld [vmem:[#allocation6 + $0x3948] sm:$0xff]
    %v3917 = vld [vmem:[#allocation6 + $0x3950] sm:$0xff]
    %v3918 = vld [vmem:[#allocation6 + $0x3958] sm:$0xff]
    %v3919 = vld [vmem:[#allocation6 + $0x3960] sm:$0xff]
    %v3920 = vld [vmem:[#allocation6 + $0x3968] sm:$0xff]
    %v3921 = vld [vmem:[#allocation6 + $0x3970] sm:$0xff]
    %v3922 = vld [vmem:[#allocation6 + $0x3978] sm:$0xff]
    %v3923 = vld [vmem:[#allocation6 + $0x3980] sm:$0xff]
    %v3924 = vld [vmem:[#allocation6 + $0x3988] sm:$0xff]
    %v3925 = vld [vmem:[#allocation6 + $0x3990] sm:$0xff]
    %v3926 = vld [vmem:[#allocation6 + $0x3998] sm:$0xff]
    %v3927 = vld [vmem:[#allocation6 + $0x39a0] sm:$0xff]
    %v3928 = vld [vmem:[#allocation6 + $0x39a8] sm:$0xff]
    %v3929 = vld [vmem:[#allocation6 + $0x39b0] sm:$0xff]
    %v3930 = vld [vmem:[#allocation6 + $0x39b8] sm:$0xff]
    %v3931 = vld [vmem:[#allocation6 + $0x39c0] sm:$0xff]
    %v3932 = vld [vmem:[#allocation6 + $0x39c8] sm:$0xff]
    %v3933 = vld [vmem:[#allocation6 + $0x39d0] sm:$0xff]
    %v3934 = vld [vmem:[#allocation6 + $0x39d8] sm:$0xff]
    %v3935 = vld [vmem:[#allocation6 + $0x39e0] sm:$0xff]
    %v3936 = vld [vmem:[#allocation6 + $0x39e8] sm:$0xff]
    %v3937 = vld [vmem:[#allocation6 + $0x39f0] sm:$0xff]
    %v3938 = vld [vmem:[#allocation6 + $0x39f8] sm:$0xff]
    %v3939 = vld [vmem:[#allocation6 + $0x3a00] sm:$0xff]
    %v3940 = vld [vmem:[#allocation6 + $0x3a08] sm:$0xff]
    %v3941 = vld [vmem:[#allocation6 + $0x3a10] sm:$0xff]
    %v3942 = vld [vmem:[#allocation6 + $0x3a18] sm:$0xff]
    %v3943 = vld [vmem:[#allocation6 + $0x3a20] sm:$0xff]
    %v3944 = vld [vmem:[#allocation6 + $0x3a28] sm:$0xff]
    %v3945 = vld [vmem:[#allocation6 + $0x3a30] sm:$0xff]
    %v3946 = vld [vmem:[#allocation6 + $0x3a38] sm:$0xff]
    %v3947 = vld [vmem:[#allocation6 + $0x3a40] sm:$0xff]
    %v3948 = vld [vmem:[#allocation6 + $0x3a48] sm:$0xff]
    %v3949 = vld [vmem:[#allocation6 + $0x3a50] sm:$0xff]
    %v3950 = vld [vmem:[#allocation6 + $0x3a58] sm:$0xff]
    %v3951 = vld [vmem:[#allocation6 + $0x3a60] sm:$0xff]
    %v3952 = vld [vmem:[#allocation6 + $0x3a68] sm:$0xff]
    %v3953 = vld [vmem:[#allocation6 + $0x3a70] sm:$0xff]
    %v3954 = vld [vmem:[#allocation6 + $0x3a78] sm:$0xff]
    %v3955 = vld [vmem:[#allocation6 + $0x3a80] sm:$0xff]
    %v3956 = vld [vmem:[#allocation6 + $0x3a88] sm:$0xff]
    %v3957 = vld [vmem:[#allocation6 + $0x3a90] sm:$0xff]
    %v3958 = vld [vmem:[#allocation6 + $0x3a98] sm:$0xff]
    %v3959 = vld [vmem:[#allocation6 + $0x3aa0] sm:$0xff]
    %v3960 = vld [vmem:[#allocation6 + $0x3aa8] sm:$0xff]
    %v3961 = vld [vmem:[#allocation6 + $0x3ab0] sm:$0xff]
    %v3962 = vld [vmem:[#allocation6 + $0x3ab8] sm:$0xff]
    %v3963 = vld [vmem:[#allocation6 + $0x3ac0] sm:$0xff]
    %v3964 = vld [vmem:[#allocation6 + $0x3ac8] sm:$0xff]
    %v3965 = vld [vmem:[#allocation6 + $0x3ad0] sm:$0xff]
    %v3966 = vld [vmem:[#allocation6 + $0x3ad8] sm:$0xff]
    %v3967 = vld [vmem:[#allocation6 + $0x3ae0] sm:$0xff]
    %v3968 = vld [vmem:[#allocation6 + $0x3ae8] sm:$0xff]
    %v3969 = vld [vmem:[#allocation6 + $0x3af0] sm:$0xff]
    %v3970 = vld [vmem:[#allocation6 + $0x3af8] sm:$0xff]
    %v3971 = vld [vmem:[#allocation6 + $0x3b00] sm:$0xff]
    %v3972 = vld [vmem:[#allocation6 + $0x3b08] sm:$0xff]
    %v3973 = vld [vmem:[#allocation6 + $0x3b10] sm:$0xff]
    %v3974 = vld [vmem:[#allocation6 + $0x3b18] sm:$0xff]
    %v3975 = vld [vmem:[#allocation6 + $0x3b20] sm:$0xff]
    %v3976 = vld [vmem:[#allocation6 + $0x3b28] sm:$0xff]
    %v3977 = vld [vmem:[#allocation6 + $0x3b30] sm:$0xff]
    %v3978 = vld [vmem:[#allocation6 + $0x3b38] sm:$0xff]
    %v3979 = vld [vmem:[#allocation6 + $0x3b40] sm:$0xff]
    %v3980 = vld [vmem:[#allocation6 + $0x3b48] sm:$0xff]
    %v3981 = vld [vmem:[#allocation6 + $0x3b50] sm:$0xff]
    %v3982 = vld [vmem:[#allocation6 + $0x3b58] sm:$0xff]
    %v3983 = vld [vmem:[#allocation6 + $0x3b60] sm:$0xff]
    %v3984 = vld [vmem:[#allocation6 + $0x3b68] sm:$0xff]
    %v3985 = vld [vmem:[#allocation6 + $0x3b70] sm:$0xff]
    %v3986 = vld [vmem:[#allocation6 + $0x3b78] sm:$0xff]
    %v3987 = vld [vmem:[#allocation6 + $0x3b80] sm:$0xff]
    %v3988 = vld [vmem:[#allocation6 + $0x3b88] sm:$0xff]
    %v3989 = vld [vmem:[#allocation6 + $0x3b90] sm:$0xff]
    %v3990 = vld [vmem:[#allocation6 + $0x3b98] sm:$0xff]
    %v3991 = vld [vmem:[#allocation6 + $0x3ba0] sm:$0xff]
    %v3992 = vld [vmem:[#allocation6 + $0x3ba8] sm:$0xff]
    %v3993 = vld [vmem:[#allocation6 + $0x3bb0] sm:$0xff]
    %v3994 = vld [vmem:[#allocation6 + $0x3bb8] sm:$0xff]
    %v3995 = vld [vmem:[#allocation6 + $0x3bc0] sm:$0xff]
    %v3996 = vld [vmem:[#allocation6 + $0x3bc8] sm:$0xff]
    %v3997 = vld [vmem:[#allocation6 + $0x3bd0] sm:$0xff]
    %v3998 = vld [vmem:[#allocation6 + $0x3bd8] sm:$0xff]
    %v3999 = vld [vmem:[#allocation6 + $0x3be0] sm:$0xff]
    %v4000 = vld [vmem:[#allocation6 + $0x3be8] sm:$0xff]
    %v4001 = vld [vmem:[#allocation6 + $0x3bf0] sm:$0xff]
    %v4002 = vld [vmem:[#allocation6 + $0x3bf8] sm:$0xff]
    %v4003 = vld [vmem:[#allocation6 + $0x3c00] sm:$0xff]
    %v4004 = vld [vmem:[#allocation6 + $0x3c08] sm:$0xff]
    %v4005 = vld [vmem:[#allocation6 + $0x3c10] sm:$0xff]
    %v4006 = vld [vmem:[#allocation6 + $0x3c18] sm:$0xff]
    %v4007 = vld [vmem:[#allocation6 + $0x3c20] sm:$0xff]
    %v4008 = vld [vmem:[#allocation6 + $0x3c28] sm:$0xff]
    %v4009 = vld [vmem:[#allocation6 + $0x3c30] sm:$0xff]
    %v4010 = vld [vmem:[#allocation6 + $0x3c38] sm:$0xff]
    %v4011 = vld [vmem:[#allocation6 + $0x3c40] sm:$0xff]
    %v4012 = vld [vmem:[#allocation6 + $0x3c48] sm:$0xff]
    %v4013 = vld [vmem:[#allocation6 + $0x3c50] sm:$0xff]
    %v4014 = vld [vmem:[#allocation6 + $0x3c58] sm:$0xff]
    %v4015 = vld [vmem:[#allocation6 + $0x3c60] sm:$0xff]
    %v4016 = vld [vmem:[#allocation6 + $0x3c68] sm:$0xff]
    %v4017 = vld [vmem:[#allocation6 + $0x3c70] sm:$0xff]
    %v4018 = vld [vmem:[#allocation6 + $0x3c78] sm:$0xff]
    %v4019 = vld [vmem:[#allocation6 + $0x3c80] sm:$0xff]
    %v4020 = vld [vmem:[#allocation6 + $0x3c88] sm:$0xff]
    %v4021 = vld [vmem:[#allocation6 + $0x3c90] sm:$0xff]
    %v4022 = vld [vmem:[#allocation6 + $0x3c98] sm:$0xff]
    %v4023 = vld [vmem:[#allocation6 + $0x3ca0] sm:$0xff]
    %v4024 = vld [vmem:[#allocation6 + $0x3ca8] sm:$0xff]
    %v4025 = vld [vmem:[#allocation6 + $0x3cb0] sm:$0xff]
    %v4026 = vld [vmem:[#allocation6 + $0x3cb8] sm:$0xff]
    %v4027 = vld [vmem:[#allocation6 + $0x3cc0] sm:$0xff]
    %v4028 = vld [vmem:[#allocation6 + $0x3cc8] sm:$0xff]
    %v4029 = vld [vmem:[#allocation6 + $0x3cd0] sm:$0xff]
    %v4030 = vld [vmem:[#allocation6 + $0x3cd8] sm:$0xff]
    %v4031 = vld [vmem:[#allocation6 + $0x3ce0] sm:$0xff]
    %v4032 = vld [vmem:[#allocation6 + $0x3ce8] sm:$0xff]
    %v4033 = vld [vmem:[#allocation6 + $0x3cf0] sm:$0xff]
    %v4034 = vld [vmem:[#allocation6 + $0x3cf8] sm:$0xff]
    %v4035 = vld [vmem:[#allocation6 + $0x3d00] sm:$0xff]
    %v4036 = vld [vmem:[#allocation6 + $0x3d08] sm:$0xff]
    %v4037 = vld [vmem:[#allocation6 + $0x3d10] sm:$0xff]
    %v4038 = vld [vmem:[#allocation6 + $0x3d18] sm:$0xff]
    %v4039 = vld [vmem:[#allocation6 + $0x3d20] sm:$0xff]
    %v4040 = vld [vmem:[#allocation6 + $0x3d28] sm:$0xff]
    %v4041 = vld [vmem:[#allocation6 + $0x3d30] sm:$0xff]
    %v4042 = vld [vmem:[#allocation6 + $0x3d38] sm:$0xff]
    %v4043 = vld [vmem:[#allocation6 + $0x3d40] sm:$0xff]
    %v4044 = vld [vmem:[#allocation6 + $0x3d48] sm:$0xff]
    %v4045 = vld [vmem:[#allocation6 + $0x3d50] sm:$0xff]
    %v4046 = vld [vmem:[#allocation6 + $0x3d58] sm:$0xff]
    %v4047 = vld [vmem:[#allocation6 + $0x3d60] sm:$0xff]
    %v4048 = vld [vmem:[#allocation6 + $0x3d68] sm:$0xff]
    %v4049 = vld [vmem:[#allocation6 + $0x3d70] sm:$0xff]
    %v4050 = vld [vmem:[#allocation6 + $0x3d78] sm:$0xff]
    %v4051 = vld [vmem:[#allocation6 + $0x3d80] sm:$0xff]
    %v4052 = vld [vmem:[#allocation6 + $0x3d88] sm:$0xff]
    %v4053 = vld [vmem:[#allocation6 + $0x3d90] sm:$0xff]
    %v4054 = vld [vmem:[#allocation6 + $0x3d98] sm:$0xff]
    %v4055 = vld [vmem:[#allocation6 + $0x3da0] sm:$0xff]
    %v4056 = vld [vmem:[#allocation6 + $0x3da8] sm:$0xff]
    %v4057 = vld [vmem:[#allocation6 + $0x3db0] sm:$0xff]
    %v4058 = vld [vmem:[#allocation6 + $0x3db8] sm:$0xff]
    %v4059 = vld [vmem:[#allocation6 + $0x3dc0] sm:$0xff]
    %v4060 = vld [vmem:[#allocation6 + $0x3dc8] sm:$0xff]
    %v4061 = vld [vmem:[#allocation6 + $0x3dd0] sm:$0xff]
    %v4062 = vld [vmem:[#allocation6 + $0x3dd8] sm:$0xff]
    %v4063 = vld [vmem:[#allocation6 + $0x3de0] sm:$0xff]
    %v4064 = vld [vmem:[#allocation6 + $0x3de8] sm:$0xff]
    %v4065 = vld [vmem:[#allocation6 + $0x3df0] sm:$0xff]
    %v4066 = vld [vmem:[#allocation6 + $0x3df8] sm:$0xff]
    %v4067 = vld [vmem:[#allocation6 + $0x3e00] sm:$0xff]
    %v4068 = vld [vmem:[#allocation6 + $0x3e08] sm:$0xff]
    %v4069 = vld [vmem:[#allocation6 + $0x3e10] sm:$0xff]
    %v4070 = vld [vmem:[#allocation6 + $0x3e18] sm:$0xff]
    %v4071 = vld [vmem:[#allocation6 + $0x3e20] sm:$0xff]
    %v4072 = vld [vmem:[#allocation6 + $0x3e28] sm:$0xff]
    %v4073 = vld [vmem:[#allocation6 + $0x3e30] sm:$0xff]
    %v4074 = vld [vmem:[#allocation6 + $0x3e38] sm:$0xff]
    %v4075 = vld [vmem:[#allocation6 + $0x3e40] sm:$0xff]
    %v4076 = vld [vmem:[#allocation6 + $0x3e48] sm:$0xff]
    %v4077 = vld [vmem:[#allocation6 + $0x3e50] sm:$0xff]
    %v4078 = vld [vmem:[#allocation6 + $0x3e58] sm:$0xff]
    %v4079 = vld [vmem:[#allocation6 + $0x3e60] sm:$0xff]
    %v4080 = vld [vmem:[#allocation6 + $0x3e68] sm:$0xff]
    %v4081 = vld [vmem:[#allocation6 + $0x3e70] sm:$0xff]
    %v4082 = vld [vmem:[#allocation6 + $0x3e78] sm:$0xff]
    %v4083 = vld [vmem:[#allocation7] sm:$0xff]
    %v4084 = vld [vmem:[#allocation7 + $0x8] sm:$0xff]
    %v4087 = vlaneseq
    %v4088 = vshrl.u32 %v4087, 7
    %v4089 = vsub.s32 0, %v4088
    %v4090 = vrot.slane %v4083, %v4089
    %v4091 = vlaneseq
    %v4092 = vshrl.u32 %v4091, 7
    %v4093 = vsub.s32 1, %v4092
    %v4094 = vrot.slane %v4083, %v4093
    %v4095 = vlaneseq
    %v4096 = vshrl.u32 %v4095, 7
    %v4097 = vsub.s32 2, %v4096
    %v4098 = vrot.slane %v4083, %v4097
    %v4099 = vlaneseq
    %v4100 = vshrl.u32 %v4099, 7
    %v4101 = vsub.s32 3, %v4100
    %v4102 = vrot.slane %v4083, %v4101
    %v4103 = vlaneseq
    %v4104 = vshrl.u32 %v4103, 7
    %v4105 = vsub.s32 4, %v4104
    %v4106 = vrot.slane %v4083, %v4105
    %v4107 = vlaneseq
    %v4108 = vshrl.u32 %v4107, 7
    %v4109 = vsub.s32 5, %v4108
    %v4110 = vrot.slane %v4083, %v4109
    %v4111 = vlaneseq
    %v4112 = vshrl.u32 %v4111, 7
    %v4113 = vsub.s32 6, %v4112
    %v4114 = vrot.slane %v4083, %v4113
    %v4115 = vlaneseq
    %v4116 = vshrl.u32 %v4115, 7
    %v4117 = vsub.s32 7, %v4116
    %v4118 = vrot.slane %v4083, %v4117
    %v4119 = vlaneseq
    %v4120 = vshrl.u32 %v4119, 7
    %v4121 = vsub.s32 0, %v4120
    %v4122 = vrot.slane %v4084, %v4121
    %v4123 = vlaneseq
    %v4124 = vshrl.u32 %v4123, 7
    %v4125 = vsub.s32 1, %v4124
    %v4126 = vrot.slane %v4084, %v4125
    %v4127 = vlaneseq
    %v4128 = vshrl.u32 %v4127, 7
    %v4129 = vsub.s32 2, %v4128
    %v4130 = vrot.slane %v4084, %v4129
    %v4131 = vlaneseq
    %v4132 = vshrl.u32 %v4131, 7
    %v4133 = vsub.s32 3, %v4132
    %v4134 = vrot.slane %v4084, %v4133
    %v4135 = vlaneseq
    %v4136 = vshrl.u32 %v4135, 7
    %v4137 = vsub.s32 4, %v4136
    %v4138 = vrot.slane %v4084, %v4137
    %v4139 = vlaneseq
    %v4140 = vshrl.u32 %v4139, 7
    %v4141 = vsub.s32 5, %v4140
    %v4142 = vrot.slane %v4084, %v4141
    %v4143 = vlaneseq
    %v4144 = vshrl.u32 %v4143, 7
    %v4145 = vsub.s32 6, %v4144
    %v4146 = vrot.slane %v4084, %v4145
    %v4147 = vlaneseq
    %v4148 = vshrl.u32 %v4147, 7
    %v4149 = vsub.s32 7, %v4148
    %v4150 = vrot.slane %v4084, %v4149
    %vm4167 = vcmask 850944
    %v4169 = vsel %vm4167, %v2082, 0
    %4171 = vmatprep.subr.mxu0 %v2084
    %4172 = vmatpush1.msra.mxu0 %v2083
    %4173 = vmatprep.subr.mxu0 %v2100
    %4174 = vmatpush1.msra.mxu0 %v2099
    %4175 = vmatprep.subr.mxu0 %v2116
    %4176 = vmatpush1.msra.mxu0 %v2115
    %4177 = vmatprep.subr.mxu0 %v2132
    %4178 = vmatpush1.msra.mxu0 %v2131
    %4179 = vmatprep.subr.mxu0 %v2148
    %4180 = vmatpush1.msra.mxu0 %v2147
    %4181 = vmatprep.subr.mxu0 %v2164
    %4182 = vmatpush1.msra.mxu0 %v2163
    %4183 = vmatprep.subr.mxu0 %v2180
    %4184 = vmatpush1.msra.mxu0 %v2179
    %4185 = vmatprep.subr.mxu0 %v2196
    %4186 = vmatpush1.msra.mxu0 %v2195
    %4187 = vmatprep.subr.mxu0 %v2212
    %4188 = vmatpush1.msra.mxu0 %v2211
    %4189 = vmatprep.subr.mxu0 %v2228
    %4190 = vmatpush1.msra.mxu0 %v2227
    %4191 = vmatprep.subr.mxu0 %v2244
    %4192 = vmatpush1.msra.mxu0 %v2243
    %4193 = vmatprep.subr.mxu0 %v2260
    %4194 = vmatpush1.msra.mxu0 %v2259
    %4195 = vmatprep.subr.mxu0 %v2276
    %4196 = vmatpush1.msra.mxu0 %v2275
    %4197 = vmatprep.subr.mxu0 %v2292
    %4198 = vmatpush1.msra.mxu0 %v2291
    %4199 = vmatprep.subr.mxu0 %v2308
    %4200 = vmatpush1.msra.mxu0 %v2307
    %4201 = vmatprep.subr.mxu0 %v2324
    %4202 = vmatpush1.msra.mxu0 %v2323
    %4203 = vmatprep.subr.mxu0 %v2340
    %4204 = vmatpush1.msra.mxu0 %v2339
    %4205 = vmatprep.subr.mxu0 %v2356
    %4206 = vmatpush1.msra.mxu0 %v2355
    %4207 = vmatprep.subr.mxu0 %v2372
    %4208 = vmatpush1.msra.mxu0 %v2371
    %4209 = vmatprep.subr.mxu0 %v2388
    %4210 = vmatpush1.msra.mxu0 %v2387
    %4211 = vmatprep.subr.mxu0 %v2404
    %4212 = vmatpush1.msra.mxu0 %v2403
    %4213 = vmatprep.subr.mxu0 %v2420
    %4214 = vmatpush1.msra.mxu0 %v2419
    %4215 = vmatprep.subr.mxu0 %v2436
    %4216 = vmatpush1.msra.mxu0 %v2435
    %4217 = vmatprep.subr.mxu0 %v2452
    %4218 = vmatpush1.msra.mxu0 %v2451
    %4219 = vmatprep.subr.mxu0 %v2468
    %4220 = vmatpush1.msra.mxu0 %v2467
    %4221 = vmatprep.subr.mxu0 %v2484
    %4222 = vmatpush1.msra.mxu0 %v2483
    %4223 = vmatprep.subr.mxu0 %v2500
    %4224 = vmatpush1.msra.mxu0 %v2499
    %4225 = vmatprep.subr.mxu0 %v2516
    %4226 = vmatpush1.msra.mxu0 %v2515
    %4227 = vmatprep.subr.mxu0 %v2532
    %4228 = vmatpush1.msra.mxu0 %v2531
    %4229 = vmatprep.subr.mxu0 %v2548
    %4230 = vmatpush1.msra.mxu0 %v2547
    %4231 = vmatprep.subr.mxu0 %v2564
    %4232 = vmatpush1.msra.mxu0 %v2563
    %4233 = vmatprep.subr.mxu0 %v2580
    %4234 = vmatpush1.msra.mxu0 %v2579
    %4235 = vmatprep.mubr.f32.mxu0 %v2076
    %4236 = vmatmul.mubr.f32.gmra.mrb[0].mxu0 %v2075
    %v4237 = vpop.f32.mrb[0].mxu0
    %v4238 = vadd.f32 %v4090, %v4237
    %v4239 = vpop.f32.mrb[0].mxu0
    %v4240 = vadd.f32 %v4094, %v4239
    %4241 = vdwg.mxu0
    %4242 = vmatprep.subr.mxu0 %v2596
    %4243 = vmatpush1.msra.mxu0 %v2595
    %4244 = vmatprep.subr.mxu0 %v2612
    %4245 = vmatpush1.msra.mxu0 %v2611
    %4246 = vmatprep.subr.mxu0 %v2628
    %4247 = vmatpush1.msra.mxu0 %v2627
    %4248 = vmatprep.subr.mxu0 %v2644
    %4249 = vmatpush1.msra.mxu0 %v2643
    %4250 = vmatprep.subr.mxu0 %v2660
    %4251 = vmatpush1.msra.mxu0 %v2659
    %4252 = vmatprep.subr.mxu0 %v2676
    %4253 = vmatpush1.msra.mxu0 %v2675
    %4254 = vmatprep.subr.mxu0 %v2692
    %4255 = vmatpush1.msra.mxu0 %v2691
    %4256 = vmatprep.subr.mxu0 %v2708
    %4257 = vmatpush1.msra.mxu0 %v2707
    %4258 = vmatprep.subr.mxu0 %v2724
    %4259 = vmatpush1.msra.mxu0 %v2723
    %4260 = vmatprep.subr.mxu0 %v2740
    %4261 = vmatpush1.msra.mxu0 %v2739
    %4262 = vmatprep.subr.mxu0 %v2756
    %4263 = vmatpush1.msra.mxu0 %v2755
    %4264 = vmatprep.subr.mxu0 %v2772
    %4265 = vmatpush1.msra.mxu0 %v2771
    %4266 = vmatprep.subr.mxu0 %v2788
    %4267 = vmatpush1.msra.mxu0 %v2787
    %4268 = vmatprep.subr.mxu0 %v2804
    %4269 = vmatpush1.msra.mxu0 %v2803
    %4270 = vmatprep.subr.mxu0 %v2820
    %4271 = vmatpush1.msra.mxu0 %v2819
    %4272 = vmatprep.subr.mxu0 %v2836
    %4273 = vmatpush1.msra.mxu0 %v2835
    %4274 = vmatprep.subr.mxu0 %v2852
    %4275 = vmatpush1.msra.mxu0 %v2851
    %4276 = vmatprep.subr.mxu0 %v2868
    %4277 = vmatpush1.msra.mxu0 %v2867
    %4278 = vmatprep.subr.mxu0 %v2884
    %4279 = vmatpush1.msra.mxu0 %v2883
    %4280 = vmatprep.subr.mxu0 %v2900
    %4281 = vmatpush1.msra.mxu0 %v2899
    %4282 = vmatprep.subr.mxu0 %v2916
    %4283 = vmatpush1.msra.mxu0 %v2915
    %4284 = vmatprep.subr.mxu0 %v2932
    %4285 = vmatpush1.msra.mxu0 %v2931
    %4286 = vmatprep.subr.mxu0 %v2948
    %4287 = vmatpush1.msra.mxu0 %v2947
    %4288 = vmatprep.subr.mxu0 %v2964
    %4289 = vmatpush1.msra.mxu0 %v2963
    %4290 = vmatprep.subr.mxu0 %v2980
    %4291 = vmatpush1.msra.mxu0 %v2979
    %4292 = vmatprep.subr.mxu0 %v2996
    %4293 = vmatpush1.msra.mxu0 %v2995
    %4294 = vmatprep.subr.mxu0 %v3012
    %4295 = vmatpush1.msra.mxu0 %v3011
    %4296 = vmatprep.subr.mxu0 %v3028
    %4297 = vmatpush1.msra.mxu0 %v3027
    %4298 = vmatprep.subr.mxu0 %v3044
    %4299 = vmatpush1.msra.mxu0 %v3043
    %4300 = vmatprep.subr.mxu0 %v3060
    %4301 = vmatpush1.msra.mxu0 %v3059
    %4302 = vmatprep.subr.mxu0 %v3076
    %4303 = vmatpush1.msra.mxu0 %v3075
    %4304 = vmatprep.subr.mxu0 %v3092
    %4305 = vmatpush1.msra.mxu0 %v3091
    %4306 = vmatprep.mubr.f32.mxu0 %v2078
    %4307 = vmatmul.mubr.f32.gmra.mrb[0].mxu0 %v2077
    %v4308 = vpop.f32.mrb[0].mxu0
    %v4309 = vadd.f32 %v4238, %v4308
    %v4310 = vpop.f32.mrb[0].mxu0
    %v4311 = vadd.f32 %v4240, %v4310
    %4312 = vdwg.mxu0
    %4313 = vmatprep.subr.mxu0 %v3108
    %4314 = vmatpush1.msra.mxu0 %v3107
    %4315 = vmatprep.subr.mxu0 %v3124
    %4316 = vmatpush1.msra.mxu0 %v3123
    %4317 = vmatprep.subr.mxu0 %v3140
    %4318 = vmatpush1.msra.mxu0 %v3139
    %4319 = vmatprep.subr.mxu0 %v3156
    %4320 = vmatpush1.msra.mxu0 %v3155
    %4321 = vmatprep.subr.mxu0 %v3172
    %4322 = vmatpush1.msra.mxu0 %v3171
    %4323 = vmatprep.subr.mxu0 %v3188
    %4324 = vmatpush1.msra.mxu0 %v3187
    %4325 = vmatprep.subr.mxu0 %v3204
    %4326 = vmatpush1.msra.mxu0 %v3203
    %4327 = vmatprep.subr.mxu0 %v3220
    %4328 = vmatpush1.msra.mxu0 %v3219
    %4329 = vmatprep.subr.mxu0 %v3236
    %4330 = vmatpush1.msra.mxu0 %v3235
    %4331 = vmatprep.subr.mxu0 %v3252
    %4332 = vmatpush1.msra.mxu0 %v3251
    %4333 = vmatprep.subr.mxu0 %v3268
    %4334 = vmatpush1.msra.mxu0 %v3267
    %4335 = vmatprep.subr.mxu0 %v3284
    %4336 = vmatpush1.msra.mxu0 %v3283
    %4337 = vmatprep.subr.mxu0 %v3300
    %4338 = vmatpush1.msra.mxu0 %v3299
    %4339 = vmatprep.subr.mxu0 %v3316
    %4340 = vmatpush1.msra.mxu0 %v3315
    %4341 = vmatprep.subr.mxu0 %v3332
    %4342 = vmatpush1.msra.mxu0 %v3331
    %4343 = vmatprep.subr.mxu0 %v3348
    %4344 = vmatpush1.msra.mxu0 %v3347
    %4345 = vmatprep.subr.mxu0 %v3364
    %4346 = vmatpush1.msra.mxu0 %v3363
    %4347 = vmatprep.subr.mxu0 %v3380
    %4348 = vmatpush1.msra.mxu0 %v3379
    %4349 = vmatprep.subr.mxu0 %v3396
    %4350 = vmatpush1.msra.mxu0 %v3395
    %4351 = vmatprep.subr.mxu0 %v3412
    %4352 = vmatpush1.msra.mxu0 %v3411
    %4353 = vmatprep.subr.mxu0 %v3428
    %4354 = vmatpush1.msra.mxu0 %v3427
    %4355 = vmatprep.subr.mxu0 %v3444
    %4356 = vmatpush1.msra.mxu0 %v3443
    %4357 = vmatprep.subr.mxu0 %v3460
    %4358 = vmatpush1.msra.mxu0 %v3459
    %4359 = vmatprep.subr.mxu0 %v3476
    %4360 = vmatpush1.msra.mxu0 %v3475
    %4361 = vmatprep.subr.mxu0 %v3492
    %4362 = vmatpush1.msra.mxu0 %v3491
    %4363 = vmatprep.subr.mxu0 %v3508
    %4364 = vmatpush1.msra.mxu0 %v3507
    %4365 = vmatprep.subr.mxu0 %v3524
    %4366 = vmatpush1.msra.mxu0 %v3523
    %4367 = vmatprep.subr.mxu0 %v3540
    %4368 = vmatpush1.msra.mxu0 %v3539
    %4369 = vmatprep.subr.mxu0 %v3556
    %4370 = vmatpush1.msra.mxu0 %v3555
    %4371 = vmatprep.subr.mxu0 %v3572
    %4372 = vmatpush1.msra.mxu0 %v3571
    %4373 = vmatprep.subr.mxu0 %v3588
    %4374 = vmatpush1.msra.mxu0 %v3587
    %4375 = vmatprep.subr.mxu0 %v3604
    %4376 = vmatpush1.msra.mxu0 %v3603
    %4377 = vmatprep.mubr.f32.mxu0 %v2080
    %4378 = vmatmul.mubr.f32.gmra.mrb[0].mxu0 %v2079
    %v4379 = vpop.f32.mrb[0].mxu0
    %v4380 = vadd.f32 %v4309, %v4379
    %v4381 = vpop.f32.mrb[0].mxu0
    %v4382 = vadd.f32 %v4311, %v4381
    %4383 = vdwg.mxu0
    %4384 = vmatprep.subr.mxu0 %v3620
    %4385 = vmatpush1.msra.mxu0 %v3619
    %4386 = vmatprep.subr.mxu0 %v3636
    %4387 = vmatpush1.msra.mxu0 %v3635
    %4388 = vmatprep.subr.mxu0 %v3652
    %4389 = vmatpush1.msra.mxu0 %v3651
    %4390 = vmatprep.subr.mxu0 %v3668
    %4391 = vmatpush1.msra.mxu0 %v3667
    %4392 = vmatprep.subr.mxu0 %v3684
    %4393 = vmatpush1.msra.mxu0 %v3683
    %4394 = vmatprep.subr.mxu0 %v3700
    %4395 = vmatpush1.msra.mxu0 %v3699
    %4396 = vmatprep.subr.mxu0 %v3716
    %4397 = vmatpush1.msra.mxu0 %v3715
    %4398 = vmatprep.subr.mxu0 %v3732
    %4399 = vmatpush1.msra.mxu0 %v3731
    %4400 = vmatprep.subr.mxu0 %v3748
    %4401 = vmatpush1.msra.mxu0 %v3747
    %4402 = vmatprep.subr.mxu0 %v3764
    %4403 = vmatpush1.msra.mxu0 %v3763
    %4404 = vmatprep.subr.mxu0 %v3780
    %4405 = vmatpush1.msra.mxu0 %v3779
    %4406 = vmatprep.subr.mxu0 %v3796
    %4407 = vmatpush1.msra.mxu0 %v3795
    %4408 = vmatprep.subr.mxu0 %v3812
    %4409 = vmatpush1.msra.mxu0 %v3811
    %4410 = vmatprep.subr.mxu0 %v3828
    %4411 = vmatpush1.msra.mxu0 %v3827
    %4412 = vmatprep.subr.mxu0 %v3844
    %4413 = vmatpush1.msra.mxu0 %v3843
    %4414 = vmatprep.subr.mxu0 %v3860
    %4415 = vmatpush1.msra.mxu0 %v3859
    %4416 = vmatprep.subr.mxu0 %v3876
    %4417 = vmatpush1.msra.mxu0 %v3875
    %4418 = vmatprep.subr.mxu0 %v3892
    %4419 = vmatpush1.msra.mxu0 %v3891
    %4420 = vmatprep.subr.mxu0 %v3908
    %4421 = vmatpush1.msra.mxu0 %v3907
    %4422 = vmatprep.subr.mxu0 %v3924
    %4423 = vmatpush1.msra.mxu0 %v3923
    %4424 = vmatprep.subr.mxu0 %v3940
    %4425 = vmatpush1.msra.mxu0 %v3939
    %4426 = vmatprep.subr.mxu0 %v3956
    %4427 = vmatpush1.msra.mxu0 %v3955
    %4428 = vmatprep.subr.mxu0 %v3972
    %4429 = vmatpush1.msra.mxu0 %v3971
    %4430 = vmatprep.subr.mxu0 %v3988
    %4431 = vmatpush1.msra.mxu0 %v3987
    %4432 = vmatprep.subr.mxu0 %v4004
    %4433 = vmatpush1.msra.mxu0 %v4003
    %4434 = vmatprep.subr.mxu0 %v4020
    %4435 = vmatpush1.msra.mxu0 %v4019
    %4436 = vmatprep.subr.mxu0 %v4036
    %4437 = vmatpush1.msra.mxu0 %v4035
    %4438 = vmatprep.subr.mxu0 %v4052
    %4439 = vmatpush1.msra.mxu0 %v4051
    %4440 = vmatprep.subr.mxu0 %v4068
    %4441 = vmatpush1.msra.mxu0 %v4067
    %4442 = vmatprep.subr.mxu0 0.0
    %4443 = vmatpush1.msra.mxu0 0.0
    %4444 = vmatprep.subr.mxu0 0.0
    %4445 = vmatpush1.msra.mxu0 0.0
    %4446 = vmatprep.subr.mxu0 0.0
    %4447 = vmatpush1.msra.mxu0 0.0
    %4448 = vmatprep.mubr.f32.mxu0 %v4169
    %4449 = vmatmul.mubr.f32.gmra.mrb[0].mxu0 %v2081
    %v4450 = vpop.f32.mrb[0].mxu0
    %v4451 = vadd.f32 %v4380, %v4450
    %v4452 = vpop.f32.mrb[0].mxu0
    %v4453 = vadd.f32 %v4382, %v4452
    %4454 = vdwg.mxu0
    %4455 = vmatprep.subr.mxu0 %v2086
    %4456 = vmatpush1.msra.mxu0 %v2085
    %4457 = vmatprep.subr.mxu0 %v2102
    %4458 = vmatpush1.msra.mxu0 %v2101
    %4459 = vmatprep.subr.mxu0 %v2118
    %4460 = vmatpush1.msra.mxu0 %v2117
    %4461 = vmatprep.subr.mxu0 %v2134
    %4462 = vmatpush1.msra.mxu0 %v2133
    %4463 = vmatprep.subr.mxu0 %v2150
    %4464 = vmatpush1.msra.mxu0 %v2149
    %4465 = vmatprep.subr.mxu0 %v2166
    %4466 = vmatpush1.msra.mxu0 %v2165
    %4467 = vmatprep.subr.mxu0 %v2182
    %4468 = vmatpush1.msra.mxu0 %v2181
    %4469 = vmatprep.subr.mxu0 %v2198
    %4470 = vmatpush1.msra.mxu0 %v2197
    %4471 = vmatprep.subr.mxu0 %v2214
    %4472 = vmatpush1.msra.mxu0 %v2213
    %4473 = vmatprep.subr.mxu0 %v2230
    %4474 = vmatpush1.msra.mxu0 %v2229
    %4475 = vmatprep.subr.mxu0 %v2246
    %4476 = vmatpush1.msra.mxu0 %v2245
    %4477 = vmatprep.subr.mxu0 %v2262
    %4478 = vmatpush1.msra.mxu0 %v2261
    %4479 = vmatprep.subr.mxu0 %v2278
    %4480 = vmatpush1.msra.mxu0 %v2277
    %4481 = vmatprep.subr.mxu0 %v2294
    %4482 = vmatpush1.msra.mxu0 %v2293
    %4483 = vmatprep.subr.mxu0 %v2310
    %4484 = vmatpush1.msra.mxu0 %v2309
    %4485 = vmatprep.subr.mxu0 %v2326
    %4486 = vmatpush1.msra.mxu0 %v2325
    %4487 = vmatprep.subr.mxu0 %v2342
    %4488 = vmatpush1.msra.mxu0 %v2341
    %4489 = vmatprep.subr.mxu0 %v2358
    %4490 = vmatpush1.msra.mxu0 %v2357
    %4491 = vmatprep.subr.mxu0 %v2374
    %4492 = vmatpush1.msra.mxu0 %v2373
    %4493 = vmatprep.subr.mxu0 %v2390
    %4494 = vmatpush1.msra.mxu0 %v2389
    %4495 = vmatprep.subr.mxu0 %v2406
    %4496 = vmatpush1.msra.mxu0 %v2405
    %4497 = vmatprep.subr.mxu0 %v2422
    %4498 = vmatpush1.msra.mxu0 %v2421
    %4499 = vmatprep.subr.mxu0 %v2438
    %4500 = vmatpush1.msra.mxu0 %v2437
    %4501 = vmatprep.subr.mxu0 %v2454
    %4502 = vmatpush1.msra.mxu0 %v2453
    %4503 = vmatprep.subr.mxu0 %v2470
    %4504 = vmatpush1.msra.mxu0 %v2469
    %4505 = vmatprep.subr.mxu0 %v2486
    %4506 = vmatpush1.msra.mxu0 %v2485
    %4507 = vmatprep.subr.mxu0 %v2502
    %4508 = vmatpush1.msra.mxu0 %v2501
    %4509 = vmatprep.subr.mxu0 %v2518
    %4510 = vmatpush1.msra.mxu0 %v2517
    %4511 = vmatprep.subr.mxu0 %v2534
    %4512 = vmatpush1.msra.mxu0 %v2533
    %4513 = vmatprep.subr.mxu0 %v2550
    %4514 = vmatpush1.msra.mxu0 %v2549
    %4515 = vmatprep.subr.mxu0 %v2566
    %4516 = vmatpush1.msra.mxu0 %v2565
    %4517 = vmatprep.subr.mxu0 %v2582
    %4518 = vmatpush1.msra.mxu0 %v2581
    %4519 = vmatprep.mubr.f32.mxu0 %v2076
    %4520 = vmatmul.mubr.f32.gmra.mrb[0].mxu0 %v2075
    %v4521 = vpop.f32.mrb[0].mxu0
    %v4522 = vadd.f32 %v4098, %v4521
    %v4523 = vpop.f32.mrb[0].mxu0
    %v4524 = vadd.f32 %v4102, %v4523
    %4525 = vdwg.mxu0
    %4526 = vmatprep.subr.mxu0 %v2598
    %4527 = vmatpush1.msra.mxu0 %v2597
    %4528 = vmatprep.subr.mxu0 %v2614
    %4529 = vmatpush1.msra.mxu0 %v2613
    %4530 = vmatprep.subr.mxu0 %v2630
    %4531 = vmatpush1.msra.mxu0 %v2629
    %4532 = vmatprep.subr.mxu0 %v2646
    %4533 = vmatpush1.msra.mxu0 %v2645
    %4534 = vmatprep.subr.mxu0 %v2662
    %4535 = vmatpush1.msra.mxu0 %v2661
    %4536 = vmatprep.subr.mxu0 %v2678
    %4537 = vmatpush1.msra.mxu0 %v2677
    %4538 = vmatprep.subr.mxu0 %v2694
    %4539 = vmatpush1.msra.mxu0 %v2693
    %4540 = vmatprep.subr.mxu0 %v2710
    %4541 = vmatpush1.msra.mxu0 %v2709
    %4542 = vmatprep.subr.mxu0 %v2726
    %4543 = vmatpush1.msra.mxu0 %v2725
    %4544 = vmatprep.subr.mxu0 %v2742
    %4545 = vmatpush1.msra.mxu0 %v2741
    %4546 = vmatprep.subr.mxu0 %v2758
    %4547 = vmatpush1.msra.mxu0 %v2757
    %4548 = vmatprep.subr.mxu0 %v2774
    %4549 = vmatpush1.msra.mxu0 %v2773
    %4550 = vmatprep.subr.mxu0 %v2790
    %4551 = vmatpush1.msra.mxu0 %v2789
    %4552 = vmatprep.subr.mxu0 %v2806
    %4553 = vmatpush1.msra.mxu0 %v2805
    %4554 = vmatprep.subr.mxu0 %v2822
    %4555 = vmatpush1.msra.mxu0 %v2821
    %4556 = vmatprep.subr.mxu0 %v2838
    %4557 = vmatpush1.msra.mxu0 %v2837
    %4558 = vmatprep.subr.mxu0 %v2854
    %4559 = vmatpush1.msra.mxu0 %v2853
    %4560 = vmatprep.subr.mxu0 %v2870
    %4561 = vmatpush1.msra.mxu0 %v2869
    %4562 = vmatprep.subr.mxu0 %v2886
    %4563 = vmatpush1.msra.mxu0 %v2885
    %4564 = vmatprep.subr.mxu0 %v2902
    %4565 = vmatpush1.msra.mxu0 %v2901
    %4566 = vmatprep.subr.mxu0 %v2918
    %4567 = vmatpush1.msra.mxu0 %v2917
    %4568 = vmatprep.subr.mxu0 %v2934
    %4569 = vmatpush1.msra.mxu0 %v2933
    %4570 = vmatprep.subr.mxu0 %v2950
    %4571 = vmatpush1.msra.mxu0 %v2949
    %4572 = vmatprep.subr.mxu0 %v2966
    %4573 = vmatpush1.msra.mxu0 %v2965
    %4574 = vmatprep.subr.mxu0 %v2982
    %4575 = vmatpush1.msra.mxu0 %v2981
    %4576 = vmatprep.subr.mxu0 %v2998
    %4577 = vmatpush1.msra.mxu0 %v2997
    %4578 = vmatprep.subr.mxu0 %v3014
    %4579 = vmatpush1.msra.mxu0 %v3013
    %4580 = vmatprep.subr.mxu0 %v3030
    %4581 = vmatpush1.msra.mxu0 %v3029
    %4582 = vmatprep.subr.mxu0 %v3046
    %4583 = vmatpush1.msra.mxu0 %v3045
    %4584 = vmatprep.subr.mxu0 %v3062
    %4585 = vmatpush1.msra.mxu0 %v3061
    %4586 = vmatprep.subr.mxu0 %v3078
    %4587 = vmatpush1.msra.mxu0 %v3077
    %4588 = vmatprep.subr.mxu0 %v3094
    %4589 = vmatpush1.msra.mxu0 %v3093
    %4590 = vmatprep.mubr.f32.mxu0 %v2078
    %4591 = vmatmul.mubr.f32.gmra.mrb[0].mxu0 %v2077
    %v4592 = vpop.f32.mrb[0].mxu0
    %v4593 = vadd.f32 %v4522, %v4592
    %v4594 = vpop.f32.mrb[0].mxu0
    %v4595 = vadd.f32 %v4524, %v4594
    %4596 = vdwg.mxu0
    %4597 = vmatprep.subr.mxu0 %v3110
    %4598 = vmatpush1.msra.mxu0 %v3109
    %4599 = vmatprep.subr.mxu0 %v3126
    %4600 = vmatpush1.msra.mxu0 %v3125
    %4601 = vmatprep.subr.mxu0 %v3142
    %4602 = vmatpush1.msra.mxu0 %v3141
    %4603 = vmatprep.subr.mxu0 %v3158
    %4604 = vmatpush1.msra.mxu0 %v3157
    %4605 = vmatprep.subr.mxu0 %v3174
    %4606 = vmatpush1.msra.mxu0 %v3173
    %4607 = vmatprep.subr.mxu0 %v3190
    %4608 = vmatpush1.msra.mxu0 %v3189
    %4609 = vmatprep.subr.mxu0 %v3206
    %4610 = vmatpush1.msra.mxu0 %v3205
    %4611 = vmatprep.subr.mxu0 %v3222
    %4612 = vmatpush1.msra.mxu0 %v3221
    %4613 = vmatprep.subr.mxu0 %v3238
    %4614 = vmatpush1.msra.mxu0 %v3237
    %4615 = vmatprep.subr.mxu0 %v3254
    %4616 = vmatpush1.msra.mxu0 %v3253
    %4617 = vmatprep.subr.mxu0 %v3270
    %4618 = vmatpush1.msra.mxu0 %v3269
    %4619 = vmatprep.subr.mxu0 %v3286
    %4620 = vmatpush1.msra.mxu0 %v3285
    %4621 = vmatprep.subr.mxu0 %v3302
    %4622 = vmatpush1.msra.mxu0 %v3301
    %4623 = vmatprep.subr.mxu0 %v3318
    %4624 = vmatpush1.msra.mxu0 %v3317
    %4625 = vmatprep.subr.mxu0 %v3334
    %4626 = vmatpush1.msra.mxu0 %v3333
    %4627 = vmatprep.subr.mxu0 %v3350
    %4628 = vmatpush1.msra.mxu0 %v3349
    %4629 = vmatprep.subr.mxu0 %v3366
    %4630 = vmatpush1.msra.mxu0 %v3365
    %4631 = vmatprep.subr.mxu0 %v3382
    %4632 = vmatpush1.msra.mxu0 %v3381
    %4633 = vmatprep.subr.mxu0 %v3398
    %4634 = vmatpush1.msra.mxu0 %v3397
    %4635 = vmatprep.subr.mxu0 %v3414
    %4636 = vmatpush1.msra.mxu0 %v3413
    %4637 = vmatprep.subr.mxu0 %v3430
    %4638 = vmatpush1.msra.mxu0 %v3429
    %4639 = vmatprep.subr.mxu0 %v3446
    %4640 = vmatpush1.msra.mxu0 %v3445
    %4641 = vmatprep.subr.mxu0 %v3462
    %4642 = vmatpush1.msra.mxu0 %v3461
    %4643 = vmatprep.subr.mxu0 %v3478
    %4644 = vmatpush1.msra.mxu0 %v3477
    %4645 = vmatprep.subr.mxu0 %v3494
    %4646 = vmatpush1.msra.mxu0 %v3493
    %4647 = vmatprep.subr.mxu0 %v3510
    %4648 = vmatpush1.msra.mxu0 %v3509
    %4649 = vmatprep.subr.mxu0 %v3526
    %4650 = vmatpush1.msra.mxu0 %v3525
    %4651 = vmatprep.subr.mxu0 %v3542
    %4652 = vmatpush1.msra.mxu0 %v3541
    %4653 = vmatprep.subr.mxu0 %v3558
    %4654 = vmatpush1.msra.mxu0 %v3557
    %4655 = vmatprep.subr.mxu0 %v3574
    %4656 = vmatpush1.msra.mxu0 %v3573
    %4657 = vmatprep.subr.mxu0 %v3590
    %4658 = vmatpush1.msra.mxu0 %v3589
    %4659 = vmatprep.subr.mxu0 %v3606
    %4660 = vmatpush1.msra.mxu0 %v3605
    %4661 = vmatprep.mubr.f32.mxu0 %v2080
    %4662 = vmatmul.mubr.f32.gmra.mrb[0].mxu0 %v2079
    %v4663 = vpop.f32.mrb[0].mxu0
    %v4664 = vadd.f32 %v4593, %v4663
    %v4665 = vpop.f32.mrb[0].mxu0
    %v4666 = vadd.f32 %v4595, %v4665
    %4667 = vdwg.mxu0
    %4668 = vmatprep.subr.mxu0 %v3622
    %4669 = vmatpush1.msra.mxu0 %v3621
    %4670 = vmatprep.subr.mxu0 %v3638
    %4671 = vmatpush1.msra.mxu0 %v3637
    %4672 = vmatprep.subr.mxu0 %v3654
    %4673 = vmatpush1.msra.mxu0 %v3653
    %4674 = vmatprep.subr.mxu0 %v3670
    %4675 = vmatpush1.msra.mxu0 %v3669
    %4676 = vmatprep.subr.mxu0 %v3686
    %4677 = vmatpush1.msra.mxu0 %v3685
    %4678 = vmatprep.subr.mxu0 %v3702
    %4679 = vmatpush1.msra.mxu0 %v3701
    %4680 = vmatprep.subr.mxu0 %v3718
    %4681 = vmatpush1.msra.mxu0 %v3717
    %4682 = vmatprep.subr.mxu0 %v3734
    %4683 = vmatpush1.msra.mxu0 %v3733
    %4684 = vmatprep.subr.mxu0 %v3750
    %4685 = vmatpush1.msra.mxu0 %v3749
    %4686 = vmatprep.subr.mxu0 %v3766
    %4687 = vmatpush1.msra.mxu0 %v3765
    %4688 = vmatprep.subr.mxu0 %v3782
    %4689 = vmatpush1.msra.mxu0 %v3781
    %4690 = vmatprep.subr.mxu0 %v3798
    %4691 = vmatpush1.msra.mxu0 %v3797
    %4692 = vmatprep.subr.mxu0 %v3814
    %4693 = vmatpush1.msra.mxu0 %v3813
    %4694 = vmatprep.subr.mxu0 %v3830
    %4695 = vmatpush1.msra.mxu0 %v3829
    %4696 = vmatprep.subr.mxu0 %v3846
    %4697 = vmatpush1.msra.mxu0 %v3845
    %4698 = vmatprep.subr.mxu0 %v3862
    %4699 = vmatpush1.msra.mxu0 %v3861
    %4700 = vmatprep.subr.mxu0 %v3878
    %4701 = vmatpush1.msra.mxu0 %v3877
    %4702 = vmatprep.subr.mxu0 %v3894
    %4703 = vmatpush1.msra.mxu0 %v3893
    %4704 = vmatprep.subr.mxu0 %v3910
    %4705 = vmatpush1.msra.mxu0 %v3909
    %4706 = vmatprep.subr.mxu0 %v3926
    %4707 = vmatpush1.msra.mxu0 %v3925
    %4708 = vmatprep.subr.mxu0 %v3942
    %4709 = vmatpush1.msra.mxu0 %v3941
    %4710 = vmatprep.subr.mxu0 %v3958
    %4711 = vmatpush1.msra.mxu0 %v3957
    %4712 = vmatprep.subr.mxu0 %v3974
    %4713 = vmatpush1.msra.mxu0 %v3973
    %4714 = vmatprep.subr.mxu0 %v3990
    %4715 = vmatpush1.msra.mxu0 %v3989
    %4716 = vmatprep.subr.mxu0 %v4006
    %4717 = vmatpush1.msra.mxu0 %v4005
    %4718 = vmatprep.subr.mxu0 %v4022
    %4719 = vmatpush1.msra.mxu0 %v4021
    %4720 = vmatprep.subr.mxu0 %v4038
    %4721 = vmatpush1.msra.mxu0 %v4037
    %4722 = vmatprep.subr.mxu0 %v4054
    %4723 = vmatpush1.msra.mxu0 %v4053
    %4724 = vmatprep.subr.mxu0 %v4070
    %4725 = vmatpush1.msra.mxu0 %v4069
    %4726 = vmatprep.subr.mxu0 0.0
    %4727 = vmatpush1.msra.mxu0 0.0
    %4728 = vmatprep.subr.mxu0 0.0
    %4729 = vmatpush1.msra.mxu0 0.0
    %4730 = vmatprep.subr.mxu0 0.0
    %4731 = vmatpush1.msra.mxu0 0.0
    %4732 = vmatprep.mubr.f32.mxu0 %v4169
    %4733 = vmatmul.mubr.f32.gmra.mrb[0].mxu0 %v2081
    %v4734 = vpop.f32.mrb[0].mxu0
    %v4735 = vadd.f32 %v4664, %v4734
    %v4736 = vpop.f32.mrb[0].mxu0
    %v4737 = vadd.f32 %v4666, %v4736
    %4738 = vdwg.mxu0
    %4739 = vmatprep.subr.mxu0 %v2088
    %4740 = vmatpush1.msra.mxu0 %v2087
    %4741 = vmatprep.subr.mxu0 %v2104
    %4742 = vmatpush1.msra.mxu0 %v2103
    %4743 = vmatprep.subr.mxu0 %v2120
    %4744 = vmatpush1.msra.mxu0 %v2119
    %4745 = vmatprep.subr.mxu0 %v2136
    %4746 = vmatpush1.msra.mxu0 %v2135
    %4747 = vmatprep.subr.mxu0 %v2152
    %4748 = vmatpush1.msra.mxu0 %v2151
    %4749 = vmatprep.subr.mxu0 %v2168
    %4750 = vmatpush1.msra.mxu0 %v2167
    %4751 = vmatprep.subr.mxu0 %v2184
    %4752 = vmatpush1.msra.mxu0 %v2183
    %4753 = vmatprep.subr.mxu0 %v2200
    %4754 = vmatpush1.msra.mxu0 %v2199
    %4755 = vmatprep.subr.mxu0 %v2216
    %4756 = vmatpush1.msra.mxu0 %v2215
    %4757 = vmatprep.subr.mxu0 %v2232
    %4758 = vmatpush1.msra.mxu0 %v2231
    %4759 = vmatprep.subr.mxu0 %v2248
    %4760 = vmatpush1.msra.mxu0 %v2247
    %4761 = vmatprep.subr.mxu0 %v2264
    %4762 = vmatpush1.msra.mxu0 %v2263
    %4763 = vmatprep.subr.mxu0 %v2280
    %4764 = vmatpush1.msra.mxu0 %v2279
    %4765 = vmatprep.subr.mxu0 %v2296
    %4766 = vmatpush1.msra.mxu0 %v2295
    %4767 = vmatprep.subr.mxu0 %v2312
    %4768 = vmatpush1.msra.mxu0 %v2311
    %4769 = vmatprep.subr.mxu0 %v2328
    %4770 = vmatpush1.msra.mxu0 %v2327
    %4771 = vmatprep.subr.mxu0 %v2344
    %4772 = vmatpush1.msra.mxu0 %v2343
    %4773 = vmatprep.subr.mxu0 %v2360
    %4774 = vmatpush1.msra.mxu0 %v2359
    %4775 = vmatprep.subr.mxu0 %v2376
    %4776 = vmatpush1.msra.mxu0 %v2375
    %4777 = vmatprep.subr.mxu0 %v2392
    %4778 = vmatpush1.msra.mxu0 %v2391
    %4779 = vmatprep.subr.mxu0 %v2408
    %4780 = vmatpush1.msra.mxu0 %v2407
    %4781 = vmatprep.subr.mxu0 %v2424
    %4782 = vmatpush1.msra.mxu0 %v2423
    %4783 = vmatprep.subr.mxu0 %v2440
    %4784 = vmatpush1.msra.mxu0 %v2439
    %4785 = vmatprep.subr.mxu0 %v2456
    %4786 = vmatpush1.msra.mxu0 %v2455
    %4787 = vmatprep.subr.mxu0 %v2472
    %4788 = vmatpush1.msra.mxu0 %v2471
    %4789 = vmatprep.subr.mxu0 %v2488
    %4790 = vmatpush1.msra.mxu0 %v2487
    %4791 = vmatprep.subr.mxu0 %v2504
    %4792 = vmatpush1.msra.mxu0 %v2503
    %4793 = vmatprep.subr.mxu0 %v2520
    %4794 = vmatpush1.msra.mxu0 %v2519
    %4795 = vmatprep.subr.mxu0 %v2536
    %4796 = vmatpush1.msra.mxu0 %v2535
    %4797 = vmatprep.subr.mxu0 %v2552
    %4798 = vmatpush1.msra.mxu0 %v2551
    %4799 = vmatprep.subr.mxu0 %v2568
    %4800 = vmatpush1.msra.mxu0 %v2567
    %4801 = vmatprep.subr.mxu0 %v2584
    %4802 = vmatpush1.msra.mxu0 %v2583
    %4803 = vmatprep.mubr.f32.mxu0 %v2076
    %4804 = vmatmul.mubr.f32.gmra.mrb[0].mxu0 %v2075
    %v4805 = vpop.f32.mrb[0].mxu0
    %v4806 = vadd.f32 %v4106, %v4805
    %v4807 = vpop.f32.mrb[0].mxu0
    %v4808 = vadd.f32 %v4110, %v4807
    %4809 = vdwg.mxu0
    %4810 = vmatprep.subr.mxu0 %v2600
    %4811 = vmatpush1.msra.mxu0 %v2599
    %4812 = vmatprep.subr.mxu0 %v2616
    %4813 = vmatpush1.msra.mxu0 %v2615
    %4814 = vmatprep.subr.mxu0 %v2632
    %4815 = vmatpush1.msra.mxu0 %v2631
    %4816 = vmatprep.subr.mxu0 %v2648
    %4817 = vmatpush1.msra.mxu0 %v2647
    %4818 = vmatprep.subr.mxu0 %v2664
    %4819 = vmatpush1.msra.mxu0 %v2663
    %4820 = vmatprep.subr.mxu0 %v2680
    %4821 = vmatpush1.msra.mxu0 %v2679
    %4822 = vmatprep.subr.mxu0 %v2696
    %4823 = vmatpush1.msra.mxu0 %v2695
    %4824 = vmatprep.subr.mxu0 %v2712
    %4825 = vmatpush1.msra.mxu0 %v2711
    %4826 = vmatprep.subr.mxu0 %v2728
    %4827 = vmatpush1.msra.mxu0 %v2727
    %4828 = vmatprep.subr.mxu0 %v2744
    %4829 = vmatpush1.msra.mxu0 %v2743
    %4830 = vmatprep.subr.mxu0 %v2760
    %4831 = vmatpush1.msra.mxu0 %v2759
    %4832 = vmatprep.subr.mxu0 %v2776
    %4833 = vmatpush1.msra.mxu0 %v2775
    %4834 = vmatprep.subr.mxu0 %v2792
    %4835 = vmatpush1.msra.mxu0 %v2791
    %4836 = vmatprep.subr.mxu0 %v2808
    %4837 = vmatpush1.msra.mxu0 %v2807
    %4838 = vmatprep.subr.mxu0 %v2824
    %4839 = vmatpush1.msra.mxu0 %v2823
    %4840 = vmatprep.subr.mxu0 %v2840
    %4841 = vmatpush1.msra.mxu0 %v2839
    %4842 = vmatprep.subr.mxu0 %v2856
    %4843 = vmatpush1.msra.mxu0 %v2855
    %4844 = vmatprep.subr.mxu0 %v2872
    %4845 = vmatpush1.msra.mxu0 %v2871
    %4846 = vmatprep.subr.mxu0 %v2888
    %4847 = vmatpush1.msra.mxu0 %v2887
    %4848 = vmatprep.subr.mxu0 %v2904
    %4849 = vmatpush1.msra.mxu0 %v2903
    %4850 = vmatprep.subr.mxu0 %v2920
    %4851 = vmatpush1.msra.mxu0 %v2919
    %4852 = vmatprep.subr.mxu0 %v2936
    %4853 = vmatpush1.msra.mxu0 %v2935
    %4854 = vmatprep.subr.mxu0 %v2952
    %4855 = vmatpush1.msra.mxu0 %v2951
    %4856 = vmatprep.subr.mxu0 %v2968
    %4857 = vmatpush1.msra.mxu0 %v2967
    %4858 = vmatprep.subr.mxu0 %v2984
    %4859 = vmatpush1.msra.mxu0 %v2983
    %4860 = vmatprep.subr.mxu0 %v3000
    %4861 = vmatpush1.msra.mxu0 %v2999
    %4862 = vmatprep.subr.mxu0 %v3016
    %4863 = vmatpush1.msra.mxu0 %v3015
    %4864 = vmatprep.subr.mxu0 %v3032
    %4865 = vmatpush1.msra.mxu0 %v3031
    %4866 = vmatprep.subr.mxu0 %v3048
    %4867 = vmatpush1.msra.mxu0 %v3047
    %4868 = vmatprep.subr.mxu0 %v3064
    %4869 = vmatpush1.msra.mxu0 %v3063
    %4870 = vmatprep.subr.mxu0 %v3080
    %4871 = vmatpush1.msra.mxu0 %v3079
    %4872 = vmatprep.subr.mxu0 %v3096
    %4873 = vmatpush1.msra.mxu0 %v3095
    %4874 = vmatprep.mubr.f32.mxu0 %v2078
    %4875 = vmatmul.mubr.f32.gmra.mrb[0].mxu0 %v2077
    %v4876 = vpop.f32.mrb[0].mxu0
    %v4877 = vadd.f32 %v4806, %v4876
    %v4878 = vpop.f32.mrb[0].mxu0
    %v4879 = vadd.f32 %v4808, %v4878
    %4880 = vdwg.mxu0
    %4881 = vmatprep.subr.mxu0 %v3112
    %4882 = vmatpush1.msra.mxu0 %v3111
    %4883 = vmatprep.subr.mxu0 %v3128
    %4884 = vmatpush1.msra.mxu0 %v3127
    %4885 = vmatprep.subr.mxu0 %v3144
    %4886 = vmatpush1.msra.mxu0 %v3143
    %4887 = vmatprep.subr.mxu0 %v3160
    %4888 = vmatpush1.msra.mxu0 %v3159
    %4889 = vmatprep.subr.mxu0 %v3176
    %4890 = vmatpush1.msra.mxu0 %v3175
    %4891 = vmatprep.subr.mxu0 %v3192
    %4892 = vmatpush1.msra.mxu0 %v3191
    %4893 = vmatprep.subr.mxu0 %v3208
    %4894 = vmatpush1.msra.mxu0 %v3207
    %4895 = vmatprep.subr.mxu0 %v3224
    %4896 = vmatpush1.msra.mxu0 %v3223
    %4897 = vmatprep.subr.mxu0 %v3240
    %4898 = vmatpush1.msra.mxu0 %v3239
    %4899 = vmatprep.subr.mxu0 %v3256
    %4900 = vmatpush1.msra.mxu0 %v3255
    %4901 = vmatprep.subr.mxu0 %v3272
    %4902 = vmatpush1.msra.mxu0 %v3271
    %4903 = vmatprep.subr.mxu0 %v3288
    %4904 = vmatpush1.msra.mxu0 %v3287
    %4905 = vmatprep.subr.mxu0 %v3304
    %4906 = vmatpush1.msra.mxu0 %v3303
    %4907 = vmatprep.subr.mxu0 %v3320
    %4908 = vmatpush1.msra.mxu0 %v3319
    %4909 = vmatprep.subr.mxu0 %v3336
    %4910 = vmatpush1.msra.mxu0 %v3335
    %4911 = vmatprep.subr.mxu0 %v3352
    %4912 = vmatpush1.msra.mxu0 %v3351
    %4913 = vmatprep.subr.mxu0 %v3368
    %4914 = vmatpush1.msra.mxu0 %v3367
    %4915 = vmatprep.subr.mxu0 %v3384
    %4916 = vmatpush1.msra.mxu0 %v3383
    %4917 = vmatprep.subr.mxu0 %v3400
    %4918 = vmatpush1.msra.mxu0 %v3399
    %4919 = vmatprep.subr.mxu0 %v3416
    %4920 = vmatpush1.msra.mxu0 %v3415
    %4921 = vmatprep.subr.mxu0 %v3432
    %4922 = vmatpush1.msra.mxu0 %v3431
    %4923 = vmatprep.subr.mxu0 %v3448
    %4924 = vmatpush1.msra.mxu0 %v3447
    %4925 = vmatprep.subr.mxu0 %v3464
    %4926 = vmatpush1.msra.mxu0 %v3463
    %4927 = vmatprep.subr.mxu0 %v3480
    %4928 = vmatpush1.msra.mxu0 %v3479
    %4929 = vmatprep.subr.mxu0 %v3496
    %4930 = vmatpush1.msra.mxu0 %v3495
    %4931 = vmatprep.subr.mxu0 %v3512
    %4932 = vmatpush1.msra.mxu0 %v3511
    %4933 = vmatprep.subr.mxu0 %v3528
    %4934 = vmatpush1.msra.mxu0 %v3527
    %4935 = vmatprep.subr.mxu0 %v3544
    %4936 = vmatpush1.msra.mxu0 %v3543
    %4937 = vmatprep.subr.mxu0 %v3560
    %4938 = vmatpush1.msra.mxu0 %v3559
    %4939 = vmatprep.subr.mxu0 %v3576
    %4940 = vmatpush1.msra.mxu0 %v3575
    %4941 = vmatprep.subr.mxu0 %v3592
    %4942 = vmatpush1.msra.mxu0 %v3591
    %4943 = vmatprep.subr.mxu0 %v3608
    %4944 = vmatpush1.msra.mxu0 %v3607
    %4945 = vmatprep.mubr.f32.mxu0 %v2080
    %4946 = vmatmul.mubr.f32.gmra.mrb[0].mxu0 %v2079
    %v4947 = vpop.f32.mrb[0].mxu0
    %v4948 = vadd.f32 %v4877, %v4947
    %v4949 = vpop.f32.mrb[0].mxu0
    %v4950 = vadd.f32 %v4879, %v4949
    %4951 = vdwg.mxu0
    %4952 = vmatprep.subr.mxu0 %v3624
    %4953 = vmatpush1.msra.mxu0 %v3623
    %4954 = vmatprep.subr.mxu0 %v3640
    %4955 = vmatpush1.msra.mxu0 %v3639
    %4956 = vmatprep.subr.mxu0 %v3656
    %4957 = vmatpush1.msra.mxu0 %v3655
    %4958 = vmatprep.subr.mxu0 %v3672
    %4959 = vmatpush1.msra.mxu0 %v3671
    %4960 = vmatprep.subr.mxu0 %v3688
    %4961 = vmatpush1.msra.mxu0 %v3687
    %4962 = vmatprep.subr.mxu0 %v3704
    %4963 = vmatpush1.msra.mxu0 %v3703
    %4964 = vmatprep.subr.mxu0 %v3720
    %4965 = vmatpush1.msra.mxu0 %v3719
    %4966 = vmatprep.subr.mxu0 %v3736
    %4967 = vmatpush1.msra.mxu0 %v3735
    %4968 = vmatprep.subr.mxu0 %v3752
    %4969 = vmatpush1.msra.mxu0 %v3751
    %4970 = vmatprep.subr.mxu0 %v3768
    %4971 = vmatpush1.msra.mxu0 %v3767
    %4972 = vmatprep.subr.mxu0 %v3784
    %4973 = vmatpush1.msra.mxu0 %v3783
    %4974 = vmatprep.subr.mxu0 %v3800
    %4975 = vmatpush1.msra.mxu0 %v3799
    %4976 = vmatprep.subr.mxu0 %v3816
    %4977 = vmatpush1.msra.mxu0 %v3815
    %4978 = vmatprep.subr.mxu0 %v3832
    %4979 = vmatpush1.msra.mxu0 %v3831
    %4980 = vmatprep.subr.mxu0 %v3848
    %4981 = vmatpush1.msra.mxu0 %v3847
    %4982 = vmatprep.subr.mxu0 %v3864
    %4983 = vmatpush1.msra.mxu0 %v3863
    %4984 = vmatprep.subr.mxu0 %v3880
    %4985 = vmatpush1.msra.mxu0 %v3879
    %4986 = vmatprep.subr.mxu0 %v3896
    %4987 = vmatpush1.msra.mxu0 %v3895
    %4988 = vmatprep.subr.mxu0 %v3912
    %4989 = vmatpush1.msra.mxu0 %v3911
    %4990 = vmatprep.subr.mxu0 %v3928
    %4991 = vmatpush1.msra.mxu0 %v3927
    %4992 = vmatprep.subr.mxu0 %v3944
    %4993 = vmatpush1.msra.mxu0 %v3943
    %4994 = vmatprep.subr.mxu0 %v3960
    %4995 = vmatpush1.msra.mxu0 %v3959
    %4996 = vmatprep.subr.mxu0 %v3976
    %4997 = vmatpush1.msra.mxu0 %v3975
    %4998 = vmatprep.subr.mxu0 %v3992
    %4999 = vmatpush1.msra.mxu0 %v3991
    %5000 = vmatprep.subr.mxu0 %v4008
    %5001 = vmatpush1.msra.mxu0 %v4007
    %5002 = vmatprep.subr.mxu0 %v4024
    %5003 = vmatpush1.msra.mxu0 %v4023
    %5004 = vmatprep.subr.mxu0 %v4040
    %5005 = vmatpush1.msra.mxu0 %v4039
    %5006 = vmatprep.subr.mxu0 %v4056
    %5007 = vmatpush1.msra.mxu0 %v4055
    %5008 = vmatprep.subr.mxu0 %v4072
    %5009 = vmatpush1.msra.mxu0 %v4071
    %5010 = vmatprep.subr.mxu0 0.0
    %5011 = vmatpush1.msra.mxu0 0.0
    %5012 = vmatprep.subr.mxu0 0.0
    %5013 = vmatpush1.msra.mxu0 0.0
    %5014 = vmatprep.subr.mxu0 0.0
    %5015 = vmatpush1.msra.mxu0 0.0
    %5016 = vmatprep.mubr.f32.mxu0 %v4169
    %5017 = vmatmul.mubr.f32.gmra.mrb[0].mxu0 %v2081
    %v5018 = vpop.f32.mrb[0].mxu0
    %v5019 = vadd.f32 %v4948, %v5018
    %v5020 = vpop.f32.mrb[0].mxu0
    %v5021 = vadd.f32 %v4950, %v5020
    %5022 = vdwg.mxu0
    %5023 = vmatprep.subr.mxu0 %v2090
    %5024 = vmatpush1.msra.mxu0 %v2089
    %5025 = vmatprep.subr.mxu0 %v2106
    %5026 = vmatpush1.msra.mxu0 %v2105
    %5027 = vmatprep.subr.mxu0 %v2122
    %5028 = vmatpush1.msra.mxu0 %v2121
    %5029 = vmatprep.subr.mxu0 %v2138
    %5030 = vmatpush1.msra.mxu0 %v2137
    %5031 = vmatprep.subr.mxu0 %v2154
    %5032 = vmatpush1.msra.mxu0 %v2153
    %5033 = vmatprep.subr.mxu0 %v2170
    %5034 = vmatpush1.msra.mxu0 %v2169
    %5035 = vmatprep.subr.mxu0 %v2186
    %5036 = vmatpush1.msra.mxu0 %v2185
    %5037 = vmatprep.subr.mxu0 %v2202
    %5038 = vmatpush1.msra.mxu0 %v2201
    %5039 = vmatprep.subr.mxu0 %v2218
    %5040 = vmatpush1.msra.mxu0 %v2217
    %5041 = vmatprep.subr.mxu0 %v2234
    %5042 = vmatpush1.msra.mxu0 %v2233
    %5043 = vmatprep.subr.mxu0 %v2250
    %5044 = vmatpush1.msra.mxu0 %v2249
    %5045 = vmatprep.subr.mxu0 %v2266
    %5046 = vmatpush1.msra.mxu0 %v2265
    %5047 = vmatprep.subr.mxu0 %v2282
    %5048 = vmatpush1.msra.mxu0 %v2281
    %5049 = vmatprep.subr.mxu0 %v2298
    %5050 = vmatpush1.msra.mxu0 %v2297
    %5051 = vmatprep.subr.mxu0 %v2314
    %5052 = vmatpush1.msra.mxu0 %v2313
    %5053 = vmatprep.subr.mxu0 %v2330
    %5054 = vmatpush1.msra.mxu0 %v2329
    %5055 = vmatprep.subr.mxu0 %v2346
    %5056 = vmatpush1.msra.mxu0 %v2345
    %5057 = vmatprep.subr.mxu0 %v2362
    %5058 = vmatpush1.msra.mxu0 %v2361
    %5059 = vmatprep.subr.mxu0 %v2378
    %5060 = vmatpush1.msra.mxu0 %v2377
    %5061 = vmatprep.subr.mxu0 %v2394
    %5062 = vmatpush1.msra.mxu0 %v2393
    %5063 = vmatprep.subr.mxu0 %v2410
    %5064 = vmatpush1.msra.mxu0 %v2409
    %5065 = vmatprep.subr.mxu0 %v2426
    %5066 = vmatpush1.msra.mxu0 %v2425
    %5067 = vmatprep.subr.mxu0 %v2442
    %5068 = vmatpush1.msra.mxu0 %v2441
    %5069 = vmatprep.subr.mxu0 %v2458
    %5070 = vmatpush1.msra.mxu0 %v2457
    %5071 = vmatprep.subr.mxu0 %v2474
    %5072 = vmatpush1.msra.mxu0 %v2473
    %5073 = vmatprep.subr.mxu0 %v2490
    %5074 = vmatpush1.msra.mxu0 %v2489
    %5075 = vmatprep.subr.mxu0 %v2506
    %5076 = vmatpush1.msra.mxu0 %v2505
    %5077 = vmatprep.subr.mxu0 %v2522
    %5078 = vmatpush1.msra.mxu0 %v2521
    %5079 = vmatprep.subr.mxu0 %v2538
    %5080 = vmatpush1.msra.mxu0 %v2537
    %5081 = vmatprep.subr.mxu0 %v2554
    %5082 = vmatpush1.msra.mxu0 %v2553
    %5083 = vmatprep.subr.mxu0 %v2570
    %5084 = vmatpush1.msra.mxu0 %v2569
    %5085 = vmatprep.subr.mxu0 %v2586
    %5086 = vmatpush1.msra.mxu0 %v2585
    %5087 = vmatprep.mubr.f32.mxu0 %v2076
    %5088 = vmatmul.mubr.f32.gmra.mrb[0].mxu0 %v2075
    %v5089 = vpop.f32.mrb[0].mxu0
    %v5090 = vadd.f32 %v4114, %v5089
    %v5091 = vpop.f32.mrb[0].mxu0
    %v5092 = vadd.f32 %v4118, %v5091
    %5093 = vdwg.mxu0
    %5094 = vmatprep.subr.mxu0 %v2602
    %5095 = vmatpush1.msra.mxu0 %v2601
    %5096 = vmatprep.subr.mxu0 %v2618
    %5097 = vmatpush1.msra.mxu0 %v2617
    %5098 = vmatprep.subr.mxu0 %v2634
    %5099 = vmatpush1.msra.mxu0 %v2633
    %5100 = vmatprep.subr.mxu0 %v2650
    %5101 = vmatpush1.msra.mxu0 %v2649
    %5102 = vmatprep.subr.mxu0 %v2666
    %5103 = vmatpush1.msra.mxu0 %v2665
    %5104 = vmatprep.subr.mxu0 %v2682
    %5105 = vmatpush1.msra.mxu0 %v2681
    %5106 = vmatprep.subr.mxu0 %v2698
    %5107 = vmatpush1.msra.mxu0 %v2697
    %5108 = vmatprep.subr.mxu0 %v2714
    %5109 = vmatpush1.msra.mxu0 %v2713
    %5110 = vmatprep.subr.mxu0 %v2730
    %5111 = vmatpush1.msra.mxu0 %v2729
    %5112 = vmatprep.subr.mxu0 %v2746
    %5113 = vmatpush1.msra.mxu0 %v2745
    %5114 = vmatprep.subr.mxu0 %v2762
    %5115 = vmatpush1.msra.mxu0 %v2761
    %5116 = vmatprep.subr.mxu0 %v2778
    %5117 = vmatpush1.msra.mxu0 %v2777
    %5118 = vmatprep.subr.mxu0 %v2794
    %5119 = vmatpush1.msra.mxu0 %v2793
    %5120 = vmatprep.subr.mxu0 %v2810
    %5121 = vmatpush1.msra.mxu0 %v2809
    %5122 = vmatprep.subr.mxu0 %v2826
    %5123 = vmatpush1.msra.mxu0 %v2825
    %5124 = vmatprep.subr.mxu0 %v2842
    %5125 = vmatpush1.msra.mxu0 %v2841
    %5126 = vmatprep.subr.mxu0 %v2858
    %5127 = vmatpush1.msra.mxu0 %v2857
    %5128 = vmatprep.subr.mxu0 %v2874
    %5129 = vmatpush1.msra.mxu0 %v2873
    %5130 = vmatprep.subr.mxu0 %v2890
    %5131 = vmatpush1.msra.mxu0 %v2889
    %5132 = vmatprep.subr.mxu0 %v2906
    %5133 = vmatpush1.msra.mxu0 %v2905
    %5134 = vmatprep.subr.mxu0 %v2922
    %5135 = vmatpush1.msra.mxu0 %v2921
    %5136 = vmatprep.subr.mxu0 %v2938
    %5137 = vmatpush1.msra.mxu0 %v2937
    %5138 = vmatprep.subr.mxu0 %v2954
    %5139 = vmatpush1.msra.mxu0 %v2953
    %5140 = vmatprep.subr.mxu0 %v2970
    %5141 = vmatpush1.msra.mxu0 %v2969
    %5142 = vmatprep.subr.mxu0 %v2986
    %5143 = vmatpush1.msra.mxu0 %v2985
    %5144 = vmatprep.subr.mxu0 %v3002
    %5145 = vmatpush1.msra.mxu0 %v3001
    %5146 = vmatprep.subr.mxu0 %v3018
    %5147 = vmatpush1.msra.mxu0 %v3017
    %5148 = vmatprep.subr.mxu0 %v3034
    %5149 = vmatpush1.msra.mxu0 %v3033
    %5150 = vmatprep.subr.mxu0 %v3050
    %5151 = vmatpush1.msra.mxu0 %v3049
    %5152 = vmatprep.subr.mxu0 %v3066
    %5153 = vmatpush1.msra.mxu0 %v3065
    %5154 = vmatprep.subr.mxu0 %v3082
    %5155 = vmatpush1.msra.mxu0 %v3081
    %5156 = vmatprep.subr.mxu0 %v3098
    %5157 = vmatpush1.msra.mxu0 %v3097
    %5158 = vmatprep.mubr.f32.mxu0 %v2078
    %5159 = vmatmul.mubr.f32.gmra.mrb[0].mxu0 %v2077
    %v5160 = vpop.f32.mrb[0].mxu0
    %v5161 = vadd.f32 %v5090, %v5160
    %v5162 = vpop.f32.mrb[0].mxu0
    %v5163 = vadd.f32 %v5092, %v5162
    %5164 = vdwg.mxu0
    %5165 = vmatprep.subr.mxu0 %v3114
    %5166 = vmatpush1.msra.mxu0 %v3113
    %5167 = vmatprep.subr.mxu0 %v3130
    %5168 = vmatpush1.msra.mxu0 %v3129
    %5169 = vmatprep.subr.mxu0 %v3146
    %5170 = vmatpush1.msra.mxu0 %v3145
    %5171 = vmatprep.subr.mxu0 %v3162
    %5172 = vmatpush1.msra.mxu0 %v3161
    %5173 = vmatprep.subr.mxu0 %v3178
    %5174 = vmatpush1.msra.mxu0 %v3177
    %5175 = vmatprep.subr.mxu0 %v3194
    %5176 = vmatpush1.msra.mxu0 %v3193
    %5177 = vmatprep.subr.mxu0 %v3210
    %5178 = vmatpush1.msra.mxu0 %v3209
    %5179 = vmatprep.subr.mxu0 %v3226
    %5180 = vmatpush1.msra.mxu0 %v3225
    %5181 = vmatprep.subr.mxu0 %v3242
    %5182 = vmatpush1.msra.mxu0 %v3241
    %5183 = vmatprep.subr.mxu0 %v3258
    %5184 = vmatpush1.msra.mxu0 %v3257
    %5185 = vmatprep.subr.mxu0 %v3274
    %5186 = vmatpush1.msra.mxu0 %v3273
    %5187 = vmatprep.subr.mxu0 %v3290
    %5188 = vmatpush1.msra.mxu0 %v3289
    %5189 = vmatprep.subr.mxu0 %v3306
    %5190 = vmatpush1.msra.mxu0 %v3305
    %5191 = vmatprep.subr.mxu0 %v3322
    %5192 = vmatpush1.msra.mxu0 %v3321
    %5193 = vmatprep.subr.mxu0 %v3338
    %5194 = vmatpush1.msra.mxu0 %v3337
    %5195 = vmatprep.subr.mxu0 %v3354
    %5196 = vmatpush1.msra.mxu0 %v3353
    %5197 = vmatprep.subr.mxu0 %v3370
    %5198 = vmatpush1.msra.mxu0 %v3369
    %5199 = vmatprep.subr.mxu0 %v3386
    %5200 = vmatpush1.msra.mxu0 %v3385
    %5201 = vmatprep.subr.mxu0 %v3402
    %5202 = vmatpush1.msra.mxu0 %v3401
    %5203 = vmatprep.subr.mxu0 %v3418
    %5204 = vmatpush1.msra.mxu0 %v3417
    %5205 = vmatprep.subr.mxu0 %v3434
    %5206 = vmatpush1.msra.mxu0 %v3433
    %5207 = vmatprep.subr.mxu0 %v3450
    %5208 = vmatpush1.msra.mxu0 %v3449
    %5209 = vmatprep.subr.mxu0 %v3466
    %5210 = vmatpush1.msra.mxu0 %v3465
    %5211 = vmatprep.subr.mxu0 %v3482
    %5212 = vmatpush1.msra.mxu0 %v3481
    %5213 = vmatprep.subr.mxu0 %v3498
    %5214 = vmatpush1.msra.mxu0 %v3497
    %5215 = vmatprep.subr.mxu0 %v3514
    %5216 = vmatpush1.msra.mxu0 %v3513
    %5217 = vmatprep.subr.mxu0 %v3530
    %5218 = vmatpush1.msra.mxu0 %v3529
    %5219 = vmatprep.subr.mxu0 %v3546
    %5220 = vmatpush1.msra.mxu0 %v3545
    %5221 = vmatprep.subr.mxu0 %v3562
    %5222 = vmatpush1.msra.mxu0 %v3561
    %5223 = vmatprep.subr.mxu0 %v3578
    %5224 = vmatpush1.msra.mxu0 %v3577
    %5225 = vmatprep.subr.mxu0 %v3594
    %5226 = vmatpush1.msra.mxu0 %v3593
    %5227 = vmatprep.subr.mxu0 %v3610
    %5228 = vmatpush1.msra.mxu0 %v3609
    %5229 = vmatprep.mubr.f32.mxu0 %v2080
    %5230 = vmatmul.mubr.f32.gmra.mrb[0].mxu0 %v2079
    %v5231 = vpop.f32.mrb[0].mxu0
    %v5232 = vadd.f32 %v5161, %v5231
    %v5233 = vpop.f32.mrb[0].mxu0
    %v5234 = vadd.f32 %v5163, %v5233
    %5235 = vdwg.mxu0
    %5236 = vmatprep.subr.mxu0 %v3626
    %5237 = vmatpush1.msra.mxu0 %v3625
    %5238 = vmatprep.subr.mxu0 %v3642
    %5239 = vmatpush1.msra.mxu0 %v3641
    %5240 = vmatprep.subr.mxu0 %v3658
    %5241 = vmatpush1.msra.mxu0 %v3657
    %5242 = vmatprep.subr.mxu0 %v3674
    %5243 = vmatpush1.msra.mxu0 %v3673
    %5244 = vmatprep.subr.mxu0 %v3690
    %5245 = vmatpush1.msra.mxu0 %v3689
    %5246 = vmatprep.subr.mxu0 %v3706
    %5247 = vmatpush1.msra.mxu0 %v3705
    %5248 = vmatprep.subr.mxu0 %v3722
    %5249 = vmatpush1.msra.mxu0 %v3721
    %5250 = vmatprep.subr.mxu0 %v3738
    %5251 = vmatpush1.msra.mxu0 %v3737
    %5252 = vmatprep.subr.mxu0 %v3754
    %5253 = vmatpush1.msra.mxu0 %v3753
    %5254 = vmatprep.subr.mxu0 %v3770
    %5255 = vmatpush1.msra.mxu0 %v3769
    %5256 = vmatprep.subr.mxu0 %v3786
    %5257 = vmatpush1.msra.mxu0 %v3785
    %5258 = vmatprep.subr.mxu0 %v3802
    %5259 = vmatpush1.msra.mxu0 %v3801
    %5260 = vmatprep.subr.mxu0 %v3818
    %5261 = vmatpush1.msra.mxu0 %v3817
    %5262 = vmatprep.subr.mxu0 %v3834
    %5263 = vmatpush1.msra.mxu0 %v3833
    %5264 = vmatprep.subr.mxu0 %v3850
    %5265 = vmatpush1.msra.mxu0 %v3849
    %5266 = vmatprep.subr.mxu0 %v3866
    %5267 = vmatpush1.msra.mxu0 %v3865
    %5268 = vmatprep.subr.mxu0 %v3882
    %5269 = vmatpush1.msra.mxu0 %v3881
    %5270 = vmatprep.subr.mxu0 %v3898
    %5271 = vmatpush1.msra.mxu0 %v3897
    %5272 = vmatprep.subr.mxu0 %v3914
    %5273 = vmatpush1.msra.mxu0 %v3913
    %5274 = vmatprep.subr.mxu0 %v3930
    %5275 = vmatpush1.msra.mxu0 %v3929
    %5276 = vmatprep.subr.mxu0 %v3946
    %5277 = vmatpush1.msra.mxu0 %v3945
    %5278 = vmatprep.subr.mxu0 %v3962
    %5279 = vmatpush1.msra.mxu0 %v3961
    %5280 = vmatprep.subr.mxu0 %v3978
    %5281 = vmatpush1.msra.mxu0 %v3977
    %5282 = vmatprep.subr.mxu0 %v3994
    %5283 = vmatpush1.msra.mxu0 %v3993
    %5284 = vmatprep.subr.mxu0 %v4010
    %5285 = vmatpush1.msra.mxu0 %v4009
    %5286 = vmatprep.subr.mxu0 %v4026
    %5287 = vmatpush1.msra.mxu0 %v4025
    %5288 = vmatprep.subr.mxu0 %v4042
    %5289 = vmatpush1.msra.mxu0 %v4041
    %5290 = vmatprep.subr.mxu0 %v4058
    %5291 = vmatpush1.msra.mxu0 %v4057
    %5292 = vmatprep.subr.mxu0 %v4074
    %5293 = vmatpush1.msra.mxu0 %v4073
    %5294 = vmatprep.subr.mxu0 0.0
    %5295 = vmatpush1.msra.mxu0 0.0
    %5296 = vmatprep.subr.mxu0 0.0
    %5297 = vmatpush1.msra.mxu0 0.0
    %5298 = vmatprep.subr.mxu0 0.0
    %5299 = vmatpush1.msra.mxu0 0.0
    %5300 = vmatprep.mubr.f32.mxu0 %v4169
    %5301 = vmatmul.mubr.f32.gmra.mrb[0].mxu0 %v2081
    %v5302 = vpop.f32.mrb[0].mxu0
    %v5303 = vadd.f32 %v5232, %v5302
    %v5304 = vpop.f32.mrb[0].mxu0
    %v5305 = vadd.f32 %v5234, %v5304
    %5306 = vdwg.mxu0
    %5307 = vmatprep.subr.mxu0 %v2092
    %5308 = vmatpush1.msra.mxu0 %v2091
    %5309 = vmatprep.subr.mxu0 %v2108
    %5310 = vmatpush1.msra.mxu0 %v2107
    %5311 = vmatprep.subr.mxu0 %v2124
    %5312 = vmatpush1.msra.mxu0 %v2123
    %5313 = vmatprep.subr.mxu0 %v2140
    %5314 = vmatpush1.msra.mxu0 %v2139
    %5315 = vmatprep.subr.mxu0 %v2156
    %5316 = vmatpush1.msra.mxu0 %v2155
    %5317 = vmatprep.subr.mxu0 %v2172
    %5318 = vmatpush1.msra.mxu0 %v2171
    %5319 = vmatprep.subr.mxu0 %v2188
    %5320 = vmatpush1.msra.mxu0 %v2187
    %5321 = vmatprep.subr.mxu0 %v2204
    %5322 = vmatpush1.msra.mxu0 %v2203
    %5323 = vmatprep.subr.mxu0 %v2220
    %5324 = vmatpush1.msra.mxu0 %v2219
    %5325 = vmatprep.subr.mxu0 %v2236
    %5326 = vmatpush1.msra.mxu0 %v2235
    %5327 = vmatprep.subr.mxu0 %v2252
    %5328 = vmatpush1.msra.mxu0 %v2251
    %5329 = vmatprep.subr.mxu0 %v2268
    %5330 = vmatpush1.msra.mxu0 %v2267
    %5331 = vmatprep.subr.mxu0 %v2284
    %5332 = vmatpush1.msra.mxu0 %v2283
    %5333 = vmatprep.subr.mxu0 %v2300
    %5334 = vmatpush1.msra.mxu0 %v2299
    %5335 = vmatprep.subr.mxu0 %v2316
    %5336 = vmatpush1.msra.mxu0 %v2315
    %5337 = vmatprep.subr.mxu0 %v2332
    %5338 = vmatpush1.msra.mxu0 %v2331
    %5339 = vmatprep.subr.mxu0 %v2348
    %5340 = vmatpush1.msra.mxu0 %v2347
    %5341 = vmatprep.subr.mxu0 %v2364
    %5342 = vmatpush1.msra.mxu0 %v2363
    %5343 = vmatprep.subr.mxu0 %v2380
    %5344 = vmatpush1.msra.mxu0 %v2379
    %5345 = vmatprep.subr.mxu0 %v2396
    %5346 = vmatpush1.msra.mxu0 %v2395
    %5347 = vmatprep.subr.mxu0 %v2412
    %5348 = vmatpush1.msra.mxu0 %v2411
    %5349 = vmatprep.subr.mxu0 %v2428
    %5350 = vmatpush1.msra.mxu0 %v2427
    %5351 = vmatprep.subr.mxu0 %v2444
    %5352 = vmatpush1.msra.mxu0 %v2443
    %5353 = vmatprep.subr.mxu0 %v2460
    %5354 = vmatpush1.msra.mxu0 %v2459
    %5355 = vmatprep.subr.mxu0 %v2476
    %5356 = vmatpush1.msra.mxu0 %v2475
    %5357 = vmatprep.subr.mxu0 %v2492
    %5358 = vmatpush1.msra.mxu0 %v2491
    %5359 = vmatprep.subr.mxu0 %v2508
    %5360 = vmatpush1.msra.mxu0 %v2507
    %5361 = vmatprep.subr.mxu0 %v2524
    %5362 = vmatpush1.msra.mxu0 %v2523
    %5363 = vmatprep.subr.mxu0 %v2540
    %5364 = vmatpush1.msra.mxu0 %v2539
    %5365 = vmatprep.subr.mxu0 %v2556
    %5366 = vmatpush1.msra.mxu0 %v2555
    %5367 = vmatprep.subr.mxu0 %v2572
    %5368 = vmatpush1.msra.mxu0 %v2571
    %5369 = vmatprep.subr.mxu0 %v2588
    %5370 = vmatpush1.msra.mxu0 %v2587
    %5371 = vmatprep.mubr.f32.mxu0 %v2076
    %5372 = vmatmul.mubr.f32.gmra.mrb[0].mxu0 %v2075
    %v5373 = vpop.f32.mrb[0].mxu0
    %v5374 = vadd.f32 %v4122, %v5373
    %v5375 = vpop.f32.mrb[0].mxu0
    %v5376 = vadd.f32 %v4126, %v5375
    %5377 = vdwg.mxu0
    %5378 = vmatprep.subr.mxu0 %v2604
    %5379 = vmatpush1.msra.mxu0 %v2603
    %5380 = vmatprep.subr.mxu0 %v2620
    %5381 = vmatpush1.msra.mxu0 %v2619
    %5382 = vmatprep.subr.mxu0 %v2636
    %5383 = vmatpush1.msra.mxu0 %v2635
    %5384 = vmatprep.subr.mxu0 %v2652
    %5385 = vmatpush1.msra.mxu0 %v2651
    %5386 = vmatprep.subr.mxu0 %v2668
    %5387 = vmatpush1.msra.mxu0 %v2667
    %5388 = vmatprep.subr.mxu0 %v2684
    %5389 = vmatpush1.msra.mxu0 %v2683
    %5390 = vmatprep.subr.mxu0 %v2700
    %5391 = vmatpush1.msra.mxu0 %v2699
    %5392 = vmatprep.subr.mxu0 %v2716
    %5393 = vmatpush1.msra.mxu0 %v2715
    %5394 = vmatprep.subr.mxu0 %v2732
    %5395 = vmatpush1.msra.mxu0 %v2731
    %5396 = vmatprep.subr.mxu0 %v2748
    %5397 = vmatpush1.msra.mxu0 %v2747
    %5398 = vmatprep.subr.mxu0 %v2764
    %5399 = vmatpush1.msra.mxu0 %v2763
    %5400 = vmatprep.subr.mxu0 %v2780
    %5401 = vmatpush1.msra.mxu0 %v2779
    %5402 = vmatprep.subr.mxu0 %v2796
    %5403 = vmatpush1.msra.mxu0 %v2795
    %5404 = vmatprep.subr.mxu0 %v2812
    %5405 = vmatpush1.msra.mxu0 %v2811
    %5406 = vmatprep.subr.mxu0 %v2828
    %5407 = vmatpush1.msra.mxu0 %v2827
    %5408 = vmatprep.subr.mxu0 %v2844
    %5409 = vmatpush1.msra.mxu0 %v2843
    %5410 = vmatprep.subr.mxu0 %v2860
    %5411 = vmatpush1.msra.mxu0 %v2859
    %5412 = vmatprep.subr.mxu0 %v2876
    %5413 = vmatpush1.msra.mxu0 %v2875
    %5414 = vmatprep.subr.mxu0 %v2892
    %5415 = vmatpush1.msra.mxu0 %v2891
    %5416 = vmatprep.subr.mxu0 %v2908
    %5417 = vmatpush1.msra.mxu0 %v2907
    %5418 = vmatprep.subr.mxu0 %v2924
    %5419 = vmatpush1.msra.mxu0 %v2923
    %5420 = vmatprep.subr.mxu0 %v2940
    %5421 = vmatpush1.msra.mxu0 %v2939
    %5422 = vmatprep.subr.mxu0 %v2956
    %5423 = vmatpush1.msra.mxu0 %v2955
    %5424 = vmatprep.subr.mxu0 %v2972
    %5425 = vmatpush1.msra.mxu0 %v2971
    %5426 = vmatprep.subr.mxu0 %v2988
    %5427 = vmatpush1.msra.mxu0 %v2987
    %5428 = vmatprep.subr.mxu0 %v3004
    %5429 = vmatpush1.msra.mxu0 %v3003
    %5430 = vmatprep.subr.mxu0 %v3020
    %5431 = vmatpush1.msra.mxu0 %v3019
    %5432 = vmatprep.subr.mxu0 %v3036
    %5433 = vmatpush1.msra.mxu0 %v3035
    %5434 = vmatprep.subr.mxu0 %v3052
    %5435 = vmatpush1.msra.mxu0 %v3051
    %5436 = vmatprep.subr.mxu0 %v3068
    %5437 = vmatpush1.msra.mxu0 %v3067
    %5438 = vmatprep.subr.mxu0 %v3084
    %5439 = vmatpush1.msra.mxu0 %v3083
    %5440 = vmatprep.subr.mxu0 %v3100
    %5441 = vmatpush1.msra.mxu0 %v3099
    %5442 = vmatprep.mubr.f32.mxu0 %v2078
    %5443 = vmatmul.mubr.f32.gmra.mrb[0].mxu0 %v2077
    %v5444 = vpop.f32.mrb[0].mxu0
    %v5445 = vadd.f32 %v5374, %v5444
    %v5446 = vpop.f32.mrb[0].mxu0
    %v5447 = vadd.f32 %v5376, %v5446
    %5448 = vdwg.mxu0
    %5449 = vmatprep.subr.mxu0 %v3116
    %5450 = vmatpush1.msra.mxu0 %v3115
    %5451 = vmatprep.subr.mxu0 %v3132
    %5452 = vmatpush1.msra.mxu0 %v3131
    %5453 = vmatprep.subr.mxu0 %v3148
    %5454 = vmatpush1.msra.mxu0 %v3147
    %5455 = vmatprep.subr.mxu0 %v3164
    %5456 = vmatpush1.msra.mxu0 %v3163
    %5457 = vmatprep.subr.mxu0 %v3180
    %5458 = vmatpush1.msra.mxu0 %v3179
    %5459 = vmatprep.subr.mxu0 %v3196
    %5460 = vmatpush1.msra.mxu0 %v3195
    %5461 = vmatprep.subr.mxu0 %v3212
    %5462 = vmatpush1.msra.mxu0 %v3211
    %5463 = vmatprep.subr.mxu0 %v3228
    %5464 = vmatpush1.msra.mxu0 %v3227
    %5465 = vmatprep.subr.mxu0 %v3244
    %5466 = vmatpush1.msra.mxu0 %v3243
    %5467 = vmatprep.subr.mxu0 %v3260
    %5468 = vmatpush1.msra.mxu0 %v3259
    %5469 = vmatprep.subr.mxu0 %v3276
    %5470 = vmatpush1.msra.mxu0 %v3275
    %5471 = vmatprep.subr.mxu0 %v3292
    %5472 = vmatpush1.msra.mxu0 %v3291
    %5473 = vmatprep.subr.mxu0 %v3308
    %5474 = vmatpush1.msra.mxu0 %v3307
    %5475 = vmatprep.subr.mxu0 %v3324
    %5476 = vmatpush1.msra.mxu0 %v3323
    %5477 = vmatprep.subr.mxu0 %v3340
    %5478 = vmatpush1.msra.mxu0 %v3339
    %5479 = vmatprep.subr.mxu0 %v3356
    %5480 = vmatpush1.msra.mxu0 %v3355
    %5481 = vmatprep.subr.mxu0 %v3372
    %5482 = vmatpush1.msra.mxu0 %v3371
    %5483 = vmatprep.subr.mxu0 %v3388
    %5484 = vmatpush1.msra.mxu0 %v3387
    %5485 = vmatprep.subr.mxu0 %v3404
    %5486 = vmatpush1.msra.mxu0 %v3403
    %5487 = vmatprep.subr.mxu0 %v3420
    %5488 = vmatpush1.msra.mxu0 %v3419
    %5489 = vmatprep.subr.mxu0 %v3436
    %5490 = vmatpush1.msra.mxu0 %v3435
    %5491 = vmatprep.subr.mxu0 %v3452
    %5492 = vmatpush1.msra.mxu0 %v3451
    %5493 = vmatprep.subr.mxu0 %v3468
    %5494 = vmatpush1.msra.mxu0 %v3467
    %5495 = vmatprep.subr.mxu0 %v3484
    %5496 = vmatpush1.msra.mxu0 %v3483
    %5497 = vmatprep.subr.mxu0 %v3500
    %5498 = vmatpush1.msra.mxu0 %v3499
    %5499 = vmatprep.subr.mxu0 %v3516
    %5500 = vmatpush1.msra.mxu0 %v3515
    %5501 = vmatprep.subr.mxu0 %v3532
    %5502 = vmatpush1.msra.mxu0 %v3531
    %5503 = vmatprep.subr.mxu0 %v3548
    %5504 = vmatpush1.msra.mxu0 %v3547
    %5505 = vmatprep.subr.mxu0 %v3564
    %5506 = vmatpush1.msra.mxu0 %v3563
    %5507 = vmatprep.subr.mxu0 %v3580
    %5508 = vmatpush1.msra.mxu0 %v3579
    %5509 = vmatprep.subr.mxu0 %v3596
    %5510 = vmatpush1.msra.mxu0 %v3595
    %5511 = vmatprep.subr.mxu0 %v3612
    %5512 = vmatpush1.msra.mxu0 %v3611
    %5513 = vmatprep.mubr.f32.mxu0 %v2080
    %5514 = vmatmul.mubr.f32.gmra.mrb[0].mxu0 %v2079
    %v5515 = vpop.f32.mrb[0].mxu0
    %v5516 = vadd.f32 %v5445, %v5515
    %v5517 = vpop.f32.mrb[0].mxu0
    %v5518 = vadd.f32 %v5447, %v5517
    %5519 = vdwg.mxu0
    %5520 = vmatprep.subr.mxu0 %v3628
    %5521 = vmatpush1.msra.mxu0 %v3627
    %5522 = vmatprep.subr.mxu0 %v3644
    %5523 = vmatpush1.msra.mxu0 %v3643
    %5524 = vmatprep.subr.mxu0 %v3660
    %5525 = vmatpush1.msra.mxu0 %v3659
    %5526 = vmatprep.subr.mxu0 %v3676
    %5527 = vmatpush1.msra.mxu0 %v3675
    %5528 = vmatprep.subr.mxu0 %v3692
    %5529 = vmatpush1.msra.mxu0 %v3691
    %5530 = vmatprep.subr.mxu0 %v3708
    %5531 = vmatpush1.msra.mxu0 %v3707
    %5532 = vmatprep.subr.mxu0 %v3724
    %5533 = vmatpush1.msra.mxu0 %v3723
    %5534 = vmatprep.subr.mxu0 %v3740
    %5535 = vmatpush1.msra.mxu0 %v3739
    %5536 = vmatprep.subr.mxu0 %v3756
    %5537 = vmatpush1.msra.mxu0 %v3755
    %5538 = vmatprep.subr.mxu0 %v3772
    %5539 = vmatpush1.msra.mxu0 %v3771
    %5540 = vmatprep.subr.mxu0 %v3788
    %5541 = vmatpush1.msra.mxu0 %v3787
    %5542 = vmatprep.subr.mxu0 %v3804
    %5543 = vmatpush1.msra.mxu0 %v3803
    %5544 = vmatprep.subr.mxu0 %v3820
    %5545 = vmatpush1.msra.mxu0 %v3819
    %5546 = vmatprep.subr.mxu0 %v3836
    %5547 = vmatpush1.msra.mxu0 %v3835
    %5548 = vmatprep.subr.mxu0 %v3852
    %5549 = vmatpush1.msra.mxu0 %v3851
    %5550 = vmatprep.subr.mxu0 %v3868
    %5551 = vmatpush1.msra.mxu0 %v3867
    %5552 = vmatprep.subr.mxu0 %v3884
    %5553 = vmatpush1.msra.mxu0 %v3883
    %5554 = vmatprep.subr.mxu0 %v3900
    %5555 = vmatpush1.msra.mxu0 %v3899
    %5556 = vmatprep.subr.mxu0 %v3916
    %5557 = vmatpush1.msra.mxu0 %v3915
    %5558 = vmatprep.subr.mxu0 %v3932
    %5559 = vmatpush1.msra.mxu0 %v3931
    %5560 = vmatprep.subr.mxu0 %v3948
    %5561 = vmatpush1.msra.mxu0 %v3947
    %5562 = vmatprep.subr.mxu0 %v3964
    %5563 = vmatpush1.msra.mxu0 %v3963
    %5564 = vmatprep.subr.mxu0 %v3980
    %5565 = vmatpush1.msra.mxu0 %v3979
    %5566 = vmatprep.subr.mxu0 %v3996
    %5567 = vmatpush1.msra.mxu0 %v3995
    %5568 = vmatprep.subr.mxu0 %v4012
    %5569 = vmatpush1.msra.mxu0 %v4011
    %5570 = vmatprep.subr.mxu0 %v4028
    %5571 = vmatpush1.msra.mxu0 %v4027
    %5572 = vmatprep.subr.mxu0 %v4044
    %5573 = vmatpush1.msra.mxu0 %v4043
    %5574 = vmatprep.subr.mxu0 %v4060
    %5575 = vmatpush1.msra.mxu0 %v4059
    %5576 = vmatprep.subr.mxu0 %v4076
    %5577 = vmatpush1.msra.mxu0 %v4075
    %5578 = vmatprep.subr.mxu0 0.0
    %5579 = vmatpush1.msra.mxu0 0.0
    %5580 = vmatprep.subr.mxu0 0.0
    %5581 = vmatpush1.msra.mxu0 0.0
    %5582 = vmatprep.subr.mxu0 0.0
    %5583 = vmatpush1.msra.mxu0 0.0
    %5584 = vmatprep.mubr.f32.mxu0 %v4169
    %5585 = vmatmul.mubr.f32.gmra.mrb[0].mxu0 %v2081
    %v5586 = vpop.f32.mrb[0].mxu0
    %v5587 = vadd.f32 %v5516, %v5586
    %v5588 = vpop.f32.mrb[0].mxu0
    %v5589 = vadd.f32 %v5518, %v5588
    %5590 = vdwg.mxu0
    %5591 = vmatprep.subr.mxu0 %v2094
    %5592 = vmatpush1.msra.mxu0 %v2093
    %5593 = vmatprep.subr.mxu0 %v2110
    %5594 = vmatpush1.msra.mxu0 %v2109
    %5595 = vmatprep.subr.mxu0 %v2126
    %5596 = vmatpush1.msra.mxu0 %v2125
    %5597 = vmatprep.subr.mxu0 %v2142
    %5598 = vmatpush1.msra.mxu0 %v2141
    %5599 = vmatprep.subr.mxu0 %v2158
    %5600 = vmatpush1.msra.mxu0 %v2157
    %5601 = vmatprep.subr.mxu0 %v2174
    %5602 = vmatpush1.msra.mxu0 %v2173
    %5603 = vmatprep.subr.mxu0 %v2190
    %5604 = vmatpush1.msra.mxu0 %v2189
    %5605 = vmatprep.subr.mxu0 %v2206
    %5606 = vmatpush1.msra.mxu0 %v2205
    %5607 = vmatprep.subr.mxu0 %v2222
    %5608 = vmatpush1.msra.mxu0 %v2221
    %5609 = vmatprep.subr.mxu0 %v2238
    %5610 = vmatpush1.msra.mxu0 %v2237
    %5611 = vmatprep.subr.mxu0 %v2254
    %5612 = vmatpush1.msra.mxu0 %v2253
    %5613 = vmatprep.subr.mxu0 %v2270
    %5614 = vmatpush1.msra.mxu0 %v2269
    %5615 = vmatprep.subr.mxu0 %v2286
    %5616 = vmatpush1.msra.mxu0 %v2285
    %5617 = vmatprep.subr.mxu0 %v2302
    %5618 = vmatpush1.msra.mxu0 %v2301
    %5619 = vmatprep.subr.mxu0 %v2318
    %5620 = vmatpush1.msra.mxu0 %v2317
    %5621 = vmatprep.subr.mxu0 %v2334
    %5622 = vmatpush1.msra.mxu0 %v2333
    %5623 = vmatprep.subr.mxu0 %v2350
    %5624 = vmatpush1.msra.mxu0 %v2349
    %5625 = vmatprep.subr.mxu0 %v2366
    %5626 = vmatpush1.msra.mxu0 %v2365
    %5627 = vmatprep.subr.mxu0 %v2382
    %5628 = vmatpush1.msra.mxu0 %v2381
    %5629 = vmatprep.subr.mxu0 %v2398
    %5630 = vmatpush1.msra.mxu0 %v2397
    %5631 = vmatprep.subr.mxu0 %v2414
    %5632 = vmatpush1.msra.mxu0 %v2413
    %5633 = vmatprep.subr.mxu0 %v2430
    %5634 = vmatpush1.msra.mxu0 %v2429
    %5635 = vmatprep.subr.mxu0 %v2446
    %5636 = vmatpush1.msra.mxu0 %v2445
    %5637 = vmatprep.subr.mxu0 %v2462
    %5638 = vmatpush1.msra.mxu0 %v2461
    %5639 = vmatprep.subr.mxu0 %v2478
    %5640 = vmatpush1.msra.mxu0 %v2477
    %5641 = vmatprep.subr.mxu0 %v2494
    %5642 = vmatpush1.msra.mxu0 %v2493
    %5643 = vmatprep.subr.mxu0 %v2510
    %5644 = vmatpush1.msra.mxu0 %v2509
    %5645 = vmatprep.subr.mxu0 %v2526
    %5646 = vmatpush1.msra.mxu0 %v2525
    %5647 = vmatprep.subr.mxu0 %v2542
    %5648 = vmatpush1.msra.mxu0 %v2541
    %5649 = vmatprep.subr.mxu0 %v2558
    %5650 = vmatpush1.msra.mxu0 %v2557
    %5651 = vmatprep.subr.mxu0 %v2574
    %5652 = vmatpush1.msra.mxu0 %v2573
    %5653 = vmatprep.subr.mxu0 %v2590
    %5654 = vmatpush1.msra.mxu0 %v2589
    %5655 = vmatprep.mubr.f32.mxu0 %v2076
    %5656 = vmatmul.mubr.f32.gmra.mrb[0].mxu0 %v2075
    %v5657 = vpop.f32.mrb[0].mxu0
    %v5658 = vadd.f32 %v4130, %v5657
    %v5659 = vpop.f32.mrb[0].mxu0
    %v5660 = vadd.f32 %v4134, %v5659
    %5661 = vdwg.mxu0
    %5662 = vmatprep.subr.mxu0 %v2606
    %5663 = vmatpush1.msra.mxu0 %v2605
    %5664 = vmatprep.subr.mxu0 %v2622
    %5665 = vmatpush1.msra.mxu0 %v2621
    %5666 = vmatprep.subr.mxu0 %v2638
    %5667 = vmatpush1.msra.mxu0 %v2637
    %5668 = vmatprep.subr.mxu0 %v2654
    %5669 = vmatpush1.msra.mxu0 %v2653
    %5670 = vmatprep.subr.mxu0 %v2670
    %5671 = vmatpush1.msra.mxu0 %v2669
    %5672 = vmatprep.subr.mxu0 %v2686
    %5673 = vmatpush1.msra.mxu0 %v2685
    %5674 = vmatprep.subr.mxu0 %v2702
    %5675 = vmatpush1.msra.mxu0 %v2701
    %5676 = vmatprep.subr.mxu0 %v2718
    %5677 = vmatpush1.msra.mxu0 %v2717
    %5678 = vmatprep.subr.mxu0 %v2734
    %5679 = vmatpush1.msra.mxu0 %v2733
    %5680 = vmatprep.subr.mxu0 %v2750
    %5681 = vmatpush1.msra.mxu0 %v2749
    %5682 = vmatprep.subr.mxu0 %v2766
    %5683 = vmatpush1.msra.mxu0 %v2765
    %5684 = vmatprep.subr.mxu0 %v2782
    %5685 = vmatpush1.msra.mxu0 %v2781
    %5686 = vmatprep.subr.mxu0 %v2798
    %5687 = vmatpush1.msra.mxu0 %v2797
    %5688 = vmatprep.subr.mxu0 %v2814
    %5689 = vmatpush1.msra.mxu0 %v2813
    %5690 = vmatprep.subr.mxu0 %v2830
    %5691 = vmatpush1.msra.mxu0 %v2829
    %5692 = vmatprep.subr.mxu0 %v2846
    %5693 = vmatpush1.msra.mxu0 %v2845
    %5694 = vmatprep.subr.mxu0 %v2862
    %5695 = vmatpush1.msra.mxu0 %v2861
    %5696 = vmatprep.subr.mxu0 %v2878
    %5697 = vmatpush1.msra.mxu0 %v2877
    %5698 = vmatprep.subr.mxu0 %v2894
    %5699 = vmatpush1.msra.mxu0 %v2893
    %5700 = vmatprep.subr.mxu0 %v2910
    %5701 = vmatpush1.msra.mxu0 %v2909
    %5702 = vmatprep.subr.mxu0 %v2926
    %5703 = vmatpush1.msra.mxu0 %v2925
    %5704 = vmatprep.subr.mxu0 %v2942
    %5705 = vmatpush1.msra.mxu0 %v2941
    %5706 = vmatprep.subr.mxu0 %v2958
    %5707 = vmatpush1.msra.mxu0 %v2957
    %5708 = vmatprep.subr.mxu0 %v2974
    %5709 = vmatpush1.msra.mxu0 %v2973
    %5710 = vmatprep.subr.mxu0 %v2990
    %5711 = vmatpush1.msra.mxu0 %v2989
    %5712 = vmatprep.subr.mxu0 %v3006
    %5713 = vmatpush1.msra.mxu0 %v3005
    %5714 = vmatprep.subr.mxu0 %v3022
    %5715 = vmatpush1.msra.mxu0 %v3021
    %5716 = vmatprep.subr.mxu0 %v3038
    %5717 = vmatpush1.msra.mxu0 %v3037
    %5718 = vmatprep.subr.mxu0 %v3054
    %5719 = vmatpush1.msra.mxu0 %v3053
    %5720 = vmatprep.subr.mxu0 %v3070
    %5721 = vmatpush1.msra.mxu0 %v3069
    %5722 = vmatprep.subr.mxu0 %v3086
    %5723 = vmatpush1.msra.mxu0 %v3085
    %5724 = vmatprep.subr.mxu0 %v3102
    %5725 = vmatpush1.msra.mxu0 %v3101
    %5726 = vmatprep.mubr.f32.mxu0 %v2078
    %5727 = vmatmul.mubr.f32.gmra.mrb[0].mxu0 %v2077
    %v5728 = vpop.f32.mrb[0].mxu0
    %v5729 = vadd.f32 %v5658, %v5728
    %v5730 = vpop.f32.mrb[0].mxu0
    %v5731 = vadd.f32 %v5660, %v5730
    %5732 = vdwg.mxu0
    %5733 = vmatprep.subr.mxu0 %v3118
    %5734 = vmatpush1.msra.mxu0 %v3117
    %5735 = vmatprep.subr.mxu0 %v3134
    %5736 = vmatpush1.msra.mxu0 %v3133
    %5737 = vmatprep.subr.mxu0 %v3150
    %5738 = vmatpush1.msra.mxu0 %v3149
    %5739 = vmatprep.subr.mxu0 %v3166
    %5740 = vmatpush1.msra.mxu0 %v3165
    %5741 = vmatprep.subr.mxu0 %v3182
    %5742 = vmatpush1.msra.mxu0 %v3181
    %5743 = vmatprep.subr.mxu0 %v3198
    %5744 = vmatpush1.msra.mxu0 %v3197
    %5745 = vmatprep.subr.mxu0 %v3214
    %5746 = vmatpush1.msra.mxu0 %v3213
    %5747 = vmatprep.subr.mxu0 %v3230
    %5748 = vmatpush1.msra.mxu0 %v3229
    %5749 = vmatprep.subr.mxu0 %v3246
    %5750 = vmatpush1.msra.mxu0 %v3245
    %5751 = vmatprep.subr.mxu0 %v3262
    %5752 = vmatpush1.msra.mxu0 %v3261
    %5753 = vmatprep.subr.mxu0 %v3278
    %5754 = vmatpush1.msra.mxu0 %v3277
    %5755 = vmatprep.subr.mxu0 %v3294
    %5756 = vmatpush1.msra.mxu0 %v3293
    %5757 = vmatprep.subr.mxu0 %v3310
    %5758 = vmatpush1.msra.mxu0 %v3309
    %5759 = vmatprep.subr.mxu0 %v3326
    %5760 = vmatpush1.msra.mxu0 %v3325
    %5761 = vmatprep.subr.mxu0 %v3342
    %5762 = vmatpush1.msra.mxu0 %v3341
    %5763 = vmatprep.subr.mxu0 %v3358
    %5764 = vmatpush1.msra.mxu0 %v3357
    %5765 = vmatprep.subr.mxu0 %v3374
    %5766 = vmatpush1.msra.mxu0 %v3373
    %5767 = vmatprep.subr.mxu0 %v3390
    %5768 = vmatpush1.msra.mxu0 %v3389
    %5769 = vmatprep.subr.mxu0 %v3406
    %5770 = vmatpush1.msra.mxu0 %v3405
    %5771 = vmatprep.subr.mxu0 %v3422
    %5772 = vmatpush1.msra.mxu0 %v3421
    %5773 = vmatprep.subr.mxu0 %v3438
    %5774 = vmatpush1.msra.mxu0 %v3437
    %5775 = vmatprep.subr.mxu0 %v3454
    %5776 = vmatpush1.msra.mxu0 %v3453
    %5777 = vmatprep.subr.mxu0 %v3470
    %5778 = vmatpush1.msra.mxu0 %v3469
    %5779 = vmatprep.subr.mxu0 %v3486
    %5780 = vmatpush1.msra.mxu0 %v3485
    %5781 = vmatprep.subr.mxu0 %v3502
    %5782 = vmatpush1.msra.mxu0 %v3501
    %5783 = vmatprep.subr.mxu0 %v3518
    %5784 = vmatpush1.msra.mxu0 %v3517
    %5785 = vmatprep.subr.mxu0 %v3534
    %5786 = vmatpush1.msra.mxu0 %v3533
    %5787 = vmatprep.subr.mxu0 %v3550
    %5788 = vmatpush1.msra.mxu0 %v3549
    %5789 = vmatprep.subr.mxu0 %v3566
    %5790 = vmatpush1.msra.mxu0 %v3565
    %5791 = vmatprep.subr.mxu0 %v3582
    %5792 = vmatpush1.msra.mxu0 %v3581
    %5793 = vmatprep.subr.mxu0 %v3598
    %5794 = vmatpush1.msra.mxu0 %v3597
    %5795 = vmatprep.subr.mxu0 %v3614
    %5796 = vmatpush1.msra.mxu0 %v3613
    %5797 = vmatprep.mubr.f32.mxu0 %v2080
    %5798 = vmatmul.mubr.f32.gmra.mrb[0].mxu0 %v2079
    %v5799 = vpop.f32.mrb[0].mxu0
    %v5800 = vadd.f32 %v5729, %v5799
    %v5801 = vpop.f32.mrb[0].mxu0
    %v5802 = vadd.f32 %v5731, %v5801
    %5803 = vdwg.mxu0
    %5804 = vmatprep.subr.mxu0 %v3630
    %5805 = vmatpush1.msra.mxu0 %v3629
    %5806 = vmatprep.subr.mxu0 %v3646
    %5807 = vmatpush1.msra.mxu0 %v3645
    %5808 = vmatprep.subr.mxu0 %v3662
    %5809 = vmatpush1.msra.mxu0 %v3661
    %5810 = vmatprep.subr.mxu0 %v3678
    %5811 = vmatpush1.msra.mxu0 %v3677
    %5812 = vmatprep.subr.mxu0 %v3694
    %5813 = vmatpush1.msra.mxu0 %v3693
    %5814 = vmatprep.subr.mxu0 %v3710
    %5815 = vmatpush1.msra.mxu0 %v3709
    %5816 = vmatprep.subr.mxu0 %v3726
    %5817 = vmatpush1.msra.mxu0 %v3725
    %5818 = vmatprep.subr.mxu0 %v3742
    %5819 = vmatpush1.msra.mxu0 %v3741
    %5820 = vmatprep.subr.mxu0 %v3758
    %5821 = vmatpush1.msra.mxu0 %v3757
    %5822 = vmatprep.subr.mxu0 %v3774
    %5823 = vmatpush1.msra.mxu0 %v3773
    %5824 = vmatprep.subr.mxu0 %v3790
    %5825 = vmatpush1.msra.mxu0 %v3789
    %5826 = vmatprep.subr.mxu0 %v3806
    %5827 = vmatpush1.msra.mxu0 %v3805
    %5828 = vmatprep.subr.mxu0 %v3822
    %5829 = vmatpush1.msra.mxu0 %v3821
    %5830 = vmatprep.subr.mxu0 %v3838
    %5831 = vmatpush1.msra.mxu0 %v3837
    %5832 = vmatprep.subr.mxu0 %v3854
    %5833 = vmatpush1.msra.mxu0 %v3853
    %5834 = vmatprep.subr.mxu0 %v3870
    %5835 = vmatpush1.msra.mxu0 %v3869
    %5836 = vmatprep.subr.mxu0 %v3886
    %5837 = vmatpush1.msra.mxu0 %v3885
    %5838 = vmatprep.subr.mxu0 %v3902
    %5839 = vmatpush1.msra.mxu0 %v3901
    %5840 = vmatprep.subr.mxu0 %v3918
    %5841 = vmatpush1.msra.mxu0 %v3917
    %5842 = vmatprep.subr.mxu0 %v3934
    %5843 = vmatpush1.msra.mxu0 %v3933
    %5844 = vmatprep.subr.mxu0 %v3950
    %5845 = vmatpush1.msra.mxu0 %v3949
    %5846 = vmatprep.subr.mxu0 %v3966
    %5847 = vmatpush1.msra.mxu0 %v3965
    %5848 = vmatprep.subr.mxu0 %v3982
    %5849 = vmatpush1.msra.mxu0 %v3981
    %5850 = vmatprep.subr.mxu0 %v3998
    %5851 = vmatpush1.msra.mxu0 %v3997
    %5852 = vmatprep.subr.mxu0 %v4014
    %5853 = vmatpush1.msra.mxu0 %v4013
    %5854 = vmatprep.subr.mxu0 %v4030
    %5855 = vmatpush1.msra.mxu0 %v4029
    %5856 = vmatprep.subr.mxu0 %v4046
    %5857 = vmatpush1.msra.mxu0 %v4045
    %5858 = vmatprep.subr.mxu0 %v4062
    %5859 = vmatpush1.msra.mxu0 %v4061
    %5860 = vmatprep.subr.mxu0 %v4078
    %5861 = vmatpush1.msra.mxu0 %v4077
    %5862 = vmatprep.subr.mxu0 0.0
    %5863 = vmatpush1.msra.mxu0 0.0
    %5864 = vmatprep.subr.mxu0 0.0
    %5865 = vmatpush1.msra.mxu0 0.0
    %5866 = vmatprep.subr.mxu0 0.0
    %5867 = vmatpush1.msra.mxu0 0.0
    %5868 = vmatprep.mubr.f32.mxu0 %v4169
    %5869 = vmatmul.mubr.f32.gmra.mrb[0].mxu0 %v2081
    %v5870 = vpop.f32.mrb[0].mxu0
    %v5871 = vadd.f32 %v5800, %v5870
    %v5872 = vpop.f32.mrb[0].mxu0
    %v5873 = vadd.f32 %v5802, %v5872
    %5874 = vdwg.mxu0
    %5875 = vmatprep.subr.mxu0 %v2096
    %5876 = vmatpush1.msra.mxu0 %v2095
    %5877 = vmatprep.subr.mxu0 %v2112
    %5878 = vmatpush1.msra.mxu0 %v2111
    %5879 = vmatprep.subr.mxu0 %v2128
    %5880 = vmatpush1.msra.mxu0 %v2127
    %5881 = vmatprep.subr.mxu0 %v2144
    %5882 = vmatpush1.msra.mxu0 %v2143
    %5883 = vmatprep.subr.mxu0 %v2160
    %5884 = vmatpush1.msra.mxu0 %v2159
    %5885 = vmatprep.subr.mxu0 %v2176
    %5886 = vmatpush1.msra.mxu0 %v2175
    %5887 = vmatprep.subr.mxu0 %v2192
    %5888 = vmatpush1.msra.mxu0 %v2191
    %5889 = vmatprep.subr.mxu0 %v2208
    %5890 = vmatpush1.msra.mxu0 %v2207
    %5891 = vmatprep.subr.mxu0 %v2224
    %5892 = vmatpush1.msra.mxu0 %v2223
    %5893 = vmatprep.subr.mxu0 %v2240
    %5894 = vmatpush1.msra.mxu0 %v2239
    %5895 = vmatprep.subr.mxu0 %v2256
    %5896 = vmatpush1.msra.mxu0 %v2255
    %5897 = vmatprep.subr.mxu0 %v2272
    %5898 = vmatpush1.msra.mxu0 %v2271
    %5899 = vmatprep.subr.mxu0 %v2288
    %5900 = vmatpush1.msra.mxu0 %v2287
    %5901 = vmatprep.subr.mxu0 %v2304
    %5902 = vmatpush1.msra.mxu0 %v2303
    %5903 = vmatprep.subr.mxu0 %v2320
    %5904 = vmatpush1.msra.mxu0 %v2319
    %5905 = vmatprep.subr.mxu0 %v2336
    %5906 = vmatpush1.msra.mxu0 %v2335
    %5907 = vmatprep.subr.mxu0 %v2352
    %5908 = vmatpush1.msra.mxu0 %v2351
    %5909 = vmatprep.subr.mxu0 %v2368
    %5910 = vmatpush1.msra.mxu0 %v2367
    %5911 = vmatprep.subr.mxu0 %v2384
    %5912 = vmatpush1.msra.mxu0 %v2383
    %5913 = vmatprep.subr.mxu0 %v2400
    %5914 = vmatpush1.msra.mxu0 %v2399
    %5915 = vmatprep.subr.mxu0 %v2416
    %5916 = vmatpush1.msra.mxu0 %v2415
    %5917 = vmatprep.subr.mxu0 %v2432
    %5918 = vmatpush1.msra.mxu0 %v2431
    %5919 = vmatprep.subr.mxu0 %v2448
    %5920 = vmatpush1.msra.mxu0 %v2447
    %5921 = vmatprep.subr.mxu0 %v2464
    %5922 = vmatpush1.msra.mxu0 %v2463
    %5923 = vmatprep.subr.mxu0 %v2480
    %5924 = vmatpush1.msra.mxu0 %v2479
    %5925 = vmatprep.subr.mxu0 %v2496
    %5926 = vmatpush1.msra.mxu0 %v2495
    %5927 = vmatprep.subr.mxu0 %v2512
    %5928 = vmatpush1.msra.mxu0 %v2511
    %5929 = vmatprep.subr.mxu0 %v2528
    %5930 = vmatpush1.msra.mxu0 %v2527
    %5931 = vmatprep.subr.mxu0 %v2544
    %5932 = vmatpush1.msra.mxu0 %v2543
    %5933 = vmatprep.subr.mxu0 %v2560
    %5934 = vmatpush1.msra.mxu0 %v2559
    %5935 = vmatprep.subr.mxu0 %v2576
    %5936 = vmatpush1.msra.mxu0 %v2575
    %5937 = vmatprep.subr.mxu0 %v2592
    %5938 = vmatpush1.msra.mxu0 %v2591
    %5939 = vmatprep.mubr.f32.mxu0 %v2076
    %5940 = vmatmul.mubr.f32.gmra.mrb[0].mxu0 %v2075
    %v5941 = vpop.f32.mrb[0].mxu0
    %v5942 = vadd.f32 %v4138, %v5941
    %v5943 = vpop.f32.mrb[0].mxu0
    %v5944 = vadd.f32 %v4142, %v5943
    %5945 = vdwg.mxu0
    %5946 = vmatprep.subr.mxu0 %v2608
    %5947 = vmatpush1.msra.mxu0 %v2607
    %5948 = vmatprep.subr.mxu0 %v2624
    %5949 = vmatpush1.msra.mxu0 %v2623
    %5950 = vmatprep.subr.mxu0 %v2640
    %5951 = vmatpush1.msra.mxu0 %v2639
    %5952 = vmatprep.subr.mxu0 %v2656
    %5953 = vmatpush1.msra.mxu0 %v2655
    %5954 = vmatprep.subr.mxu0 %v2672
    %5955 = vmatpush1.msra.mxu0 %v2671
    %5956 = vmatprep.subr.mxu0 %v2688
    %5957 = vmatpush1.msra.mxu0 %v2687
    %5958 = vmatprep.subr.mxu0 %v2704
    %5959 = vmatpush1.msra.mxu0 %v2703
    %5960 = vmatprep.subr.mxu0 %v2720
    %5961 = vmatpush1.msra.mxu0 %v2719
    %5962 = vmatprep.subr.mxu0 %v2736
    %5963 = vmatpush1.msra.mxu0 %v2735
    %5964 = vmatprep.subr.mxu0 %v2752
    %5965 = vmatpush1.msra.mxu0 %v2751
    %5966 = vmatprep.subr.mxu0 %v2768
    %5967 = vmatpush1.msra.mxu0 %v2767
    %5968 = vmatprep.subr.mxu0 %v2784
    %5969 = vmatpush1.msra.mxu0 %v2783
    %5970 = vmatprep.subr.mxu0 %v2800
    %5971 = vmatpush1.msra.mxu0 %v2799
    %5972 = vmatprep.subr.mxu0 %v2816
    %5973 = vmatpush1.msra.mxu0 %v2815
    %5974 = vmatprep.subr.mxu0 %v2832
    %5975 = vmatpush1.msra.mxu0 %v2831
    %5976 = vmatprep.subr.mxu0 %v2848
    %5977 = vmatpush1.msra.mxu0 %v2847
    %5978 = vmatprep.subr.mxu0 %v2864
    %5979 = vmatpush1.msra.mxu0 %v2863
    %5980 = vmatprep.subr.mxu0 %v2880
    %5981 = vmatpush1.msra.mxu0 %v2879
    %5982 = vmatprep.subr.mxu0 %v2896
    %5983 = vmatpush1.msra.mxu0 %v2895
    %5984 = vmatprep.subr.mxu0 %v2912
    %5985 = vmatpush1.msra.mxu0 %v2911
    %5986 = vmatprep.subr.mxu0 %v2928
    %5987 = vmatpush1.msra.mxu0 %v2927
    %5988 = vmatprep.subr.mxu0 %v2944
    %5989 = vmatpush1.msra.mxu0 %v2943
    %5990 = vmatprep.subr.mxu0 %v2960
    %5991 = vmatpush1.msra.mxu0 %v2959
    %5992 = vmatprep.subr.mxu0 %v2976
    %5993 = vmatpush1.msra.mxu0 %v2975
    %5994 = vmatprep.subr.mxu0 %v2992
    %5995 = vmatpush1.msra.mxu0 %v2991
    %5996 = vmatprep.subr.mxu0 %v3008
    %5997 = vmatpush1.msra.mxu0 %v3007
    %5998 = vmatprep.subr.mxu0 %v3024
    %5999 = vmatpush1.msra.mxu0 %v3023
    %6000 = vmatprep.subr.mxu0 %v3040
    %6001 = vmatpush1.msra.mxu0 %v3039
    %6002 = vmatprep.subr.mxu0 %v3056
    %6003 = vmatpush1.msra.mxu0 %v3055
    %6004 = vmatprep.subr.mxu0 %v3072
    %6005 = vmatpush1.msra.mxu0 %v3071
    %6006 = vmatprep.subr.mxu0 %v3088
    %6007 = vmatpush1.msra.mxu0 %v3087
    %6008 = vmatprep.subr.mxu0 %v3104
    %6009 = vmatpush1.msra.mxu0 %v3103
    %6010 = vmatprep.mubr.f32.mxu0 %v2078
    %6011 = vmatmul.mubr.f32.gmra.mrb[0].mxu0 %v2077
    %v6012 = vpop.f32.mrb[0].mxu0
    %v6013 = vadd.f32 %v5942, %v6012
    %v6014 = vpop.f32.mrb[0].mxu0
    %v6015 = vadd.f32 %v5944, %v6014
    %6016 = vdwg.mxu0
    %6017 = vmatprep.subr.mxu0 %v3120
    %6018 = vmatpush1.msra.mxu0 %v3119
    %6019 = vmatprep.subr.mxu0 %v3136
    %6020 = vmatpush1.msra.mxu0 %v3135
    %6021 = vmatprep.subr.mxu0 %v3152
    %6022 = vmatpush1.msra.mxu0 %v3151
    %6023 = vmatprep.subr.mxu0 %v3168
    %6024 = vmatpush1.msra.mxu0 %v3167
    %6025 = vmatprep.subr.mxu0 %v3184
    %6026 = vmatpush1.msra.mxu0 %v3183
    %6027 = vmatprep.subr.mxu0 %v3200
    %6028 = vmatpush1.msra.mxu0 %v3199
    %6029 = vmatprep.subr.mxu0 %v3216
    %6030 = vmatpush1.msra.mxu0 %v3215
    %6031 = vmatprep.subr.mxu0 %v3232
    %6032 = vmatpush1.msra.mxu0 %v3231
    %6033 = vmatprep.subr.mxu0 %v3248
    %6034 = vmatpush1.msra.mxu0 %v3247
    %6035 = vmatprep.subr.mxu0 %v3264
    %6036 = vmatpush1.msra.mxu0 %v3263
    %6037 = vmatprep.subr.mxu0 %v3280
    %6038 = vmatpush1.msra.mxu0 %v3279
    %6039 = vmatprep.subr.mxu0 %v3296
    %6040 = vmatpush1.msra.mxu0 %v3295
    %6041 = vmatprep.subr.mxu0 %v3312
    %6042 = vmatpush1.msra.mxu0 %v3311
    %6043 = vmatprep.subr.mxu0 %v3328
    %6044 = vmatpush1.msra.mxu0 %v3327
    %6045 = vmatprep.subr.mxu0 %v3344
    %6046 = vmatpush1.msra.mxu0 %v3343
    %6047 = vmatprep.subr.mxu0 %v3360
    %6048 = vmatpush1.msra.mxu0 %v3359
    %6049 = vmatprep.subr.mxu0 %v3376
    %6050 = vmatpush1.msra.mxu0 %v3375
    %6051 = vmatprep.subr.mxu0 %v3392
    %6052 = vmatpush1.msra.mxu0 %v3391
    %6053 = vmatprep.subr.mxu0 %v3408
    %6054 = vmatpush1.msra.mxu0 %v3407
    %6055 = vmatprep.subr.mxu0 %v3424
    %6056 = vmatpush1.msra.mxu0 %v3423
    %6057 = vmatprep.subr.mxu0 %v3440
    %6058 = vmatpush1.msra.mxu0 %v3439
    %6059 = vmatprep.subr.mxu0 %v3456
    %6060 = vmatpush1.msra.mxu0 %v3455
    %6061 = vmatprep.subr.mxu0 %v3472
    %6062 = vmatpush1.msra.mxu0 %v3471
    %6063 = vmatprep.subr.mxu0 %v3488
    %6064 = vmatpush1.msra.mxu0 %v3487
    %6065 = vmatprep.subr.mxu0 %v3504
    %6066 = vmatpush1.msra.mxu0 %v3503
    %6067 = vmatprep.subr.mxu0 %v3520
    %6068 = vmatpush1.msra.mxu0 %v3519
    %6069 = vmatprep.subr.mxu0 %v3536
    %6070 = vmatpush1.msra.mxu0 %v3535
    %6071 = vmatprep.subr.mxu0 %v3552
    %6072 = vmatpush1.msra.mxu0 %v3551
    %6073 = vmatprep.subr.mxu0 %v3568
    %6074 = vmatpush1.msra.mxu0 %v3567
    %6075 = vmatprep.subr.mxu0 %v3584
    %6076 = vmatpush1.msra.mxu0 %v3583
    %6077 = vmatprep.subr.mxu0 %v3600
    %6078 = vmatpush1.msra.mxu0 %v3599
    %6079 = vmatprep.subr.mxu0 %v3616
    %6080 = vmatpush1.msra.mxu0 %v3615
    %6081 = vmatprep.mubr.f32.mxu0 %v2080
    %6082 = vmatmul.mubr.f32.gmra.mrb[0].mxu0 %v2079
    %v6083 = vpop.f32.mrb[0].mxu0
    %v6084 = vadd.f32 %v6013, %v6083
    %v6085 = vpop.f32.mrb[0].mxu0
    %v6086 = vadd.f32 %v6015, %v6085
    %6087 = vdwg.mxu0
    %6088 = vmatprep.subr.mxu0 %v3632
    %6089 = vmatpush1.msra.mxu0 %v3631
    %6090 = vmatprep.subr.mxu0 %v3648
    %6091 = vmatpush1.msra.mxu0 %v3647
    %6092 = vmatprep.subr.mxu0 %v3664
    %6093 = vmatpush1.msra.mxu0 %v3663
    %6094 = vmatprep.subr.mxu0 %v3680
    %6095 = vmatpush1.msra.mxu0 %v3679
    %6096 = vmatprep.subr.mxu0 %v3696
    %6097 = vmatpush1.msra.mxu0 %v3695
    %6098 = vmatprep.subr.mxu0 %v3712
    %6099 = vmatpush1.msra.mxu0 %v3711
    %6100 = vmatprep.subr.mxu0 %v3728
    %6101 = vmatpush1.msra.mxu0 %v3727
    %6102 = vmatprep.subr.mxu0 %v3744
    %6103 = vmatpush1.msra.mxu0 %v3743
    %6104 = vmatprep.subr.mxu0 %v3760
    %6105 = vmatpush1.msra.mxu0 %v3759
    %6106 = vmatprep.subr.mxu0 %v3776
    %6107 = vmatpush1.msra.mxu0 %v3775
    %6108 = vmatprep.subr.mxu0 %v3792
    %6109 = vmatpush1.msra.mxu0 %v3791
    %6110 = vmatprep.subr.mxu0 %v3808
    %6111 = vmatpush1.msra.mxu0 %v3807
    %6112 = vmatprep.subr.mxu0 %v3824
    %6113 = vmatpush1.msra.mxu0 %v3823
    %6114 = vmatprep.subr.mxu0 %v3840
    %6115 = vmatpush1.msra.mxu0 %v3839
    %6116 = vmatprep.subr.mxu0 %v3856
    %6117 = vmatpush1.msra.mxu0 %v3855
    %6118 = vmatprep.subr.mxu0 %v3872
    %6119 = vmatpush1.msra.mxu0 %v3871
    %6120 = vmatprep.subr.mxu0 %v3888
    %6121 = vmatpush1.msra.mxu0 %v3887
    %6122 = vmatprep.subr.mxu0 %v3904
    %6123 = vmatpush1.msra.mxu0 %v3903
    %6124 = vmatprep.subr.mxu0 %v3920
    %6125 = vmatpush1.msra.mxu0 %v3919
    %6126 = vmatprep.subr.mxu0 %v3936
    %6127 = vmatpush1.msra.mxu0 %v3935
    %6128 = vmatprep.subr.mxu0 %v3952
    %6129 = vmatpush1.msra.mxu0 %v3951
    %6130 = vmatprep.subr.mxu0 %v3968
    %6131 = vmatpush1.msra.mxu0 %v3967
    %6132 = vmatprep.subr.mxu0 %v3984
    %6133 = vmatpush1.msra.mxu0 %v3983
    %6134 = vmatprep.subr.mxu0 %v4000
    %6135 = vmatpush1.msra.mxu0 %v3999
    %6136 = vmatprep.subr.mxu0 %v4016
    %6137 = vmatpush1.msra.mxu0 %v4015
    %6138 = vmatprep.subr.mxu0 %v4032
    %6139 = vmatpush1.msra.mxu0 %v4031
    %6140 = vmatprep.subr.mxu0 %v4048
    %6141 = vmatpush1.msra.mxu0 %v4047
    %6142 = vmatprep.subr.mxu0 %v4064
    %6143 = vmatpush1.msra.mxu0 %v4063
    %6144 = vmatprep.subr.mxu0 %v4080
    %6145 = vmatpush1.msra.mxu0 %v4079
    %6146 = vmatprep.subr.mxu0 0.0
    %6147 = vmatpush1.msra.mxu0 0.0
    %6148 = vmatprep.subr.mxu0 0.0
    %6149 = vmatpush1.msra.mxu0 0.0
    %6150 = vmatprep.subr.mxu0 0.0
    %6151 = vmatpush1.msra.mxu0 0.0
    %6152 = vmatprep.mubr.f32.mxu0 %v4169
    %6153 = vmatmul.mubr.f32.gmra.mrb[0].mxu0 %v2081
    %v6154 = vpop.f32.mrb[0].mxu0
    %v6155 = vadd.f32 %v6084, %v6154
    %v6156 = vpop.f32.mrb[0].mxu0
    %v6157 = vadd.f32 %v6086, %v6156
    %6158 = vdwg.mxu0
    %6159 = vmatprep.subr.mxu0 %v2098
    %6160 = vmatpush1.msra.mxu0 %v2097
    %6161 = vmatprep.subr.mxu0 %v2114
    %6162 = vmatpush1.msra.mxu0 %v2113
    %6163 = vmatprep.subr.mxu0 %v2130
    %6164 = vmatpush1.msra.mxu0 %v2129
    %6165 = vmatprep.subr.mxu0 %v2146
    %6166 = vmatpush1.msra.mxu0 %v2145
    %6167 = vmatprep.subr.mxu0 %v2162
    %6168 = vmatpush1.msra.mxu0 %v2161
    %6169 = vmatprep.subr.mxu0 %v2178
    %6170 = vmatpush1.msra.mxu0 %v2177
    %6171 = vmatprep.subr.mxu0 %v2194
    %6172 = vmatpush1.msra.mxu0 %v2193
    %6173 = vmatprep.subr.mxu0 %v2210
    %6174 = vmatpush1.msra.mxu0 %v2209
    %6175 = vmatprep.subr.mxu0 %v2226
    %6176 = vmatpush1.msra.mxu0 %v2225
    %6177 = vmatprep.subr.mxu0 %v2242
    %6178 = vmatpush1.msra.mxu0 %v2241
    %6179 = vmatprep.subr.mxu0 %v2258
    %6180 = vmatpush1.msra.mxu0 %v2257
    %6181 = vmatprep.subr.mxu0 %v2274
    %6182 = vmatpush1.msra.mxu0 %v2273
    %6183 = vmatprep.subr.mxu0 %v2290
    %6184 = vmatpush1.msra.mxu0 %v2289
    %6185 = vmatprep.subr.mxu0 %v2306
    %6186 = vmatpush1.msra.mxu0 %v2305
    %6187 = vmatprep.subr.mxu0 %v2322
    %6188 = vmatpush1.msra.mxu0 %v2321
    %6189 = vmatprep.subr.mxu0 %v2338
    %6190 = vmatpush1.msra.mxu0 %v2337
    %6191 = vmatprep.subr.mxu0 %v2354
    %6192 = vmatpush1.msra.mxu0 %v2353
    %6193 = vmatprep.subr.mxu0 %v2370
    %6194 = vmatpush1.msra.mxu0 %v2369
    %6195 = vmatprep.subr.mxu0 %v2386
    %6196 = vmatpush1.msra.mxu0 %v2385
    %6197 = vmatprep.subr.mxu0 %v2402
    %6198 = vmatpush1.msra.mxu0 %v2401
    %6199 = vmatprep.subr.mxu0 %v2418
    %6200 = vmatpush1.msra.mxu0 %v2417
    %6201 = vmatprep.subr.mxu0 %v2434
    %6202 = vmatpush1.msra.mxu0 %v2433
    %6203 = vmatprep.subr.mxu0 %v2450
    %6204 = vmatpush1.msra.mxu0 %v2449
    %6205 = vmatprep.subr.mxu0 %v2466
    %6206 = vmatpush1.msra.mxu0 %v2465
    %6207 = vmatprep.subr.mxu0 %v2482
    %6208 = vmatpush1.msra.mxu0 %v2481
    %6209 = vmatprep.subr.mxu0 %v2498
    %6210 = vmatpush1.msra.mxu0 %v2497
    %6211 = vmatprep.subr.mxu0 %v2514
    %6212 = vmatpush1.msra.mxu0 %v2513
    %6213 = vmatprep.subr.mxu0 %v2530
    %6214 = vmatpush1.msra.mxu0 %v2529
    %6215 = vmatprep.subr.mxu0 %v2546
    %6216 = vmatpush1.msra.mxu0 %v2545
    %6217 = vmatprep.subr.mxu0 %v2562
    %6218 = vmatpush1.msra.mxu0 %v2561
    %6219 = vmatprep.subr.mxu0 %v2578
    %6220 = vmatpush1.msra.mxu0 %v2577
    %6221 = vmatprep.subr.mxu0 %v2594
    %6222 = vmatpush1.msra.mxu0 %v2593
    %6223 = vmatprep.mubr.f32.mxu0 %v2076
    %6224 = vmatmul.mubr.f32.gmra.mrb[0].mxu0 %v2075
    %v6225 = vpop.f32.mrb[0].mxu0
    %v6226 = vadd.f32 %v4146, %v6225
    %v6227 = vpop.f32.mrb[0].mxu0
    %v6228 = vadd.f32 %v4150, %v6227
    %6229 = vdwg.mxu0
    %6230 = vmatprep.subr.mxu0 %v2610
    %6231 = vmatpush1.msra.mxu0 %v2609
    %6232 = vmatprep.subr.mxu0 %v2626
    %6233 = vmatpush1.msra.mxu0 %v2625
    %6234 = vmatprep.subr.mxu0 %v2642
    %6235 = vmatpush1.msra.mxu0 %v2641
    %6236 = vmatprep.subr.mxu0 %v2658
    %6237 = vmatpush1.msra.mxu0 %v2657
    %6238 = vmatprep.subr.mxu0 %v2674
    %6239 = vmatpush1.msra.mxu0 %v2673
    %6240 = vmatprep.subr.mxu0 %v2690
    %6241 = vmatpush1.msra.mxu0 %v2689
    %6242 = vmatprep.subr.mxu0 %v2706
    %6243 = vmatpush1.msra.mxu0 %v2705
    %6244 = vmatprep.subr.mxu0 %v2722
    %6245 = vmatpush1.msra.mxu0 %v2721
    %6246 = vmatprep.subr.mxu0 %v2738
    %6247 = vmatpush1.msra.mxu0 %v2737
    %6248 = vmatprep.subr.mxu0 %v2754
    %6249 = vmatpush1.msra.mxu0 %v2753
    %6250 = vmatprep.subr.mxu0 %v2770
    %6251 = vmatpush1.msra.mxu0 %v2769
    %6252 = vmatprep.subr.mxu0 %v2786
    %6253 = vmatpush1.msra.mxu0 %v2785
    %6254 = vmatprep.subr.mxu0 %v2802
    %6255 = vmatpush1.msra.mxu0 %v2801
    %6256 = vmatprep.subr.mxu0 %v2818
    %6257 = vmatpush1.msra.mxu0 %v2817
    %6258 = vmatprep.subr.mxu0 %v2834
    %6259 = vmatpush1.msra.mxu0 %v2833
    %6260 = vmatprep.subr.mxu0 %v2850
    %6261 = vmatpush1.msra.mxu0 %v2849
    %6262 = vmatprep.subr.mxu0 %v2866
    %6263 = vmatpush1.msra.mxu0 %v2865
    %6264 = vmatprep.subr.mxu0 %v2882
    %6265 = vmatpush1.msra.mxu0 %v2881
    %6266 = vmatprep.subr.mxu0 %v2898
    %6267 = vmatpush1.msra.mxu0 %v2897
    %6268 = vmatprep.subr.mxu0 %v2914
    %6269 = vmatpush1.msra.mxu0 %v2913
    %6270 = vmatprep.subr.mxu0 %v2930
    %6271 = vmatpush1.msra.mxu0 %v2929
    %6272 = vmatprep.subr.mxu0 %v2946
    %6273 = vmatpush1.msra.mxu0 %v2945
    %6274 = vmatprep.subr.mxu0 %v2962
    %6275 = vmatpush1.msra.mxu0 %v2961
    %6276 = vmatprep.subr.mxu0 %v2978
    %6277 = vmatpush1.msra.mxu0 %v2977
    %6278 = vmatprep.subr.mxu0 %v2994
    %6279 = vmatpush1.msra.mxu0 %v2993
    %6280 = vmatprep.subr.mxu0 %v3010
    %6281 = vmatpush1.msra.mxu0 %v3009
    %6282 = vmatprep.subr.mxu0 %v3026
    %6283 = vmatpush1.msra.mxu0 %v3025
    %6284 = vmatprep.subr.mxu0 %v3042
    %6285 = vmatpush1.msra.mxu0 %v3041
    %6286 = vmatprep.subr.mxu0 %v3058
    %6287 = vmatpush1.msra.mxu0 %v3057
    %6288 = vmatprep.subr.mxu0 %v3074
    %6289 = vmatpush1.msra.mxu0 %v3073
    %6290 = vmatprep.subr.mxu0 %v3090
    %6291 = vmatpush1.msra.mxu0 %v3089
    %6292 = vmatprep.subr.mxu0 %v3106
    %6293 = vmatpush1.msra.mxu0 %v3105
    %6294 = vmatprep.mubr.f32.mxu0 %v2078
    %6295 = vmatmul.mubr.f32.gmra.mrb[0].mxu0 %v2077
    %v6296 = vpop.f32.mrb[0].mxu0
    %v6297 = vadd.f32 %v6226, %v6296
    %v6298 = vpop.f32.mrb[0].mxu0
    %v6299 = vadd.f32 %v6228, %v6298
    %6300 = vdwg.mxu0
    %6301 = vmatprep.subr.mxu0 %v3122
    %6302 = vmatpush1.msra.mxu0 %v3121
    %6303 = vmatprep.subr.mxu0 %v3138
    %6304 = vmatpush1.msra.mxu0 %v3137
    %6305 = vmatprep.subr.mxu0 %v3154
    %6306 = vmatpush1.msra.mxu0 %v3153
    %6307 = vmatprep.subr.mxu0 %v3170
    %6308 = vmatpush1.msra.mxu0 %v3169
    %6309 = vmatprep.subr.mxu0 %v3186
    %6310 = vmatpush1.msra.mxu0 %v3185
    %6311 = vmatprep.subr.mxu0 %v3202
    %6312 = vmatpush1.msra.mxu0 %v3201
    %6313 = vmatprep.subr.mxu0 %v3218
    %6314 = vmatpush1.msra.mxu0 %v3217
    %6315 = vmatprep.subr.mxu0 %v3234
    %6316 = vmatpush1.msra.mxu0 %v3233
    %6317 = vmatprep.subr.mxu0 %v3250
    %6318 = vmatpush1.msra.mxu0 %v3249
    %6319 = vmatprep.subr.mxu0 %v3266
    %6320 = vmatpush1.msra.mxu0 %v3265
    %6321 = vmatprep.subr.mxu0 %v3282
    %6322 = vmatpush1.msra.mxu0 %v3281
    %6323 = vmatprep.subr.mxu0 %v3298
    %6324 = vmatpush1.msra.mxu0 %v3297
    %6325 = vmatprep.subr.mxu0 %v3314
    %6326 = vmatpush1.msra.mxu0 %v3313
    %6327 = vmatprep.subr.mxu0 %v3330
    %6328 = vmatpush1.msra.mxu0 %v3329
    %6329 = vmatprep.subr.mxu0 %v3346
    %6330 = vmatpush1.msra.mxu0 %v3345
    %6331 = vmatprep.subr.mxu0 %v3362
    %6332 = vmatpush1.msra.mxu0 %v3361
    %6333 = vmatprep.subr.mxu0 %v3378
    %6334 = vmatpush1.msra.mxu0 %v3377
    %6335 = vmatprep.subr.mxu0 %v3394
    %6336 = vmatpush1.msra.mxu0 %v3393
    %6337 = vmatprep.subr.mxu0 %v3410
    %6338 = vmatpush1.msra.mxu0 %v3409
    %6339 = vmatprep.subr.mxu0 %v3426
    %6340 = vmatpush1.msra.mxu0 %v3425
    %6341 = vmatprep.subr.mxu0 %v3442
    %6342 = vmatpush1.msra.mxu0 %v3441
    %6343 = vmatprep.subr.mxu0 %v3458
    %6344 = vmatpush1.msra.mxu0 %v3457
    %6345 = vmatprep.subr.mxu0 %v3474
    %6346 = vmatpush1.msra.mxu0 %v3473
    %6347 = vmatprep.subr.mxu0 %v3490
    %6348 = vmatpush1.msra.mxu0 %v3489
    %6349 = vmatprep.subr.mxu0 %v3506
    %6350 = vmatpush1.msra.mxu0 %v3505
    %6351 = vmatprep.subr.mxu0 %v3522
    %6352 = vmatpush1.msra.mxu0 %v3521
    %6353 = vmatprep.subr.mxu0 %v3538
    %6354 = vmatpush1.msra.mxu0 %v3537
    %6355 = vmatprep.subr.mxu0 %v3554
    %6356 = vmatpush1.msra.mxu0 %v3553
    %6357 = vmatprep.subr.mxu0 %v3570
    %6358 = vmatpush1.msra.mxu0 %v3569
    %6359 = vmatprep.subr.mxu0 %v3586
    %6360 = vmatpush1.msra.mxu0 %v3585
    %6361 = vmatprep.subr.mxu0 %v3602
    %6362 = vmatpush1.msra.mxu0 %v3601
    %6363 = vmatprep.subr.mxu0 %v3618
    %6364 = vmatpush1.msra.mxu0 %v3617
    %6365 = vmatprep.mubr.f32.mxu0 %v2080
    %6366 = vmatmul.mubr.f32.gmra.mrb[0].mxu0 %v2079
    %v6367 = vpop.f32.mrb[0].mxu0
    %v6368 = vadd.f32 %v6297, %v6367
    %v6369 = vpop.f32.mrb[0].mxu0
    %v6370 = vadd.f32 %v6299, %v6369
    %6371 = vdwg.mxu0
    %6372 = vmatprep.subr.mxu0 %v3634
    %6373 = vmatpush1.msra.mxu0 %v3633
    %6374 = vmatprep.subr.mxu0 %v3650
    %6375 = vmatpush1.msra.mxu0 %v3649
    %6376 = vmatprep.subr.mxu0 %v3666
    %6377 = vmatpush1.msra.mxu0 %v3665
    %6378 = vmatprep.subr.mxu0 %v3682
    %6379 = vmatpush1.msra.mxu0 %v3681
    %6380 = vmatprep.subr.mxu0 %v3698
    %6381 = vmatpush1.msra.mxu0 %v3697
    %6382 = vmatprep.subr.mxu0 %v3714
    %6383 = vmatpush1.msra.mxu0 %v3713
    %6384 = vmatprep.subr.mxu0 %v3730
    %6385 = vmatpush1.msra.mxu0 %v3729
    %6386 = vmatprep.subr.mxu0 %v3746
    %6387 = vmatpush1.msra.mxu0 %v3745
    %6388 = vmatprep.subr.mxu0 %v3762
    %6389 = vmatpush1.msra.mxu0 %v3761
    %6390 = vmatprep.subr.mxu0 %v3778
    %6391 = vmatpush1.msra.mxu0 %v3777
    %6392 = vmatprep.subr.mxu0 %v3794
    %6393 = vmatpush1.msra.mxu0 %v3793
    %6394 = vmatprep.subr.mxu0 %v3810
    %6395 = vmatpush1.msra.mxu0 %v3809
    %6396 = vmatprep.subr.mxu0 %v3826
    %6397 = vmatpush1.msra.mxu0 %v3825
    %6398 = vmatprep.subr.mxu0 %v3842
    %6399 = vmatpush1.msra.mxu0 %v3841
    %6400 = vmatprep.subr.mxu0 %v3858
    %6401 = vmatpush1.msra.mxu0 %v3857
    %6402 = vmatprep.subr.mxu0 %v3874
    %6403 = vmatpush1.msra.mxu0 %v3873
    %6404 = vmatprep.subr.mxu0 %v3890
    %6405 = vmatpush1.msra.mxu0 %v3889
    %6406 = vmatprep.subr.mxu0 %v3906
    %6407 = vmatpush1.msra.mxu0 %v3905
    %6408 = vmatprep.subr.mxu0 %v3922
    %6409 = vmatpush1.msra.mxu0 %v3921
    %6410 = vmatprep.subr.mxu0 %v3938
    %6411 = vmatpush1.msra.mxu0 %v3937
    %6412 = vmatprep.subr.mxu0 %v3954
    %6413 = vmatpush1.msra.mxu0 %v3953
    %6414 = vmatprep.subr.mxu0 %v3970
    %6415 = vmatpush1.msra.mxu0 %v3969
    %6416 = vmatprep.subr.mxu0 %v3986
    %6417 = vmatpush1.msra.mxu0 %v3985
    %6418 = vmatprep.subr.mxu0 %v4002
    %6419 = vmatpush1.msra.mxu0 %v4001
    %6420 = vmatprep.subr.mxu0 %v4018
    %6421 = vmatpush1.msra.mxu0 %v4017
    %6422 = vmatprep.subr.mxu0 %v4034
    %6423 = vmatpush1.msra.mxu0 %v4033
    %6424 = vmatprep.subr.mxu0 %v4050
    %6425 = vmatpush1.msra.mxu0 %v4049
    %6426 = vmatprep.subr.mxu0 %v4066
    %6427 = vmatpush1.msra.mxu0 %v4065
    %6428 = vmatprep.subr.mxu0 %v4082
    %6429 = vmatpush1.msra.mxu0 %v4081
    %6430 = vmatprep.subr.mxu0 0.0
    %6431 = vmatpush1.msra.mxu0 0.0
    %6432 = vmatprep.subr.mxu0 0.0
    %6433 = vmatpush1.msra.mxu0 0.0
    %6434 = vmatprep.subr.mxu0 0.0
    %6435 = vmatpush1.msra.mxu0 0.0
    %6436 = vmatprep.mubr.f32.mxu0 %v4169
    %6437 = vmatmul.mubr.f32.gmra.mrb[0].mxu0 %v2081
    %v6438 = vpop.f32.mrb[0].mxu0
    %v6439 = vadd.f32 %v6368, %v6438
    %v6440 = vpop.f32.mrb[0].mxu0
    %v6441 = vadd.f32 %v6370, %v6440
    %6442 = vdwg.mxu0
    %v6443 = vmax.f32 %v4451, 0.0
    %v6444 = vmax.f32 %v4453, 0.0
    %v6445 = vmax.f32 %v4735, 0.0
    %v6446 = vmax.f32 %v4737, 0.0
    %v6447 = vmax.f32 %v5019, 0.0
    %v6448 = vmax.f32 %v5021, 0.0
    %v6449 = vmax.f32 %v5303, 0.0
    %v6450 = vmax.f32 %v5305, 0.0
    %v6451 = vmax.f32 %v5587, 0.0
    %v6452 = vmax.f32 %v5589, 0.0
    %v6453 = vmax.f32 %v5871, 0.0
    %v6454 = vmax.f32 %v5873, 0.0
    %v6455 = vmax.f32 %v6155, 0.0
    %v6456 = vmax.f32 %v6157, 0.0
    %v6457 = vmax.f32 %v6439, 0.0
    %v6458 = vmax.f32 %v6441, 0.0
    %v6459 = vld [vmem:[#allocation9] sm:$0xff]
    %v6460 = vld [vmem:[#allocation9 + $0x8] sm:$0xff]
    %v6461 = vld [vmem:[#allocation9 + $0x10] sm:$0xff]
    %v6462 = vld [vmem:[#allocation9 + $0x18] sm:$0xff]
    %v6463 = vld [vmem:[#allocation9 + $0x20] sm:$0xff]
    %v6464 = vld [vmem:[#allocation9 + $0x28] sm:$0xff]
    %v6465 = vld [vmem:[#allocation9 + $0x30] sm:$0xff]
    %v6466 = vld [vmem:[#allocation9 + $0x38] sm:$0xff]
    %v6467 = vld [vmem:[#allocation9 + $0x40] sm:$0xff]
    %v6468 = vld [vmem:[#allocation9 + $0x48] sm:$0xff]
    %v6469 = vld [vmem:[#allocation9 + $0x50] sm:$0xff]
    %v6470 = vld [vmem:[#allocation9 + $0x58] sm:$0xff]
    %v6471 = vld [vmem:[#allocation9 + $0x60] sm:$0xff]
    %v6472 = vld [vmem:[#allocation9 + $0x68] sm:$0xff]
    %v6473 = vld [vmem:[#allocation9 + $0x70] sm:$0xff]
    %v6474 = vld [vmem:[#allocation9 + $0x78] sm:$0xff]
    %v6475 = vld [vmem:[#allocation9 + $0x80] sm:$0xff]
    %v6476 = vld [vmem:[#allocation9 + $0x88] sm:$0xff]
    %v6477 = vld [vmem:[#allocation9 + $0x90] sm:$0xff]
    %v6478 = vld [vmem:[#allocation9 + $0x98] sm:$0xff]
    %v6479 = vld [vmem:[#allocation9 + $0xa0] sm:$0xff]
    %v6480 = vld [vmem:[#allocation9 + $0xa8] sm:$0xff]
    %v6481 = vld [vmem:[#allocation9 + $0xb0] sm:$0xff]
    %v6482 = vld [vmem:[#allocation9 + $0xb8] sm:$0xff]
    %v6483 = vld [vmem:[#allocation9 + $0xc0] sm:$0xff]
    %v6484 = vld [vmem:[#allocation9 + $0xc8] sm:$0xff]
    %v6485 = vld [vmem:[#allocation9 + $0xd0] sm:$0xff]
    %v6486 = vld [vmem:[#allocation9 + $0xd8] sm:$0xff]
    %v6487 = vld [vmem:[#allocation9 + $0xe0] sm:$0xff]
    %v6488 = vld [vmem:[#allocation9 + $0xe8] sm:$0xff]
    %v6489 = vld [vmem:[#allocation9 + $0xf0] sm:$0xff]
    %v6490 = vld [vmem:[#allocation9 + $0xf8] sm:$0xff]
    %v6491 = vld [vmem:[#allocation9 + $0x100] sm:$0xff]
    %v6492 = vld [vmem:[#allocation9 + $0x108] sm:$0xff]
    %v6493 = vld [vmem:[#allocation9 + $0x110] sm:$0xff]
    %v6494 = vld [vmem:[#allocation9 + $0x118] sm:$0xff]
    %v6495 = vld [vmem:[#allocation9 + $0x120] sm:$0xff]
    %v6496 = vld [vmem:[#allocation9 + $0x128] sm:$0xff]
    %v6497 = vld [vmem:[#allocation9 + $0x130] sm:$0xff]
    %v6498 = vld [vmem:[#allocation9 + $0x138] sm:$0xff]
    %v6499 = vld [vmem:[#allocation9 + $0x140] sm:$0xff]
    %v6500 = vld [vmem:[#allocation9 + $0x148] sm:$0xff]
    %v6501 = vld [vmem:[#allocation9 + $0x150] sm:$0xff]
    %v6502 = vld [vmem:[#allocation9 + $0x158] sm:$0xff]
    %v6503 = vld [vmem:[#allocation9 + $0x160] sm:$0xff]
    %v6504 = vld [vmem:[#allocation9 + $0x168] sm:$0xff]
    %v6505 = vld [vmem:[#allocation9 + $0x170] sm:$0xff]
    %v6506 = vld [vmem:[#allocation9 + $0x178] sm:$0xff]
    %v6507 = vld [vmem:[#allocation9 + $0x180] sm:$0xff]
    %v6508 = vld [vmem:[#allocation9 + $0x188] sm:$0xff]
    %v6509 = vld [vmem:[#allocation9 + $0x190] sm:$0xff]
    %v6510 = vld [vmem:[#allocation9 + $0x198] sm:$0xff]
    %v6511 = vld [vmem:[#allocation9 + $0x1a0] sm:$0xff]
    %v6512 = vld [vmem:[#allocation9 + $0x1a8] sm:$0xff]
    %v6513 = vld [vmem:[#allocation9 + $0x1b0] sm:$0xff]
    %v6514 = vld [vmem:[#allocation9 + $0x1b8] sm:$0xff]
    %v6515 = vld [vmem:[#allocation9 + $0x1c0] sm:$0xff]
    %v6516 = vld [vmem:[#allocation9 + $0x1c8] sm:$0xff]
    %v6517 = vld [vmem:[#allocation9 + $0x1d0] sm:$0xff]
    %v6518 = vld [vmem:[#allocation9 + $0x1d8] sm:$0xff]
    %v6519 = vld [vmem:[#allocation9 + $0x1e0] sm:$0xff]
    %v6520 = vld [vmem:[#allocation9 + $0x1e8] sm:$0xff]
    %v6521 = vld [vmem:[#allocation9 + $0x1f0] sm:$0xff]
    %v6522 = vld [vmem:[#allocation9 + $0x1f8] sm:$0xff]
    %v6523 = vld [vmem:[#allocation9 + $0x200] sm:$0xff]
    %v6524 = vld [vmem:[#allocation9 + $0x208] sm:$0xff]
    %v6525 = vld [vmem:[#allocation9 + $0x210] sm:$0xff]
    %v6526 = vld [vmem:[#allocation9 + $0x218] sm:$0xff]
    %v6527 = vld [vmem:[#allocation9 + $0x220] sm:$0xff]
    %v6528 = vld [vmem:[#allocation9 + $0x228] sm:$0xff]
    %v6529 = vld [vmem:[#allocation9 + $0x230] sm:$0xff]
    %v6530 = vld [vmem:[#allocation9 + $0x238] sm:$0xff]
    %v6531 = vld [vmem:[#allocation9 + $0x240] sm:$0xff]
    %v6532 = vld [vmem:[#allocation9 + $0x248] sm:$0xff]
    %v6533 = vld [vmem:[#allocation9 + $0x250] sm:$0xff]
    %v6534 = vld [vmem:[#allocation9 + $0x258] sm:$0xff]
    %v6535 = vld [vmem:[#allocation9 + $0x260] sm:$0xff]
    %v6536 = vld [vmem:[#allocation9 + $0x268] sm:$0xff]
    %v6537 = vld [vmem:[#allocation9 + $0x270] sm:$0xff]
    %v6538 = vld [vmem:[#allocation9 + $0x278] sm:$0xff]
    %v6539 = vld [vmem:[#allocation9 + $0x280] sm:$0xff]
    %v6540 = vld [vmem:[#allocation9 + $0x288] sm:$0xff]
    %v6541 = vld [vmem:[#allocation9 + $0x290] sm:$0xff]
    %v6542 = vld [vmem:[#allocation9 + $0x298] sm:$0xff]
    %v6543 = vld [vmem:[#allocation9 + $0x2a0] sm:$0xff]
    %v6544 = vld [vmem:[#allocation9 + $0x2a8] sm:$0xff]
    %v6545 = vld [vmem:[#allocation9 + $0x2b0] sm:$0xff]
    %v6546 = vld [vmem:[#allocation9 + $0x2b8] sm:$0xff]
    %v6547 = vld [vmem:[#allocation9 + $0x2c0] sm:$0xff]
    %v6548 = vld [vmem:[#allocation9 + $0x2c8] sm:$0xff]
    %v6549 = vld [vmem:[#allocation9 + $0x2d0] sm:$0xff]
    %v6550 = vld [vmem:[#allocation9 + $0x2d8] sm:$0xff]
    %v6551 = vld [vmem:[#allocation9 + $0x2e0] sm:$0xff]
    %v6552 = vld [vmem:[#allocation9 + $0x2e8] sm:$0xff]
    %v6553 = vld [vmem:[#allocation9 + $0x2f0] sm:$0xff]
    %v6554 = vld [vmem:[#allocation9 + $0x2f8] sm:$0xff]
    %v6555 = vld [vmem:[#allocation9 + $0x300] sm:$0xff]
    %v6556 = vld [vmem:[#allocation9 + $0x308] sm:$0xff]
    %v6557 = vld [vmem:[#allocation9 + $0x310] sm:$0xff]
    %v6558 = vld [vmem:[#allocation9 + $0x318] sm:$0xff]
    %v6559 = vld [vmem:[#allocation9 + $0x320] sm:$0xff]
    %v6560 = vld [vmem:[#allocation9 + $0x328] sm:$0xff]
    %v6561 = vld [vmem:[#allocation9 + $0x330] sm:$0xff]
    %v6562 = vld [vmem:[#allocation9 + $0x338] sm:$0xff]
    %v6563 = vld [vmem:[#allocation9 + $0x340] sm:$0xff]
    %v6564 = vld [vmem:[#allocation9 + $0x348] sm:$0xff]
    %v6565 = vld [vmem:[#allocation9 + $0x350] sm:$0xff]
    %v6566 = vld [vmem:[#allocation9 + $0x358] sm:$0xff]
    %v6567 = vld [vmem:[#allocation9 + $0x360] sm:$0xff]
    %v6568 = vld [vmem:[#allocation9 + $0x368] sm:$0xff]
    %v6569 = vld [vmem:[#allocation9 + $0x370] sm:$0xff]
    %v6570 = vld [vmem:[#allocation9 + $0x378] sm:$0xff]
    %v6571 = vld [vmem:[#allocation9 + $0x380] sm:$0xff]
    %v6572 = vld [vmem:[#allocation9 + $0x388] sm:$0xff]
    %v6573 = vld [vmem:[#allocation9 + $0x390] sm:$0xff]
    %v6574 = vld [vmem:[#allocation9 + $0x398] sm:$0xff]
    %v6575 = vld [vmem:[#allocation9 + $0x3a0] sm:$0xff]
    %v6576 = vld [vmem:[#allocation9 + $0x3a8] sm:$0xff]
    %v6577 = vld [vmem:[#allocation9 + $0x3b0] sm:$0xff]
    %v6578 = vld [vmem:[#allocation9 + $0x3b8] sm:$0xff]
    %v6579 = vld [vmem:[#allocation9 + $0x3c0] sm:$0xff]
    %v6580 = vld [vmem:[#allocation9 + $0x3c8] sm:$0xff]
    %v6581 = vld [vmem:[#allocation9 + $0x3d0] sm:$0xff]
    %v6582 = vld [vmem:[#allocation9 + $0x3d8] sm:$0xff]
    %v6583 = vld [vmem:[#allocation9 + $0x3e0] sm:$0xff]
    %v6584 = vld [vmem:[#allocation9 + $0x3e8] sm:$0xff]
    %v6585 = vld [vmem:[#allocation9 + $0x3f0] sm:$0xff]
    %v6586 = vld [vmem:[#allocation9 + $0x3f8] sm:$0xff]
    %v6587 = vld [vmem:[#allocation9 + $0x400] sm:$0xff]
    %v6588 = vld [vmem:[#allocation9 + $0x408] sm:$0xff]
    %v6589 = vld [vmem:[#allocation9 + $0x410] sm:$0xff]
    %v6590 = vld [vmem:[#allocation9 + $0x418] sm:$0xff]
    %v6591 = vld [vmem:[#allocation9 + $0x420] sm:$0xff]
    %v6592 = vld [vmem:[#allocation9 + $0x428] sm:$0xff]
    %v6593 = vld [vmem:[#allocation9 + $0x430] sm:$0xff]
    %v6594 = vld [vmem:[#allocation9 + $0x438] sm:$0xff]
    %v6595 = vld [vmem:[#allocation9 + $0x440] sm:$0xff]
    %v6596 = vld [vmem:[#allocation9 + $0x448] sm:$0xff]
    %v6597 = vld [vmem:[#allocation9 + $0x450] sm:$0xff]
    %v6598 = vld [vmem:[#allocation9 + $0x458] sm:$0xff]
    %v6599 = vld [vmem:[#allocation9 + $0x460] sm:$0xff]
    %v6600 = vld [vmem:[#allocation9 + $0x468] sm:$0xff]
    %v6601 = vld [vmem:[#allocation9 + $0x470] sm:$0xff]
    %v6602 = vld [vmem:[#allocation9 + $0x478] sm:$0xff]
    %v6603 = vld [vmem:[#allocation9 + $0x480] sm:$0xff]
    %v6604 = vld [vmem:[#allocation9 + $0x488] sm:$0xff]
    %v6605 = vld [vmem:[#allocation9 + $0x490] sm:$0xff]
    %v6606 = vld [vmem:[#allocation9 + $0x498] sm:$0xff]
    %v6607 = vld [vmem:[#allocation9 + $0x4a0] sm:$0xff]
    %v6608 = vld [vmem:[#allocation9 + $0x4a8] sm:$0xff]
    %v6609 = vld [vmem:[#allocation9 + $0x4b0] sm:$0xff]
    %v6610 = vld [vmem:[#allocation9 + $0x4b8] sm:$0xff]
    %v6611 = vld [vmem:[#allocation9 + $0x4c0] sm:$0xff]
    %v6612 = vld [vmem:[#allocation9 + $0x4c8] sm:$0xff]
    %v6613 = vld [vmem:[#allocation9 + $0x4d0] sm:$0xff]
    %v6614 = vld [vmem:[#allocation9 + $0x4d8] sm:$0xff]
    %v6615 = vld [vmem:[#allocation9 + $0x4e0] sm:$0xff]
    %v6616 = vld [vmem:[#allocation9 + $0x4e8] sm:$0xff]
    %v6617 = vld [vmem:[#allocation9 + $0x4f0] sm:$0xff]
    %v6618 = vld [vmem:[#allocation9 + $0x4f8] sm:$0xff]
    %v6619 = vld [vmem:[#allocation9 + $0x500] sm:$0xff]
    %v6620 = vld [vmem:[#allocation9 + $0x508] sm:$0xff]
    %v6621 = vld [vmem:[#allocation9 + $0x510] sm:$0xff]
    %v6622 = vld [vmem:[#allocation9 + $0x518] sm:$0xff]
    %v6623 = vld [vmem:[#allocation9 + $0x520] sm:$0xff]
    %v6624 = vld [vmem:[#allocation9 + $0x528] sm:$0xff]
    %v6625 = vld [vmem:[#allocation9 + $0x530] sm:$0xff]
    %v6626 = vld [vmem:[#allocation9 + $0x538] sm:$0xff]
    %v6627 = vld [vmem:[#allocation9 + $0x540] sm:$0xff]
    %v6628 = vld [vmem:[#allocation9 + $0x548] sm:$0xff]
    %v6629 = vld [vmem:[#allocation9 + $0x550] sm:$0xff]
    %v6630 = vld [vmem:[#allocation9 + $0x558] sm:$0xff]
    %v6631 = vld [vmem:[#allocation9 + $0x560] sm:$0xff]
    %v6632 = vld [vmem:[#allocation9 + $0x568] sm:$0xff]
    %v6633 = vld [vmem:[#allocation9 + $0x570] sm:$0xff]
    %v6634 = vld [vmem:[#allocation9 + $0x578] sm:$0xff]
    %v6635 = vld [vmem:[#allocation9 + $0x580] sm:$0xff]
    %v6636 = vld [vmem:[#allocation9 + $0x588] sm:$0xff]
    %v6637 = vld [vmem:[#allocation9 + $0x590] sm:$0xff]
    %v6638 = vld [vmem:[#allocation9 + $0x598] sm:$0xff]
    %v6639 = vld [vmem:[#allocation9 + $0x5a0] sm:$0xff]
    %v6640 = vld [vmem:[#allocation9 + $0x5a8] sm:$0xff]
    %v6641 = vld [vmem:[#allocation9 + $0x5b0] sm:$0xff]
    %v6642 = vld [vmem:[#allocation9 + $0x5b8] sm:$0xff]
    %v6643 = vld [vmem:[#allocation9 + $0x5c0] sm:$0xff]
    %v6644 = vld [vmem:[#allocation9 + $0x5c8] sm:$0xff]
    %v6645 = vld [vmem:[#allocation9 + $0x5d0] sm:$0xff]
    %v6646 = vld [vmem:[#allocation9 + $0x5d8] sm:$0xff]
    %v6647 = vld [vmem:[#allocation9 + $0x5e0] sm:$0xff]
    %v6648 = vld [vmem:[#allocation9 + $0x5e8] sm:$0xff]
    %v6649 = vld [vmem:[#allocation9 + $0x5f0] sm:$0xff]
    %v6650 = vld [vmem:[#allocation9 + $0x5f8] sm:$0xff]
    %v6651 = vld [vmem:[#allocation9 + $0x600] sm:$0xff]
    %v6652 = vld [vmem:[#allocation9 + $0x608] sm:$0xff]
    %v6653 = vld [vmem:[#allocation9 + $0x610] sm:$0xff]
    %v6654 = vld [vmem:[#allocation9 + $0x618] sm:$0xff]
    %v6655 = vld [vmem:[#allocation9 + $0x620] sm:$0xff]
    %v6656 = vld [vmem:[#allocation9 + $0x628] sm:$0xff]
    %v6657 = vld [vmem:[#allocation9 + $0x630] sm:$0xff]
    %v6658 = vld [vmem:[#allocation9 + $0x638] sm:$0xff]
    %v6659 = vld [vmem:[#allocation9 + $0x640] sm:$0xff]
    %v6660 = vld [vmem:[#allocation9 + $0x648] sm:$0xff]
    %v6661 = vld [vmem:[#allocation9 + $0x650] sm:$0xff]
    %v6662 = vld [vmem:[#allocation9 + $0x658] sm:$0xff]
    %v6663 = vld [vmem:[#allocation9 + $0x660] sm:$0xff]
    %v6664 = vld [vmem:[#allocation9 + $0x668] sm:$0xff]
    %v6665 = vld [vmem:[#allocation9 + $0x670] sm:$0xff]
    %v6666 = vld [vmem:[#allocation9 + $0x678] sm:$0xff]
    %v6667 = vld [vmem:[#allocation9 + $0x680] sm:$0xff]
    %v6668 = vld [vmem:[#allocation9 + $0x688] sm:$0xff]
    %v6669 = vld [vmem:[#allocation9 + $0x690] sm:$0xff]
    %v6670 = vld [vmem:[#allocation9 + $0x698] sm:$0xff]
    %v6671 = vld [vmem:[#allocation9 + $0x6a0] sm:$0xff]
    %v6672 = vld [vmem:[#allocation9 + $0x6a8] sm:$0xff]
    %v6673 = vld [vmem:[#allocation9 + $0x6b0] sm:$0xff]
    %v6674 = vld [vmem:[#allocation9 + $0x6b8] sm:$0xff]
    %v6675 = vld [vmem:[#allocation9 + $0x6c0] sm:$0xff]
    %v6676 = vld [vmem:[#allocation9 + $0x6c8] sm:$0xff]
    %v6677 = vld [vmem:[#allocation9 + $0x6d0] sm:$0xff]
    %v6678 = vld [vmem:[#allocation9 + $0x6d8] sm:$0xff]
    %v6679 = vld [vmem:[#allocation9 + $0x6e0] sm:$0xff]
    %v6680 = vld [vmem:[#allocation9 + $0x6e8] sm:$0xff]
    %v6681 = vld [vmem:[#allocation9 + $0x6f0] sm:$0xff]
    %v6682 = vld [vmem:[#allocation9 + $0x6f8] sm:$0xff]
    %v6683 = vld [vmem:[#allocation9 + $0x700] sm:$0xff]
    %v6684 = vld [vmem:[#allocation9 + $0x708] sm:$0xff]
    %v6685 = vld [vmem:[#allocation9 + $0x710] sm:$0xff]
    %v6686 = vld [vmem:[#allocation9 + $0x718] sm:$0xff]
    %v6687 = vld [vmem:[#allocation9 + $0x720] sm:$0xff]
    %v6688 = vld [vmem:[#allocation9 + $0x728] sm:$0xff]
    %v6689 = vld [vmem:[#allocation9 + $0x730] sm:$0xff]
    %v6690 = vld [vmem:[#allocation9 + $0x738] sm:$0xff]
    %v6691 = vld [vmem:[#allocation9 + $0x740] sm:$0xff]
    %v6692 = vld [vmem:[#allocation9 + $0x748] sm:$0xff]
    %v6693 = vld [vmem:[#allocation9 + $0x750] sm:$0xff]
    %v6694 = vld [vmem:[#allocation9 + $0x758] sm:$0xff]
    %v6695 = vld [vmem:[#allocation9 + $0x760] sm:$0xff]
    %v6696 = vld [vmem:[#allocation9 + $0x768] sm:$0xff]
    %v6697 = vld [vmem:[#allocation9 + $0x770] sm:$0xff]
    %v6698 = vld [vmem:[#allocation9 + $0x778] sm:$0xff]
    %v6699 = vld [vmem:[#allocation9 + $0x780] sm:$0xff]
    %v6700 = vld [vmem:[#allocation9 + $0x788] sm:$0xff]
    %v6701 = vld [vmem:[#allocation9 + $0x790] sm:$0xff]
    %v6702 = vld [vmem:[#allocation9 + $0x798] sm:$0xff]
    %v6703 = vld [vmem:[#allocation9 + $0x7a0] sm:$0xff]
    %v6704 = vld [vmem:[#allocation9 + $0x7a8] sm:$0xff]
    %v6705 = vld [vmem:[#allocation9 + $0x7b0] sm:$0xff]
    %v6706 = vld [vmem:[#allocation9 + $0x7b8] sm:$0xff]
    %v6707 = vld [vmem:[#allocation9 + $0x7c0] sm:$0xff]
    %v6708 = vld [vmem:[#allocation9 + $0x7c8] sm:$0xff]
    %v6709 = vld [vmem:[#allocation10] sm:$0x1]
    %v6711 = vlaneseq
    %v6712 = vshrl.u32 %v6711, 7
    %v6713 = vsub.s32 0, %v6712
    %v6714 = vrot.slane %v6709, %v6713
    %vm6716 = vcmask 654336
    %v6718 = vsel %vm6716, %v6458, 0
    %6720 = vmatprep.subr.mxu0 0.0
    %6721 = vmatpush1.msra.mxu0 %v6459
    %6722 = vmatprep.subr.mxu0 0.0
    %6723 = vmatpush1.msra.mxu0 %v6460
    %6724 = vmatprep.subr.mxu0 0.0
    %6725 = vmatpush1.msra.mxu0 %v6461
    %6726 = vmatprep.subr.mxu0 0.0
    %6727 = vmatpush1.msra.mxu0 %v6462
    %6728 = vmatprep.subr.mxu0 0.0
    %6729 = vmatpush1.msra.mxu0 %v6463
    %6730 = vmatprep.subr.mxu0 0.0
    %6731 = vmatpush1.msra.mxu0 %v6464
    %6732 = vmatprep.subr.mxu0 0.0
    %6733 = vmatpush1.msra.mxu0 %v6465
    %6734 = vmatprep.subr.mxu0 0.0
    %6735 = vmatpush1.msra.mxu0 %v6466
    %6736 = vmatprep.subr.mxu0 0.0
    %6737 = vmatpush1.msra.mxu0 %v6467
    %6738 = vmatprep.subr.mxu0 0.0
    %6739 = vmatpush1.msra.mxu0 %v6468
    %6740 = vmatprep.subr.mxu0 0.0
    %6741 = vmatpush1.msra.mxu0 %v6469
    %6742 = vmatprep.subr.mxu0 0.0
    %6743 = vmatpush1.msra.mxu0 %v6470
    %6744 = vmatprep.subr.mxu0 0.0
    %6745 = vmatpush1.msra.mxu0 %v6471
    %6746 = vmatprep.subr.mxu0 0.0
    %6747 = vmatpush1.msra.mxu0 %v6472
    %6748 = vmatprep.subr.mxu0 0.0
    %6749 = vmatpush1.msra.mxu0 %v6473
    %6750 = vmatprep.subr.mxu0 0.0
    %6751 = vmatpush1.msra.mxu0 %v6474
    %6752 = vmatprep.subr.mxu0 0.0
    %6753 = vmatpush1.msra.mxu0 %v6475
    %6754 = vmatprep.subr.mxu0 0.0
    %6755 = vmatpush1.msra.mxu0 %v6476
    %6756 = vmatprep.subr.mxu0 0.0
    %6757 = vmatpush1.msra.mxu0 %v6477
    %6758 = vmatprep.subr.mxu0 0.0
    %6759 = vmatpush1.msra.mxu0 %v6478
    %6760 = vmatprep.subr.mxu0 0.0
    %6761 = vmatpush1.msra.mxu0 %v6479
    %6762 = vmatprep.subr.mxu0 0.0
    %6763 = vmatpush1.msra.mxu0 %v6480
    %6764 = vmatprep.subr.mxu0 0.0
    %6765 = vmatpush1.msra.mxu0 %v6481
    %6766 = vmatprep.subr.mxu0 0.0
    %6767 = vmatpush1.msra.mxu0 %v6482
    %6768 = vmatprep.subr.mxu0 0.0
    %6769 = vmatpush1.msra.mxu0 %v6483
    %6770 = vmatprep.subr.mxu0 0.0
    %6771 = vmatpush1.msra.mxu0 %v6484
    %6772 = vmatprep.subr.mxu0 0.0
    %6773 = vmatpush1.msra.mxu0 %v6485
    %6774 = vmatprep.subr.mxu0 0.0
    %6775 = vmatpush1.msra.mxu0 %v6486
    %6776 = vmatprep.subr.mxu0 0.0
    %6777 = vmatpush1.msra.mxu0 %v6487
    %6778 = vmatprep.subr.mxu0 0.0
    %6779 = vmatpush1.msra.mxu0 %v6488
    %6780 = vmatprep.subr.mxu0 0.0
    %6781 = vmatpush1.msra.mxu0 %v6489
    %6782 = vmatprep.subr.mxu0 0.0
    %6783 = vmatpush1.msra.mxu0 %v6490
    %6784 = vmatprep.mubr.f32.mxu0 %v6444
    %6785 = vmatmul.mubr.f32.gmra.mrb[0].mxu0 %v6443
    %v6786 = vpop.f32.mrb[0].mxu0
    %v6787 = vadd.f32 %v6714, %v6786
    %v6788 = vpop.f32.mrb[0].mxu0
    %6789 = vdwg.mxu0
    %6790 = vmatprep.subr.mxu0 0.0
    %6791 = vmatpush1.msra.mxu0 %v6491
    %6792 = vmatprep.subr.mxu0 0.0
    %6793 = vmatpush1.msra.mxu0 %v6492
    %6794 = vmatprep.subr.mxu0 0.0
    %6795 = vmatpush1.msra.mxu0 %v6493
    %6796 = vmatprep.subr.mxu0 0.0
    %6797 = vmatpush1.msra.mxu0 %v6494
    %6798 = vmatprep.subr.mxu0 0.0
    %6799 = vmatpush1.msra.mxu0 %v6495
    %6800 = vmatprep.subr.mxu0 0.0
    %6801 = vmatpush1.msra.mxu0 %v6496
    %6802 = vmatprep.subr.mxu0 0.0
    %6803 = vmatpush1.msra.mxu0 %v6497
    %6804 = vmatprep.subr.mxu0 0.0
    %6805 = vmatpush1.msra.mxu0 %v6498
    %6806 = vmatprep.subr.mxu0 0.0
    %6807 = vmatpush1.msra.mxu0 %v6499
    %6808 = vmatprep.subr.mxu0 0.0
    %6809 = vmatpush1.msra.mxu0 %v6500
    %6810 = vmatprep.subr.mxu0 0.0
    %6811 = vmatpush1.msra.mxu0 %v6501
    %6812 = vmatprep.subr.mxu0 0.0
    %6813 = vmatpush1.msra.mxu0 %v6502
    %6814 = vmatprep.subr.mxu0 0.0
    %6815 = vmatpush1.msra.mxu0 %v6503
    %6816 = vmatprep.subr.mxu0 0.0
    %6817 = vmatpush1.msra.mxu0 %v6504
    %6818 = vmatprep.subr.mxu0 0.0
    %6819 = vmatpush1.msra.mxu0 %v6505
    %6820 = vmatprep.subr.mxu0 0.0
    %6821 = vmatpush1.msra.mxu0 %v6506
    %6822 = vmatprep.subr.mxu0 0.0
    %6823 = vmatpush1.msra.mxu0 %v6507
    %6824 = vmatprep.subr.mxu0 0.0
    %6825 = vmatpush1.msra.mxu0 %v6508
    %6826 = vmatprep.subr.mxu0 0.0
    %6827 = vmatpush1.msra.mxu0 %v6509
    %6828 = vmatprep.subr.mxu0 0.0
    %6829 = vmatpush1.msra.mxu0 %v6510
    %6830 = vmatprep.subr.mxu0 0.0
    %6831 = vmatpush1.msra.mxu0 %v6511
    %6832 = vmatprep.subr.mxu0 0.0
    %6833 = vmatpush1.msra.mxu0 %v6512
    %6834 = vmatprep.subr.mxu0 0.0
    %6835 = vmatpush1.msra.mxu0 %v6513
    %6836 = vmatprep.subr.mxu0 0.0
    %6837 = vmatpush1.msra.mxu0 %v6514
    %6838 = vmatprep.subr.mxu0 0.0
    %6839 = vmatpush1.msra.mxu0 %v6515
    %6840 = vmatprep.subr.mxu0 0.0
    %6841 = vmatpush1.msra.mxu0 %v6516
    %6842 = vmatprep.subr.mxu0 0.0
    %6843 = vmatpush1.msra.mxu0 %v6517
    %6844 = vmatprep.subr.mxu0 0.0
    %6845 = vmatpush1.msra.mxu0 %v6518
    %6846 = vmatprep.subr.mxu0 0.0
    %6847 = vmatpush1.msra.mxu0 %v6519
    %6848 = vmatprep.subr.mxu0 0.0
    %6849 = vmatpush1.msra.mxu0 %v6520
    %6850 = vmatprep.subr.mxu0 0.0
    %6851 = vmatpush1.msra.mxu0 %v6521
    %6852 = vmatprep.subr.mxu0 0.0
    %6853 = vmatpush1.msra.mxu0 %v6522
    %6854 = vmatprep.mubr.f32.mxu0 %v6446
    %6855 = vmatmul.mubr.f32.gmra.mrb[0].mxu0 %v6445
    %v6856 = vpop.f32.mrb[0].mxu0
    %v6857 = vadd.f32 %v6787, %v6856
    %v6858 = vpop.f32.mrb[0].mxu0
    %6859 = vdwg.mxu0
    %6860 = vmatprep.subr.mxu0 0.0
    %6861 = vmatpush1.msra.mxu0 %v6523
    %6862 = vmatprep.subr.mxu0 0.0
    %6863 = vmatpush1.msra.mxu0 %v6524
    %6864 = vmatprep.subr.mxu0 0.0
    %6865 = vmatpush1.msra.mxu0 %v6525
    %6866 = vmatprep.subr.mxu0 0.0
    %6867 = vmatpush1.msra.mxu0 %v6526
    %6868 = vmatprep.subr.mxu0 0.0
    %6869 = vmatpush1.msra.mxu0 %v6527
    %6870 = vmatprep.subr.mxu0 0.0
    %6871 = vmatpush1.msra.mxu0 %v6528
    %6872 = vmatprep.subr.mxu0 0.0
    %6873 = vmatpush1.msra.mxu0 %v6529
    %6874 = vmatprep.subr.mxu0 0.0
    %6875 = vmatpush1.msra.mxu0 %v6530
    %6876 = vmatprep.subr.mxu0 0.0
    %6877 = vmatpush1.msra.mxu0 %v6531
    %6878 = vmatprep.subr.mxu0 0.0
    %6879 = vmatpush1.msra.mxu0 %v6532
    %6880 = vmatprep.subr.mxu0 0.0
    %6881 = vmatpush1.msra.mxu0 %v6533
    %6882 = vmatprep.subr.mxu0 0.0
    %6883 = vmatpush1.msra.mxu0 %v6534
    %6884 = vmatprep.subr.mxu0 0.0
    %6885 = vmatpush1.msra.mxu0 %v6535
    %6886 = vmatprep.subr.mxu0 0.0
    %6887 = vmatpush1.msra.mxu0 %v6536
    %6888 = vmatprep.subr.mxu0 0.0
    %6889 = vmatpush1.msra.mxu0 %v6537
    %6890 = vmatprep.subr.mxu0 0.0
    %6891 = vmatpush1.msra.mxu0 %v6538
    %6892 = vmatprep.subr.mxu0 0.0
    %6893 = vmatpush1.msra.mxu0 %v6539
    %6894 = vmatprep.subr.mxu0 0.0
    %6895 = vmatpush1.msra.mxu0 %v6540
    %6896 = vmatprep.subr.mxu0 0.0
    %6897 = vmatpush1.msra.mxu0 %v6541
    %6898 = vmatprep.subr.mxu0 0.0
    %6899 = vmatpush1.msra.mxu0 %v6542
    %6900 = vmatprep.subr.mxu0 0.0
    %6901 = vmatpush1.msra.mxu0 %v6543
    %6902 = vmatprep.subr.mxu0 0.0
    %6903 = vmatpush1.msra.mxu0 %v6544
    %6904 = vmatprep.subr.mxu0 0.0
    %6905 = vmatpush1.msra.mxu0 %v6545
    %6906 = vmatprep.subr.mxu0 0.0
    %6907 = vmatpush1.msra.mxu0 %v6546
    %6908 = vmatprep.subr.mxu0 0.0
    %6909 = vmatpush1.msra.mxu0 %v6547
    %6910 = vmatprep.subr.mxu0 0.0
    %6911 = vmatpush1.msra.mxu0 %v6548
    %6912 = vmatprep.subr.mxu0 0.0
    %6913 = vmatpush1.msra.mxu0 %v6549
    %6914 = vmatprep.subr.mxu0 0.0
    %6915 = vmatpush1.msra.mxu0 %v6550
    %6916 = vmatprep.subr.mxu0 0.0
    %6917 = vmatpush1.msra.mxu0 %v6551
    %6918 = vmatprep.subr.mxu0 0.0
    %6919 = vmatpush1.msra.mxu0 %v6552
    %6920 = vmatprep.subr.mxu0 0.0
    %6921 = vmatpush1.msra.mxu0 %v6553
    %6922 = vmatprep.subr.mxu0 0.0
    %6923 = vmatpush1.msra.mxu0 %v6554
    %6924 = vmatprep.mubr.f32.mxu0 %v6448
    %6925 = vmatmul.mubr.f32.gmra.mrb[0].mxu0 %v6447
    %v6926 = vpop.f32.mrb[0].mxu0
    %v6927 = vadd.f32 %v6857, %v6926
    %v6928 = vpop.f32.mrb[0].mxu0
    %6929 = vdwg.mxu0
    %6930 = vmatprep.subr.mxu0 0.0
    %6931 = vmatpush1.msra.mxu0 %v6555
    %6932 = vmatprep.subr.mxu0 0.0
    %6933 = vmatpush1.msra.mxu0 %v6556
    %6934 = vmatprep.subr.mxu0 0.0
    %6935 = vmatpush1.msra.mxu0 %v6557
    %6936 = vmatprep.subr.mxu0 0.0
    %6937 = vmatpush1.msra.mxu0 %v6558
    %6938 = vmatprep.subr.mxu0 0.0
    %6939 = vmatpush1.msra.mxu0 %v6559
    %6940 = vmatprep.subr.mxu0 0.0
    %6941 = vmatpush1.msra.mxu0 %v6560
    %6942 = vmatprep.subr.mxu0 0.0
    %6943 = vmatpush1.msra.mxu0 %v6561
    %6944 = vmatprep.subr.mxu0 0.0
    %6945 = vmatpush1.msra.mxu0 %v6562
    %6946 = vmatprep.subr.mxu0 0.0
    %6947 = vmatpush1.msra.mxu0 %v6563
    %6948 = vmatprep.subr.mxu0 0.0
    %6949 = vmatpush1.msra.mxu0 %v6564
    %6950 = vmatprep.subr.mxu0 0.0
    %6951 = vmatpush1.msra.mxu0 %v6565
    %6952 = vmatprep.subr.mxu0 0.0
    %6953 = vmatpush1.msra.mxu0 %v6566
    %6954 = vmatprep.subr.mxu0 0.0
    %6955 = vmatpush1.msra.mxu0 %v6567
    %6956 = vmatprep.subr.mxu0 0.0
    %6957 = vmatpush1.msra.mxu0 %v6568
    %6958 = vmatprep.subr.mxu0 0.0
    %6959 = vmatpush1.msra.mxu0 %v6569
    %6960 = vmatprep.subr.mxu0 0.0
    %6961 = vmatpush1.msra.mxu0 %v6570
    %6962 = vmatprep.subr.mxu0 0.0
    %6963 = vmatpush1.msra.mxu0 %v6571
    %6964 = vmatprep.subr.mxu0 0.0
    %6965 = vmatpush1.msra.mxu0 %v6572
    %6966 = vmatprep.subr.mxu0 0.0
    %6967 = vmatpush1.msra.mxu0 %v6573
    %6968 = vmatprep.subr.mxu0 0.0
    %6969 = vmatpush1.msra.mxu0 %v6574
    %6970 = vmatprep.subr.mxu0 0.0
    %6971 = vmatpush1.msra.mxu0 %v6575
    %6972 = vmatprep.subr.mxu0 0.0
    %6973 = vmatpush1.msra.mxu0 %v6576
    %6974 = vmatprep.subr.mxu0 0.0
    %6975 = vmatpush1.msra.mxu0 %v6577
    %6976 = vmatprep.subr.mxu0 0.0
    %6977 = vmatpush1.msra.mxu0 %v6578
    %6978 = vmatprep.subr.mxu0 0.0
    %6979 = vmatpush1.msra.mxu0 %v6579
    %6980 = vmatprep.subr.mxu0 0.0
    %6981 = vmatpush1.msra.mxu0 %v6580
    %6982 = vmatprep.subr.mxu0 0.0
    %6983 = vmatpush1.msra.mxu0 %v6581
    %6984 = vmatprep.subr.mxu0 0.0
    %6985 = vmatpush1.msra.mxu0 %v6582
    %6986 = vmatprep.subr.mxu0 0.0
    %6987 = vmatpush1.msra.mxu0 %v6583
    %6988 = vmatprep.subr.mxu0 0.0
    %6989 = vmatpush1.msra.mxu0 %v6584
    %6990 = vmatprep.subr.mxu0 0.0
    %6991 = vmatpush1.msra.mxu0 %v6585
    %6992 = vmatprep.subr.mxu0 0.0
    %6993 = vmatpush1.msra.mxu0 %v6586
    %6994 = vmatprep.mubr.f32.mxu0 %v6450
    %6995 = vmatmul.mubr.f32.gmra.mrb[0].mxu0 %v6449
    %v6996 = vpop.f32.mrb[0].mxu0
    %v6997 = vadd.f32 %v6927, %v6996
    %v6998 = vpop.f32.mrb[0].mxu0
    %6999 = vdwg.mxu0
    %7000 = vmatprep.subr.mxu0 0.0
    %7001 = vmatpush1.msra.mxu0 %v6587
    %7002 = vmatprep.subr.mxu0 0.0
    %7003 = vmatpush1.msra.mxu0 %v6588
    %7004 = vmatprep.subr.mxu0 0.0
    %7005 = vmatpush1.msra.mxu0 %v6589
    %7006 = vmatprep.subr.mxu0 0.0
    %7007 = vmatpush1.msra.mxu0 %v6590
    %7008 = vmatprep.subr.mxu0 0.0
    %7009 = vmatpush1.msra.mxu0 %v6591
    %7010 = vmatprep.subr.mxu0 0.0
    %7011 = vmatpush1.msra.mxu0 %v6592
    %7012 = vmatprep.subr.mxu0 0.0
    %7013 = vmatpush1.msra.mxu0 %v6593
    %7014 = vmatprep.subr.mxu0 0.0
    %7015 = vmatpush1.msra.mxu0 %v6594
    %7016 = vmatprep.subr.mxu0 0.0
    %7017 = vmatpush1.msra.mxu0 %v6595
    %7018 = vmatprep.subr.mxu0 0.0
    %7019 = vmatpush1.msra.mxu0 %v6596
    %7020 = vmatprep.subr.mxu0 0.0
    %7021 = vmatpush1.msra.mxu0 %v6597
    %7022 = vmatprep.subr.mxu0 0.0
    %7023 = vmatpush1.msra.mxu0 %v6598
    %7024 = vmatprep.subr.mxu0 0.0
    %7025 = vmatpush1.msra.mxu0 %v6599
    %7026 = vmatprep.subr.mxu0 0.0
    %7027 = vmatpush1.msra.mxu0 %v6600
    %7028 = vmatprep.subr.mxu0 0.0
    %7029 = vmatpush1.msra.mxu0 %v6601
    %7030 = vmatprep.subr.mxu0 0.0
    %7031 = vmatpush1.msra.mxu0 %v6602
    %7032 = vmatprep.subr.mxu0 0.0
    %7033 = vmatpush1.msra.mxu0 %v6603
    %7034 = vmatprep.subr.mxu0 0.0
    %7035 = vmatpush1.msra.mxu0 %v6604
    %7036 = vmatprep.subr.mxu0 0.0
    %7037 = vmatpush1.msra.mxu0 %v6605
    %7038 = vmatprep.subr.mxu0 0.0
    %7039 = vmatpush1.msra.mxu0 %v6606
    %7040 = vmatprep.subr.mxu0 0.0
    %7041 = vmatpush1.msra.mxu0 %v6607
    %7042 = vmatprep.subr.mxu0 0.0
    %7043 = vmatpush1.msra.mxu0 %v6608
    %7044 = vmatprep.subr.mxu0 0.0
    %7045 = vmatpush1.msra.mxu0 %v6609
    %7046 = vmatprep.subr.mxu0 0.0
    %7047 = vmatpush1.msra.mxu0 %v6610
    %7048 = vmatprep.subr.mxu0 0.0
    %7049 = vmatpush1.msra.mxu0 %v6611
    %7050 = vmatprep.subr.mxu0 0.0
    %7051 = vmatpush1.msra.mxu0 %v6612
    %7052 = vmatprep.subr.mxu0 0.0
    %7053 = vmatpush1.msra.mxu0 %v6613
    %7054 = vmatprep.subr.mxu0 0.0
    %7055 = vmatpush1.msra.mxu0 %v6614
    %7056 = vmatprep.subr.mxu0 0.0
    %7057 = vmatpush1.msra.mxu0 %v6615
    %7058 = vmatprep.subr.mxu0 0.0
    %7059 = vmatpush1.msra.mxu0 %v6616
    %7060 = vmatprep.subr.mxu0 0.0
    %7061 = vmatpush1.msra.mxu0 %v6617
    %7062 = vmatprep.subr.mxu0 0.0
    %7063 = vmatpush1.msra.mxu0 %v6618
    %7064 = vmatprep.mubr.f32.mxu0 %v6452
    %7065 = vmatmul.mubr.f32.gmra.mrb[0].mxu0 %v6451
    %v7066 = vpop.f32.mrb[0].mxu0
    %v7067 = vadd.f32 %v6997, %v7066
    %v7068 = vpop.f32.mrb[0].mxu0
    %7069 = vdwg.mxu0
    %7070 = vmatprep.subr.mxu0 0.0
    %7071 = vmatpush1.msra.mxu0 %v6619
    %7072 = vmatprep.subr.mxu0 0.0
    %7073 = vmatpush1.msra.mxu0 %v6620
    %7074 = vmatprep.subr.mxu0 0.0
    %7075 = vmatpush1.msra.mxu0 %v6621
    %7076 = vmatprep.subr.mxu0 0.0
    %7077 = vmatpush1.msra.mxu0 %v6622
    %7078 = vmatprep.subr.mxu0 0.0
    %7079 = vmatpush1.msra.mxu0 %v6623
    %7080 = vmatprep.subr.mxu0 0.0
    %7081 = vmatpush1.msra.mxu0 %v6624
    %7082 = vmatprep.subr.mxu0 0.0
    %7083 = vmatpush1.msra.mxu0 %v6625
    %7084 = vmatprep.subr.mxu0 0.0
    %7085 = vmatpush1.msra.mxu0 %v6626
    %7086 = vmatprep.subr.mxu0 0.0
    %7087 = vmatpush1.msra.mxu0 %v6627
    %7088 = vmatprep.subr.mxu0 0.0
    %7089 = vmatpush1.msra.mxu0 %v6628
    %7090 = vmatprep.subr.mxu0 0.0
    %7091 = vmatpush1.msra.mxu0 %v6629
    %7092 = vmatprep.subr.mxu0 0.0
    %7093 = vmatpush1.msra.mxu0 %v6630
    %7094 = vmatprep.subr.mxu0 0.0
    %7095 = vmatpush1.msra.mxu0 %v6631
    %7096 = vmatprep.subr.mxu0 0.0
    %7097 = vmatpush1.msra.mxu0 %v6632
    %7098 = vmatprep.subr.mxu0 0.0
    %7099 = vmatpush1.msra.mxu0 %v6633
    %7100 = vmatprep.subr.mxu0 0.0
    %7101 = vmatpush1.msra.mxu0 %v6634
    %7102 = vmatprep.subr.mxu0 0.0
    %7103 = vmatpush1.msra.mxu0 %v6635
    %7104 = vmatprep.subr.mxu0 0.0
    %7105 = vmatpush1.msra.mxu0 %v6636
    %7106 = vmatprep.subr.mxu0 0.0
    %7107 = vmatpush1.msra.mxu0 %v6637
    %7108 = vmatprep.subr.mxu0 0.0
    %7109 = vmatpush1.msra.mxu0 %v6638
    %7110 = vmatprep.subr.mxu0 0.0
    %7111 = vmatpush1.msra.mxu0 %v6639
    %7112 = vmatprep.subr.mxu0 0.0
    %7113 = vmatpush1.msra.mxu0 %v6640
    %7114 = vmatprep.subr.mxu0 0.0
    %7115 = vmatpush1.msra.mxu0 %v6641
    %7116 = vmatprep.subr.mxu0 0.0
    %7117 = vmatpush1.msra.mxu0 %v6642
    %7118 = vmatprep.subr.mxu0 0.0
    %7119 = vmatpush1.msra.mxu0 %v6643
    %7120 = vmatprep.subr.mxu0 0.0
    %7121 = vmatpush1.msra.mxu0 %v6644
    %7122 = vmatprep.subr.mxu0 0.0
    %7123 = vmatpush1.msra.mxu0 %v6645
    %7124 = vmatprep.subr.mxu0 0.0
    %7125 = vmatpush1.msra.mxu0 %v6646
    %7126 = vmatprep.subr.mxu0 0.0
    %7127 = vmatpush1.msra.mxu0 %v6647
    %7128 = vmatprep.subr.mxu0 0.0
    %7129 = vmatpush1.msra.mxu0 %v6648
    %7130 = vmatprep.subr.mxu0 0.0
    %7131 = vmatpush1.msra.mxu0 %v6649
    %7132 = vmatprep.subr.mxu0 0.0
    %7133 = vmatpush1.msra.mxu0 %v6650
    %7134 = vmatprep.mubr.f32.mxu0 %v6454
    %7135 = vmatmul.mubr.f32.gmra.mrb[0].mxu0 %v6453
    %v7136 = vpop.f32.mrb[0].mxu0
    %v7137 = vadd.f32 %v7067, %v7136
    %v7138 = vpop.f32.mrb[0].mxu0
    %7139 = vdwg.mxu0
    %7140 = vmatprep.subr.mxu0 0.0
    %7141 = vmatpush1.msra.mxu0 %v6651
    %7142 = vmatprep.subr.mxu0 0.0
    %7143 = vmatpush1.msra.mxu0 %v6652
    %7144 = vmatprep.subr.mxu0 0.0
    %7145 = vmatpush1.msra.mxu0 %v6653
    %7146 = vmatprep.subr.mxu0 0.0
    %7147 = vmatpush1.msra.mxu0 %v6654
    %7148 = vmatprep.subr.mxu0 0.0
    %7149 = vmatpush1.msra.mxu0 %v6655
    %7150 = vmatprep.subr.mxu0 0.0
    %7151 = vmatpush1.msra.mxu0 %v6656
    %7152 = vmatprep.subr.mxu0 0.0
    %7153 = vmatpush1.msra.mxu0 %v6657
    %7154 = vmatprep.subr.mxu0 0.0
    %7155 = vmatpush1.msra.mxu0 %v6658
    %7156 = vmatprep.subr.mxu0 0.0
    %7157 = vmatpush1.msra.mxu0 %v6659
    %7158 = vmatprep.subr.mxu0 0.0
    %7159 = vmatpush1.msra.mxu0 %v6660
    %7160 = vmatprep.subr.mxu0 0.0
    %7161 = vmatpush1.msra.mxu0 %v6661
    %7162 = vmatprep.subr.mxu0 0.0
    %7163 = vmatpush1.msra.mxu0 %v6662
    %7164 = vmatprep.subr.mxu0 0.0
    %7165 = vmatpush1.msra.mxu0 %v6663
    %7166 = vmatprep.subr.mxu0 0.0
    %7167 = vmatpush1.msra.mxu0 %v6664
    %7168 = vmatprep.subr.mxu0 0.0
    %7169 = vmatpush1.msra.mxu0 %v6665
    %7170 = vmatprep.subr.mxu0 0.0
    %7171 = vmatpush1.msra.mxu0 %v6666
    %7172 = vmatprep.subr.mxu0 0.0
    %7173 = vmatpush1.msra.mxu0 %v6667
    %7174 = vmatprep.subr.mxu0 0.0
    %7175 = vmatpush1.msra.mxu0 %v6668
    %7176 = vmatprep.subr.mxu0 0.0
    %7177 = vmatpush1.msra.mxu0 %v6669
    %7178 = vmatprep.subr.mxu0 0.0
    %7179 = vmatpush1.msra.mxu0 %v6670
    %7180 = vmatprep.subr.mxu0 0.0
    %7181 = vmatpush1.msra.mxu0 %v6671
    %7182 = vmatprep.subr.mxu0 0.0
    %7183 = vmatpush1.msra.mxu0 %v6672
    %7184 = vmatprep.subr.mxu0 0.0
    %7185 = vmatpush1.msra.mxu0 %v6673
    %7186 = vmatprep.subr.mxu0 0.0
    %7187 = vmatpush1.msra.mxu0 %v6674
    %7188 = vmatprep.subr.mxu0 0.0
    %7189 = vmatpush1.msra.mxu0 %v6675
    %7190 = vmatprep.subr.mxu0 0.0
    %7191 = vmatpush1.msra.mxu0 %v6676
    %7192 = vmatprep.subr.mxu0 0.0
    %7193 = vmatpush1.msra.mxu0 %v6677
    %7194 = vmatprep.subr.mxu0 0.0
    %7195 = vmatpush1.msra.mxu0 %v6678
    %7196 = vmatprep.subr.mxu0 0.0
    %7197 = vmatpush1.msra.mxu0 %v6679
    %7198 = vmatprep.subr.mxu0 0.0
    %7199 = vmatpush1.msra.mxu0 %v6680
    %7200 = vmatprep.subr.mxu0 0.0
    %7201 = vmatpush1.msra.mxu0 %v6681
    %7202 = vmatprep.subr.mxu0 0.0
    %7203 = vmatpush1.msra.mxu0 %v6682
    %7204 = vmatprep.mubr.f32.mxu0 %v6456
    %7205 = vmatmul.mubr.f32.gmra.mrb[0].mxu0 %v6455
    %v7206 = vpop.f32.mrb[0].mxu0
    %v7207 = vadd.f32 %v7137, %v7206
    %v7208 = vpop.f32.mrb[0].mxu0
    %7209 = vdwg.mxu0
    %7210 = vmatprep.subr.mxu0 0.0
    %7211 = vmatpush1.msra.mxu0 %v6683
    %7212 = vmatprep.subr.mxu0 0.0
    %7213 = vmatpush1.msra.mxu0 %v6684
    %7214 = vmatprep.subr.mxu0 0.0
    %7215 = vmatpush1.msra.mxu0 %v6685
    %7216 = vmatprep.subr.mxu0 0.0
    %7217 = vmatpush1.msra.mxu0 %v6686
    %7218 = vmatprep.subr.mxu0 0.0
    %7219 = vmatpush1.msra.mxu0 %v6687
    %7220 = vmatprep.subr.mxu0 0.0
    %7221 = vmatpush1.msra.mxu0 %v6688
    %7222 = vmatprep.subr.mxu0 0.0
    %7223 = vmatpush1.msra.mxu0 %v6689
    %7224 = vmatprep.subr.mxu0 0.0
    %7225 = vmatpush1.msra.mxu0 %v6690
    %7226 = vmatprep.subr.mxu0 0.0
    %7227 = vmatpush1.msra.mxu0 %v6691
    %7228 = vmatprep.subr.mxu0 0.0
    %7229 = vmatpush1.msra.mxu0 %v6692
    %7230 = vmatprep.subr.mxu0 0.0
    %7231 = vmatpush1.msra.mxu0 %v6693
    %7232 = vmatprep.subr.mxu0 0.0
    %7233 = vmatpush1.msra.mxu0 %v6694
    %7234 = vmatprep.subr.mxu0 0.0
    %7235 = vmatpush1.msra.mxu0 %v6695
    %7236 = vmatprep.subr.mxu0 0.0
    %7237 = vmatpush1.msra.mxu0 %v6696
    %7238 = vmatprep.subr.mxu0 0.0
    %7239 = vmatpush1.msra.mxu0 %v6697
    %7240 = vmatprep.subr.mxu0 0.0
    %7241 = vmatpush1.msra.mxu0 %v6698
    %7242 = vmatprep.subr.mxu0 0.0
    %7243 = vmatpush1.msra.mxu0 %v6699
    %7244 = vmatprep.subr.mxu0 0.0
    %7245 = vmatpush1.msra.mxu0 %v6700
    %7246 = vmatprep.subr.mxu0 0.0
    %7247 = vmatpush1.msra.mxu0 %v6701
    %7248 = vmatprep.subr.mxu0 0.0
    %7249 = vmatpush1.msra.mxu0 %v6702
    %7250 = vmatprep.subr.mxu0 0.0
    %7251 = vmatpush1.msra.mxu0 %v6703
    %7252 = vmatprep.subr.mxu0 0.0
    %7253 = vmatpush1.msra.mxu0 %v6704
    %7254 = vmatprep.subr.mxu0 0.0
    %7255 = vmatpush1.msra.mxu0 %v6705
    %7256 = vmatprep.subr.mxu0 0.0
    %7257 = vmatpush1.msra.mxu0 %v6706
    %7258 = vmatprep.subr.mxu0 0.0
    %7259 = vmatpush1.msra.mxu0 %v6707
    %7260 = vmatprep.subr.mxu0 0.0
    %7261 = vmatpush1.msra.mxu0 %v6708
    %7262 = vmatprep.subr.mxu0 0.0
    %7263 = vmatpush1.msra.mxu0 0.0
    %7264 = vmatprep.subr.mxu0 0.0
    %7265 = vmatpush1.msra.mxu0 0.0
    %7266 = vmatprep.subr.mxu0 0.0
    %7267 = vmatpush1.msra.mxu0 0.0
    %7268 = vmatprep.subr.mxu0 0.0
    %7269 = vmatpush1.msra.mxu0 0.0
    %7270 = vmatprep.subr.mxu0 0.0
    %7271 = vmatpush1.msra.mxu0 0.0
    %7272 = vmatprep.subr.mxu0 0.0
    %7273 = vmatpush1.msra.mxu0 0.0
    %7274 = vmatprep.mubr.f32.mxu0 %v6718
    %7275 = vmatmul.mubr.f32.gmra.mrb[0].mxu0 %v6457
    %v7276 = vpop.f32.mrb[0].mxu0
    %v7277 = vadd.f32 %v7207, %v7276
    %v7278 = vpop.f32.mrb[0].mxu0
    %7279 = vdwg.mxu0
    %7280 = vst [vmem:[%s7] sm:$0xff] %v7277
    // Predicated region
    $region54: #{simple_nn_forward.1} parent=1 // pred_check
      _
    $region55: #{simple_nn_forward.1} parent=1 // pred_check_branch
      %7282 = sbr.rel (0) target = $region57
    $region56: #{simple_nn_forward.1} parent=1 // pred_region
      _
    $region57: #{simple_nn_forward.1} parent=1 // pred_fallthru
      _
    // Predicated region
    $region58: #{simple_nn_forward.1} parent=1 // pred_check
      _
    $region59: #{simple_nn_forward.1} parent=1 // pred_check_branch
      %7284 = sbr.rel (0) target = $region61
    $region60: #{simple_nn_forward.1} parent=1 // pred_region
      _
    $region61: #{simple_nn_forward.1} parent=1 // pred_fallthru
      _
    %7285 = vsyncpa [#allocation3], 1
    %7286 = vsyncpa [#allocation5], 1
    %7287 = vsyncpa [#allocation8], 1
    %7288 = vsyncpa [#allocation11], 1

</llo_original>
